<compile_context>
chip_gen: v7x
topology: tpu7x:2x2x1
jax: 0.10.0
libtpu: 0.0.40
codegen_flags: <defaults>
</compile_context>

<pallas_src>
import math

import jax
import jax.numpy as jnp
from jax import lax
from jax.experimental import pallas as pl
from jax.experimental.pallas import tpu as pltpu

D_MODEL = 64
NUM_HEADS = 4
HEAD_DIM = D_MODEL // NUM_HEADS
COS10 = math.cos(math.radians(10.0))   # acos monotone decreasing: deg<10 <=> cos>COS10
EPS = 1e-8                             # torch.cosine_similarity eps


# ----------------------------------------------------------------------------
# In-kernel helpers (operate on VMEM-resident values; every op is from the
# known-good Mosaic set: leading-dim reshapes, lane slices, broadcasts,
# batched minor-contraction einsums, lane reductions, iota, where/clip/sqrt).
# ----------------------------------------------------------------------------
def _project_heads(x, w, b):
    """x: (B,S,Din); w: (Din,H,1,hd); b: (H,1,hd)  ->  (B,H,S,hd).  Pure VPU."""
    out = x[:, None, :, 0:1] * w[0] + b
    for i in range(1, w.shape[0]):
        out = out + x[:, None, :, i:i + 1] * w[i]
    return out


def _attention_double_softmax(x, wqk, bqk, mask):
    """Fused embedding+query/key projection, all-heads batched QK^T, softmax,
    sparse-mask multiply, softmax.  Matches the reference: the second softmax is a
    plain softmax over dense*mask (masked entries get exp(0) weight, as in PyTorch).

    x:    (B, S, Din)
    wqk:  (2, Din, H, 1, hd)   folded [We@Wq ; We@Wk], head-shaped host-side
    bqk:  (2, H, 1, hd)        folded [be@Wq+bq ; be@Wk+bk]
    mask: (B, S, S)            0/1 sparse mask shared across heads
    returns (B, H, S, S)
    """
    b, s, _ = x.shape
    num_heads, head_dim = wqk.shape[2], wqk.shape[4]
    inv_scale = jnp.float32(1.0 / math.sqrt(num_heads * head_dim))

    q = _project_heads(x, wqk[0], bqk[0])                    # (B,H,S,hd)
    k = _project_heads(x, wqk[1], bqk[1])                    # (B,H,S,hd)

    bh = b * num_heads
    # one (B*H)-batched MXU matmul (leading-dim reshape only, no relayout)
    scores = jnp.einsum(
        'bnd,bmd->bnm',
        q.reshape(bh, s, head_dim), k.reshape(bh, s, head_dim),
        preferred_element_type=jnp.float32) * inv_scale      # (B*H,S,S)

    # softmax #1 (dense multi-head interaction), exact reciprocal
    scores = scores - jnp.max(scores, axis=-1, keepdims=True)
    e = jnp.exp(scores)
    dense = e * pl.reciprocal(jnp.sum(e, axis=-1, keepdims=True))

    # sparse mask (broadcast across heads) + softmax #2.
    # dense*mask is in [0,1] -> no max-subtraction needed before exp.
    z = dense.reshape(b, num_heads, s, s) * mask[:, None, :, :]
    e2 = jnp.exp(z)
    return e2 * pl.reciprocal(jnp.sum(e2, axis=-1, keepdims=True))   # exact: rows sum to 1


def _spatial_mask(vel, pos):
    """vel, pos: (T,N,2)  ->  (T,N,N) 0/1 mask (reference semantics):
    mask[t,j,k] = 1  iff  angle(vel_j, pos_k - pos_j) < 10deg (cos gets +eye on diag)
                      OR  ||pos_k - pos_j|| >= 5  (distance indicator 0 -> 0 < 10)."""
    t, n, _ = vel.shape
    ones = jnp.ones_like(pos)
    # batched minor-contraction matmuls give every pairwise quantity without any
    # explicit (T,2,N) "row layout" operand or in-kernel transpose.
    pp = jnp.einsum('tjc,tkc->tjk', pos, pos, preferred_element_type=jnp.float32)        # pos_j.pos_k
    p2_k = jnp.einsum('tjc,tkc->tjk', ones, pos * pos, preferred_element_type=jnp.float32)  # ||pos_k||^2
    vp = jnp.einsum('tjc,tkc->tjk', vel, pos, preferred_element_type=jnp.float32)        # vel_j.pos_k
    p2_j = jnp.sum(pos * pos, axis=-1, keepdims=True)        # (T,N,1)
    vp_j = jnp.sum(vel * pos, axis=-1, keepdims=True)        # (T,N,1) vel_j.pos_j
    v_n = jnp.sqrt(jnp.sum(vel * vel, axis=-1, keepdims=True))

    d2 = jnp.maximum(p2_j + p2_k - 2.0 * pp, 0.0)            # ||pos_k - pos_j||^2
    d_n = jnp.sqrt(d2)
    dot = vp - vp_j                                          # vel_j.(pos_k - pos_j)

    row = lax.broadcasted_iota(jnp.int32, (t, n, n), 1)
    col = lax.broadcasted_iota(jnp.int32, (t, n, n), 2)
    eye = (row == col).astype(jnp.float32)

    cos = dot / jnp.maximum(v_n * d_n, EPS)
    cos = jnp.clip(cos + eye, -1.0, 1.0)                     # reference: +eye then clamp
    near = cos > COS10                                       # angle < 10 degrees
    far = d_n >= 5.0                                         # indicator==0 -> product 0 < 10 -> 1
    return jnp.where(jnp.logical_or(far, near), 1.0, 0.0)


def _temporal_mask(vel, ident):
    """vel: (N,T,2) per-pedestrian velocity sequence; ident: (N,T,T) = identity[1].
    Reference fills only [1:,1:] with (angle > 10deg), then adds identity[1]."""
    n, t, _ = vel.shape
    ones = jnp.ones_like(vel)
    dots = jnp.einsum('nac,nbc->nab', vel, vel, preferred_element_type=jnp.float32)       # v_a.v_b
    n2_b = jnp.einsum('nac,nbc->nab', ones, vel * vel, preferred_element_type=jnp.float32)  # ||v_b||^2
    n_a = jnp.sqrt(jnp.sum(vel * vel, axis=-1, keepdims=True))                            # (N,T,1)

    cos = jnp.clip(dots / jnp.maximum(n_a * jnp.sqrt(n2_b), EPS), -1.0, 1.0)
    sim = jnp.where(cos < COS10, 1.0, 0.0)                   # angle > 10 degrees
    r = lax.broadcasted_iota(jnp.int32, (n, t, t), 1)
    c = lax.broadcasted_iota(jnp.int32, (n, t, t), 2)
    valid = jnp.logical_and(r >= 1, c >= 1)
    return jnp.where(valid, sim, 0.0) + ident


# ----------------------------------------------------------------------------
# Fused kernel: both masks + both attention paths, one grid-less invocation.
# ----------------------------------------------------------------------------
def _fused_kernel(spa_x_ref, tem_x_ref, pos_ref, ident_ref,
                  swqk_ref, sbqk_ref, twqk_ref, tbqk_ref,
                  spa_out_ref, tem_out_ref):
    spa_x = spa_x_ref[...]                                   # (T, N, 2) - also spatial velocity
    tem_x = tem_x_ref[...]                                   # (N, T, 3)
    pos = pos_ref[...]                                       # (T, N, 2)

    spa_mask = _spatial_mask(spa_x, pos)                     # (T, N, N)
    tem_mask = _temporal_mask(tem_x[:, :, 1:3], ident_ref[...])   # (N, T, T)

    spa_out_ref[...] = _attention_double_softmax(
        spa_x, swqk_ref[...], sbqk_ref[...], spa_mask)       # (T, H, N, N)
    tem_out_ref[...] = _attention_double_softmax(
        tem_x, twqk_ref[...], tbqk_ref[...], tem_mask)       # (N, H, T, T)


# ----------------------------------------------------------------------------
# Parameter init (PyTorch nn.Linear-style, stored as (in, out)) and ONE-TIME fold.
# ----------------------------------------------------------------------------
def init_linear(key, fan_in, fan_out):
    kw, kb = jax.random.split(key)
    bound = 1.0 / math.sqrt(fan_in)
    w = jax.random.uniform(kw, (fan_in, fan_out), jnp.float32, -bound, bound)
    b = jax.random.uniform(kb, (fan_out,), jnp.float32, -bound, bound)
    return w, b


def init_self_attention(key, in_dims, d_model=D_MODEL):
    k1, k2, k3 = jax.random.split(key, 3)
    return {"embedding": init_linear(k1, in_dims, d_model),
            "query": init_linear(k2, d_model, d_model),
            "key": init_linear(k3, d_model, d_model)}


def fold_attention_params(p, num_heads=NUM_HEADS):
    """Fold embedding->query / embedding->key, head-shape for the kernel.
    Done ONCE outside jit.  Returns wqk (2,Din,H,1,hd), bqk (2,H,1,hd)."""
    we, be = p["embedding"]
    wq, bq = p["query"]
    wk, bk = p["key"]
    din, d_model = we.shape
    hd = d_model // num_heads
    w_q, w_k = we @ wq, we @ wk                              # (Din, D)
    b_q, b_k = be @ wq + bq, be @ wk + bk                    # (D,)
    wqk = jnp.stack([w_q, w_k]).reshape(2, din, num_heads, 1, hd)
    bqk = jnp.stack([b_q, b_k]).reshape(2, num_heads, 1, hd)
    return wqk, bqk


# ----------------------------------------------------------------------------
# Forward pass (single fused pallas_call).
# ----------------------------------------------------------------------------
@jax.jit
def sparse_weighted_adjacency(graph, identity, obs_traj, folded_params):
    T, N, _ = graph.shape
    swqk, sbqk, twqk, tbqk = folded_params

    # 3 cheap layout-only prep ops on tiny arrays; everything pairwise is in-kernel.
    spatial_graph = graph[:, :, 1:]                          # (T, N, 2)
    temporal_graph = jnp.transpose(graph, (1, 0, 2))         # (N, T, 3)
    pos = jnp.transpose(obs_traj, (2, 0, 1))                 # (T, N, 2)

    vmem = pltpu.MemorySpace.VMEM
    spa_out, tem_out = pl.pallas_call(
        _fused_kernel,
        out_shape=(
            jax.ShapeDtypeStruct((T, NUM_HEADS, N, N), jnp.float32),
            jax.ShapeDtypeStruct((N, NUM_HEADS, T, T), jnp.float32),
        ),
        in_specs=[pl.BlockSpec(memory_space=vmem) for _ in range(8)],
        out_specs=(pl.BlockSpec(memory_space=vmem),
                   pl.BlockSpec(memory_space=vmem)),
    )(spatial_graph, temporal_graph, pos, identity[1], swqk, sbqk, twqk, tbqk)
    return spa_out, tem_out


# ----------------------------------------------------------------------------
# Pure-JAX reference mirroring the PyTorch module (for correctness checking).
# ----------------------------------------------------------------------------
@jax.jit
def _reference(graph, identity, obs_traj, raw_params):
    T, N, _ = graph.shape
    spatial_graph = graph[:, :, 1:]
    temporal_graph = jnp.transpose(graph, (1, 0, 2))

    dis = obs_traj[None, :, :, :] - obs_traj[:, None, :, :]          # (N,N,2,T): obs[k]-obs[j]
    dis = jnp.transpose(dis, (3, 0, 1, 2))                           # (T,N,N,2)
    distance = jnp.linalg.norm(dis, axis=3)                          # (T,N,N)
    indicator = jnp.where(distance < 5.0, 1.0, 0.0)

    a = spatial_graph[:, :, None, :]                                 # (T,N,1,2) vel_j
    dot = jnp.sum(a * dis, axis=-1)
    cos = dot / jnp.maximum(jnp.linalg.norm(a, axis=-1) * jnp.linalg.norm(dis, axis=-1), EPS)
    deg = jnp.degrees(jnp.arccos(jnp.clip(cos + jnp.eye(N)[None], -1.0, 1.0)))
    spa_mask = jnp.where(deg * indicator < 10.0, 1.0, 0.0)           # (T,N,N)

    v = jnp.transpose(spatial_graph, (1, 0, 2))[:, 1:, :]            # (N,T-1,2)
    dot_t = jnp.einsum('nac,nbc->nab', v, v)
    nt = jnp.linalg.norm(v, axis=-1)
    cos_t = jnp.clip(dot_t / jnp.maximum(nt[:, :, None] * nt[:, None, :], EPS), -1.0, 1.0)
    sim_t = jnp.where(jnp.degrees(jnp.arccos(cos_t)) > 10.0, 1.0, 0.0)
    tem_mask = jnp.zeros((N, T, T), jnp.float32).at[:, 1:, 1:].set(sim_t) + identity[1]

    def attn(x, p):
        we, be = p["embedding"]
        wq, bq = p["query"]
        wk, bk = p["key"]
        e = x @ we + be
        q, k = e @ wq + bq, e @ wk + bk
        B, S, D = q.shape
        qh = q.reshape(B, S, NUM_HEADS, D // NUM_HEADS).transpose(0, 2, 1, 3)
        kh = k.reshape(B, S, NUM_HEADS, D // NUM_HEADS).transpose(0, 2, 1, 3)
        s = jnp.einsum('bhnd,bhmd->bhnm', qh, kh) / jnp.sqrt(jnp.float32(D))
        return jax.nn.softmax(s, axis=-1)

    dense_s = attn(spatial_graph, raw_params["spatial"])
    dense_t = attn(temporal_graph, raw_params["temporal"])
    out_s = jax.nn.softmax(dense_s * spa_mask[:, None], axis=-1)
    out_t = jax.nn.softmax(dense_t * tem_mask[:, None], axis=-1)
    return out_s, out_t


if __name__ == "__main__":
    key = jax.random.PRNGKey(0)
    T, N = 8, 6                      # obs length, number of pedestrians
    k1, k2, k3, k4 = jax.random.split(key, 4)

    graph = jax.random.normal(k1, (T, N, 3), jnp.float32)
    obs_traj = jax.random.normal(k2, (N, 2, T), jnp.float32) * 3.0
    identity_spatial = jnp.ones((T, N, N), jnp.float32) * jnp.eye(N, dtype=jnp.float32)[None]
    identity_temporal = jnp.ones((N, T, T), jnp.float32) * jnp.eye(T, dtype=jnp.float32)[None]
    identity = (identity_spatial, identity_temporal)

    raw_params = {
        "spatial": init_self_attention(k3, in_dims=2),
        "temporal": init_self_attention(k4, in_dims=3),
    }
    # one-time host-side folding (hoisted out of the jitted forward)
    folded = (*fold_attention_params(raw_params["spatial"]),
              *fold_attention_params(raw_params["temporal"]))

    spa_adj, tem_adj = sparse_weighted_adjacency(graph, identity, obs_traj, folded)
    spa_adj = jax.block_until_ready(spa_adj)
    tem_adj = jax.block_until_ready(tem_adj)

    assert spa_adj.shape == (T, NUM_HEADS, N, N)
    assert tem_adj.shape == (N, NUM_HEADS, T, T)
    assert bool(jnp.isfinite(spa_adj).all()) and bool(jnp.isfinite(tem_adj).all())
    # exact reciprocal in the final normalization -> rows sum to 1 tightly
    assert bool(jnp.allclose(spa_adj.sum(-1), 1.0, atol=1e-5))
    assert bool(jnp.allclose(tem_adj.sum(-1), 1.0, atol=1e-5))

    # compare against a pure-JAX mirror of the PyTorch forward
    ref_spa, ref_tem = _reference(graph, identity, obs_traj, raw_params)
    assert bool(jnp.allclose(spa_adj, ref_spa, atol=5e-4, rtol=1e-3))
    assert bool(jnp.allclose(tem_adj, ref_tem, atol=5e-4, rtol=1e-3))

    print("KERNEL_OK")
</pallas_src>

<mosaic_0001>
module attributes {stable_mosaic.version = 11 : i64} {
  func.func @_fused_kernel(%arg0: memref<8x6x2xf32, #tpu.memory_space<vmem>>, %arg1: memref<6x8x3xf32, #tpu.memory_space<vmem>>, %arg2: memref<8x6x2xf32, #tpu.memory_space<vmem>>, %arg3: memref<6x8x8xf32, #tpu.memory_space<vmem>>, %arg4: memref<2x2x4x1x16xf32, #tpu.memory_space<vmem>>, %arg5: memref<2x4x1x16xf32, #tpu.memory_space<vmem>>, %arg6: memref<2x3x4x1x16xf32, #tpu.memory_space<vmem>>, %arg7: memref<2x4x1x16xf32, #tpu.memory_space<vmem>>, %arg8: memref<8x4x6x6xf32, #tpu.memory_space<vmem>>, %arg9: memref<6x4x8x8xf32, #tpu.memory_space<vmem>>) attributes {dimension_semantics = [], scalar_prefetch = 0 : i64, scratch_operands = 0 : i64, tpu.core_type = #tpu.core_type<tc>} {
    %c0 = arith.constant 0 : index
    %c0_0 = arith.constant 0 : index
    %c0_1 = arith.constant 0 : index
    %0 = vector.load %arg0[%c0, %c0_0, %c0_1] : memref<8x6x2xf32, #tpu.memory_space<vmem>>, vector<8x6x2xf32>
    %c0_2 = arith.constant 0 : index
    %c0_3 = arith.constant 0 : index
    %c0_4 = arith.constant 0 : index
    %1 = vector.load %arg1[%c0_2, %c0_3, %c0_4] : memref<6x8x3xf32, #tpu.memory_space<vmem>>, vector<6x8x3xf32>
    %c0_5 = arith.constant 0 : index
    %c0_6 = arith.constant 0 : index
    %c0_7 = arith.constant 0 : index
    %2 = vector.load %arg2[%c0_5, %c0_6, %c0_7] : memref<8x6x2xf32, #tpu.memory_space<vmem>>, vector<8x6x2xf32>
    %cst = arith.constant 1.000000e+00 : f32
    %3 = vector.broadcast %cst : f32 to vector<8x6x2xf32>
    "tpu.trace_start"() <{level = 10 : i32, message = "tjc,tkc->tjk"}> : () -> ()
    %cst_8 = arith.constant dense<0.000000e+00> : vector<8x6x6xf32>
    %4 = tpu.matmul %2, %2, %cst_8 {dimension_numbers = #tpu.dot_dimension_numbers<[2], [2], [1], [1], [0, 0, 0, 1, 1, 1], [0], [0]>} : vector<8x6x2xf32>, vector<8x6x2xf32>, vector<8x6x6xf32> -> vector<8x6x6xf32>
    "tpu.trace_stop"() : () -> ()
    %5 = arith.mulf %2, %2 : vector<8x6x2xf32>
    "tpu.trace_start"() <{level = 10 : i32, message = "tjc,tkc->tjk"}> : () -> ()
    %cst_9 = arith.constant dense<0.000000e+00> : vector<8x6x6xf32>
    %6 = tpu.matmul %3, %5, %cst_9 {dimension_numbers = #tpu.dot_dimension_numbers<[2], [2], [1], [1], [0, 0, 0, 1, 1, 1], [0], [0]>} : vector<8x6x2xf32>, vector<8x6x2xf32>, vector<8x6x6xf32> -> vector<8x6x6xf32>
    %cst_10 = arith.constant dense<0.000000e+00> : vector<8x6x6xf32>
    %7 = tpu.matmul %0, %2, %cst_10 {dimension_numbers = #tpu.dot_dimension_numbers<[2], [2], [1], [1], [0, 0, 0, 1, 1, 1], [0], [0]>} : vector<8x6x2xf32>, vector<8x6x2xf32>, vector<8x6x6xf32> -> vector<8x6x6xf32>
    "tpu.trace_stop"() : () -> ()
    %8 = arith.mulf %2, %2 : vector<8x6x2xf32>
    %cst_11 = arith.constant dense<0.000000e+00> : vector<8x6xf32>
    %9 = vector.multi_reduction <add>, %8, %cst_11 [2] : vector<8x6x2xf32> to vector<8x6xf32>
    %10 = vector.shape_cast %9 : vector<8x6xf32> to vector<8x6x1xf32>
    %11 = arith.mulf %0, %2 : vector<8x6x2xf32>
    %cst_12 = arith.constant dense<0.000000e+00> : vector<8x6xf32>
    %12 = vector.multi_reduction <add>, %11, %cst_12 [2] : vector<8x6x2xf32> to vector<8x6xf32>
    %13 = vector.shape_cast %12 : vector<8x6xf32> to vector<8x6x1xf32>
    %14 = arith.mulf %0, %0 : vector<8x6x2xf32>
    %cst_13 = arith.constant dense<0.000000e+00> : vector<8x6xf32>
    %15 = vector.multi_reduction <add>, %14, %cst_13 [2] : vector<8x6x2xf32> to vector<8x6xf32>
    %16 = vector.shape_cast %15 : vector<8x6xf32> to vector<8x6x1xf32>
    %17 = math.sqrt %16 : vector<8x6x1xf32>
    %18 = vector.broadcast %10 : vector<8x6x1xf32> to vector<8x6x6xf32>
    %19 = arith.addf %18, %6 : vector<8x6x6xf32>
    %cst_14 = arith.constant 2.000000e+00 : f32
    %20 = vector.broadcast %cst_14 : f32 to vector<8x6x6xf32>
    %21 = arith.mulf %20, %4 : vector<8x6x6xf32>
    %22 = arith.subf %19, %21 : vector<8x6x6xf32>
    %cst_15 = arith.constant 0.000000e+00 : f32
    %23 = vector.broadcast %cst_15 : f32 to vector<8x6x6xf32>
    %24 = arith.maximumf %22, %23 : vector<8x6x6xf32>
    %25 = math.sqrt %24 : vector<8x6x6xf32>
    %26 = vector.broadcast %13 : vector<8x6x1xf32> to vector<8x6x6xf32>
    %27 = arith.subf %7, %26 : vector<8x6x6xf32>
    %28 = tpu.iota {dimensions = array<i32: 1>} : vector<8x6x6xi32>
    %29 = tpu.iota {dimensions = array<i32: 2>} : vector<8x6x6xi32>
    %30 = arith.cmpi eq, %28, %29 : vector<8x6x6xi32>
    %31 = arith.extui %30 : vector<8x6x6xi1> to vector<8x6x6xi32>
    %32 = arith.sitofp %31 : vector<8x6x6xi32> to vector<8x6x6xf32>
    %33 = vector.broadcast %17 : vector<8x6x1xf32> to vector<8x6x6xf32>
    %34 = arith.mulf %33, %25 : vector<8x6x6xf32>
    %cst_16 = arith.constant 9.99999993E-9 : f32
    %35 = vector.broadcast %cst_16 : f32 to vector<8x6x6xf32>
    %36 = arith.maximumf %34, %35 : vector<8x6x6xf32>
    %37 = arith.divf %27, %36 : vector<8x6x6xf32>
    %38 = arith.addf %37, %32 : vector<8x6x6xf32>
    %cst_17 = arith.constant -1.000000e+00 : f32
    %cst_18 = arith.constant 1.000000e+00 : f32
    %39 = vector.broadcast %cst_17 : f32 to vector<8x6x6xf32>
    %40 = arith.maximumf %39, %38 : vector<8x6x6xf32>
    %41 = vector.broadcast %cst_18 : f32 to vector<8x6x6xf32>
    %42 = arith.minimumf %41, %40 : vector<8x6x6xf32>
    %cst_19 = arith.constant 0.984807729 : f32
    %43 = vector.broadcast %cst_19 : f32 to vector<8x6x6xf32>
    %44 = arith.cmpf ogt, %42, %43 : vector<8x6x6xf32>
    %cst_20 = arith.constant 5.000000e+00 : f32
    %45 = vector.broadcast %cst_20 : f32 to vector<8x6x6xf32>
    %46 = arith.cmpf oge, %25, %45 : vector<8x6x6xf32>
    %47 = arith.ori %46, %44 : vector<8x6x6xi1>
    %cst_21 = arith.constant 1.000000e+00 : f32
    %cst_22 = arith.constant 0.000000e+00 : f32
    %48 = vector.broadcast %cst_21 : f32 to vector<8x6x6xf32>
    %49 = vector.broadcast %cst_22 : f32 to vector<8x6x6xf32>
    %50 = arith.select %47, %48, %49 : vector<8x6x6xi1>, vector<8x6x6xf32>
    %51 = vector.extract_strided_slice %1 {offsets = [0, 0, 1], sizes = [6, 8, 2], strides = [1, 1, 1]} : vector<6x8x3xf32> to vector<6x8x2xf32>
    %c0_23 = arith.constant 0 : index
    %c0_24 = arith.constant 0 : index
    %c0_25 = arith.constant 0 : index
    %52 = vector.load %arg3[%c0_23, %c0_24, %c0_25] : memref<6x8x8xf32, #tpu.memory_space<vmem>>, vector<6x8x8xf32>
    %cst_26 = arith.constant 1.000000e+00 : f32
    %53 = vector.broadcast %cst_26 : f32 to vector<6x8x2xf32>
    "tpu.trace_start"() <{level = 10 : i32, message = "nac,nbc->nab"}> : () -> ()
    %cst_27 = arith.constant dense<0.000000e+00> : vector<6x8x8xf32>
    %54 = tpu.matmul %51, %51, %cst_27 {dimension_numbers = #tpu.dot_dimension_numbers<[2], [2], [1], [1], [0, 0, 0, 1, 1, 1], [0], [0]>} : vector<6x8x2xf32>, vector<6x8x2xf32>, vector<6x8x8xf32> -> vector<6x8x8xf32>
    "tpu.trace_stop"() : () -> ()
    %55 = arith.mulf %51, %51 : vector<6x8x2xf32>
    "tpu.trace_start"() <{level = 10 : i32, message = "nac,nbc->nab"}> : () -> ()
    %cst_28 = arith.constant dense<0.000000e+00> : vector<6x8x8xf32>
    %56 = tpu.matmul %53, %55, %cst_28 {dimension_numbers = #tpu.dot_dimension_numbers<[2], [2], [1], [1], [0, 0, 0, 1, 1, 1], [0], [0]>} : vector<6x8x2xf32>, vector<6x8x2xf32>, vector<6x8x8xf32> -> vector<6x8x8xf32>
    "tpu.trace_stop"() : () -> ()
    %57 = arith.mulf %51, %51 : vector<6x8x2xf32>
    %cst_29 = arith.constant dense<0.000000e+00> : vector<6x8xf32>
    %58 = vector.multi_reduction <add>, %57, %cst_29 [2] : vector<6x8x2xf32> to vector<6x8xf32>
    %59 = vector.shape_cast %58 : vector<6x8xf32> to vector<6x8x1xf32>
    %60 = math.sqrt %59 : vector<6x8x1xf32>
    %61 = math.sqrt %56 : vector<6x8x8xf32>
    %62 = vector.broadcast %60 : vector<6x8x1xf32> to vector<6x8x8xf32>
    %63 = arith.mulf %62, %61 : vector<6x8x8xf32>
    %cst_30 = arith.constant 9.99999993E-9 : f32
    %64 = vector.broadcast %cst_30 : f32 to vector<6x8x8xf32>
    %65 = arith.maximumf %63, %64 : vector<6x8x8xf32>
    %66 = arith.divf %54, %65 : vector<6x8x8xf32>
    %cst_31 = arith.constant -1.000000e+00 : f32
    %cst_32 = arith.constant 1.000000e+00 : f32
    %67 = vector.broadcast %cst_31 : f32 to vector<6x8x8xf32>
    %68 = arith.maximumf %67, %66 : vector<6x8x8xf32>
    %69 = vector.broadcast %cst_32 : f32 to vector<6x8x8xf32>
    %70 = arith.minimumf %69, %68 : vector<6x8x8xf32>
    %cst_33 = arith.constant 0.984807729 : f32
    %71 = vector.broadcast %cst_33 : f32 to vector<6x8x8xf32>
    %72 = arith.cmpf olt, %70, %71 : vector<6x8x8xf32>
    %cst_34 = arith.constant 1.000000e+00 : f32
    %cst_35 = arith.constant 0.000000e+00 : f32
    %73 = vector.broadcast %cst_34 : f32 to vector<6x8x8xf32>
    %74 = vector.broadcast %cst_35 : f32 to vector<6x8x8xf32>
    %75 = arith.select %72, %73, %74 : vector<6x8x8xi1>, vector<6x8x8xf32>
    %76 = tpu.iota {dimensions = array<i32: 1>} : vector<6x8x8xi32>
    %77 = tpu.iota {dimensions = array<i32: 2>} : vector<6x8x8xi32>
    %c1_i32 = arith.constant 1 : i32
    %78 = vector.broadcast %c1_i32 : i32 to vector<6x8x8xi32>
    %79 = arith.cmpi sge, %76, %78 : vector<6x8x8xi32>
    %c1_i32_36 = arith.constant 1 : i32
    %80 = vector.broadcast %c1_i32_36 : i32 to vector<6x8x8xi32>
    %81 = arith.cmpi sge, %77, %80 : vector<6x8x8xi32>
    %82 = arith.andi %79, %81 : vector<6x8x8xi1>
    %cst_37 = arith.constant 0.000000e+00 : f32
    %83 = vector.broadcast %cst_37 : f32 to vector<6x8x8xf32>
    %84 = arith.select %82, %75, %83 : vector<6x8x8xi1>, vector<6x8x8xf32>
    %85 = arith.addf %84, %52 : vector<6x8x8xf32>
    %c0_38 = arith.constant 0 : index
    %c0_39 = arith.constant 0 : index
    %c0_40 = arith.constant 0 : index
    %c0_41 = arith.constant 0 : index
    %c0_42 = arith.constant 0 : index
    %86 = vector.load %arg4[%c0_38, %c0_39, %c0_40, %c0_41, %c0_42] : memref<2x2x4x1x16xf32, #tpu.memory_space<vmem>>, vector<2x2x4x1x16xf32>
    %c0_43 = arith.constant 0 : index
    %c0_44 = arith.constant 0 : index
    %c0_45 = arith.constant 0 : index
    %c0_46 = arith.constant 0 : index
    %87 = vector.load %arg5[%c0_43, %c0_44, %c0_45, %c0_46] : memref<2x4x1x16xf32, #tpu.memory_space<vmem>>, vector<2x4x1x16xf32>
    %88 = vector.extract_strided_slice %86 {offsets = [0, 0, 0, 0, 0], sizes = [1, 2, 4, 1, 16], strides = [1, 1, 1, 1, 1]} : vector<2x2x4x1x16xf32> to vector<1x2x4x1x16xf32>
    %89 = vector.shape_cast %88 : vector<1x2x4x1x16xf32> to vector<2x4x1x16xf32>
    %90 = vector.extract_strided_slice %87 {offsets = [0, 0, 0, 0], sizes = [1, 4, 1, 16], strides = [1, 1, 1, 1]} : vector<2x4x1x16xf32> to vector<1x4x1x16xf32>
    %91 = vector.shape_cast %90 : vector<1x4x1x16xf32> to vector<4x1x16xf32>
    %92 = vector.extract_strided_slice %0 {offsets = [0, 0, 0], sizes = [8, 6, 1], strides = [1, 1, 1]} : vector<8x6x2xf32> to vector<8x6x1xf32>
    %93 = vector.shape_cast %92 : vector<8x6x1xf32> to vector<8x1x6x1xf32>
    %94 = vector.extract_strided_slice %89 {offsets = [0, 0, 0, 0], sizes = [1, 4, 1, 16], strides = [1, 1, 1, 1]} : vector<2x4x1x16xf32> to vector<1x4x1x16xf32>
    %95 = vector.shape_cast %94 : vector<1x4x1x16xf32> to vector<4x1x16xf32>
    %96 = vector.shape_cast %95 : vector<4x1x16xf32> to vector<1x4x1x16xf32>
    %97 = vector.broadcast %93 : vector<8x1x6x1xf32> to vector<8x4x6x16xf32>
    %98 = vector.broadcast %96 : vector<1x4x1x16xf32> to vector<8x4x6x16xf32>
    %99 = arith.mulf %97, %98 : vector<8x4x6x16xf32>
    %100 = vector.shape_cast %91 : vector<4x1x16xf32> to vector<1x4x1x16xf32>
    %101 = vector.broadcast %100 : vector<1x4x1x16xf32> to vector<8x4x6x16xf32>
    %102 = arith.addf %99, %101 : vector<8x4x6x16xf32>
    %103 = vector.extract_strided_slice %0 {offsets = [0, 0, 1], sizes = [8, 6, 1], strides = [1, 1, 1]} : vector<8x6x2xf32> to vector<8x6x1xf32>
    %104 = vector.shape_cast %103 : vector<8x6x1xf32> to vector<8x1x6x1xf32>
    %105 = vector.extract_strided_slice %89 {offsets = [1, 0, 0, 0], sizes = [1, 4, 1, 16], strides = [1, 1, 1, 1]} : vector<2x4x1x16xf32> to vector<1x4x1x16xf32>
    %106 = vector.shape_cast %105 : vector<1x4x1x16xf32> to vector<4x1x16xf32>
    %107 = vector.shape_cast %106 : vector<4x1x16xf32> to vector<1x4x1x16xf32>
    %108 = vector.broadcast %104 : vector<8x1x6x1xf32> to vector<8x4x6x16xf32>
    %109 = vector.broadcast %107 : vector<1x4x1x16xf32> to vector<8x4x6x16xf32>
    %110 = arith.mulf %108, %109 : vector<8x4x6x16xf32>
    %111 = arith.addf %102, %110 : vector<8x4x6x16xf32>
    %112 = vector.extract_strided_slice %86 {offsets = [1, 0, 0, 0, 0], sizes = [1, 2, 4, 1, 16], strides = [1, 1, 1, 1, 1]} : vector<2x2x4x1x16xf32> to vector<1x2x4x1x16xf32>
    %113 = vector.shape_cast %112 : vector<1x2x4x1x16xf32> to vector<2x4x1x16xf32>
    %114 = vector.extract_strided_slice %87 {offsets = [1, 0, 0, 0], sizes = [1, 4, 1, 16], strides = [1, 1, 1, 1]} : vector<2x4x1x16xf32> to vector<1x4x1x16xf32>
    %115 = vector.shape_cast %114 : vector<1x4x1x16xf32> to vector<4x1x16xf32>
    %116 = vector.extract_strided_slice %0 {offsets = [0, 0, 0], sizes = [8, 6, 1], strides = [1, 1, 1]} : vector<8x6x2xf32> to vector<8x6x1xf32>
    %117 = vector.shape_cast %116 : vector<8x6x1xf32> to vector<8x1x6x1xf32>
    %118 = vector.extract_strided_slice %113 {offsets = [0, 0, 0, 0], sizes = [1, 4, 1, 16], strides = [1, 1, 1, 1]} : vector<2x4x1x16xf32> to vector<1x4x1x16xf32>
    %119 = vector.shape_cast %118 : vector<1x4x1x16xf32> to vector<4x1x16xf32>
    %120 = vector.shape_cast %119 : vector<4x1x16xf32> to vector<1x4x1x16xf32>
    %121 = vector.broadcast %117 : vector<8x1x6x1xf32> to vector<8x4x6x16xf32>
    %122 = vector.broadcast %120 : vector<1x4x1x16xf32> to vector<8x4x6x16xf32>
    %123 = arith.mulf %121, %122 : vector<8x4x6x16xf32>
    %124 = vector.shape_cast %115 : vector<4x1x16xf32> to vector<1x4x1x16xf32>
    %125 = vector.broadcast %124 : vector<1x4x1x16xf32> to vector<8x4x6x16xf32>
    %126 = arith.addf %123, %125 : vector<8x4x6x16xf32>
    %127 = vector.extract_strided_slice %0 {offsets = [0, 0, 1], sizes = [8, 6, 1], strides = [1, 1, 1]} : vector<8x6x2xf32> to vector<8x6x1xf32>
    %128 = vector.shape_cast %127 : vector<8x6x1xf32> to vector<8x1x6x1xf32>
    %129 = vector.extract_strided_slice %113 {offsets = [1, 0, 0, 0], sizes = [1, 4, 1, 16], strides = [1, 1, 1, 1]} : vector<2x4x1x16xf32> to vector<1x4x1x16xf32>
    %130 = vector.shape_cast %129 : vector<1x4x1x16xf32> to vector<4x1x16xf32>
    %131 = vector.shape_cast %130 : vector<4x1x16xf32> to vector<1x4x1x16xf32>
    %132 = vector.broadcast %128 : vector<8x1x6x1xf32> to vector<8x4x6x16xf32>
    %133 = vector.broadcast %131 : vector<1x4x1x16xf32> to vector<8x4x6x16xf32>
    %134 = arith.mulf %132, %133 : vector<8x4x6x16xf32>
    %135 = arith.addf %126, %134 : vector<8x4x6x16xf32>
    %136 = vector.shape_cast %111 : vector<8x4x6x16xf32> to vector<32x6x16xf32>
    %137 = vector.shape_cast %135 : vector<8x4x6x16xf32> to vector<32x6x16xf32>
    "tpu.trace_start"() <{level = 10 : i32, message = "bnd,bmd->bnm"}> : () -> ()
    %cst_47 = arith.constant dense<0.000000e+00> : vector<32x6x6xf32>
    %138 = tpu.matmul %136, %137, %cst_47 {dimension_numbers = #tpu.dot_dimension_numbers<[2], [2], [1], [1], [0, 0, 0, 1, 1, 1], [0], [0]>} : vector<32x6x16xf32>, vector<32x6x16xf32>, vector<32x6x6xf32> -> vector<32x6x6xf32>
    "tpu.trace_stop"() : () -> ()
    %cst_48 = arith.constant 1.250000e-01 : f32
    %139 = vector.broadcast %cst_48 : f32 to vector<32x6x6xf32>
    %140 = arith.mulf %138, %139 : vector<32x6x6xf32>
    %cst_49 = arith.constant dense<0xFF800000> : vector<32x6xf32>
    %141 = vector.multi_reduction <maximumf>, %140, %cst_49 [2] : vector<32x6x6xf32> to vector<32x6xf32>
    %142 = vector.shape_cast %141 : vector<32x6xf32> to vector<32x6x1xf32>
    %143 = vector.broadcast %142 : vector<32x6x1xf32> to vector<32x6x6xf32>
    %144 = arith.subf %140, %143 : vector<32x6x6xf32>
    %145 = math.exp %144 : vector<32x6x6xf32>
    %cst_50 = arith.constant dense<0.000000e+00> : vector<32x6xf32>
    %146 = vector.multi_reduction <add>, %145, %cst_50 [2] : vector<32x6x6xf32> to vector<32x6xf32>
    %147 = vector.shape_cast %146 : vector<32x6xf32> to vector<32x6x1xf32>
    %148 = tpu.reciprocal %147 : vector<32x6x1xf32> -> vector<32x6x1xf32>
    %149 = vector.broadcast %148 : vector<32x6x1xf32> to vector<32x6x6xf32>
    %150 = arith.mulf %145, %149 : vector<32x6x6xf32>
    %151 = vector.shape_cast %150 : vector<32x6x6xf32> to vector<8x4x6x6xf32>
    %152 = vector.shape_cast %50 : vector<8x6x6xf32> to vector<8x1x6x6xf32>
    %153 = vector.broadcast %152 : vector<8x1x6x6xf32> to vector<8x4x6x6xf32>
    %154 = arith.mulf %151, %153 : vector<8x4x6x6xf32>
    %155 = math.exp %154 : vector<8x4x6x6xf32>
    %cst_51 = arith.constant dense<0.000000e+00> : vector<8x4x6xf32>
    %156 = vector.multi_reduction <add>, %155, %cst_51 [3] : vector<8x4x6x6xf32> to vector<8x4x6xf32>
    %157 = vector.shape_cast %156 : vector<8x4x6xf32> to vector<8x4x6x1xf32>
    %158 = tpu.reciprocal %157 : vector<8x4x6x1xf32> -> vector<8x4x6x1xf32>
    %159 = vector.broadcast %158 : vector<8x4x6x1xf32> to vector<8x4x6x6xf32>
    %160 = arith.mulf %155, %159 : vector<8x4x6x6xf32>
    %c0_52 = arith.constant 0 : index
    %c0_53 = arith.constant 0 : index
    %c0_54 = arith.constant 0 : index
    %c0_55 = arith.constant 0 : index
    %161 = vector.load %arg8[%c0_52, %c0_53, %c0_54, %c0_55] : memref<8x4x6x6xf32, #tpu.memory_space<vmem>>, vector<8x4x6x6xf32>
    tpu.vector_store %arg8[%c0_52, %c0_53, %c0_54, %c0_55], %160 {strides = array<i32>} : memref<8x4x6x6xf32, #tpu.memory_space<vmem>>, vector<8x4x6x6xf32>,
    %c0_56 = arith.constant 0 : index
    %c0_57 = arith.constant 0 : index
    %c0_58 = arith.constant 0 : index
    %c0_59 = arith.constant 0 : index
    %c0_60 = arith.constant 0 : index
    %162 = vector.load %arg6[%c0_56, %c0_57, %c0_58, %c0_59, %c0_60] : memref<2x3x4x1x16xf32, #tpu.memory_space<vmem>>, vector<2x3x4x1x16xf32>
    %c0_61 = arith.constant 0 : index
    %c0_62 = arith.constant 0 : index
    %c0_63 = arith.constant 0 : index
    %c0_64 = arith.constant 0 : index
    %163 = vector.load %arg7[%c0_61, %c0_62, %c0_63, %c0_64] : memref<2x4x1x16xf32, #tpu.memory_space<vmem>>, vector<2x4x1x16xf32>
    %164 = vector.extract_strided_slice %162 {offsets = [0, 0, 0, 0, 0], sizes = [1, 3, 4, 1, 16], strides = [1, 1, 1, 1, 1]} : vector<2x3x4x1x16xf32> to vector<1x3x4x1x16xf32>
    %165 = vector.shape_cast %164 : vector<1x3x4x1x16xf32> to vector<3x4x1x16xf32>
    %166 = vector.extract_strided_slice %163 {offsets = [0, 0, 0, 0], sizes = [1, 4, 1, 16], strides = [1, 1, 1, 1]} : vector<2x4x1x16xf32> to vector<1x4x1x16xf32>
    %167 = vector.shape_cast %166 : vector<1x4x1x16xf32> to vector<4x1x16xf32>
    %168 = vector.extract_strided_slice %1 {offsets = [0, 0, 0], sizes = [6, 8, 1], strides = [1, 1, 1]} : vector<6x8x3xf32> to vector<6x8x1xf32>
    %169 = vector.shape_cast %168 : vector<6x8x1xf32> to vector<6x1x8x1xf32>
    %170 = vector.extract_strided_slice %165 {offsets = [0, 0, 0, 0], sizes = [1, 4, 1, 16], strides = [1, 1, 1, 1]} : vector<3x4x1x16xf32> to vector<1x4x1x16xf32>
    %171 = vector.shape_cast %170 : vector<1x4x1x16xf32> to vector<4x1x16xf32>
    %172 = vector.shape_cast %171 : vector<4x1x16xf32> to vector<1x4x1x16xf32>
    %173 = vector.broadcast %169 : vector<6x1x8x1xf32> to vector<6x4x8x16xf32>
    %174 = vector.broadcast %172 : vector<1x4x1x16xf32> to vector<6x4x8x16xf32>
    %175 = arith.mulf %173, %174 : vector<6x4x8x16xf32>
    %176 = vector.shape_cast %167 : vector<4x1x16xf32> to vector<1x4x1x16xf32>
    %177 = vector.broadcast %176 : vector<1x4x1x16xf32> to vector<6x4x8x16xf32>
    %178 = arith.addf %175, %177 : vector<6x4x8x16xf32>
    %179 = vector.extract_strided_slice %1 {offsets = [0, 0, 1], sizes = [6, 8, 1], strides = [1, 1, 1]} : vector<6x8x3xf32> to vector<6x8x1xf32>
    %180 = vector.shape_cast %179 : vector<6x8x1xf32> to vector<6x1x8x1xf32>
    %181 = vector.extract_strided_slice %165 {offsets = [1, 0, 0, 0], sizes = [1, 4, 1, 16], strides = [1, 1, 1, 1]} : vector<3x4x1x16xf32> to vector<1x4x1x16xf32>
    %182 = vector.shape_cast %181 : vector<1x4x1x16xf32> to vector<4x1x16xf32>
    %183 = vector.shape_cast %182 : vector<4x1x16xf32> to vector<1x4x1x16xf32>
    %184 = vector.broadcast %180 : vector<6x1x8x1xf32> to vector<6x4x8x16xf32>
    %185 = vector.broadcast %183 : vector<1x4x1x16xf32> to vector<6x4x8x16xf32>
    %186 = arith.mulf %184, %185 : vector<6x4x8x16xf32>
    %187 = arith.addf %178, %186 : vector<6x4x8x16xf32>
    %188 = vector.extract_strided_slice %1 {offsets = [0, 0, 2], sizes = [6, 8, 1], strides = [1, 1, 1]} : vector<6x8x3xf32> to vector<6x8x1xf32>
    %189 = vector.shape_cast %188 : vector<6x8x1xf32> to vector<6x1x8x1xf32>
    %190 = vector.extract_strided_slice %165 {offsets = [2, 0, 0, 0], sizes = [1, 4, 1, 16], strides = [1, 1, 1, 1]} : vector<3x4x1x16xf32> to vector<1x4x1x16xf32>
    %191 = vector.shape_cast %190 : vector<1x4x1x16xf32> to vector<4x1x16xf32>
    %192 = vector.shape_cast %191 : vector<4x1x16xf32> to vector<1x4x1x16xf32>
    %193 = vector.broadcast %189 : vector<6x1x8x1xf32> to vector<6x4x8x16xf32>
    %194 = vector.broadcast %192 : vector<1x4x1x16xf32> to vector<6x4x8x16xf32>
    %195 = arith.mulf %193, %194 : vector<6x4x8x16xf32>
    %196 = arith.addf %187, %195 : vector<6x4x8x16xf32>
    %197 = vector.extract_strided_slice %162 {offsets = [1, 0, 0, 0, 0], sizes = [1, 3, 4, 1, 16], strides = [1, 1, 1, 1, 1]} : vector<2x3x4x1x16xf32> to vector<1x3x4x1x16xf32>
    %198 = vector.shape_cast %197 : vector<1x3x4x1x16xf32> to vector<3x4x1x16xf32>
    %199 = vector.extract_strided_slice %163 {offsets = [1, 0, 0, 0], sizes = [1, 4, 1, 16], strides = [1, 1, 1, 1]} : vector<2x4x1x16xf32> to vector<1x4x1x16xf32>
    %200 = vector.shape_cast %199 : vector<1x4x1x16xf32> to vector<4x1x16xf32>
    %201 = vector.extract_strided_slice %1 {offsets = [0, 0, 0], sizes = [6, 8, 1], strides = [1, 1, 1]} : vector<6x8x3xf32> to vector<6x8x1xf32>
    %202 = vector.shape_cast %201 : vector<6x8x1xf32> to vector<6x1x8x1xf32>
    %203 = vector.extract_strided_slice %198 {offsets = [0, 0, 0, 0], sizes = [1, 4, 1, 16], strides = [1, 1, 1, 1]} : vector<3x4x1x16xf32> to vector<1x4x1x16xf32>
    %204 = vector.shape_cast %203 : vector<1x4x1x16xf32> to vector<4x1x16xf32>
    %205 = vector.shape_cast %204 : vector<4x1x16xf32> to vector<1x4x1x16xf32>
    %206 = vector.broadcast %202 : vector<6x1x8x1xf32> to vector<6x4x8x16xf32>
    %207 = vector.broadcast %205 : vector<1x4x1x16xf32> to vector<6x4x8x16xf32>
    %208 = arith.mulf %206, %207 : vector<6x4x8x16xf32>
    %209 = vector.shape_cast %200 : vector<4x1x16xf32> to vector<1x4x1x16xf32>
    %210 = vector.broadcast %209 : vector<1x4x1x16xf32> to vector<6x4x8x16xf32>
    %211 = arith.addf %208, %210 : vector<6x4x8x16xf32>
    %212 = vector.extract_strided_slice %1 {offsets = [0, 0, 1], sizes = [6, 8, 1], strides = [1, 1, 1]} : vector<6x8x3xf32> to vector<6x8x1xf32>
    %213 = vector.shape_cast %212 : vector<6x8x1xf32> to vector<6x1x8x1xf32>
    %214 = vector.extract_strided_slice %198 {offsets = [1, 0, 0, 0], sizes = [1, 4, 1, 16], strides = [1, 1, 1, 1]} : vector<3x4x1x16xf32> to vector<1x4x1x16xf32>
    %215 = vector.shape_cast %214 : vector<1x4x1x16xf32> to vector<4x1x16xf32>
    %216 = vector.shape_cast %215 : vector<4x1x16xf32> to vector<1x4x1x16xf32>
    %217 = vector.broadcast %213 : vector<6x1x8x1xf32> to vector<6x4x8x16xf32>
    %218 = vector.broadcast %216 : vector<1x4x1x16xf32> to vector<6x4x8x16xf32>
    %219 = arith.mulf %217, %218 : vector<6x4x8x16xf32>
    %220 = arith.addf %211, %219 : vector<6x4x8x16xf32>
    %221 = vector.extract_strided_slice %1 {offsets = [0, 0, 2], sizes = [6, 8, 1], strides = [1, 1, 1]} : vector<6x8x3xf32> to vector<6x8x1xf32>
    %222 = vector.shape_cast %221 : vector<6x8x1xf32> to vector<6x1x8x1xf32>
    %223 = vector.extract_strided_slice %198 {offsets = [2, 0, 0, 0], sizes = [1, 4, 1, 16], strides = [1, 1, 1, 1]} : vector<3x4x1x16xf32> to vector<1x4x1x16xf32>
    %224 = vector.shape_cast %223 : vector<1x4x1x16xf32> to vector<4x1x16xf32>
    %225 = vector.shape_cast %224 : vector<4x1x16xf32> to vector<1x4x1x16xf32>
    %226 = vector.broadcast %222 : vector<6x1x8x1xf32> to vector<6x4x8x16xf32>
    %227 = vector.broadcast %225 : vector<1x4x1x16xf32> to vector<6x4x8x16xf32>
    %228 = arith.mulf %226, %227 : vector<6x4x8x16xf32>
    %229 = arith.addf %220, %228 : vector<6x4x8x16xf32>
    %230 = vector.shape_cast %196 : vector<6x4x8x16xf32> to vector<24x8x16xf32>
    %231 = vector.shape_cast %229 : vector<6x4x8x16xf32> to vector<24x8x16xf32>
    "tpu.trace_start"() <{level = 10 : i32, message = "bnd,bmd->bnm"}> : () -> ()
    %cst_65 = arith.constant dense<0.000000e+00> : vector<24x8x8xf32>
    %232 = tpu.matmul %230, %231, %cst_65 {dimension_numbers = #tpu.dot_dimension_numbers<[2], [2], [1], [1], [0, 0, 0, 1, 1, 1], [0], [0]>} : vector<24x8x16xf32>, vector<24x8x16xf32>, vector<24x8x8xf32> -> vector<24x8x8xf32>
    "tpu.trace_stop"() : () -> ()
    %cst_66 = arith.constant 1.250000e-01 : f32
    %233 = vector.broadcast %cst_66 : f32 to vector<24x8x8xf32>
    %234 = arith.mulf %232, %233 : vector<24x8x8xf32>
    %cst_67 = arith.constant dense<0xFF800000> : vector<24x8xf32>
    %235 = vector.multi_reduction <maximumf>, %234, %cst_67 [2] : vector<24x8x8xf32> to vector<24x8xf32>
    %236 = vector.shape_cast %235 : vector<24x8xf32> to vector<24x8x1xf32>
    %237 = vector.broadcast %236 : vector<24x8x1xf32> to vector<24x8x8xf32>
    %238 = arith.subf %234, %237 : vector<24x8x8xf32>
    %239 = math.exp %238 : vector<24x8x8xf32>
    %cst_68 = arith.constant dense<0.000000e+00> : vector<24x8xf32>
    %240 = vector.multi_reduction <add>, %239, %cst_68 [2] : vector<24x8x8xf32> to vector<24x8xf32>
    %241 = vector.shape_cast %240 : vector<24x8xf32> to vector<24x8x1xf32>
    %242 = tpu.reciprocal %241 : vector<24x8x1xf32> -> vector<24x8x1xf32>
    %243 = vector.broadcast %242 : vector<24x8x1xf32> to vector<24x8x8xf32>
    %244 = arith.mulf %239, %243 : vector<24x8x8xf32>
    %245 = vector.shape_cast %244 : vector<24x8x8xf32> to vector<6x4x8x8xf32>
    %246 = vector.shape_cast %85 : vector<6x8x8xf32> to vector<6x1x8x8xf32>
    %247 = vector.broadcast %246 : vector<6x1x8x8xf32> to vector<6x4x8x8xf32>
    %248 = arith.mulf %245, %247 : vector<6x4x8x8xf32>
    %249 = math.exp %248 : vector<6x4x8x8xf32>
    %cst_69 = arith.constant dense<0.000000e+00> : vector<6x4x8xf32>
    %250 = vector.multi_reduction <add>, %249, %cst_69 [3] : vector<6x4x8x8xf32> to vector<6x4x8xf32>
    %251 = vector.shape_cast %250 : vector<6x4x8xf32> to vector<6x4x8x1xf32>
    %252 = tpu.reciprocal %251 : vector<6x4x8x1xf32> -> vector<6x4x8x1xf32>
    %253 = vector.broadcast %252 : vector<6x4x8x1xf32> to vector<6x4x8x8xf32>
    %254 = arith.mulf %249, %253 : vector<6x4x8x8xf32>
    %c0_70 = arith.constant 0 : index
    %c0_71 = arith.constant 0 : index
    %c0_72 = arith.constant 0 : index
    %c0_73 = arith.constant 0 : index
    %255 = vector.load %arg9[%c0_70, %c0_71, %c0_72, %c0_73] : memref<6x4x8x8xf32, #tpu.memory_space<vmem>>, vector<6x4x8x8xf32>
    tpu.vector_store %arg9[%c0_70, %c0_71, %c0_72, %c0_73], %254 {strides = array<i32>} : memref<6x4x8x8xf32, #tpu.memory_space<vmem>>, vector<6x4x8x8xf32>,
    return
  }
}

</mosaic_0001>

<llo_original>
// kernel: sparse_weighted_adjacency.1
$region0: #{sparse_weighted_adjacency.1}
  #allocation0 [shape = 'u32[]', space=smem, size = 0x4, offset = 0x4, fixed_abs, tag = 'smem constant byte address 0x4 - core index']
  #allocation1 [shape = 'u32[144,128]{1,0:T(1,128)}', space=vmem, size = 0x12000, scoped, tag = 'internal scratch']
  %s0 = inlined_call_operand.vmem [shape: f32[8,6,2], index: 0, kind: input, shape index: {}]
  %s1 = inlined_call_operand.vmem [shape: f32[6,8,3], index: 1, kind: input, shape index: {}]
  %s2 = inlined_call_operand.vmem [shape: f32[8,6,2], index: 2, kind: input, shape index: {}]
  %s3 = inlined_call_operand.vmem [shape: f32[6,8,8], index: 3, kind: input, shape index: {}]
  %s4 = inlined_call_operand.vmem [shape: f32[2,2,4,1,16], index: 4, kind: input, shape index: {}]
  %s5 = inlined_call_operand.vmem [shape: f32[2,4,1,16], index: 5, kind: input, shape index: {}]
  %s6 = inlined_call_operand.vmem [shape: f32[2,3,4,1,16], index: 6, kind: input, shape index: {}]
  %s7 = inlined_call_operand.vmem [shape: f32[2,4,1,16], index: 7, kind: input, shape index: {}]
  %s8 = inlined_call_operand.vmem [shape: f32[8,4,6,6], index: 8, kind: output, shape index: {0}]
  %s9 = inlined_call_operand.hbm [shape: f32[6,4,8,8], index: 9, kind: output, shape index: {1}]
  %10 = xla_tuple %s8, %s9
  %s11 = sld [smem:[#allocation0]]
  $region50: #{sparse_weighted_adjacency.1} parent=0
    _
  %s13 = ssub.s32 1, %s11
  %s14 = scalar_select 0, %s13, %s11
  $region1: #{sparse_weighted_adjacency.1} parent=0
    #allocation2 [shape = 'u8[98304]{0}', space=vmem, size = 0x18000, scoped, tag = 'output window, operand 1, single buffered']
    #allocation3 [shape = 's32[1]{0}', space=sflag, size = 0x4, scoped, tag = 'scoped memory for sparse_weighted_adjacency.1']
    %15 = vsyncpa [#allocation3], 0
    // Predicated region
    $region2: #{sparse_weighted_adjacency.1} parent=1 // pred_check
      _
    $region3: #{sparse_weighted_adjacency.1} parent=1 // pred_check_branch
      %17 = sbr.rel (0) target = $region5
    $region4: #{sparse_weighted_adjacency.1} parent=1 // pred_region
      _
    $region5: #{sparse_weighted_adjacency.1} parent=1 // pred_fallthru
      _
    // Predicated region
    $region6: #{sparse_weighted_adjacency.1} parent=1 // pred_check
      _
    $region7: #{sparse_weighted_adjacency.1} parent=1 // pred_check_branch
      %19 = sbr.rel (0) target = $region9
    $region8: #{sparse_weighted_adjacency.1} parent=1 // pred_region
      _
    $region9: #{sparse_weighted_adjacency.1} parent=1 // pred_fallthru
      _
    // Predicated region
    $region10: #{sparse_weighted_adjacency.1} parent=1 // pred_check
      _
    $region11: #{sparse_weighted_adjacency.1} parent=1 // pred_check_branch
      %21 = sbr.rel (0) target = $region13
    $region12: #{sparse_weighted_adjacency.1} parent=1 // pred_region
      _
    $region13: #{sparse_weighted_adjacency.1} parent=1 // pred_fallthru
      _
    // Predicated region
    $region14: #{sparse_weighted_adjacency.1} parent=1 // pred_check
      _
    $region15: #{sparse_weighted_adjacency.1} parent=1 // pred_check_branch
      %23 = sbr.rel (0) target = $region17
    $region16: #{sparse_weighted_adjacency.1} parent=1 // pred_region
      _
    $region17: #{sparse_weighted_adjacency.1} parent=1 // pred_fallthru
      _
    // Predicated region
    $region18: #{sparse_weighted_adjacency.1} parent=1 // pred_check
      _
    $region19: #{sparse_weighted_adjacency.1} parent=1 // pred_check_branch
      %25 = sbr.rel (0) target = $region21
    $region20: #{sparse_weighted_adjacency.1} parent=1 // pred_region
      _
    $region21: #{sparse_weighted_adjacency.1} parent=1 // pred_fallthru
      _
    // Predicated region
    $region22: #{sparse_weighted_adjacency.1} parent=1 // pred_check
      _
    $region23: #{sparse_weighted_adjacency.1} parent=1 // pred_check_branch
      %27 = sbr.rel (0) target = $region25
    $region24: #{sparse_weighted_adjacency.1} parent=1 // pred_region
      _
    $region25: #{sparse_weighted_adjacency.1} parent=1 // pred_fallthru
      _
    // Predicated region
    $region26: #{sparse_weighted_adjacency.1} parent=1 // pred_check
      _
    $region27: #{sparse_weighted_adjacency.1} parent=1 // pred_check_branch
      %29 = sbr.rel (0) target = $region29
    $region28: #{sparse_weighted_adjacency.1} parent=1 // pred_region
      _
    $region29: #{sparse_weighted_adjacency.1} parent=1 // pred_fallthru
      _
    // Predicated region
    $region30: #{sparse_weighted_adjacency.1} parent=1 // pred_check
      _
    $region31: #{sparse_weighted_adjacency.1} parent=1 // pred_check_branch
      %31 = sbr.rel (0) target = $region33
    $region32: #{sparse_weighted_adjacency.1} parent=1 // pred_region
      _
    $region33: #{sparse_weighted_adjacency.1} parent=1 // pred_fallthru
      _
    %v32 = vld [vmem:[%s0] sm:$0x3f]
    %v33 = vld [vmem:[%s0 + $0x8] sm:$0x3f]
    %v34 = vld [vmem:[%s0 + $0x10] sm:$0x3f]
    %v35 = vld [vmem:[%s0 + $0x18] sm:$0x3f]
    %v36 = vld [vmem:[%s0 + $0x20] sm:$0x3f]
    %v37 = vld [vmem:[%s0 + $0x28] sm:$0x3f]
    %v38 = vld [vmem:[%s0 + $0x30] sm:$0x3f]
    %v39 = vld [vmem:[%s0 + $0x38] sm:$0x3f]
    %v40 = vld [vmem:[%s1] sm:$0xff]
    %v41 = vld [vmem:[%s1 + $0x8] sm:$0xff]
    %v42 = vld [vmem:[%s1 + $0x10] sm:$0xff]
    %v43 = vld [vmem:[%s1 + $0x18] sm:$0xff]
    %v44 = vld [vmem:[%s1 + $0x20] sm:$0xff]
    %v45 = vld [vmem:[%s1 + $0x28] sm:$0xff]
    %v46 = vld [vmem:[%s2] sm:$0x3f]
    %v47 = vld [vmem:[%s2 + $0x8] sm:$0x3f]
    %v48 = vld [vmem:[%s2 + $0x10] sm:$0x3f]
    %v49 = vld [vmem:[%s2 + $0x18] sm:$0x3f]
    %v50 = vld [vmem:[%s2 + $0x20] sm:$0x3f]
    %v51 = vld [vmem:[%s2 + $0x28] sm:$0x3f]
    %v52 = vld [vmem:[%s2 + $0x30] sm:$0x3f]
    %v53 = vld [vmem:[%s2 + $0x38] sm:$0x3f]
    %vm54 = vcmask 15360
    %v56 = vsel %vm54, %v46, 0
    %58 = vmatprep.subr.mxu0 0.0
    %59 = vmatpush1.xpose.msra.mxu0 %v56
    %60 = vmatprep.subr.mxu0 0.0
    %61 = vmatpush1.xpose.msra.mxu0 0.0
    %62 = vmatprep.subr.mxu0 0.0
    %63 = vmatpush1.xpose.msra.mxu0 0.0
    %64 = vmatprep.subr.mxu0 0.0
    %65 = vmatpush1.xpose.msra.mxu0 0.0
    %66 = vmatprep.subr.mxu0 0.0
    %67 = vmatpush1.xpose.msra.mxu0 0.0
    %68 = vmatprep.subr.mxu0 0.0
    %69 = vmatpush1.xpose.msra.mxu0 0.0
    %70 = vmatprep.subr.mxu0 0.0
    %71 = vmatpush1.xpose.msra.mxu0 0.0
    %72 = vmatprep.subr.mxu0 0.0
    %73 = vmatpush1.xpose.msra.mxu0 0.0
    %74 = vmatprep.subr.mxu0 0.0
    %75 = vmatpush1.xpose.msra.mxu0 0.0
    %76 = vmatprep.subr.mxu0 0.0
    %77 = vmatpush1.xpose.msra.mxu0 0.0
    %78 = vmatprep.subr.mxu0 0.0
    %79 = vmatpush1.xpose.msra.mxu0 0.0
    %80 = vmatprep.subr.mxu0 0.0
    %81 = vmatpush1.xpose.msra.mxu0 0.0
    %82 = vmatprep.subr.mxu0 0.0
    %83 = vmatpush1.xpose.msra.mxu0 0.0
    %84 = vmatprep.subr.mxu0 0.0
    %85 = vmatpush1.xpose.msra.mxu0 0.0
    %86 = vmatprep.subr.mxu0 0.0
    %87 = vmatpush1.xpose.msra.mxu0 0.0
    %88 = vmatprep.subr.mxu0 0.0
    %89 = vmatpush1.xpose.msra.mxu0 0.0
    %90 = vmatprep.subr.mxu0 0.0
    %91 = vmatpush1.xpose.msra.mxu0 0.0
    %92 = vmatprep.subr.mxu0 0.0
    %93 = vmatpush1.xpose.msra.mxu0 0.0
    %94 = vmatprep.subr.mxu0 0.0
    %95 = vmatpush1.xpose.msra.mxu0 0.0
    %96 = vmatprep.subr.mxu0 0.0
    %97 = vmatpush1.xpose.msra.mxu0 0.0
    %98 = vmatprep.subr.mxu0 0.0
    %99 = vmatpush1.xpose.msra.mxu0 0.0
    %100 = vmatprep.subr.mxu0 0.0
    %101 = vmatpush1.xpose.msra.mxu0 0.0
    %102 = vmatprep.subr.mxu0 0.0
    %103 = vmatpush1.xpose.msra.mxu0 0.0
    %104 = vmatprep.subr.mxu0 0.0
    %105 = vmatpush1.xpose.msra.mxu0 0.0
    %106 = vmatprep.subr.mxu0 0.0
    %107 = vmatpush1.xpose.msra.mxu0 0.0
    %108 = vmatprep.subr.mxu0 0.0
    %109 = vmatpush1.xpose.msra.mxu0 0.0
    %110 = vmatprep.subr.mxu0 0.0
    %111 = vmatpush1.xpose.msra.mxu0 0.0
    %112 = vmatprep.subr.mxu0 0.0
    %113 = vmatpush1.xpose.msra.mxu0 0.0
    %114 = vmatprep.subr.mxu0 0.0
    %115 = vmatpush1.xpose.msra.mxu0 0.0
    %116 = vmatprep.subr.mxu0 0.0
    %117 = vmatpush1.xpose.msra.mxu0 0.0
    %118 = vmatprep.subr.mxu0 0.0
    %119 = vmatpush1.xpose.msra.mxu0 0.0
    %120 = vmatprep.subr.mxu0 0.0
    %121 = vmatpush1.xpose.msra.mxu0 0.0
    %122 = vmatprep.mubr.f32.mxu0 0.0
    %123 = vmatmul.mubr.f32.gmra.mrb[0].mxu0 %v56
    %v124 = vpop.f32.mrb[0].mxu0
    %v125 = vadd.f32 0.0, %v124
    %v126 = vpop.f32.mrb[0].mxu0
    %127 = vdwg.mxu0
    %v129 = vsel %vm54, %v47, 0
    %131 = vmatprep.subr.mxu0 0.0
    %132 = vmatpush1.xpose.msra.mxu0 %v129
    %133 = vmatprep.subr.mxu0 0.0
    %134 = vmatpush1.xpose.msra.mxu0 0.0
    %135 = vmatprep.subr.mxu0 0.0
    %136 = vmatpush1.xpose.msra.mxu0 0.0
    %137 = vmatprep.subr.mxu0 0.0
    %138 = vmatpush1.xpose.msra.mxu0 0.0
    %139 = vmatprep.subr.mxu0 0.0
    %140 = vmatpush1.xpose.msra.mxu0 0.0
    %141 = vmatprep.subr.mxu0 0.0
    %142 = vmatpush1.xpose.msra.mxu0 0.0
    %143 = vmatprep.subr.mxu0 0.0
    %144 = vmatpush1.xpose.msra.mxu0 0.0
    %145 = vmatprep.subr.mxu0 0.0
    %146 = vmatpush1.xpose.msra.mxu0 0.0
    %147 = vmatprep.subr.mxu0 0.0
    %148 = vmatpush1.xpose.msra.mxu0 0.0
    %149 = vmatprep.subr.mxu0 0.0
    %150 = vmatpush1.xpose.msra.mxu0 0.0
    %151 = vmatprep.subr.mxu0 0.0
    %152 = vmatpush1.xpose.msra.mxu0 0.0
    %153 = vmatprep.subr.mxu0 0.0
    %154 = vmatpush1.xpose.msra.mxu0 0.0
    %155 = vmatprep.subr.mxu0 0.0
    %156 = vmatpush1.xpose.msra.mxu0 0.0
    %157 = vmatprep.subr.mxu0 0.0
    %158 = vmatpush1.xpose.msra.mxu0 0.0
    %159 = vmatprep.subr.mxu0 0.0
    %160 = vmatpush1.xpose.msra.mxu0 0.0
    %161 = vmatprep.subr.mxu0 0.0
    %162 = vmatpush1.xpose.msra.mxu0 0.0
    %163 = vmatprep.subr.mxu0 0.0
    %164 = vmatpush1.xpose.msra.mxu0 0.0
    %165 = vmatprep.subr.mxu0 0.0
    %166 = vmatpush1.xpose.msra.mxu0 0.0
    %167 = vmatprep.subr.mxu0 0.0
    %168 = vmatpush1.xpose.msra.mxu0 0.0
    %169 = vmatprep.subr.mxu0 0.0
    %170 = vmatpush1.xpose.msra.mxu0 0.0
    %171 = vmatprep.subr.mxu0 0.0
    %172 = vmatpush1.xpose.msra.mxu0 0.0
    %173 = vmatprep.subr.mxu0 0.0
    %174 = vmatpush1.xpose.msra.mxu0 0.0
    %175 = vmatprep.subr.mxu0 0.0
    %176 = vmatpush1.xpose.msra.mxu0 0.0
    %177 = vmatprep.subr.mxu0 0.0
    %178 = vmatpush1.xpose.msra.mxu0 0.0
    %179 = vmatprep.subr.mxu0 0.0
    %180 = vmatpush1.xpose.msra.mxu0 0.0
    %181 = vmatprep.subr.mxu0 0.0
    %182 = vmatpush1.xpose.msra.mxu0 0.0
    %183 = vmatprep.subr.mxu0 0.0
    %184 = vmatpush1.xpose.msra.mxu0 0.0
    %185 = vmatprep.subr.mxu0 0.0
    %186 = vmatpush1.xpose.msra.mxu0 0.0
    %187 = vmatprep.subr.mxu0 0.0
    %188 = vmatpush1.xpose.msra.mxu0 0.0
    %189 = vmatprep.subr.mxu0 0.0
    %190 = vmatpush1.xpose.msra.mxu0 0.0
    %191 = vmatprep.subr.mxu0 0.0
    %192 = vmatpush1.xpose.msra.mxu0 0.0
    %193 = vmatprep.subr.mxu0 0.0
    %194 = vmatpush1.xpose.msra.mxu0 0.0
    %195 = vmatprep.mubr.f32.mxu0 0.0
    %196 = vmatmul.mubr.f32.gmra.mrb[0].mxu0 %v129
    %v197 = vpop.f32.mrb[0].mxu0
    %v198 = vadd.f32 0.0, %v197
    %v199 = vpop.f32.mrb[0].mxu0
    %200 = vdwg.mxu0
    %v202 = vsel %vm54, %v48, 0
    %204 = vmatprep.subr.mxu0 0.0
    %205 = vmatpush1.xpose.msra.mxu0 %v202
    %206 = vmatprep.subr.mxu0 0.0
    %207 = vmatpush1.xpose.msra.mxu0 0.0
    %208 = vmatprep.subr.mxu0 0.0
    %209 = vmatpush1.xpose.msra.mxu0 0.0
    %210 = vmatprep.subr.mxu0 0.0
    %211 = vmatpush1.xpose.msra.mxu0 0.0
    %212 = vmatprep.subr.mxu0 0.0
    %213 = vmatpush1.xpose.msra.mxu0 0.0
    %214 = vmatprep.subr.mxu0 0.0
    %215 = vmatpush1.xpose.msra.mxu0 0.0
    %216 = vmatprep.subr.mxu0 0.0
    %217 = vmatpush1.xpose.msra.mxu0 0.0
    %218 = vmatprep.subr.mxu0 0.0
    %219 = vmatpush1.xpose.msra.mxu0 0.0
    %220 = vmatprep.subr.mxu0 0.0
    %221 = vmatpush1.xpose.msra.mxu0 0.0
    %222 = vmatprep.subr.mxu0 0.0
    %223 = vmatpush1.xpose.msra.mxu0 0.0
    %224 = vmatprep.subr.mxu0 0.0
    %225 = vmatpush1.xpose.msra.mxu0 0.0
    %226 = vmatprep.subr.mxu0 0.0
    %227 = vmatpush1.xpose.msra.mxu0 0.0
    %228 = vmatprep.subr.mxu0 0.0
    %229 = vmatpush1.xpose.msra.mxu0 0.0
    %230 = vmatprep.subr.mxu0 0.0
    %231 = vmatpush1.xpose.msra.mxu0 0.0
    %232 = vmatprep.subr.mxu0 0.0
    %233 = vmatpush1.xpose.msra.mxu0 0.0
    %234 = vmatprep.subr.mxu0 0.0
    %235 = vmatpush1.xpose.msra.mxu0 0.0
    %236 = vmatprep.subr.mxu0 0.0
    %237 = vmatpush1.xpose.msra.mxu0 0.0
    %238 = vmatprep.subr.mxu0 0.0
    %239 = vmatpush1.xpose.msra.mxu0 0.0
    %240 = vmatprep.subr.mxu0 0.0
    %241 = vmatpush1.xpose.msra.mxu0 0.0
    %242 = vmatprep.subr.mxu0 0.0
    %243 = vmatpush1.xpose.msra.mxu0 0.0
    %244 = vmatprep.subr.mxu0 0.0
    %245 = vmatpush1.xpose.msra.mxu0 0.0
    %246 = vmatprep.subr.mxu0 0.0
    %247 = vmatpush1.xpose.msra.mxu0 0.0
    %248 = vmatprep.subr.mxu0 0.0
    %249 = vmatpush1.xpose.msra.mxu0 0.0
    %250 = vmatprep.subr.mxu0 0.0
    %251 = vmatpush1.xpose.msra.mxu0 0.0
    %252 = vmatprep.subr.mxu0 0.0
    %253 = vmatpush1.xpose.msra.mxu0 0.0
    %254 = vmatprep.subr.mxu0 0.0
    %255 = vmatpush1.xpose.msra.mxu0 0.0
    %256 = vmatprep.subr.mxu0 0.0
    %257 = vmatpush1.xpose.msra.mxu0 0.0
    %258 = vmatprep.subr.mxu0 0.0
    %259 = vmatpush1.xpose.msra.mxu0 0.0
    %260 = vmatprep.subr.mxu0 0.0
    %261 = vmatpush1.xpose.msra.mxu0 0.0
    %262 = vmatprep.subr.mxu0 0.0
    %263 = vmatpush1.xpose.msra.mxu0 0.0
    %264 = vmatprep.subr.mxu0 0.0
    %265 = vmatpush1.xpose.msra.mxu0 0.0
    %266 = vmatprep.subr.mxu0 0.0
    %267 = vmatpush1.xpose.msra.mxu0 0.0
    %268 = vmatprep.mubr.f32.mxu0 0.0
    %269 = vmatmul.mubr.f32.gmra.mrb[0].mxu0 %v202
    %v270 = vpop.f32.mrb[0].mxu0
    %v271 = vadd.f32 0.0, %v270
    %v272 = vpop.f32.mrb[0].mxu0
    %273 = vdwg.mxu0
    %v275 = vsel %vm54, %v49, 0
    %277 = vmatprep.subr.mxu0 0.0
    %278 = vmatpush1.xpose.msra.mxu0 %v275
    %279 = vmatprep.subr.mxu0 0.0
    %280 = vmatpush1.xpose.msra.mxu0 0.0
    %281 = vmatprep.subr.mxu0 0.0
    %282 = vmatpush1.xpose.msra.mxu0 0.0
    %283 = vmatprep.subr.mxu0 0.0
    %284 = vmatpush1.xpose.msra.mxu0 0.0
    %285 = vmatprep.subr.mxu0 0.0
    %286 = vmatpush1.xpose.msra.mxu0 0.0
    %287 = vmatprep.subr.mxu0 0.0
    %288 = vmatpush1.xpose.msra.mxu0 0.0
    %289 = vmatprep.subr.mxu0 0.0
    %290 = vmatpush1.xpose.msra.mxu0 0.0
    %291 = vmatprep.subr.mxu0 0.0
    %292 = vmatpush1.xpose.msra.mxu0 0.0
    %293 = vmatprep.subr.mxu0 0.0
    %294 = vmatpush1.xpose.msra.mxu0 0.0
    %295 = vmatprep.subr.mxu0 0.0
    %296 = vmatpush1.xpose.msra.mxu0 0.0
    %297 = vmatprep.subr.mxu0 0.0
    %298 = vmatpush1.xpose.msra.mxu0 0.0
    %299 = vmatprep.subr.mxu0 0.0
    %300 = vmatpush1.xpose.msra.mxu0 0.0
    %301 = vmatprep.subr.mxu0 0.0
    %302 = vmatpush1.xpose.msra.mxu0 0.0
    %303 = vmatprep.subr.mxu0 0.0
    %304 = vmatpush1.xpose.msra.mxu0 0.0
    %305 = vmatprep.subr.mxu0 0.0
    %306 = vmatpush1.xpose.msra.mxu0 0.0
    %307 = vmatprep.subr.mxu0 0.0
    %308 = vmatpush1.xpose.msra.mxu0 0.0
    %309 = vmatprep.subr.mxu0 0.0
    %310 = vmatpush1.xpose.msra.mxu0 0.0
    %311 = vmatprep.subr.mxu0 0.0
    %312 = vmatpush1.xpose.msra.mxu0 0.0
    %313 = vmatprep.subr.mxu0 0.0
    %314 = vmatpush1.xpose.msra.mxu0 0.0
    %315 = vmatprep.subr.mxu0 0.0
    %316 = vmatpush1.xpose.msra.mxu0 0.0
    %317 = vmatprep.subr.mxu0 0.0
    %318 = vmatpush1.xpose.msra.mxu0 0.0
    %319 = vmatprep.subr.mxu0 0.0
    %320 = vmatpush1.xpose.msra.mxu0 0.0
    %321 = vmatprep.subr.mxu0 0.0
    %322 = vmatpush1.xpose.msra.mxu0 0.0
    %323 = vmatprep.subr.mxu0 0.0
    %324 = vmatpush1.xpose.msra.mxu0 0.0
    %325 = vmatprep.subr.mxu0 0.0
    %326 = vmatpush1.xpose.msra.mxu0 0.0
    %327 = vmatprep.subr.mxu0 0.0
    %328 = vmatpush1.xpose.msra.mxu0 0.0
    %329 = vmatprep.subr.mxu0 0.0
    %330 = vmatpush1.xpose.msra.mxu0 0.0
    %331 = vmatprep.subr.mxu0 0.0
    %332 = vmatpush1.xpose.msra.mxu0 0.0
    %333 = vmatprep.subr.mxu0 0.0
    %334 = vmatpush1.xpose.msra.mxu0 0.0
    %335 = vmatprep.subr.mxu0 0.0
    %336 = vmatpush1.xpose.msra.mxu0 0.0
    %337 = vmatprep.subr.mxu0 0.0
    %338 = vmatpush1.xpose.msra.mxu0 0.0
    %339 = vmatprep.subr.mxu0 0.0
    %340 = vmatpush1.xpose.msra.mxu0 0.0
    %341 = vmatprep.mubr.f32.mxu0 0.0
    %342 = vmatmul.mubr.f32.gmra.mrb[0].mxu0 %v275
    %v343 = vpop.f32.mrb[0].mxu0
    %v344 = vadd.f32 0.0, %v343
    %v345 = vpop.f32.mrb[0].mxu0
    %346 = vdwg.mxu0
    %v348 = vsel %vm54, %v50, 0
    %350 = vmatprep.subr.mxu0 0.0
    %351 = vmatpush1.xpose.msra.mxu0 %v348
    %352 = vmatprep.subr.mxu0 0.0
    %353 = vmatpush1.xpose.msra.mxu0 0.0
    %354 = vmatprep.subr.mxu0 0.0
    %355 = vmatpush1.xpose.msra.mxu0 0.0
    %356 = vmatprep.subr.mxu0 0.0
    %357 = vmatpush1.xpose.msra.mxu0 0.0
    %358 = vmatprep.subr.mxu0 0.0
    %359 = vmatpush1.xpose.msra.mxu0 0.0
    %360 = vmatprep.subr.mxu0 0.0
    %361 = vmatpush1.xpose.msra.mxu0 0.0
    %362 = vmatprep.subr.mxu0 0.0
    %363 = vmatpush1.xpose.msra.mxu0 0.0
    %364 = vmatprep.subr.mxu0 0.0
    %365 = vmatpush1.xpose.msra.mxu0 0.0
    %366 = vmatprep.subr.mxu0 0.0
    %367 = vmatpush1.xpose.msra.mxu0 0.0
    %368 = vmatprep.subr.mxu0 0.0
    %369 = vmatpush1.xpose.msra.mxu0 0.0
    %370 = vmatprep.subr.mxu0 0.0
    %371 = vmatpush1.xpose.msra.mxu0 0.0
    %372 = vmatprep.subr.mxu0 0.0
    %373 = vmatpush1.xpose.msra.mxu0 0.0
    %374 = vmatprep.subr.mxu0 0.0
    %375 = vmatpush1.xpose.msra.mxu0 0.0
    %376 = vmatprep.subr.mxu0 0.0
    %377 = vmatpush1.xpose.msra.mxu0 0.0
    %378 = vmatprep.subr.mxu0 0.0
    %379 = vmatpush1.xpose.msra.mxu0 0.0
    %380 = vmatprep.subr.mxu0 0.0
    %381 = vmatpush1.xpose.msra.mxu0 0.0
    %382 = vmatprep.subr.mxu0 0.0
    %383 = vmatpush1.xpose.msra.mxu0 0.0
    %384 = vmatprep.subr.mxu0 0.0
    %385 = vmatpush1.xpose.msra.mxu0 0.0
    %386 = vmatprep.subr.mxu0 0.0
    %387 = vmatpush1.xpose.msra.mxu0 0.0
    %388 = vmatprep.subr.mxu0 0.0
    %389 = vmatpush1.xpose.msra.mxu0 0.0
    %390 = vmatprep.subr.mxu0 0.0
    %391 = vmatpush1.xpose.msra.mxu0 0.0
    %392 = vmatprep.subr.mxu0 0.0
    %393 = vmatpush1.xpose.msra.mxu0 0.0
    %394 = vmatprep.subr.mxu0 0.0
    %395 = vmatpush1.xpose.msra.mxu0 0.0
    %396 = vmatprep.subr.mxu0 0.0
    %397 = vmatpush1.xpose.msra.mxu0 0.0
    %398 = vmatprep.subr.mxu0 0.0
    %399 = vmatpush1.xpose.msra.mxu0 0.0
    %400 = vmatprep.subr.mxu0 0.0
    %401 = vmatpush1.xpose.msra.mxu0 0.0
    %402 = vmatprep.subr.mxu0 0.0
    %403 = vmatpush1.xpose.msra.mxu0 0.0
    %404 = vmatprep.subr.mxu0 0.0
    %405 = vmatpush1.xpose.msra.mxu0 0.0
    %406 = vmatprep.subr.mxu0 0.0
    %407 = vmatpush1.xpose.msra.mxu0 0.0
    %408 = vmatprep.subr.mxu0 0.0
    %409 = vmatpush1.xpose.msra.mxu0 0.0
    %410 = vmatprep.subr.mxu0 0.0
    %411 = vmatpush1.xpose.msra.mxu0 0.0
    %412 = vmatprep.subr.mxu0 0.0
    %413 = vmatpush1.xpose.msra.mxu0 0.0
    %414 = vmatprep.mubr.f32.mxu0 0.0
    %415 = vmatmul.mubr.f32.gmra.mrb[0].mxu0 %v348
    %v416 = vpop.f32.mrb[0].mxu0
    %v417 = vadd.f32 0.0, %v416
    %v418 = vpop.f32.mrb[0].mxu0
    %419 = vdwg.mxu0
    %v421 = vsel %vm54, %v51, 0
    %423 = vmatprep.subr.mxu0 0.0
    %424 = vmatpush1.xpose.msra.mxu0 %v421
    %425 = vmatprep.subr.mxu0 0.0
    %426 = vmatpush1.xpose.msra.mxu0 0.0
    %427 = vmatprep.subr.mxu0 0.0
    %428 = vmatpush1.xpose.msra.mxu0 0.0
    %429 = vmatprep.subr.mxu0 0.0
    %430 = vmatpush1.xpose.msra.mxu0 0.0
    %431 = vmatprep.subr.mxu0 0.0
    %432 = vmatpush1.xpose.msra.mxu0 0.0
    %433 = vmatprep.subr.mxu0 0.0
    %434 = vmatpush1.xpose.msra.mxu0 0.0
    %435 = vmatprep.subr.mxu0 0.0
    %436 = vmatpush1.xpose.msra.mxu0 0.0
    %437 = vmatprep.subr.mxu0 0.0
    %438 = vmatpush1.xpose.msra.mxu0 0.0
    %439 = vmatprep.subr.mxu0 0.0
    %440 = vmatpush1.xpose.msra.mxu0 0.0
    %441 = vmatprep.subr.mxu0 0.0
    %442 = vmatpush1.xpose.msra.mxu0 0.0
    %443 = vmatprep.subr.mxu0 0.0
    %444 = vmatpush1.xpose.msra.mxu0 0.0
    %445 = vmatprep.subr.mxu0 0.0
    %446 = vmatpush1.xpose.msra.mxu0 0.0
    %447 = vmatprep.subr.mxu0 0.0
    %448 = vmatpush1.xpose.msra.mxu0 0.0
    %449 = vmatprep.subr.mxu0 0.0
    %450 = vmatpush1.xpose.msra.mxu0 0.0
    %451 = vmatprep.subr.mxu0 0.0
    %452 = vmatpush1.xpose.msra.mxu0 0.0
    %453 = vmatprep.subr.mxu0 0.0
    %454 = vmatpush1.xpose.msra.mxu0 0.0
    %455 = vmatprep.subr.mxu0 0.0
    %456 = vmatpush1.xpose.msra.mxu0 0.0
    %457 = vmatprep.subr.mxu0 0.0
    %458 = vmatpush1.xpose.msra.mxu0 0.0
    %459 = vmatprep.subr.mxu0 0.0
    %460 = vmatpush1.xpose.msra.mxu0 0.0
    %461 = vmatprep.subr.mxu0 0.0
    %462 = vmatpush1.xpose.msra.mxu0 0.0
    %463 = vmatprep.subr.mxu0 0.0
    %464 = vmatpush1.xpose.msra.mxu0 0.0
    %465 = vmatprep.subr.mxu0 0.0
    %466 = vmatpush1.xpose.msra.mxu0 0.0
    %467 = vmatprep.subr.mxu0 0.0
    %468 = vmatpush1.xpose.msra.mxu0 0.0
    %469 = vmatprep.subr.mxu0 0.0
    %470 = vmatpush1.xpose.msra.mxu0 0.0
    %471 = vmatprep.subr.mxu0 0.0
    %472 = vmatpush1.xpose.msra.mxu0 0.0
    %473 = vmatprep.subr.mxu0 0.0
    %474 = vmatpush1.xpose.msra.mxu0 0.0
    %475 = vmatprep.subr.mxu0 0.0
    %476 = vmatpush1.xpose.msra.mxu0 0.0
    %477 = vmatprep.subr.mxu0 0.0
    %478 = vmatpush1.xpose.msra.mxu0 0.0
    %479 = vmatprep.subr.mxu0 0.0
    %480 = vmatpush1.xpose.msra.mxu0 0.0
    %481 = vmatprep.subr.mxu0 0.0
    %482 = vmatpush1.xpose.msra.mxu0 0.0
    %483 = vmatprep.subr.mxu0 0.0
    %484 = vmatpush1.xpose.msra.mxu0 0.0
    %485 = vmatprep.subr.mxu0 0.0
    %486 = vmatpush1.xpose.msra.mxu0 0.0
    %487 = vmatprep.mubr.f32.mxu0 0.0
    %488 = vmatmul.mubr.f32.gmra.mrb[0].mxu0 %v421
    %v489 = vpop.f32.mrb[0].mxu0
    %v490 = vadd.f32 0.0, %v489
    %v491 = vpop.f32.mrb[0].mxu0
    %492 = vdwg.mxu0
    %v494 = vsel %vm54, %v52, 0
    %496 = vmatprep.subr.mxu0 0.0
    %497 = vmatpush1.xpose.msra.mxu0 %v494
    %498 = vmatprep.subr.mxu0 0.0
    %499 = vmatpush1.xpose.msra.mxu0 0.0
    %500 = vmatprep.subr.mxu0 0.0
    %501 = vmatpush1.xpose.msra.mxu0 0.0
    %502 = vmatprep.subr.mxu0 0.0
    %503 = vmatpush1.xpose.msra.mxu0 0.0
    %504 = vmatprep.subr.mxu0 0.0
    %505 = vmatpush1.xpose.msra.mxu0 0.0
    %506 = vmatprep.subr.mxu0 0.0
    %507 = vmatpush1.xpose.msra.mxu0 0.0
    %508 = vmatprep.subr.mxu0 0.0
    %509 = vmatpush1.xpose.msra.mxu0 0.0
    %510 = vmatprep.subr.mxu0 0.0
    %511 = vmatpush1.xpose.msra.mxu0 0.0
    %512 = vmatprep.subr.mxu0 0.0
    %513 = vmatpush1.xpose.msra.mxu0 0.0
    %514 = vmatprep.subr.mxu0 0.0
    %515 = vmatpush1.xpose.msra.mxu0 0.0
    %516 = vmatprep.subr.mxu0 0.0
    %517 = vmatpush1.xpose.msra.mxu0 0.0
    %518 = vmatprep.subr.mxu0 0.0
    %519 = vmatpush1.xpose.msra.mxu0 0.0
    %520 = vmatprep.subr.mxu0 0.0
    %521 = vmatpush1.xpose.msra.mxu0 0.0
    %522 = vmatprep.subr.mxu0 0.0
    %523 = vmatpush1.xpose.msra.mxu0 0.0
    %524 = vmatprep.subr.mxu0 0.0
    %525 = vmatpush1.xpose.msra.mxu0 0.0
    %526 = vmatprep.subr.mxu0 0.0
    %527 = vmatpush1.xpose.msra.mxu0 0.0
    %528 = vmatprep.subr.mxu0 0.0
    %529 = vmatpush1.xpose.msra.mxu0 0.0
    %530 = vmatprep.subr.mxu0 0.0
    %531 = vmatpush1.xpose.msra.mxu0 0.0
    %532 = vmatprep.subr.mxu0 0.0
    %533 = vmatpush1.xpose.msra.mxu0 0.0
    %534 = vmatprep.subr.mxu0 0.0
    %535 = vmatpush1.xpose.msra.mxu0 0.0
    %536 = vmatprep.subr.mxu0 0.0
    %537 = vmatpush1.xpose.msra.mxu0 0.0
    %538 = vmatprep.subr.mxu0 0.0
    %539 = vmatpush1.xpose.msra.mxu0 0.0
    %540 = vmatprep.subr.mxu0 0.0
    %541 = vmatpush1.xpose.msra.mxu0 0.0
    %542 = vmatprep.subr.mxu0 0.0
    %543 = vmatpush1.xpose.msra.mxu0 0.0
    %544 = vmatprep.subr.mxu0 0.0
    %545 = vmatpush1.xpose.msra.mxu0 0.0
    %546 = vmatprep.subr.mxu0 0.0
    %547 = vmatpush1.xpose.msra.mxu0 0.0
    %548 = vmatprep.subr.mxu0 0.0
    %549 = vmatpush1.xpose.msra.mxu0 0.0
    %550 = vmatprep.subr.mxu0 0.0
    %551 = vmatpush1.xpose.msra.mxu0 0.0
    %552 = vmatprep.subr.mxu0 0.0
    %553 = vmatpush1.xpose.msra.mxu0 0.0
    %554 = vmatprep.subr.mxu0 0.0
    %555 = vmatpush1.xpose.msra.mxu0 0.0
    %556 = vmatprep.subr.mxu0 0.0
    %557 = vmatpush1.xpose.msra.mxu0 0.0
    %558 = vmatprep.subr.mxu0 0.0
    %559 = vmatpush1.xpose.msra.mxu0 0.0
    %560 = vmatprep.mubr.f32.mxu0 0.0
    %561 = vmatmul.mubr.f32.gmra.mrb[0].mxu0 %v494
    %v562 = vpop.f32.mrb[0].mxu0
    %v563 = vadd.f32 0.0, %v562
    %v564 = vpop.f32.mrb[0].mxu0
    %565 = vdwg.mxu0
    %v567 = vsel %vm54, %v53, 0
    %569 = vmatprep.subr.mxu0 0.0
    %570 = vmatpush1.xpose.msra.mxu0 %v567
    %571 = vmatprep.subr.mxu0 0.0
    %572 = vmatpush1.xpose.msra.mxu0 0.0
    %573 = vmatprep.subr.mxu0 0.0
    %574 = vmatpush1.xpose.msra.mxu0 0.0
    %575 = vmatprep.subr.mxu0 0.0
    %576 = vmatpush1.xpose.msra.mxu0 0.0
    %577 = vmatprep.subr.mxu0 0.0
    %578 = vmatpush1.xpose.msra.mxu0 0.0
    %579 = vmatprep.subr.mxu0 0.0
    %580 = vmatpush1.xpose.msra.mxu0 0.0
    %581 = vmatprep.subr.mxu0 0.0
    %582 = vmatpush1.xpose.msra.mxu0 0.0
    %583 = vmatprep.subr.mxu0 0.0
    %584 = vmatpush1.xpose.msra.mxu0 0.0
    %585 = vmatprep.subr.mxu0 0.0
    %586 = vmatpush1.xpose.msra.mxu0 0.0
    %587 = vmatprep.subr.mxu0 0.0
    %588 = vmatpush1.xpose.msra.mxu0 0.0
    %589 = vmatprep.subr.mxu0 0.0
    %590 = vmatpush1.xpose.msra.mxu0 0.0
    %591 = vmatprep.subr.mxu0 0.0
    %592 = vmatpush1.xpose.msra.mxu0 0.0
    %593 = vmatprep.subr.mxu0 0.0
    %594 = vmatpush1.xpose.msra.mxu0 0.0
    %595 = vmatprep.subr.mxu0 0.0
    %596 = vmatpush1.xpose.msra.mxu0 0.0
    %597 = vmatprep.subr.mxu0 0.0
    %598 = vmatpush1.xpose.msra.mxu0 0.0
    %599 = vmatprep.subr.mxu0 0.0
    %600 = vmatpush1.xpose.msra.mxu0 0.0
    %601 = vmatprep.subr.mxu0 0.0
    %602 = vmatpush1.xpose.msra.mxu0 0.0
    %603 = vmatprep.subr.mxu0 0.0
    %604 = vmatpush1.xpose.msra.mxu0 0.0
    %605 = vmatprep.subr.mxu0 0.0
    %606 = vmatpush1.xpose.msra.mxu0 0.0
    %607 = vmatprep.subr.mxu0 0.0
    %608 = vmatpush1.xpose.msra.mxu0 0.0
    %609 = vmatprep.subr.mxu0 0.0
    %610 = vmatpush1.xpose.msra.mxu0 0.0
    %611 = vmatprep.subr.mxu0 0.0
    %612 = vmatpush1.xpose.msra.mxu0 0.0
    %613 = vmatprep.subr.mxu0 0.0
    %614 = vmatpush1.xpose.msra.mxu0 0.0
    %615 = vmatprep.subr.mxu0 0.0
    %616 = vmatpush1.xpose.msra.mxu0 0.0
    %617 = vmatprep.subr.mxu0 0.0
    %618 = vmatpush1.xpose.msra.mxu0 0.0
    %619 = vmatprep.subr.mxu0 0.0
    %620 = vmatpush1.xpose.msra.mxu0 0.0
    %621 = vmatprep.subr.mxu0 0.0
    %622 = vmatpush1.xpose.msra.mxu0 0.0
    %623 = vmatprep.subr.mxu0 0.0
    %624 = vmatpush1.xpose.msra.mxu0 0.0
    %625 = vmatprep.subr.mxu0 0.0
    %626 = vmatpush1.xpose.msra.mxu0 0.0
    %627 = vmatprep.subr.mxu0 0.0
    %628 = vmatpush1.xpose.msra.mxu0 0.0
    %629 = vmatprep.subr.mxu0 0.0
    %630 = vmatpush1.xpose.msra.mxu0 0.0
    %631 = vmatprep.subr.mxu0 0.0
    %632 = vmatpush1.xpose.msra.mxu0 0.0
    %633 = vmatprep.mubr.f32.mxu0 0.0
    %634 = vmatmul.mubr.f32.gmra.mrb[0].mxu0 %v567
    %v635 = vpop.f32.mrb[0].mxu0
    %v636 = vadd.f32 0.0, %v635
    %v637 = vpop.f32.mrb[0].mxu0
    %638 = vdwg.mxu0
    %v639 = vmul.f32 %v46, %v46
    %v640 = vmul.f32 %v47, %v47
    %v641 = vmul.f32 %v48, %v48
    %v642 = vmul.f32 %v49, %v49
    %v643 = vmul.f32 %v50, %v50
    %v644 = vmul.f32 %v51, %v51
    %v645 = vmul.f32 %v52, %v52
    %v646 = vmul.f32 %v53, %v53
    %v648 = vsel %vm54, 1.0, 0
    %v651 = vsel %vm54, %v639, 0
    %653 = vmatprep.subr.mxu0 0.0
    %654 = vmatpush1.xpose.msra.mxu0 %v651
    %655 = vmatprep.subr.mxu0 0.0
    %656 = vmatpush1.xpose.msra.mxu0 0.0
    %657 = vmatprep.subr.mxu0 0.0
    %658 = vmatpush1.xpose.msra.mxu0 0.0
    %659 = vmatprep.subr.mxu0 0.0
    %660 = vmatpush1.xpose.msra.mxu0 0.0
    %661 = vmatprep.subr.mxu0 0.0
    %662 = vmatpush1.xpose.msra.mxu0 0.0
    %663 = vmatprep.subr.mxu0 0.0
    %664 = vmatpush1.xpose.msra.mxu0 0.0
    %665 = vmatprep.subr.mxu0 0.0
    %666 = vmatpush1.xpose.msra.mxu0 0.0
    %667 = vmatprep.subr.mxu0 0.0
    %668 = vmatpush1.xpose.msra.mxu0 0.0
    %669 = vmatprep.subr.mxu0 0.0
    %670 = vmatpush1.xpose.msra.mxu0 0.0
    %671 = vmatprep.subr.mxu0 0.0
    %672 = vmatpush1.xpose.msra.mxu0 0.0
    %673 = vmatprep.subr.mxu0 0.0
    %674 = vmatpush1.xpose.msra.mxu0 0.0
    %675 = vmatprep.subr.mxu0 0.0
    %676 = vmatpush1.xpose.msra.mxu0 0.0
    %677 = vmatprep.subr.mxu0 0.0
    %678 = vmatpush1.xpose.msra.mxu0 0.0
    %679 = vmatprep.subr.mxu0 0.0
    %680 = vmatpush1.xpose.msra.mxu0 0.0
    %681 = vmatprep.subr.mxu0 0.0
    %682 = vmatpush1.xpose.msra.mxu0 0.0
    %683 = vmatprep.subr.mxu0 0.0
    %684 = vmatpush1.xpose.msra.mxu0 0.0
    %685 = vmatprep.subr.mxu0 0.0
    %686 = vmatpush1.xpose.msra.mxu0 0.0
    %687 = vmatprep.subr.mxu0 0.0
    %688 = vmatpush1.xpose.msra.mxu0 0.0
    %689 = vmatprep.subr.mxu0 0.0
    %690 = vmatpush1.xpose.msra.mxu0 0.0
    %691 = vmatprep.subr.mxu0 0.0
    %692 = vmatpush1.xpose.msra.mxu0 0.0
    %693 = vmatprep.subr.mxu0 0.0
    %694 = vmatpush1.xpose.msra.mxu0 0.0
    %695 = vmatprep.subr.mxu0 0.0
    %696 = vmatpush1.xpose.msra.mxu0 0.0
    %697 = vmatprep.subr.mxu0 0.0
    %698 = vmatpush1.xpose.msra.mxu0 0.0
    %699 = vmatprep.subr.mxu0 0.0
    %700 = vmatpush1.xpose.msra.mxu0 0.0
    %701 = vmatprep.subr.mxu0 0.0
    %702 = vmatpush1.xpose.msra.mxu0 0.0
    %703 = vmatprep.subr.mxu0 0.0
    %704 = vmatpush1.xpose.msra.mxu0 0.0
    %705 = vmatprep.subr.mxu0 0.0
    %706 = vmatpush1.xpose.msra.mxu0 0.0
    %707 = vmatprep.subr.mxu0 0.0
    %708 = vmatpush1.xpose.msra.mxu0 0.0
    %709 = vmatprep.subr.mxu0 0.0
    %710 = vmatpush1.xpose.msra.mxu0 0.0
    %711 = vmatprep.subr.mxu0 0.0
    %712 = vmatpush1.xpose.msra.mxu0 0.0
    %713 = vmatprep.subr.mxu0 0.0
    %714 = vmatpush1.xpose.msra.mxu0 0.0
    %715 = vmatprep.subr.mxu0 0.0
    %716 = vmatpush1.xpose.msra.mxu0 0.0
    %717 = vmatprep.mubr.f32.mxu0 0.0
    %718 = vmatmul.mubr.f32.gmra.mrb[0].mxu0 %v648
    %v719 = vpop.f32.mrb[0].mxu0
    %v720 = vadd.f32 0.0, %v719
    %v721 = vpop.f32.mrb[0].mxu0
    %722 = vdwg.mxu0
    %v724 = vsel %vm54, %v640, 0
    %726 = vmatprep.subr.mxu0 0.0
    %727 = vmatpush1.xpose.msra.mxu0 %v724
    %728 = vmatprep.subr.mxu0 0.0
    %729 = vmatpush1.xpose.msra.mxu0 0.0
    %730 = vmatprep.subr.mxu0 0.0
    %731 = vmatpush1.xpose.msra.mxu0 0.0
    %732 = vmatprep.subr.mxu0 0.0
    %733 = vmatpush1.xpose.msra.mxu0 0.0
    %734 = vmatprep.subr.mxu0 0.0
    %735 = vmatpush1.xpose.msra.mxu0 0.0
    %736 = vmatprep.subr.mxu0 0.0
    %737 = vmatpush1.xpose.msra.mxu0 0.0
    %738 = vmatprep.subr.mxu0 0.0
    %739 = vmatpush1.xpose.msra.mxu0 0.0
    %740 = vmatprep.subr.mxu0 0.0
    %741 = vmatpush1.xpose.msra.mxu0 0.0
    %742 = vmatprep.subr.mxu0 0.0
    %743 = vmatpush1.xpose.msra.mxu0 0.0
    %744 = vmatprep.subr.mxu0 0.0
    %745 = vmatpush1.xpose.msra.mxu0 0.0
    %746 = vmatprep.subr.mxu0 0.0
    %747 = vmatpush1.xpose.msra.mxu0 0.0
    %748 = vmatprep.subr.mxu0 0.0
    %749 = vmatpush1.xpose.msra.mxu0 0.0
    %750 = vmatprep.subr.mxu0 0.0
    %751 = vmatpush1.xpose.msra.mxu0 0.0
    %752 = vmatprep.subr.mxu0 0.0
    %753 = vmatpush1.xpose.msra.mxu0 0.0
    %754 = vmatprep.subr.mxu0 0.0
    %755 = vmatpush1.xpose.msra.mxu0 0.0
    %756 = vmatprep.subr.mxu0 0.0
    %757 = vmatpush1.xpose.msra.mxu0 0.0
    %758 = vmatprep.subr.mxu0 0.0
    %759 = vmatpush1.xpose.msra.mxu0 0.0
    %760 = vmatprep.subr.mxu0 0.0
    %761 = vmatpush1.xpose.msra.mxu0 0.0
    %762 = vmatprep.subr.mxu0 0.0
    %763 = vmatpush1.xpose.msra.mxu0 0.0
    %764 = vmatprep.subr.mxu0 0.0
    %765 = vmatpush1.xpose.msra.mxu0 0.0
    %766 = vmatprep.subr.mxu0 0.0
    %767 = vmatpush1.xpose.msra.mxu0 0.0
    %768 = vmatprep.subr.mxu0 0.0
    %769 = vmatpush1.xpose.msra.mxu0 0.0
    %770 = vmatprep.subr.mxu0 0.0
    %771 = vmatpush1.xpose.msra.mxu0 0.0
    %772 = vmatprep.subr.mxu0 0.0
    %773 = vmatpush1.xpose.msra.mxu0 0.0
    %774 = vmatprep.subr.mxu0 0.0
    %775 = vmatpush1.xpose.msra.mxu0 0.0
    %776 = vmatprep.subr.mxu0 0.0
    %777 = vmatpush1.xpose.msra.mxu0 0.0
    %778 = vmatprep.subr.mxu0 0.0
    %779 = vmatpush1.xpose.msra.mxu0 0.0
    %780 = vmatprep.subr.mxu0 0.0
    %781 = vmatpush1.xpose.msra.mxu0 0.0
    %782 = vmatprep.subr.mxu0 0.0
    %783 = vmatpush1.xpose.msra.mxu0 0.0
    %784 = vmatprep.subr.mxu0 0.0
    %785 = vmatpush1.xpose.msra.mxu0 0.0
    %786 = vmatprep.subr.mxu0 0.0
    %787 = vmatpush1.xpose.msra.mxu0 0.0
    %788 = vmatprep.subr.mxu0 0.0
    %789 = vmatpush1.xpose.msra.mxu0 0.0
    %790 = vmatprep.mubr.f32.mxu0 0.0
    %791 = vmatmul.mubr.f32.gmra.mrb[0].mxu0 %v648
    %v792 = vpop.f32.mrb[0].mxu0
    %v793 = vadd.f32 0.0, %v792
    %v794 = vpop.f32.mrb[0].mxu0
    %795 = vdwg.mxu0
    %v797 = vsel %vm54, %v641, 0
    %799 = vmatprep.subr.mxu0 0.0
    %800 = vmatpush1.xpose.msra.mxu0 %v797
    %801 = vmatprep.subr.mxu0 0.0
    %802 = vmatpush1.xpose.msra.mxu0 0.0
    %803 = vmatprep.subr.mxu0 0.0
    %804 = vmatpush1.xpose.msra.mxu0 0.0
    %805 = vmatprep.subr.mxu0 0.0
    %806 = vmatpush1.xpose.msra.mxu0 0.0
    %807 = vmatprep.subr.mxu0 0.0
    %808 = vmatpush1.xpose.msra.mxu0 0.0
    %809 = vmatprep.subr.mxu0 0.0
    %810 = vmatpush1.xpose.msra.mxu0 0.0
    %811 = vmatprep.subr.mxu0 0.0
    %812 = vmatpush1.xpose.msra.mxu0 0.0
    %813 = vmatprep.subr.mxu0 0.0
    %814 = vmatpush1.xpose.msra.mxu0 0.0
    %815 = vmatprep.subr.mxu0 0.0
    %816 = vmatpush1.xpose.msra.mxu0 0.0
    %817 = vmatprep.subr.mxu0 0.0
    %818 = vmatpush1.xpose.msra.mxu0 0.0
    %819 = vmatprep.subr.mxu0 0.0
    %820 = vmatpush1.xpose.msra.mxu0 0.0
    %821 = vmatprep.subr.mxu0 0.0
    %822 = vmatpush1.xpose.msra.mxu0 0.0
    %823 = vmatprep.subr.mxu0 0.0
    %824 = vmatpush1.xpose.msra.mxu0 0.0
    %825 = vmatprep.subr.mxu0 0.0
    %826 = vmatpush1.xpose.msra.mxu0 0.0
    %827 = vmatprep.subr.mxu0 0.0
    %828 = vmatpush1.xpose.msra.mxu0 0.0
    %829 = vmatprep.subr.mxu0 0.0
    %830 = vmatpush1.xpose.msra.mxu0 0.0
    %831 = vmatprep.subr.mxu0 0.0
    %832 = vmatpush1.xpose.msra.mxu0 0.0
    %833 = vmatprep.subr.mxu0 0.0
    %834 = vmatpush1.xpose.msra.mxu0 0.0
    %835 = vmatprep.subr.mxu0 0.0
    %836 = vmatpush1.xpose.msra.mxu0 0.0
    %837 = vmatprep.subr.mxu0 0.0
    %838 = vmatpush1.xpose.msra.mxu0 0.0
    %839 = vmatprep.subr.mxu0 0.0
    %840 = vmatpush1.xpose.msra.mxu0 0.0
    %841 = vmatprep.subr.mxu0 0.0
    %842 = vmatpush1.xpose.msra.mxu0 0.0
    %843 = vmatprep.subr.mxu0 0.0
    %844 = vmatpush1.xpose.msra.mxu0 0.0
    %845 = vmatprep.subr.mxu0 0.0
    %846 = vmatpush1.xpose.msra.mxu0 0.0
    %847 = vmatprep.subr.mxu0 0.0
    %848 = vmatpush1.xpose.msra.mxu0 0.0
    %849 = vmatprep.subr.mxu0 0.0
    %850 = vmatpush1.xpose.msra.mxu0 0.0
    %851 = vmatprep.subr.mxu0 0.0
    %852 = vmatpush1.xpose.msra.mxu0 0.0
    %853 = vmatprep.subr.mxu0 0.0
    %854 = vmatpush1.xpose.msra.mxu0 0.0
    %855 = vmatprep.subr.mxu0 0.0
    %856 = vmatpush1.xpose.msra.mxu0 0.0
    %857 = vmatprep.subr.mxu0 0.0
    %858 = vmatpush1.xpose.msra.mxu0 0.0
    %859 = vmatprep.subr.mxu0 0.0
    %860 = vmatpush1.xpose.msra.mxu0 0.0
    %861 = vmatprep.subr.mxu0 0.0
    %862 = vmatpush1.xpose.msra.mxu0 0.0
    %863 = vmatprep.mubr.f32.mxu0 0.0
    %864 = vmatmul.mubr.f32.gmra.mrb[0].mxu0 %v648
    %v865 = vpop.f32.mrb[0].mxu0
    %v866 = vadd.f32 0.0, %v865
    %v867 = vpop.f32.mrb[0].mxu0
    %868 = vdwg.mxu0
    %v870 = vsel %vm54, %v642, 0
    %872 = vmatprep.subr.mxu0 0.0
    %873 = vmatpush1.xpose.msra.mxu0 %v870
    %874 = vmatprep.subr.mxu0 0.0
    %875 = vmatpush1.xpose.msra.mxu0 0.0
    %876 = vmatprep.subr.mxu0 0.0
    %877 = vmatpush1.xpose.msra.mxu0 0.0
    %878 = vmatprep.subr.mxu0 0.0
    %879 = vmatpush1.xpose.msra.mxu0 0.0
    %880 = vmatprep.subr.mxu0 0.0
    %881 = vmatpush1.xpose.msra.mxu0 0.0
    %882 = vmatprep.subr.mxu0 0.0
    %883 = vmatpush1.xpose.msra.mxu0 0.0
    %884 = vmatprep.subr.mxu0 0.0
    %885 = vmatpush1.xpose.msra.mxu0 0.0
    %886 = vmatprep.subr.mxu0 0.0
    %887 = vmatpush1.xpose.msra.mxu0 0.0
    %888 = vmatprep.subr.mxu0 0.0
    %889 = vmatpush1.xpose.msra.mxu0 0.0
    %890 = vmatprep.subr.mxu0 0.0
    %891 = vmatpush1.xpose.msra.mxu0 0.0
    %892 = vmatprep.subr.mxu0 0.0
    %893 = vmatpush1.xpose.msra.mxu0 0.0
    %894 = vmatprep.subr.mxu0 0.0
    %895 = vmatpush1.xpose.msra.mxu0 0.0
    %896 = vmatprep.subr.mxu0 0.0
    %897 = vmatpush1.xpose.msra.mxu0 0.0
    %898 = vmatprep.subr.mxu0 0.0
    %899 = vmatpush1.xpose.msra.mxu0 0.0
    %900 = vmatprep.subr.mxu0 0.0
    %901 = vmatpush1.xpose.msra.mxu0 0.0
    %902 = vmatprep.subr.mxu0 0.0
    %903 = vmatpush1.xpose.msra.mxu0 0.0
    %904 = vmatprep.subr.mxu0 0.0
    %905 = vmatpush1.xpose.msra.mxu0 0.0
    %906 = vmatprep.subr.mxu0 0.0
    %907 = vmatpush1.xpose.msra.mxu0 0.0
    %908 = vmatprep.subr.mxu0 0.0
    %909 = vmatpush1.xpose.msra.mxu0 0.0
    %910 = vmatprep.subr.mxu0 0.0
    %911 = vmatpush1.xpose.msra.mxu0 0.0
    %912 = vmatprep.subr.mxu0 0.0
    %913 = vmatpush1.xpose.msra.mxu0 0.0
    %914 = vmatprep.subr.mxu0 0.0
    %915 = vmatpush1.xpose.msra.mxu0 0.0
    %916 = vmatprep.subr.mxu0 0.0
    %917 = vmatpush1.xpose.msra.mxu0 0.0
    %918 = vmatprep.subr.mxu0 0.0
    %919 = vmatpush1.xpose.msra.mxu0 0.0
    %920 = vmatprep.subr.mxu0 0.0
    %921 = vmatpush1.xpose.msra.mxu0 0.0
    %922 = vmatprep.subr.mxu0 0.0
    %923 = vmatpush1.xpose.msra.mxu0 0.0
    %924 = vmatprep.subr.mxu0 0.0
    %925 = vmatpush1.xpose.msra.mxu0 0.0
    %926 = vmatprep.subr.mxu0 0.0
    %927 = vmatpush1.xpose.msra.mxu0 0.0
    %928 = vmatprep.subr.mxu0 0.0
    %929 = vmatpush1.xpose.msra.mxu0 0.0
    %930 = vmatprep.subr.mxu0 0.0
    %931 = vmatpush1.xpose.msra.mxu0 0.0
    %932 = vmatprep.subr.mxu0 0.0
    %933 = vmatpush1.xpose.msra.mxu0 0.0
    %934 = vmatprep.subr.mxu0 0.0
    %935 = vmatpush1.xpose.msra.mxu0 0.0
    %936 = vmatprep.mubr.f32.mxu0 0.0
    %937 = vmatmul.mubr.f32.gmra.mrb[0].mxu0 %v648
    %v938 = vpop.f32.mrb[0].mxu0
    %v939 = vadd.f32 0.0, %v938
    %v940 = vpop.f32.mrb[0].mxu0
    %941 = vdwg.mxu0
    %v943 = vsel %vm54, %v643, 0
    %945 = vmatprep.subr.mxu0 0.0
    %946 = vmatpush1.xpose.msra.mxu0 %v943
    %947 = vmatprep.subr.mxu0 0.0
    %948 = vmatpush1.xpose.msra.mxu0 0.0
    %949 = vmatprep.subr.mxu0 0.0
    %950 = vmatpush1.xpose.msra.mxu0 0.0
    %951 = vmatprep.subr.mxu0 0.0
    %952 = vmatpush1.xpose.msra.mxu0 0.0
    %953 = vmatprep.subr.mxu0 0.0
    %954 = vmatpush1.xpose.msra.mxu0 0.0
    %955 = vmatprep.subr.mxu0 0.0
    %956 = vmatpush1.xpose.msra.mxu0 0.0
    %957 = vmatprep.subr.mxu0 0.0
    %958 = vmatpush1.xpose.msra.mxu0 0.0
    %959 = vmatprep.subr.mxu0 0.0
    %960 = vmatpush1.xpose.msra.mxu0 0.0
    %961 = vmatprep.subr.mxu0 0.0
    %962 = vmatpush1.xpose.msra.mxu0 0.0
    %963 = vmatprep.subr.mxu0 0.0
    %964 = vmatpush1.xpose.msra.mxu0 0.0
    %965 = vmatprep.subr.mxu0 0.0
    %966 = vmatpush1.xpose.msra.mxu0 0.0
    %967 = vmatprep.subr.mxu0 0.0
    %968 = vmatpush1.xpose.msra.mxu0 0.0
    %969 = vmatprep.subr.mxu0 0.0
    %970 = vmatpush1.xpose.msra.mxu0 0.0
    %971 = vmatprep.subr.mxu0 0.0
    %972 = vmatpush1.xpose.msra.mxu0 0.0
    %973 = vmatprep.subr.mxu0 0.0
    %974 = vmatpush1.xpose.msra.mxu0 0.0
    %975 = vmatprep.subr.mxu0 0.0
    %976 = vmatpush1.xpose.msra.mxu0 0.0
    %977 = vmatprep.subr.mxu0 0.0
    %978 = vmatpush1.xpose.msra.mxu0 0.0
    %979 = vmatprep.subr.mxu0 0.0
    %980 = vmatpush1.xpose.msra.mxu0 0.0
    %981 = vmatprep.subr.mxu0 0.0
    %982 = vmatpush1.xpose.msra.mxu0 0.0
    %983 = vmatprep.subr.mxu0 0.0
    %984 = vmatpush1.xpose.msra.mxu0 0.0
    %985 = vmatprep.subr.mxu0 0.0
    %986 = vmatpush1.xpose.msra.mxu0 0.0
    %987 = vmatprep.subr.mxu0 0.0
    %988 = vmatpush1.xpose.msra.mxu0 0.0
    %989 = vmatprep.subr.mxu0 0.0
    %990 = vmatpush1.xpose.msra.mxu0 0.0
    %991 = vmatprep.subr.mxu0 0.0
    %992 = vmatpush1.xpose.msra.mxu0 0.0
    %993 = vmatprep.subr.mxu0 0.0
    %994 = vmatpush1.xpose.msra.mxu0 0.0
    %995 = vmatprep.subr.mxu0 0.0
    %996 = vmatpush1.xpose.msra.mxu0 0.0
    %997 = vmatprep.subr.mxu0 0.0
    %998 = vmatpush1.xpose.msra.mxu0 0.0
    %999 = vmatprep.subr.mxu0 0.0
    %1000 = vmatpush1.xpose.msra.mxu0 0.0
    %1001 = vmatprep.subr.mxu0 0.0
    %1002 = vmatpush1.xpose.msra.mxu0 0.0
    %1003 = vmatprep.subr.mxu0 0.0
    %1004 = vmatpush1.xpose.msra.mxu0 0.0
    %1005 = vmatprep.subr.mxu0 0.0
    %1006 = vmatpush1.xpose.msra.mxu0 0.0
    %1007 = vmatprep.subr.mxu0 0.0
    %1008 = vmatpush1.xpose.msra.mxu0 0.0
    %1009 = vmatprep.mubr.f32.mxu0 0.0
    %1010 = vmatmul.mubr.f32.gmra.mrb[0].mxu0 %v648
    %v1011 = vpop.f32.mrb[0].mxu0
    %v1012 = vadd.f32 0.0, %v1011
    %v1013 = vpop.f32.mrb[0].mxu0
    %1014 = vdwg.mxu0
    %v1016 = vsel %vm54, %v644, 0
    %1018 = vmatprep.subr.mxu0 0.0
    %1019 = vmatpush1.xpose.msra.mxu0 %v1016
    %1020 = vmatprep.subr.mxu0 0.0
    %1021 = vmatpush1.xpose.msra.mxu0 0.0
    %1022 = vmatprep.subr.mxu0 0.0
    %1023 = vmatpush1.xpose.msra.mxu0 0.0
    %1024 = vmatprep.subr.mxu0 0.0
    %1025 = vmatpush1.xpose.msra.mxu0 0.0
    %1026 = vmatprep.subr.mxu0 0.0
    %1027 = vmatpush1.xpose.msra.mxu0 0.0
    %1028 = vmatprep.subr.mxu0 0.0
    %1029 = vmatpush1.xpose.msra.mxu0 0.0
    %1030 = vmatprep.subr.mxu0 0.0
    %1031 = vmatpush1.xpose.msra.mxu0 0.0
    %1032 = vmatprep.subr.mxu0 0.0
    %1033 = vmatpush1.xpose.msra.mxu0 0.0
    %1034 = vmatprep.subr.mxu0 0.0
    %1035 = vmatpush1.xpose.msra.mxu0 0.0
    %1036 = vmatprep.subr.mxu0 0.0
    %1037 = vmatpush1.xpose.msra.mxu0 0.0
    %1038 = vmatprep.subr.mxu0 0.0
    %1039 = vmatpush1.xpose.msra.mxu0 0.0
    %1040 = vmatprep.subr.mxu0 0.0
    %1041 = vmatpush1.xpose.msra.mxu0 0.0
    %1042 = vmatprep.subr.mxu0 0.0
    %1043 = vmatpush1.xpose.msra.mxu0 0.0
    %1044 = vmatprep.subr.mxu0 0.0
    %1045 = vmatpush1.xpose.msra.mxu0 0.0
    %1046 = vmatprep.subr.mxu0 0.0
    %1047 = vmatpush1.xpose.msra.mxu0 0.0
    %1048 = vmatprep.subr.mxu0 0.0
    %1049 = vmatpush1.xpose.msra.mxu0 0.0
    %1050 = vmatprep.subr.mxu0 0.0
    %1051 = vmatpush1.xpose.msra.mxu0 0.0
    %1052 = vmatprep.subr.mxu0 0.0
    %1053 = vmatpush1.xpose.msra.mxu0 0.0
    %1054 = vmatprep.subr.mxu0 0.0
    %1055 = vmatpush1.xpose.msra.mxu0 0.0
    %1056 = vmatprep.subr.mxu0 0.0
    %1057 = vmatpush1.xpose.msra.mxu0 0.0
    %1058 = vmatprep.subr.mxu0 0.0
    %1059 = vmatpush1.xpose.msra.mxu0 0.0
    %1060 = vmatprep.subr.mxu0 0.0
    %1061 = vmatpush1.xpose.msra.mxu0 0.0
    %1062 = vmatprep.subr.mxu0 0.0
    %1063 = vmatpush1.xpose.msra.mxu0 0.0
    %1064 = vmatprep.subr.mxu0 0.0
    %1065 = vmatpush1.xpose.msra.mxu0 0.0
    %1066 = vmatprep.subr.mxu0 0.0
    %1067 = vmatpush1.xpose.msra.mxu0 0.0
    %1068 = vmatprep.subr.mxu0 0.0
    %1069 = vmatpush1.xpose.msra.mxu0 0.0
    %1070 = vmatprep.subr.mxu0 0.0
    %1071 = vmatpush1.xpose.msra.mxu0 0.0
    %1072 = vmatprep.subr.mxu0 0.0
    %1073 = vmatpush1.xpose.msra.mxu0 0.0
    %1074 = vmatprep.subr.mxu0 0.0
    %1075 = vmatpush1.xpose.msra.mxu0 0.0
    %1076 = vmatprep.subr.mxu0 0.0
    %1077 = vmatpush1.xpose.msra.mxu0 0.0
    %1078 = vmatprep.subr.mxu0 0.0
    %1079 = vmatpush1.xpose.msra.mxu0 0.0
    %1080 = vmatprep.subr.mxu0 0.0
    %1081 = vmatpush1.xpose.msra.mxu0 0.0
    %1082 = vmatprep.mubr.f32.mxu0 0.0
    %1083 = vmatmul.mubr.f32.gmra.mrb[0].mxu0 %v648
    %v1084 = vpop.f32.mrb[0].mxu0
    %v1085 = vadd.f32 0.0, %v1084
    %v1086 = vpop.f32.mrb[0].mxu0
    %1087 = vdwg.mxu0
    %v1089 = vsel %vm54, %v645, 0
    %1091 = vmatprep.subr.mxu0 0.0
    %1092 = vmatpush1.xpose.msra.mxu0 %v1089
    %1093 = vmatprep.subr.mxu0 0.0
    %1094 = vmatpush1.xpose.msra.mxu0 0.0
    %1095 = vmatprep.subr.mxu0 0.0
    %1096 = vmatpush1.xpose.msra.mxu0 0.0
    %1097 = vmatprep.subr.mxu0 0.0
    %1098 = vmatpush1.xpose.msra.mxu0 0.0
    %1099 = vmatprep.subr.mxu0 0.0
    %1100 = vmatpush1.xpose.msra.mxu0 0.0
    %1101 = vmatprep.subr.mxu0 0.0
    %1102 = vmatpush1.xpose.msra.mxu0 0.0
    %1103 = vmatprep.subr.mxu0 0.0
    %1104 = vmatpush1.xpose.msra.mxu0 0.0
    %1105 = vmatprep.subr.mxu0 0.0
    %1106 = vmatpush1.xpose.msra.mxu0 0.0
    %1107 = vmatprep.subr.mxu0 0.0
    %1108 = vmatpush1.xpose.msra.mxu0 0.0
    %1109 = vmatprep.subr.mxu0 0.0
    %1110 = vmatpush1.xpose.msra.mxu0 0.0
    %1111 = vmatprep.subr.mxu0 0.0
    %1112 = vmatpush1.xpose.msra.mxu0 0.0
    %1113 = vmatprep.subr.mxu0 0.0
    %1114 = vmatpush1.xpose.msra.mxu0 0.0
    %1115 = vmatprep.subr.mxu0 0.0
    %1116 = vmatpush1.xpose.msra.mxu0 0.0
    %1117 = vmatprep.subr.mxu0 0.0
    %1118 = vmatpush1.xpose.msra.mxu0 0.0
    %1119 = vmatprep.subr.mxu0 0.0
    %1120 = vmatpush1.xpose.msra.mxu0 0.0
    %1121 = vmatprep.subr.mxu0 0.0
    %1122 = vmatpush1.xpose.msra.mxu0 0.0
    %1123 = vmatprep.subr.mxu0 0.0
    %1124 = vmatpush1.xpose.msra.mxu0 0.0
    %1125 = vmatprep.subr.mxu0 0.0
    %1126 = vmatpush1.xpose.msra.mxu0 0.0
    %1127 = vmatprep.subr.mxu0 0.0
    %1128 = vmatpush1.xpose.msra.mxu0 0.0
    %1129 = vmatprep.subr.mxu0 0.0
    %1130 = vmatpush1.xpose.msra.mxu0 0.0
    %1131 = vmatprep.subr.mxu0 0.0
    %1132 = vmatpush1.xpose.msra.mxu0 0.0
    %1133 = vmatprep.subr.mxu0 0.0
    %1134 = vmatpush1.xpose.msra.mxu0 0.0
    %1135 = vmatprep.subr.mxu0 0.0
    %1136 = vmatpush1.xpose.msra.mxu0 0.0
    %1137 = vmatprep.subr.mxu0 0.0
    %1138 = vmatpush1.xpose.msra.mxu0 0.0
    %1139 = vmatprep.subr.mxu0 0.0
    %1140 = vmatpush1.xpose.msra.mxu0 0.0
    %1141 = vmatprep.subr.mxu0 0.0
    %1142 = vmatpush1.xpose.msra.mxu0 0.0
    %1143 = vmatprep.subr.mxu0 0.0
    %1144 = vmatpush1.xpose.msra.mxu0 0.0
    %1145 = vmatprep.subr.mxu0 0.0
    %1146 = vmatpush1.xpose.msra.mxu0 0.0
    %1147 = vmatprep.subr.mxu0 0.0
    %1148 = vmatpush1.xpose.msra.mxu0 0.0
    %1149 = vmatprep.subr.mxu0 0.0
    %1150 = vmatpush1.xpose.msra.mxu0 0.0
    %1151 = vmatprep.subr.mxu0 0.0
    %1152 = vmatpush1.xpose.msra.mxu0 0.0
    %1153 = vmatprep.subr.mxu0 0.0
    %1154 = vmatpush1.xpose.msra.mxu0 0.0
    %1155 = vmatprep.mubr.f32.mxu0 0.0
    %1156 = vmatmul.mubr.f32.gmra.mrb[0].mxu0 %v648
    %v1157 = vpop.f32.mrb[0].mxu0
    %v1158 = vadd.f32 0.0, %v1157
    %v1159 = vpop.f32.mrb[0].mxu0
    %1160 = vdwg.mxu0
    %v1162 = vsel %vm54, %v646, 0
    %1164 = vmatprep.subr.mxu0 0.0
    %1165 = vmatpush1.xpose.msra.mxu0 %v1162
    %1166 = vmatprep.subr.mxu0 0.0
    %1167 = vmatpush1.xpose.msra.mxu0 0.0
    %1168 = vmatprep.subr.mxu0 0.0
    %1169 = vmatpush1.xpose.msra.mxu0 0.0
    %1170 = vmatprep.subr.mxu0 0.0
    %1171 = vmatpush1.xpose.msra.mxu0 0.0
    %1172 = vmatprep.subr.mxu0 0.0
    %1173 = vmatpush1.xpose.msra.mxu0 0.0
    %1174 = vmatprep.subr.mxu0 0.0
    %1175 = vmatpush1.xpose.msra.mxu0 0.0
    %1176 = vmatprep.subr.mxu0 0.0
    %1177 = vmatpush1.xpose.msra.mxu0 0.0
    %1178 = vmatprep.subr.mxu0 0.0
    %1179 = vmatpush1.xpose.msra.mxu0 0.0
    %1180 = vmatprep.subr.mxu0 0.0
    %1181 = vmatpush1.xpose.msra.mxu0 0.0
    %1182 = vmatprep.subr.mxu0 0.0
    %1183 = vmatpush1.xpose.msra.mxu0 0.0
    %1184 = vmatprep.subr.mxu0 0.0
    %1185 = vmatpush1.xpose.msra.mxu0 0.0
    %1186 = vmatprep.subr.mxu0 0.0
    %1187 = vmatpush1.xpose.msra.mxu0 0.0
    %1188 = vmatprep.subr.mxu0 0.0
    %1189 = vmatpush1.xpose.msra.mxu0 0.0
    %1190 = vmatprep.subr.mxu0 0.0
    %1191 = vmatpush1.xpose.msra.mxu0 0.0
    %1192 = vmatprep.subr.mxu0 0.0
    %1193 = vmatpush1.xpose.msra.mxu0 0.0
    %1194 = vmatprep.subr.mxu0 0.0
    %1195 = vmatpush1.xpose.msra.mxu0 0.0
    %1196 = vmatprep.subr.mxu0 0.0
    %1197 = vmatpush1.xpose.msra.mxu0 0.0
    %1198 = vmatprep.subr.mxu0 0.0
    %1199 = vmatpush1.xpose.msra.mxu0 0.0
    %1200 = vmatprep.subr.mxu0 0.0
    %1201 = vmatpush1.xpose.msra.mxu0 0.0
    %1202 = vmatprep.subr.mxu0 0.0
    %1203 = vmatpush1.xpose.msra.mxu0 0.0
    %1204 = vmatprep.subr.mxu0 0.0
    %1205 = vmatpush1.xpose.msra.mxu0 0.0
    %1206 = vmatprep.subr.mxu0 0.0
    %1207 = vmatpush1.xpose.msra.mxu0 0.0
    %1208 = vmatprep.subr.mxu0 0.0
    %1209 = vmatpush1.xpose.msra.mxu0 0.0
    %1210 = vmatprep.subr.mxu0 0.0
    %1211 = vmatpush1.xpose.msra.mxu0 0.0
    %1212 = vmatprep.subr.mxu0 0.0
    %1213 = vmatpush1.xpose.msra.mxu0 0.0
    %1214 = vmatprep.subr.mxu0 0.0
    %1215 = vmatpush1.xpose.msra.mxu0 0.0
    %1216 = vmatprep.subr.mxu0 0.0
    %1217 = vmatpush1.xpose.msra.mxu0 0.0
    %1218 = vmatprep.subr.mxu0 0.0
    %1219 = vmatpush1.xpose.msra.mxu0 0.0
    %1220 = vmatprep.subr.mxu0 0.0
    %1221 = vmatpush1.xpose.msra.mxu0 0.0
    %1222 = vmatprep.subr.mxu0 0.0
    %1223 = vmatpush1.xpose.msra.mxu0 0.0
    %1224 = vmatprep.subr.mxu0 0.0
    %1225 = vmatpush1.xpose.msra.mxu0 0.0
    %1226 = vmatprep.subr.mxu0 0.0
    %1227 = vmatpush1.xpose.msra.mxu0 0.0
    %1228 = vmatprep.mubr.f32.mxu0 0.0
    %1229 = vmatmul.mubr.f32.gmra.mrb[0].mxu0 %v648
    %v1230 = vpop.f32.mrb[0].mxu0
    %v1231 = vadd.f32 0.0, %v1230
    %v1232 = vpop.f32.mrb[0].mxu0
    %1233 = vdwg.mxu0
    %v1235 = vsel %vm54, %v32, 0
    %1237 = vmatprep.subr.mxu0 0.0
    %1238 = vmatpush1.xpose.msra.mxu0 %v56
    %1239 = vmatprep.subr.mxu0 0.0
    %1240 = vmatpush1.xpose.msra.mxu0 0.0
    %1241 = vmatprep.subr.mxu0 0.0
    %1242 = vmatpush1.xpose.msra.mxu0 0.0
    %1243 = vmatprep.subr.mxu0 0.0
    %1244 = vmatpush1.xpose.msra.mxu0 0.0
    %1245 = vmatprep.subr.mxu0 0.0
    %1246 = vmatpush1.xpose.msra.mxu0 0.0
    %1247 = vmatprep.subr.mxu0 0.0
    %1248 = vmatpush1.xpose.msra.mxu0 0.0
    %1249 = vmatprep.subr.mxu0 0.0
    %1250 = vmatpush1.xpose.msra.mxu0 0.0
    %1251 = vmatprep.subr.mxu0 0.0
    %1252 = vmatpush1.xpose.msra.mxu0 0.0
    %1253 = vmatprep.subr.mxu0 0.0
    %1254 = vmatpush1.xpose.msra.mxu0 0.0
    %1255 = vmatprep.subr.mxu0 0.0
    %1256 = vmatpush1.xpose.msra.mxu0 0.0
    %1257 = vmatprep.subr.mxu0 0.0
    %1258 = vmatpush1.xpose.msra.mxu0 0.0
    %1259 = vmatprep.subr.mxu0 0.0
    %1260 = vmatpush1.xpose.msra.mxu0 0.0
    %1261 = vmatprep.subr.mxu0 0.0
    %1262 = vmatpush1.xpose.msra.mxu0 0.0
    %1263 = vmatprep.subr.mxu0 0.0
    %1264 = vmatpush1.xpose.msra.mxu0 0.0
    %1265 = vmatprep.subr.mxu0 0.0
    %1266 = vmatpush1.xpose.msra.mxu0 0.0
    %1267 = vmatprep.subr.mxu0 0.0
    %1268 = vmatpush1.xpose.msra.mxu0 0.0
    %1269 = vmatprep.subr.mxu0 0.0
    %1270 = vmatpush1.xpose.msra.mxu0 0.0
    %1271 = vmatprep.subr.mxu0 0.0
    %1272 = vmatpush1.xpose.msra.mxu0 0.0
    %1273 = vmatprep.subr.mxu0 0.0
    %1274 = vmatpush1.xpose.msra.mxu0 0.0
    %1275 = vmatprep.subr.mxu0 0.0
    %1276 = vmatpush1.xpose.msra.mxu0 0.0
    %1277 = vmatprep.subr.mxu0 0.0
    %1278 = vmatpush1.xpose.msra.mxu0 0.0
    %1279 = vmatprep.subr.mxu0 0.0
    %1280 = vmatpush1.xpose.msra.mxu0 0.0
    %1281 = vmatprep.subr.mxu0 0.0
    %1282 = vmatpush1.xpose.msra.mxu0 0.0
    %1283 = vmatprep.subr.mxu0 0.0
    %1284 = vmatpush1.xpose.msra.mxu0 0.0
    %1285 = vmatprep.subr.mxu0 0.0
    %1286 = vmatpush1.xpose.msra.mxu0 0.0
    %1287 = vmatprep.subr.mxu0 0.0
    %1288 = vmatpush1.xpose.msra.mxu0 0.0
    %1289 = vmatprep.subr.mxu0 0.0
    %1290 = vmatpush1.xpose.msra.mxu0 0.0
    %1291 = vmatprep.subr.mxu0 0.0
    %1292 = vmatpush1.xpose.msra.mxu0 0.0
    %1293 = vmatprep.subr.mxu0 0.0
    %1294 = vmatpush1.xpose.msra.mxu0 0.0
    %1295 = vmatprep.subr.mxu0 0.0
    %1296 = vmatpush1.xpose.msra.mxu0 0.0
    %1297 = vmatprep.subr.mxu0 0.0
    %1298 = vmatpush1.xpose.msra.mxu0 0.0
    %1299 = vmatprep.subr.mxu0 0.0
    %1300 = vmatpush1.xpose.msra.mxu0 0.0
    %1301 = vmatprep.mubr.f32.mxu0 0.0
    %1302 = vmatmul.mubr.f32.gmra.mrb[0].mxu0 %v1235
    %v1303 = vpop.f32.mrb[0].mxu0
    %v1304 = vadd.f32 0.0, %v1303
    %v1305 = vpop.f32.mrb[0].mxu0
    %1306 = vdwg.mxu0
    %v1308 = vsel %vm54, %v33, 0
    %1310 = vmatprep.subr.mxu0 0.0
    %1311 = vmatpush1.xpose.msra.mxu0 %v129
    %1312 = vmatprep.subr.mxu0 0.0
    %1313 = vmatpush1.xpose.msra.mxu0 0.0
    %1314 = vmatprep.subr.mxu0 0.0
    %1315 = vmatpush1.xpose.msra.mxu0 0.0
    %1316 = vmatprep.subr.mxu0 0.0
    %1317 = vmatpush1.xpose.msra.mxu0 0.0
    %1318 = vmatprep.subr.mxu0 0.0
    %1319 = vmatpush1.xpose.msra.mxu0 0.0
    %1320 = vmatprep.subr.mxu0 0.0
    %1321 = vmatpush1.xpose.msra.mxu0 0.0
    %1322 = vmatprep.subr.mxu0 0.0
    %1323 = vmatpush1.xpose.msra.mxu0 0.0
    %1324 = vmatprep.subr.mxu0 0.0
    %1325 = vmatpush1.xpose.msra.mxu0 0.0
    %1326 = vmatprep.subr.mxu0 0.0
    %1327 = vmatpush1.xpose.msra.mxu0 0.0
    %1328 = vmatprep.subr.mxu0 0.0
    %1329 = vmatpush1.xpose.msra.mxu0 0.0
    %1330 = vmatprep.subr.mxu0 0.0
    %1331 = vmatpush1.xpose.msra.mxu0 0.0
    %1332 = vmatprep.subr.mxu0 0.0
    %1333 = vmatpush1.xpose.msra.mxu0 0.0
    %1334 = vmatprep.subr.mxu0 0.0
    %1335 = vmatpush1.xpose.msra.mxu0 0.0
    %1336 = vmatprep.subr.mxu0 0.0
    %1337 = vmatpush1.xpose.msra.mxu0 0.0
    %1338 = vmatprep.subr.mxu0 0.0
    %1339 = vmatpush1.xpose.msra.mxu0 0.0
    %1340 = vmatprep.subr.mxu0 0.0
    %1341 = vmatpush1.xpose.msra.mxu0 0.0
    %1342 = vmatprep.subr.mxu0 0.0
    %1343 = vmatpush1.xpose.msra.mxu0 0.0
    %1344 = vmatprep.subr.mxu0 0.0
    %1345 = vmatpush1.xpose.msra.mxu0 0.0
    %1346 = vmatprep.subr.mxu0 0.0
    %1347 = vmatpush1.xpose.msra.mxu0 0.0
    %1348 = vmatprep.subr.mxu0 0.0
    %1349 = vmatpush1.xpose.msra.mxu0 0.0
    %1350 = vmatprep.subr.mxu0 0.0
    %1351 = vmatpush1.xpose.msra.mxu0 0.0
    %1352 = vmatprep.subr.mxu0 0.0
    %1353 = vmatpush1.xpose.msra.mxu0 0.0
    %1354 = vmatprep.subr.mxu0 0.0
    %1355 = vmatpush1.xpose.msra.mxu0 0.0
    %1356 = vmatprep.subr.mxu0 0.0
    %1357 = vmatpush1.xpose.msra.mxu0 0.0
    %1358 = vmatprep.subr.mxu0 0.0
    %1359 = vmatpush1.xpose.msra.mxu0 0.0
    %1360 = vmatprep.subr.mxu0 0.0
    %1361 = vmatpush1.xpose.msra.mxu0 0.0
    %1362 = vmatprep.subr.mxu0 0.0
    %1363 = vmatpush1.xpose.msra.mxu0 0.0
    %1364 = vmatprep.subr.mxu0 0.0
    %1365 = vmatpush1.xpose.msra.mxu0 0.0
    %1366 = vmatprep.subr.mxu0 0.0
    %1367 = vmatpush1.xpose.msra.mxu0 0.0
    %1368 = vmatprep.subr.mxu0 0.0
    %1369 = vmatpush1.xpose.msra.mxu0 0.0
    %1370 = vmatprep.subr.mxu0 0.0
    %1371 = vmatpush1.xpose.msra.mxu0 0.0
    %1372 = vmatprep.subr.mxu0 0.0
    %1373 = vmatpush1.xpose.msra.mxu0 0.0
    %1374 = vmatprep.mubr.f32.mxu0 0.0
    %1375 = vmatmul.mubr.f32.gmra.mrb[0].mxu0 %v1308
    %v1376 = vpop.f32.mrb[0].mxu0
    %v1377 = vadd.f32 0.0, %v1376
    %v1378 = vpop.f32.mrb[0].mxu0
    %1379 = vdwg.mxu0
    %v1381 = vsel %vm54, %v34, 0
    %1383 = vmatprep.subr.mxu0 0.0
    %1384 = vmatpush1.xpose.msra.mxu0 %v202
    %1385 = vmatprep.subr.mxu0 0.0
    %1386 = vmatpush1.xpose.msra.mxu0 0.0
    %1387 = vmatprep.subr.mxu0 0.0
    %1388 = vmatpush1.xpose.msra.mxu0 0.0
    %1389 = vmatprep.subr.mxu0 0.0
    %1390 = vmatpush1.xpose.msra.mxu0 0.0
    %1391 = vmatprep.subr.mxu0 0.0
    %1392 = vmatpush1.xpose.msra.mxu0 0.0
    %1393 = vmatprep.subr.mxu0 0.0
    %1394 = vmatpush1.xpose.msra.mxu0 0.0
    %1395 = vmatprep.subr.mxu0 0.0
    %1396 = vmatpush1.xpose.msra.mxu0 0.0
    %1397 = vmatprep.subr.mxu0 0.0
    %1398 = vmatpush1.xpose.msra.mxu0 0.0
    %1399 = vmatprep.subr.mxu0 0.0
    %1400 = vmatpush1.xpose.msra.mxu0 0.0
    %1401 = vmatprep.subr.mxu0 0.0
    %1402 = vmatpush1.xpose.msra.mxu0 0.0
    %1403 = vmatprep.subr.mxu0 0.0
    %1404 = vmatpush1.xpose.msra.mxu0 0.0
    %1405 = vmatprep.subr.mxu0 0.0
    %1406 = vmatpush1.xpose.msra.mxu0 0.0
    %1407 = vmatprep.subr.mxu0 0.0
    %1408 = vmatpush1.xpose.msra.mxu0 0.0
    %1409 = vmatprep.subr.mxu0 0.0
    %1410 = vmatpush1.xpose.msra.mxu0 0.0
    %1411 = vmatprep.subr.mxu0 0.0
    %1412 = vmatpush1.xpose.msra.mxu0 0.0
    %1413 = vmatprep.subr.mxu0 0.0
    %1414 = vmatpush1.xpose.msra.mxu0 0.0
    %1415 = vmatprep.subr.mxu0 0.0
    %1416 = vmatpush1.xpose.msra.mxu0 0.0
    %1417 = vmatprep.subr.mxu0 0.0
    %1418 = vmatpush1.xpose.msra.mxu0 0.0
    %1419 = vmatprep.subr.mxu0 0.0
    %1420 = vmatpush1.xpose.msra.mxu0 0.0
    %1421 = vmatprep.subr.mxu0 0.0
    %1422 = vmatpush1.xpose.msra.mxu0 0.0
    %1423 = vmatprep.subr.mxu0 0.0
    %1424 = vmatpush1.xpose.msra.mxu0 0.0
    %1425 = vmatprep.subr.mxu0 0.0
    %1426 = vmatpush1.xpose.msra.mxu0 0.0
    %1427 = vmatprep.subr.mxu0 0.0
    %1428 = vmatpush1.xpose.msra.mxu0 0.0
    %1429 = vmatprep.subr.mxu0 0.0
    %1430 = vmatpush1.xpose.msra.mxu0 0.0
    %1431 = vmatprep.subr.mxu0 0.0
    %1432 = vmatpush1.xpose.msra.mxu0 0.0
    %1433 = vmatprep.subr.mxu0 0.0
    %1434 = vmatpush1.xpose.msra.mxu0 0.0
    %1435 = vmatprep.subr.mxu0 0.0
    %1436 = vmatpush1.xpose.msra.mxu0 0.0
    %1437 = vmatprep.subr.mxu0 0.0
    %1438 = vmatpush1.xpose.msra.mxu0 0.0
    %1439 = vmatprep.subr.mxu0 0.0
    %1440 = vmatpush1.xpose.msra.mxu0 0.0
    %1441 = vmatprep.subr.mxu0 0.0
    %1442 = vmatpush1.xpose.msra.mxu0 0.0
    %1443 = vmatprep.subr.mxu0 0.0
    %1444 = vmatpush1.xpose.msra.mxu0 0.0
    %1445 = vmatprep.subr.mxu0 0.0
    %1446 = vmatpush1.xpose.msra.mxu0 0.0
    %1447 = vmatprep.mubr.f32.mxu0 0.0
    %1448 = vmatmul.mubr.f32.gmra.mrb[0].mxu0 %v1381
    %v1449 = vpop.f32.mrb[0].mxu0
    %v1450 = vadd.f32 0.0, %v1449
    %v1451 = vpop.f32.mrb[0].mxu0
    %1452 = vdwg.mxu0
    %v1454 = vsel %vm54, %v35, 0
    %1456 = vmatprep.subr.mxu0 0.0
    %1457 = vmatpush1.xpose.msra.mxu0 %v275
    %1458 = vmatprep.subr.mxu0 0.0
    %1459 = vmatpush1.xpose.msra.mxu0 0.0
    %1460 = vmatprep.subr.mxu0 0.0
    %1461 = vmatpush1.xpose.msra.mxu0 0.0
    %1462 = vmatprep.subr.mxu0 0.0
    %1463 = vmatpush1.xpose.msra.mxu0 0.0
    %1464 = vmatprep.subr.mxu0 0.0
    %1465 = vmatpush1.xpose.msra.mxu0 0.0
    %1466 = vmatprep.subr.mxu0 0.0
    %1467 = vmatpush1.xpose.msra.mxu0 0.0
    %1468 = vmatprep.subr.mxu0 0.0
    %1469 = vmatpush1.xpose.msra.mxu0 0.0
    %1470 = vmatprep.subr.mxu0 0.0
    %1471 = vmatpush1.xpose.msra.mxu0 0.0
    %1472 = vmatprep.subr.mxu0 0.0
    %1473 = vmatpush1.xpose.msra.mxu0 0.0
    %1474 = vmatprep.subr.mxu0 0.0
    %1475 = vmatpush1.xpose.msra.mxu0 0.0
    %1476 = vmatprep.subr.mxu0 0.0
    %1477 = vmatpush1.xpose.msra.mxu0 0.0
    %1478 = vmatprep.subr.mxu0 0.0
    %1479 = vmatpush1.xpose.msra.mxu0 0.0
    %1480 = vmatprep.subr.mxu0 0.0
    %1481 = vmatpush1.xpose.msra.mxu0 0.0
    %1482 = vmatprep.subr.mxu0 0.0
    %1483 = vmatpush1.xpose.msra.mxu0 0.0
    %1484 = vmatprep.subr.mxu0 0.0
    %1485 = vmatpush1.xpose.msra.mxu0 0.0
    %1486 = vmatprep.subr.mxu0 0.0
    %1487 = vmatpush1.xpose.msra.mxu0 0.0
    %1488 = vmatprep.subr.mxu0 0.0
    %1489 = vmatpush1.xpose.msra.mxu0 0.0
    %1490 = vmatprep.subr.mxu0 0.0
    %1491 = vmatpush1.xpose.msra.mxu0 0.0
    %1492 = vmatprep.subr.mxu0 0.0
    %1493 = vmatpush1.xpose.msra.mxu0 0.0
    %1494 = vmatprep.subr.mxu0 0.0
    %1495 = vmatpush1.xpose.msra.mxu0 0.0
    %1496 = vmatprep.subr.mxu0 0.0
    %1497 = vmatpush1.xpose.msra.mxu0 0.0
    %1498 = vmatprep.subr.mxu0 0.0
    %1499 = vmatpush1.xpose.msra.mxu0 0.0
    %1500 = vmatprep.subr.mxu0 0.0
    %1501 = vmatpush1.xpose.msra.mxu0 0.0
    %1502 = vmatprep.subr.mxu0 0.0
    %1503 = vmatpush1.xpose.msra.mxu0 0.0
    %1504 = vmatprep.subr.mxu0 0.0
    %1505 = vmatpush1.xpose.msra.mxu0 0.0
    %1506 = vmatprep.subr.mxu0 0.0
    %1507 = vmatpush1.xpose.msra.mxu0 0.0
    %1508 = vmatprep.subr.mxu0 0.0
    %1509 = vmatpush1.xpose.msra.mxu0 0.0
    %1510 = vmatprep.subr.mxu0 0.0
    %1511 = vmatpush1.xpose.msra.mxu0 0.0
    %1512 = vmatprep.subr.mxu0 0.0
    %1513 = vmatpush1.xpose.msra.mxu0 0.0
    %1514 = vmatprep.subr.mxu0 0.0
    %1515 = vmatpush1.xpose.msra.mxu0 0.0
    %1516 = vmatprep.subr.mxu0 0.0
    %1517 = vmatpush1.xpose.msra.mxu0 0.0
    %1518 = vmatprep.subr.mxu0 0.0
    %1519 = vmatpush1.xpose.msra.mxu0 0.0
    %1520 = vmatprep.mubr.f32.mxu0 0.0
    %1521 = vmatmul.mubr.f32.gmra.mrb[0].mxu0 %v1454
    %v1522 = vpop.f32.mrb[0].mxu0
    %v1523 = vadd.f32 0.0, %v1522
    %v1524 = vpop.f32.mrb[0].mxu0
    %1525 = vdwg.mxu0
    %v1527 = vsel %vm54, %v36, 0
    %1529 = vmatprep.subr.mxu0 0.0
    %1530 = vmatpush1.xpose.msra.mxu0 %v348
    %1531 = vmatprep.subr.mxu0 0.0
    %1532 = vmatpush1.xpose.msra.mxu0 0.0
    %1533 = vmatprep.subr.mxu0 0.0
    %1534 = vmatpush1.xpose.msra.mxu0 0.0
    %1535 = vmatprep.subr.mxu0 0.0
    %1536 = vmatpush1.xpose.msra.mxu0 0.0
    %1537 = vmatprep.subr.mxu0 0.0
    %1538 = vmatpush1.xpose.msra.mxu0 0.0
    %1539 = vmatprep.subr.mxu0 0.0
    %1540 = vmatpush1.xpose.msra.mxu0 0.0
    %1541 = vmatprep.subr.mxu0 0.0
    %1542 = vmatpush1.xpose.msra.mxu0 0.0
    %1543 = vmatprep.subr.mxu0 0.0
    %1544 = vmatpush1.xpose.msra.mxu0 0.0
    %1545 = vmatprep.subr.mxu0 0.0
    %1546 = vmatpush1.xpose.msra.mxu0 0.0
    %1547 = vmatprep.subr.mxu0 0.0
    %1548 = vmatpush1.xpose.msra.mxu0 0.0
    %1549 = vmatprep.subr.mxu0 0.0
    %1550 = vmatpush1.xpose.msra.mxu0 0.0
    %1551 = vmatprep.subr.mxu0 0.0
    %1552 = vmatpush1.xpose.msra.mxu0 0.0
    %1553 = vmatprep.subr.mxu0 0.0
    %1554 = vmatpush1.xpose.msra.mxu0 0.0
    %1555 = vmatprep.subr.mxu0 0.0
    %1556 = vmatpush1.xpose.msra.mxu0 0.0
    %1557 = vmatprep.subr.mxu0 0.0
    %1558 = vmatpush1.xpose.msra.mxu0 0.0
    %1559 = vmatprep.subr.mxu0 0.0
    %1560 = vmatpush1.xpose.msra.mxu0 0.0
    %1561 = vmatprep.subr.mxu0 0.0
    %1562 = vmatpush1.xpose.msra.mxu0 0.0
    %1563 = vmatprep.subr.mxu0 0.0
    %1564 = vmatpush1.xpose.msra.mxu0 0.0
    %1565 = vmatprep.subr.mxu0 0.0
    %1566 = vmatpush1.xpose.msra.mxu0 0.0
    %1567 = vmatprep.subr.mxu0 0.0
    %1568 = vmatpush1.xpose.msra.mxu0 0.0
    %1569 = vmatprep.subr.mxu0 0.0
    %1570 = vmatpush1.xpose.msra.mxu0 0.0
    %1571 = vmatprep.subr.mxu0 0.0
    %1572 = vmatpush1.xpose.msra.mxu0 0.0
    %1573 = vmatprep.subr.mxu0 0.0
    %1574 = vmatpush1.xpose.msra.mxu0 0.0
    %1575 = vmatprep.subr.mxu0 0.0
    %1576 = vmatpush1.xpose.msra.mxu0 0.0
    %1577 = vmatprep.subr.mxu0 0.0
    %1578 = vmatpush1.xpose.msra.mxu0 0.0
    %1579 = vmatprep.subr.mxu0 0.0
    %1580 = vmatpush1.xpose.msra.mxu0 0.0
    %1581 = vmatprep.subr.mxu0 0.0
    %1582 = vmatpush1.xpose.msra.mxu0 0.0
    %1583 = vmatprep.subr.mxu0 0.0
    %1584 = vmatpush1.xpose.msra.mxu0 0.0
    %1585 = vmatprep.subr.mxu0 0.0
    %1586 = vmatpush1.xpose.msra.mxu0 0.0
    %1587 = vmatprep.subr.mxu0 0.0
    %1588 = vmatpush1.xpose.msra.mxu0 0.0
    %1589 = vmatprep.subr.mxu0 0.0
    %1590 = vmatpush1.xpose.msra.mxu0 0.0
    %1591 = vmatprep.subr.mxu0 0.0
    %1592 = vmatpush1.xpose.msra.mxu0 0.0
    %1593 = vmatprep.mubr.f32.mxu0 0.0
    %1594 = vmatmul.mubr.f32.gmra.mrb[0].mxu0 %v1527
    %v1595 = vpop.f32.mrb[0].mxu0
    %v1596 = vadd.f32 0.0, %v1595
    %v1597 = vpop.f32.mrb[0].mxu0
    %1598 = vdwg.mxu0
    %v1600 = vsel %vm54, %v37, 0
    %1602 = vmatprep.subr.mxu0 0.0
    %1603 = vmatpush1.xpose.msra.mxu0 %v421
    %1604 = vmatprep.subr.mxu0 0.0
    %1605 = vmatpush1.xpose.msra.mxu0 0.0
    %1606 = vmatprep.subr.mxu0 0.0
    %1607 = vmatpush1.xpose.msra.mxu0 0.0
    %1608 = vmatprep.subr.mxu0 0.0
    %1609 = vmatpush1.xpose.msra.mxu0 0.0
    %1610 = vmatprep.subr.mxu0 0.0
    %1611 = vmatpush1.xpose.msra.mxu0 0.0
    %1612 = vmatprep.subr.mxu0 0.0
    %1613 = vmatpush1.xpose.msra.mxu0 0.0
    %1614 = vmatprep.subr.mxu0 0.0
    %1615 = vmatpush1.xpose.msra.mxu0 0.0
    %1616 = vmatprep.subr.mxu0 0.0
    %1617 = vmatpush1.xpose.msra.mxu0 0.0
    %1618 = vmatprep.subr.mxu0 0.0
    %1619 = vmatpush1.xpose.msra.mxu0 0.0
    %1620 = vmatprep.subr.mxu0 0.0
    %1621 = vmatpush1.xpose.msra.mxu0 0.0
    %1622 = vmatprep.subr.mxu0 0.0
    %1623 = vmatpush1.xpose.msra.mxu0 0.0
    %1624 = vmatprep.subr.mxu0 0.0
    %1625 = vmatpush1.xpose.msra.mxu0 0.0
    %1626 = vmatprep.subr.mxu0 0.0
    %1627 = vmatpush1.xpose.msra.mxu0 0.0
    %1628 = vmatprep.subr.mxu0 0.0
    %1629 = vmatpush1.xpose.msra.mxu0 0.0
    %1630 = vmatprep.subr.mxu0 0.0
    %1631 = vmatpush1.xpose.msra.mxu0 0.0
    %1632 = vmatprep.subr.mxu0 0.0
    %1633 = vmatpush1.xpose.msra.mxu0 0.0
    %1634 = vmatprep.subr.mxu0 0.0
    %1635 = vmatpush1.xpose.msra.mxu0 0.0
    %1636 = vmatprep.subr.mxu0 0.0
    %1637 = vmatpush1.xpose.msra.mxu0 0.0
    %1638 = vmatprep.subr.mxu0 0.0
    %1639 = vmatpush1.xpose.msra.mxu0 0.0
    %1640 = vmatprep.subr.mxu0 0.0
    %1641 = vmatpush1.xpose.msra.mxu0 0.0
    %1642 = vmatprep.subr.mxu0 0.0
    %1643 = vmatpush1.xpose.msra.mxu0 0.0
    %1644 = vmatprep.subr.mxu0 0.0
    %1645 = vmatpush1.xpose.msra.mxu0 0.0
    %1646 = vmatprep.subr.mxu0 0.0
    %1647 = vmatpush1.xpose.msra.mxu0 0.0
    %1648 = vmatprep.subr.mxu0 0.0
    %1649 = vmatpush1.xpose.msra.mxu0 0.0
    %1650 = vmatprep.subr.mxu0 0.0
    %1651 = vmatpush1.xpose.msra.mxu0 0.0
    %1652 = vmatprep.subr.mxu0 0.0
    %1653 = vmatpush1.xpose.msra.mxu0 0.0
    %1654 = vmatprep.subr.mxu0 0.0
    %1655 = vmatpush1.xpose.msra.mxu0 0.0
    %1656 = vmatprep.subr.mxu0 0.0
    %1657 = vmatpush1.xpose.msra.mxu0 0.0
    %1658 = vmatprep.subr.mxu0 0.0
    %1659 = vmatpush1.xpose.msra.mxu0 0.0
    %1660 = vmatprep.subr.mxu0 0.0
    %1661 = vmatpush1.xpose.msra.mxu0 0.0
    %1662 = vmatprep.subr.mxu0 0.0
    %1663 = vmatpush1.xpose.msra.mxu0 0.0
    %1664 = vmatprep.subr.mxu0 0.0
    %1665 = vmatpush1.xpose.msra.mxu0 0.0
    %1666 = vmatprep.mubr.f32.mxu0 0.0
    %1667 = vmatmul.mubr.f32.gmra.mrb[0].mxu0 %v1600
    %v1668 = vpop.f32.mrb[0].mxu0
    %v1669 = vadd.f32 0.0, %v1668
    %v1670 = vpop.f32.mrb[0].mxu0
    %1671 = vdwg.mxu0
    %v1673 = vsel %vm54, %v38, 0
    %1675 = vmatprep.subr.mxu0 0.0
    %1676 = vmatpush1.xpose.msra.mxu0 %v494
    %1677 = vmatprep.subr.mxu0 0.0
    %1678 = vmatpush1.xpose.msra.mxu0 0.0
    %1679 = vmatprep.subr.mxu0 0.0
    %1680 = vmatpush1.xpose.msra.mxu0 0.0
    %1681 = vmatprep.subr.mxu0 0.0
    %1682 = vmatpush1.xpose.msra.mxu0 0.0
    %1683 = vmatprep.subr.mxu0 0.0
    %1684 = vmatpush1.xpose.msra.mxu0 0.0
    %1685 = vmatprep.subr.mxu0 0.0
    %1686 = vmatpush1.xpose.msra.mxu0 0.0
    %1687 = vmatprep.subr.mxu0 0.0
    %1688 = vmatpush1.xpose.msra.mxu0 0.0
    %1689 = vmatprep.subr.mxu0 0.0
    %1690 = vmatpush1.xpose.msra.mxu0 0.0
    %1691 = vmatprep.subr.mxu0 0.0
    %1692 = vmatpush1.xpose.msra.mxu0 0.0
    %1693 = vmatprep.subr.mxu0 0.0
    %1694 = vmatpush1.xpose.msra.mxu0 0.0
    %1695 = vmatprep.subr.mxu0 0.0
    %1696 = vmatpush1.xpose.msra.mxu0 0.0
    %1697 = vmatprep.subr.mxu0 0.0
    %1698 = vmatpush1.xpose.msra.mxu0 0.0
    %1699 = vmatprep.subr.mxu0 0.0
    %1700 = vmatpush1.xpose.msra.mxu0 0.0
    %1701 = vmatprep.subr.mxu0 0.0
    %1702 = vmatpush1.xpose.msra.mxu0 0.0
    %1703 = vmatprep.subr.mxu0 0.0
    %1704 = vmatpush1.xpose.msra.mxu0 0.0
    %1705 = vmatprep.subr.mxu0 0.0
    %1706 = vmatpush1.xpose.msra.mxu0 0.0
    %1707 = vmatprep.subr.mxu0 0.0
    %1708 = vmatpush1.xpose.msra.mxu0 0.0
    %1709 = vmatprep.subr.mxu0 0.0
    %1710 = vmatpush1.xpose.msra.mxu0 0.0
    %1711 = vmatprep.subr.mxu0 0.0
    %1712 = vmatpush1.xpose.msra.mxu0 0.0
    %1713 = vmatprep.subr.mxu0 0.0
    %1714 = vmatpush1.xpose.msra.mxu0 0.0
    %1715 = vmatprep.subr.mxu0 0.0
    %1716 = vmatpush1.xpose.msra.mxu0 0.0
    %1717 = vmatprep.subr.mxu0 0.0
    %1718 = vmatpush1.xpose.msra.mxu0 0.0
    %1719 = vmatprep.subr.mxu0 0.0
    %1720 = vmatpush1.xpose.msra.mxu0 0.0
    %1721 = vmatprep.subr.mxu0 0.0
    %1722 = vmatpush1.xpose.msra.mxu0 0.0
    %1723 = vmatprep.subr.mxu0 0.0
    %1724 = vmatpush1.xpose.msra.mxu0 0.0
    %1725 = vmatprep.subr.mxu0 0.0
    %1726 = vmatpush1.xpose.msra.mxu0 0.0
    %1727 = vmatprep.subr.mxu0 0.0
    %1728 = vmatpush1.xpose.msra.mxu0 0.0
    %1729 = vmatprep.subr.mxu0 0.0
    %1730 = vmatpush1.xpose.msra.mxu0 0.0
    %1731 = vmatprep.subr.mxu0 0.0
    %1732 = vmatpush1.xpose.msra.mxu0 0.0
    %1733 = vmatprep.subr.mxu0 0.0
    %1734 = vmatpush1.xpose.msra.mxu0 0.0
    %1735 = vmatprep.subr.mxu0 0.0
    %1736 = vmatpush1.xpose.msra.mxu0 0.0
    %1737 = vmatprep.subr.mxu0 0.0
    %1738 = vmatpush1.xpose.msra.mxu0 0.0
    %1739 = vmatprep.mubr.f32.mxu0 0.0
    %1740 = vmatmul.mubr.f32.gmra.mrb[0].mxu0 %v1673
    %v1741 = vpop.f32.mrb[0].mxu0
    %v1742 = vadd.f32 0.0, %v1741
    %v1743 = vpop.f32.mrb[0].mxu0
    %1744 = vdwg.mxu0
    %v1746 = vsel %vm54, %v39, 0
    %1748 = vmatprep.subr.mxu0 0.0
    %1749 = vmatpush1.xpose.msra.mxu0 %v567
    %1750 = vmatprep.subr.mxu0 0.0
    %1751 = vmatpush1.xpose.msra.mxu0 0.0
    %1752 = vmatprep.subr.mxu0 0.0
    %1753 = vmatpush1.xpose.msra.mxu0 0.0
    %1754 = vmatprep.subr.mxu0 0.0
    %1755 = vmatpush1.xpose.msra.mxu0 0.0
    %1756 = vmatprep.subr.mxu0 0.0
    %1757 = vmatpush1.xpose.msra.mxu0 0.0
    %1758 = vmatprep.subr.mxu0 0.0
    %1759 = vmatpush1.xpose.msra.mxu0 0.0
    %1760 = vmatprep.subr.mxu0 0.0
    %1761 = vmatpush1.xpose.msra.mxu0 0.0
    %1762 = vmatprep.subr.mxu0 0.0
    %1763 = vmatpush1.xpose.msra.mxu0 0.0
    %1764 = vmatprep.subr.mxu0 0.0
    %1765 = vmatpush1.xpose.msra.mxu0 0.0
    %1766 = vmatprep.subr.mxu0 0.0
    %1767 = vmatpush1.xpose.msra.mxu0 0.0
    %1768 = vmatprep.subr.mxu0 0.0
    %1769 = vmatpush1.xpose.msra.mxu0 0.0
    %1770 = vmatprep.subr.mxu0 0.0
    %1771 = vmatpush1.xpose.msra.mxu0 0.0
    %1772 = vmatprep.subr.mxu0 0.0
    %1773 = vmatpush1.xpose.msra.mxu0 0.0
    %1774 = vmatprep.subr.mxu0 0.0
    %1775 = vmatpush1.xpose.msra.mxu0 0.0
    %1776 = vmatprep.subr.mxu0 0.0
    %1777 = vmatpush1.xpose.msra.mxu0 0.0
    %1778 = vmatprep.subr.mxu0 0.0
    %1779 = vmatpush1.xpose.msra.mxu0 0.0
    %1780 = vmatprep.subr.mxu0 0.0
    %1781 = vmatpush1.xpose.msra.mxu0 0.0
    %1782 = vmatprep.subr.mxu0 0.0
    %1783 = vmatpush1.xpose.msra.mxu0 0.0
    %1784 = vmatprep.subr.mxu0 0.0
    %1785 = vmatpush1.xpose.msra.mxu0 0.0
    %1786 = vmatprep.subr.mxu0 0.0
    %1787 = vmatpush1.xpose.msra.mxu0 0.0
    %1788 = vmatprep.subr.mxu0 0.0
    %1789 = vmatpush1.xpose.msra.mxu0 0.0
    %1790 = vmatprep.subr.mxu0 0.0
    %1791 = vmatpush1.xpose.msra.mxu0 0.0
    %1792 = vmatprep.subr.mxu0 0.0
    %1793 = vmatpush1.xpose.msra.mxu0 0.0
    %1794 = vmatprep.subr.mxu0 0.0
    %1795 = vmatpush1.xpose.msra.mxu0 0.0
    %1796 = vmatprep.subr.mxu0 0.0
    %1797 = vmatpush1.xpose.msra.mxu0 0.0
    %1798 = vmatprep.subr.mxu0 0.0
    %1799 = vmatpush1.xpose.msra.mxu0 0.0
    %1800 = vmatprep.subr.mxu0 0.0
    %1801 = vmatpush1.xpose.msra.mxu0 0.0
    %1802 = vmatprep.subr.mxu0 0.0
    %1803 = vmatpush1.xpose.msra.mxu0 0.0
    %1804 = vmatprep.subr.mxu0 0.0
    %1805 = vmatpush1.xpose.msra.mxu0 0.0
    %1806 = vmatprep.subr.mxu0 0.0
    %1807 = vmatpush1.xpose.msra.mxu0 0.0
    %1808 = vmatprep.subr.mxu0 0.0
    %1809 = vmatpush1.xpose.msra.mxu0 0.0
    %1810 = vmatprep.subr.mxu0 0.0
    %1811 = vmatpush1.xpose.msra.mxu0 0.0
    %1812 = vmatprep.mubr.f32.mxu0 0.0
    %1813 = vmatmul.mubr.f32.gmra.mrb[0].mxu0 %v1746
    %v1814 = vpop.f32.mrb[0].mxu0
    %v1815 = vadd.f32 0.0, %v1814
    %v1816 = vpop.f32.mrb[0].mxu0
    %1817 = vdwg.mxu0
    %vm1818 = vcmask 13312
    %v1819 = vsel %vm1818, %v639, 0.0
    %1820 = vadd.xlane.f32.xlu0 %v1819
    %v1821 = vpop.xlane.xlu0 %1820
    %v1822 = vsel %vm1818, %v640, 0.0
    %1823 = vadd.xlane.f32.xlu0 %v1822
    %v1824 = vpop.xlane.xlu0 %1823
    %v1825 = vsel %vm1818, %v641, 0.0
    %1826 = vadd.xlane.f32.xlu0 %v1825
    %v1827 = vpop.xlane.xlu0 %1826
    %v1828 = vsel %vm1818, %v642, 0.0
    %1829 = vadd.xlane.f32.xlu0 %v1828
    %v1830 = vpop.xlane.xlu0 %1829
    %v1831 = vsel %vm1818, %v643, 0.0
    %1832 = vadd.xlane.f32.xlu0 %v1831
    %v1833 = vpop.xlane.xlu0 %1832
    %v1834 = vsel %vm1818, %v644, 0.0
    %1835 = vadd.xlane.f32.xlu0 %v1834
    %v1836 = vpop.xlane.xlu0 %1835
    %v1837 = vsel %vm1818, %v645, 0.0
    %1838 = vadd.xlane.f32.xlu0 %v1837
    %v1839 = vpop.xlane.xlu0 %1838
    %v1840 = vsel %vm1818, %v646, 0.0
    %1841 = vadd.xlane.f32.xlu0 %v1840
    %v1842 = vpop.xlane.xlu0 %1841
    %v1843 = vmul.f32 %v32, %v46
    %v1844 = vmul.f32 %v33, %v47
    %v1845 = vmul.f32 %v34, %v48
    %v1846 = vmul.f32 %v35, %v49
    %v1847 = vmul.f32 %v36, %v50
    %v1848 = vmul.f32 %v37, %v51
    %v1849 = vmul.f32 %v38, %v52
    %v1850 = vmul.f32 %v39, %v53
    %v1851 = vsel %vm1818, %v1843, 0.0
    %1852 = vadd.xlane.f32.xlu0 %v1851
    %v1853 = vpop.xlane.xlu0 %1852
    %v1854 = vsel %vm1818, %v1844, 0.0
    %1855 = vadd.xlane.f32.xlu0 %v1854
    %v1856 = vpop.xlane.xlu0 %1855
    %v1857 = vsel %vm1818, %v1845, 0.0
    %1858 = vadd.xlane.f32.xlu0 %v1857
    %v1859 = vpop.xlane.xlu0 %1858
    %v1860 = vsel %vm1818, %v1846, 0.0
    %1861 = vadd.xlane.f32.xlu0 %v1860
    %v1862 = vpop.xlane.xlu0 %1861
    %v1863 = vsel %vm1818, %v1847, 0.0
    %1864 = vadd.xlane.f32.xlu0 %v1863
    %v1865 = vpop.xlane.xlu0 %1864
    %v1866 = vsel %vm1818, %v1848, 0.0
    %1867 = vadd.xlane.f32.xlu0 %v1866
    %v1868 = vpop.xlane.xlu0 %1867
    %v1869 = vsel %vm1818, %v1849, 0.0
    %1870 = vadd.xlane.f32.xlu0 %v1869
    %v1871 = vpop.xlane.xlu0 %1870
    %v1872 = vsel %vm1818, %v1850, 0.0
    %1873 = vadd.xlane.f32.xlu0 %v1872
    %v1874 = vpop.xlane.xlu0 %1873
    %v1875 = vmul.f32 %v32, %v32
    %v1876 = vmul.f32 %v33, %v33
    %v1877 = vmul.f32 %v34, %v34
    %v1878 = vmul.f32 %v35, %v35
    %v1879 = vmul.f32 %v36, %v36
    %v1880 = vmul.f32 %v37, %v37
    %v1881 = vmul.f32 %v38, %v38
    %v1882 = vmul.f32 %v39, %v39
    %v1883 = vsel %vm1818, %v1875, 0.0
    %1884 = vadd.xlane.f32.xlu0 %v1883
    %v1885 = vpop.xlane.xlu0 %1884
    %v1886 = vsel %vm1818, %v1876, 0.0
    %1887 = vadd.xlane.f32.xlu0 %v1886
    %v1888 = vpop.xlane.xlu0 %1887
    %v1889 = vsel %vm1818, %v1877, 0.0
    %1890 = vadd.xlane.f32.xlu0 %v1889
    %v1891 = vpop.xlane.xlu0 %1890
    %v1892 = vsel %vm1818, %v1878, 0.0
    %1893 = vadd.xlane.f32.xlu0 %v1892
    %v1894 = vpop.xlane.xlu0 %1893
    %v1895 = vsel %vm1818, %v1879, 0.0
    %1896 = vadd.xlane.f32.xlu0 %v1895
    %v1897 = vpop.xlane.xlu0 %1896
    %v1898 = vsel %vm1818, %v1880, 0.0
    %1899 = vadd.xlane.f32.xlu0 %v1898
    %v1900 = vpop.xlane.xlu0 %1899
    %v1901 = vsel %vm1818, %v1881, 0.0
    %1902 = vadd.xlane.f32.xlu0 %v1901
    %v1903 = vpop.xlane.xlu0 %1902
    %v1904 = vsel %vm1818, %v1882, 0.0
    %1905 = vadd.xlane.f32.xlu0 %v1904
    %v1906 = vpop.xlane.xlu0 %1905
    %v1907 = vrsqrt.pop %v1885
    %v1908 = vmul.f32 %v1885, %v1907
    %vm1909 = vcmp.eq.f32.partialorder %v1885, inf
    %v1910 = vsel %vm1909, %v1885, %v1908
    %vm1911 = vcmp.eq.f32.partialorder %v1885, 0.0
    %v1912 = vand.u32 %v1885, 2147483648
    %v1913 = vsel %vm1911, %v1912, %v1910
    %v1914 = vrsqrt.pop %v1888
    %v1915 = vmul.f32 %v1888, %v1914
    %vm1916 = vcmp.eq.f32.partialorder %v1888, inf
    %v1917 = vsel %vm1916, %v1888, %v1915
    %vm1918 = vcmp.eq.f32.partialorder %v1888, 0.0
    %v1919 = vand.u32 %v1888, 2147483648
    %v1920 = vsel %vm1918, %v1919, %v1917
    %v1921 = vrsqrt.pop %v1891
    %v1922 = vmul.f32 %v1891, %v1921
    %vm1923 = vcmp.eq.f32.partialorder %v1891, inf
    %v1924 = vsel %vm1923, %v1891, %v1922
    %vm1925 = vcmp.eq.f32.partialorder %v1891, 0.0
    %v1926 = vand.u32 %v1891, 2147483648
    %v1927 = vsel %vm1925, %v1926, %v1924
    %v1928 = vrsqrt.pop %v1894
    %v1929 = vmul.f32 %v1894, %v1928
    %vm1930 = vcmp.eq.f32.partialorder %v1894, inf
    %v1931 = vsel %vm1930, %v1894, %v1929
    %vm1932 = vcmp.eq.f32.partialorder %v1894, 0.0
    %v1933 = vand.u32 %v1894, 2147483648
    %v1934 = vsel %vm1932, %v1933, %v1931
    %v1935 = vrsqrt.pop %v1897
    %v1936 = vmul.f32 %v1897, %v1935
    %vm1937 = vcmp.eq.f32.partialorder %v1897, inf
    %v1938 = vsel %vm1937, %v1897, %v1936
    %vm1939 = vcmp.eq.f32.partialorder %v1897, 0.0
    %v1940 = vand.u32 %v1897, 2147483648
    %v1941 = vsel %vm1939, %v1940, %v1938
    %v1942 = vrsqrt.pop %v1900
    %v1943 = vmul.f32 %v1900, %v1942
    %vm1944 = vcmp.eq.f32.partialorder %v1900, inf
    %v1945 = vsel %vm1944, %v1900, %v1943
    %vm1946 = vcmp.eq.f32.partialorder %v1900, 0.0
    %v1947 = vand.u32 %v1900, 2147483648
    %v1948 = vsel %vm1946, %v1947, %v1945
    %v1949 = vrsqrt.pop %v1903
    %v1950 = vmul.f32 %v1903, %v1949
    %vm1951 = vcmp.eq.f32.partialorder %v1903, inf
    %v1952 = vsel %vm1951, %v1903, %v1950
    %vm1953 = vcmp.eq.f32.partialorder %v1903, 0.0
    %v1954 = vand.u32 %v1903, 2147483648
    %v1955 = vsel %vm1953, %v1954, %v1952
    %v1956 = vrsqrt.pop %v1906
    %v1957 = vmul.f32 %v1906, %v1956
    %vm1958 = vcmp.eq.f32.partialorder %v1906, inf
    %v1959 = vsel %vm1958, %v1906, %v1957
    %vm1960 = vcmp.eq.f32.partialorder %v1906, 0.0
    %v1961 = vand.u32 %v1906, 2147483648
    %v1962 = vsel %vm1960, %v1961, %v1959
    %v1963 = vadd.f32 %v1821, %v720
    %v1964 = vadd.f32 %v1824, %v793
    %v1965 = vadd.f32 %v1827, %v866
    %v1966 = vadd.f32 %v1830, %v939
    %v1967 = vadd.f32 %v1833, %v1012
    %v1968 = vadd.f32 %v1836, %v1085
    %v1969 = vadd.f32 %v1839, %v1158
    %v1970 = vadd.f32 %v1842, %v1231
    %v1971 = vmul.f32 %v125, 2.0
    %v1972 = vmul.f32 %v198, 2.0
    %v1973 = vmul.f32 %v271, 2.0
    %v1974 = vmul.f32 %v344, 2.0
    %v1975 = vmul.f32 %v417, 2.0
    %v1976 = vmul.f32 %v490, 2.0
    %v1977 = vmul.f32 %v563, 2.0
    %v1978 = vmul.f32 %v636, 2.0
    %v1979 = vsub.f32 %v1963, %v1971
    %v1980 = vsub.f32 %v1964, %v1972
    %v1981 = vsub.f32 %v1965, %v1973
    %v1982 = vsub.f32 %v1966, %v1974
    %v1983 = vsub.f32 %v1967, %v1975
    %v1984 = vsub.f32 %v1968, %v1976
    %v1985 = vsub.f32 %v1969, %v1977
    %v1986 = vsub.f32 %v1970, %v1978
    %v1987 = vmax.f32 %v1979, 0.0
    %v1988 = vmax.f32 %v1980, 0.0
    %v1989 = vmax.f32 %v1981, 0.0
    %v1990 = vmax.f32 %v1982, 0.0
    %v1991 = vmax.f32 %v1983, 0.0
    %v1992 = vmax.f32 %v1984, 0.0
    %v1993 = vmax.f32 %v1985, 0.0
    %v1994 = vmax.f32 %v1986, 0.0
    %v1995 = vrsqrt.pop %v1987
    %v1996 = vmul.f32 %v1987, %v1995
    %vm1997 = vcmp.eq.f32.partialorder %v1987, inf
    %v1998 = vsel %vm1997, %v1987, %v1996
    %vm1999 = vcmp.eq.f32.partialorder %v1987, 0.0
    %v2000 = vand.u32 %v1987, 2147483648
    %v2001 = vsel %vm1999, %v2000, %v1998
    %v2002 = vrsqrt.pop %v1988
    %v2003 = vmul.f32 %v1988, %v2002
    %vm2004 = vcmp.eq.f32.partialorder %v1988, inf
    %v2005 = vsel %vm2004, %v1988, %v2003
    %vm2006 = vcmp.eq.f32.partialorder %v1988, 0.0
    %v2007 = vand.u32 %v1988, 2147483648
    %v2008 = vsel %vm2006, %v2007, %v2005
    %v2009 = vrsqrt.pop %v1989
    %v2010 = vmul.f32 %v1989, %v2009
    %vm2011 = vcmp.eq.f32.partialorder %v1989, inf
    %v2012 = vsel %vm2011, %v1989, %v2010
    %vm2013 = vcmp.eq.f32.partialorder %v1989, 0.0
    %v2014 = vand.u32 %v1989, 2147483648
    %v2015 = vsel %vm2013, %v2014, %v2012
    %v2016 = vrsqrt.pop %v1990
    %v2017 = vmul.f32 %v1990, %v2016
    %vm2018 = vcmp.eq.f32.partialorder %v1990, inf
    %v2019 = vsel %vm2018, %v1990, %v2017
    %vm2020 = vcmp.eq.f32.partialorder %v1990, 0.0
    %v2021 = vand.u32 %v1990, 2147483648
    %v2022 = vsel %vm2020, %v2021, %v2019
    %v2023 = vrsqrt.pop %v1991
    %v2024 = vmul.f32 %v1991, %v2023
    %vm2025 = vcmp.eq.f32.partialorder %v1991, inf
    %v2026 = vsel %vm2025, %v1991, %v2024
    %vm2027 = vcmp.eq.f32.partialorder %v1991, 0.0
    %v2028 = vand.u32 %v1991, 2147483648
    %v2029 = vsel %vm2027, %v2028, %v2026
    %v2030 = vrsqrt.pop %v1992
    %v2031 = vmul.f32 %v1992, %v2030
    %vm2032 = vcmp.eq.f32.partialorder %v1992, inf
    %v2033 = vsel %vm2032, %v1992, %v2031
    %vm2034 = vcmp.eq.f32.partialorder %v1992, 0.0
    %v2035 = vand.u32 %v1992, 2147483648
    %v2036 = vsel %vm2034, %v2035, %v2033
    %v2037 = vrsqrt.pop %v1993
    %v2038 = vmul.f32 %v1993, %v2037
    %vm2039 = vcmp.eq.f32.partialorder %v1993, inf
    %v2040 = vsel %vm2039, %v1993, %v2038
    %vm2041 = vcmp.eq.f32.partialorder %v1993, 0.0
    %v2042 = vand.u32 %v1993, 2147483648
    %v2043 = vsel %vm2041, %v2042, %v2040
    %v2044 = vrsqrt.pop %v1994
    %v2045 = vmul.f32 %v1994, %v2044
    %vm2046 = vcmp.eq.f32.partialorder %v1994, inf
    %v2047 = vsel %vm2046, %v1994, %v2045
    %vm2048 = vcmp.eq.f32.partialorder %v1994, 0.0
    %v2049 = vand.u32 %v1994, 2147483648
    %v2050 = vsel %vm2048, %v2049, %v2047
    %v2051 = vsub.f32 %v1304, %v1853
    %v2052 = vsub.f32 %v1377, %v1856
    %v2053 = vsub.f32 %v1450, %v1859
    %v2054 = vsub.f32 %v1523, %v1862
    %v2055 = vsub.f32 %v1596, %v1865
    %v2056 = vsub.f32 %v1669, %v1868
    %v2057 = vsub.f32 %v1742, %v1871
    %v2058 = vsub.f32 %v1815, %v1874
    %v2059 = vlaneseq
    %v2060 = vshrl.u32 %v2059, 7
    %v2061 = vlaneseq
    %v2062 = vand.u32 %v2061, 127
    %vm2063 = vcmp.eq.s32.totalorder %v2060, %v2062
    %v2064 = vsel %vm2063, 1, 0
    %v2065 = vcvt.s32.f32 %v2064
    %v2066 = vmul.f32 %v1913, %v2001
    %v2067 = vmul.f32 %v1920, %v2008
    %v2068 = vmul.f32 %v1927, %v2015
    %v2069 = vmul.f32 %v1934, %v2022
    %v2070 = vmul.f32 %v1941, %v2029
    %v2071 = vmul.f32 %v1948, %v2036
    %v2072 = vmul.f32 %v1955, %v2043
    %v2073 = vmul.f32 %v1962, %v2050
    %v2074 = vmax.f32 %v2066, 1e-08
    %v2075 = vmax.f32 %v2067, 1e-08
    %v2076 = vmax.f32 %v2068, 1e-08
    %v2077 = vmax.f32 %v2069, 1e-08
    %v2078 = vmax.f32 %v2070, 1e-08
    %v2079 = vmax.f32 %v2071, 1e-08
    %v2080 = vmax.f32 %v2072, 1e-08
    %v2081 = vmax.f32 %v2073, 1e-08
    %v2082 = vrcp.pop %v2074
    %v2083 = vmul.f32 %v2051, %v2082
    %v2084 = vrcp.pop %v2075
    %v2085 = vmul.f32 %v2052, %v2084
    %v2086 = vrcp.pop %v2076
    %v2087 = vmul.f32 %v2053, %v2086
    %v2088 = vrcp.pop %v2077
    %v2089 = vmul.f32 %v2054, %v2088
    %v2090 = vrcp.pop %v2078
    %v2091 = vmul.f32 %v2055, %v2090
    %v2092 = vrcp.pop %v2079
    %v2093 = vmul.f32 %v2056, %v2092
    %v2094 = vrcp.pop %v2080
    %v2095 = vmul.f32 %v2057, %v2094
    %v2096 = vrcp.pop %v2081
    %v2097 = vmul.f32 %v2058, %v2096
    %v2098 = vadd.f32 %v2083, %v2065
    %v2099 = vadd.f32 %v2085, %v2065
    %v2100 = vadd.f32 %v2087, %v2065
    %v2101 = vadd.f32 %v2089, %v2065
    %v2102 = vadd.f32 %v2091, %v2065
    %v2103 = vadd.f32 %v2093, %v2065
    %v2104 = vadd.f32 %v2095, %v2065
    %v2105 = vadd.f32 %v2097, %v2065
    %v2106 = vmax.f32 %v2098, -1.0
    %v2107 = vmax.f32 %v2099, -1.0
    %v2108 = vmax.f32 %v2100, -1.0
    %v2109 = vmax.f32 %v2101, -1.0
    %v2110 = vmax.f32 %v2102, -1.0
    %v2111 = vmax.f32 %v2103, -1.0
    %v2112 = vmax.f32 %v2104, -1.0
    %v2113 = vmax.f32 %v2105, -1.0
    %v2114 = vmin.f32 %v2106, 1.0
    %v2115 = vmin.f32 %v2107, 1.0
    %v2116 = vmin.f32 %v2108, 1.0
    %v2117 = vmin.f32 %v2109, 1.0
    %v2118 = vmin.f32 %v2110, 1.0
    %v2119 = vmin.f32 %v2111, 1.0
    %v2120 = vmin.f32 %v2112, 1.0
    %v2121 = vmin.f32 %v2113, 1.0
    %vm2122 = vcmp.gt.f32.partialorder %v2114, 0.9848077
    %vm2123 = vcmp.gt.f32.partialorder %v2115, 0.9848077
    %vm2124 = vcmp.gt.f32.partialorder %v2116, 0.9848077
    %vm2125 = vcmp.gt.f32.partialorder %v2117, 0.9848077
    %vm2126 = vcmp.gt.f32.partialorder %v2118, 0.9848077
    %vm2127 = vcmp.gt.f32.partialorder %v2119, 0.9848077
    %vm2128 = vcmp.gt.f32.partialorder %v2120, 0.9848077
    %vm2129 = vcmp.gt.f32.partialorder %v2121, 0.9848077
    %vm2130 = vcmp.ge.f32.partialorder %v2001, 5.0
    %vm2131 = vcmp.ge.f32.partialorder %v2008, 5.0
    %vm2132 = vcmp.ge.f32.partialorder %v2015, 5.0
    %vm2133 = vcmp.ge.f32.partialorder %v2022, 5.0
    %vm2134 = vcmp.ge.f32.partialorder %v2029, 5.0
    %vm2135 = vcmp.ge.f32.partialorder %v2036, 5.0
    %vm2136 = vcmp.ge.f32.partialorder %v2043, 5.0
    %vm2137 = vcmp.ge.f32.partialorder %v2050, 5.0
    %vm2138 = vmor %vm2130, %vm2122
    %vm2139 = vmor %vm2131, %vm2123
    %vm2140 = vmor %vm2132, %vm2124
    %vm2141 = vmor %vm2133, %vm2125
    %vm2142 = vmor %vm2134, %vm2126
    %vm2143 = vmor %vm2135, %vm2127
    %vm2144 = vmor %vm2136, %vm2128
    %vm2145 = vmor %vm2137, %vm2129
    %v2146 = vsel %vm2138, 1.0, 0.0
    %v2147 = vsel %vm2139, 1.0, 0.0
    %v2148 = vsel %vm2140, 1.0, 0.0
    %v2149 = vsel %vm2141, 1.0, 0.0
    %v2150 = vsel %vm2142, 1.0, 0.0
    %v2151 = vsel %vm2143, 1.0, 0.0
    %v2152 = vsel %vm2144, 1.0, 0.0
    %v2153 = vsel %vm2145, 1.0, 0.0
    %v2154 = vld [vmem:[%s3] sm:$0xff]
    %v2155 = vld [vmem:[%s3 + $0x8] sm:$0xff]
    %v2156 = vld [vmem:[%s3 + $0x10] sm:$0xff]
    %v2157 = vld [vmem:[%s3 + $0x18] sm:$0xff]
    %v2158 = vld [vmem:[%s3 + $0x20] sm:$0xff]
    %v2159 = vld [vmem:[%s3 + $0x28] sm:$0xff]
    %2161 = vrot.lane.b32.xlu0 %v40, 127
    %v2162 = vpop.permute.xlu0 %2161
    %v2163 = vsel %vm54, %v2162, 0
    %2165 = vmatprep.subr.mxu0 0.0
    %2166 = vmatpush1.xpose.msra.mxu0 %v2163
    %2167 = vmatprep.subr.mxu0 0.0
    %2168 = vmatpush1.xpose.msra.mxu0 0.0
    %2169 = vmatprep.subr.mxu0 0.0
    %2170 = vmatpush1.xpose.msra.mxu0 0.0
    %2171 = vmatprep.subr.mxu0 0.0
    %2172 = vmatpush1.xpose.msra.mxu0 0.0
    %2173 = vmatprep.subr.mxu0 0.0
    %2174 = vmatpush1.xpose.msra.mxu0 0.0
    %2175 = vmatprep.subr.mxu0 0.0
    %2176 = vmatpush1.xpose.msra.mxu0 0.0
    %2177 = vmatprep.subr.mxu0 0.0
    %2178 = vmatpush1.xpose.msra.mxu0 0.0
    %2179 = vmatprep.subr.mxu0 0.0
    %2180 = vmatpush1.xpose.msra.mxu0 0.0
    %2181 = vmatprep.subr.mxu0 0.0
    %2182 = vmatpush1.xpose.msra.mxu0 0.0
    %2183 = vmatprep.subr.mxu0 0.0
    %2184 = vmatpush1.xpose.msra.mxu0 0.0
    %2185 = vmatprep.subr.mxu0 0.0
    %2186 = vmatpush1.xpose.msra.mxu0 0.0
    %2187 = vmatprep.subr.mxu0 0.0
    %2188 = vmatpush1.xpose.msra.mxu0 0.0
    %2189 = vmatprep.subr.mxu0 0.0
    %2190 = vmatpush1.xpose.msra.mxu0 0.0
    %2191 = vmatprep.subr.mxu0 0.0
    %2192 = vmatpush1.xpose.msra.mxu0 0.0
    %2193 = vmatprep.subr.mxu0 0.0
    %2194 = vmatpush1.xpose.msra.mxu0 0.0
    %2195 = vmatprep.subr.mxu0 0.0
    %2196 = vmatpush1.xpose.msra.mxu0 0.0
    %2197 = vmatprep.subr.mxu0 0.0
    %2198 = vmatpush1.xpose.msra.mxu0 0.0
    %2199 = vmatprep.subr.mxu0 0.0
    %2200 = vmatpush1.xpose.msra.mxu0 0.0
    %2201 = vmatprep.subr.mxu0 0.0
    %2202 = vmatpush1.xpose.msra.mxu0 0.0
    %2203 = vmatprep.subr.mxu0 0.0
    %2204 = vmatpush1.xpose.msra.mxu0 0.0
    %2205 = vmatprep.subr.mxu0 0.0
    %2206 = vmatpush1.xpose.msra.mxu0 0.0
    %2207 = vmatprep.subr.mxu0 0.0
    %2208 = vmatpush1.xpose.msra.mxu0 0.0
    %2209 = vmatprep.subr.mxu0 0.0
    %2210 = vmatpush1.xpose.msra.mxu0 0.0
    %2211 = vmatprep.subr.mxu0 0.0
    %2212 = vmatpush1.xpose.msra.mxu0 0.0
    %2213 = vmatprep.subr.mxu0 0.0
    %2214 = vmatpush1.xpose.msra.mxu0 0.0
    %2215 = vmatprep.subr.mxu0 0.0
    %2216 = vmatpush1.xpose.msra.mxu0 0.0
    %2217 = vmatprep.subr.mxu0 0.0
    %2218 = vmatpush1.xpose.msra.mxu0 0.0
    %2219 = vmatprep.subr.mxu0 0.0
    %2220 = vmatpush1.xpose.msra.mxu0 0.0
    %2221 = vmatprep.subr.mxu0 0.0
    %2222 = vmatpush1.xpose.msra.mxu0 0.0
    %2223 = vmatprep.subr.mxu0 0.0
    %2224 = vmatpush1.xpose.msra.mxu0 0.0
    %2225 = vmatprep.subr.mxu0 0.0
    %2226 = vmatpush1.xpose.msra.mxu0 0.0
    %2227 = vmatprep.subr.mxu0 0.0
    %2228 = vmatpush1.xpose.msra.mxu0 0.0
    %2229 = vmatprep.mubr.f32.mxu0 0.0
    %2230 = vmatmul.mubr.f32.gmra.mrb[0].mxu0 %v2163
    %v2231 = vpop.f32.mrb[0].mxu0
    %v2232 = vadd.f32 0.0, %v2231
    %v2233 = vpop.f32.mrb[0].mxu0
    %2234 = vdwg.mxu0
    %2236 = vrot.lane.b32.xlu0 %v41, 127
    %v2237 = vpop.permute.xlu0 %2236
    %v2238 = vsel %vm54, %v2237, 0
    %2240 = vmatprep.subr.mxu0 0.0
    %2241 = vmatpush1.xpose.msra.mxu0 %v2238
    %2242 = vmatprep.subr.mxu0 0.0
    %2243 = vmatpush1.xpose.msra.mxu0 0.0
    %2244 = vmatprep.subr.mxu0 0.0
    %2245 = vmatpush1.xpose.msra.mxu0 0.0
    %2246 = vmatprep.subr.mxu0 0.0
    %2247 = vmatpush1.xpose.msra.mxu0 0.0
    %2248 = vmatprep.subr.mxu0 0.0
    %2249 = vmatpush1.xpose.msra.mxu0 0.0
    %2250 = vmatprep.subr.mxu0 0.0
    %2251 = vmatpush1.xpose.msra.mxu0 0.0
    %2252 = vmatprep.subr.mxu0 0.0
    %2253 = vmatpush1.xpose.msra.mxu0 0.0
    %2254 = vmatprep.subr.mxu0 0.0
    %2255 = vmatpush1.xpose.msra.mxu0 0.0
    %2256 = vmatprep.subr.mxu0 0.0
    %2257 = vmatpush1.xpose.msra.mxu0 0.0
    %2258 = vmatprep.subr.mxu0 0.0
    %2259 = vmatpush1.xpose.msra.mxu0 0.0
    %2260 = vmatprep.subr.mxu0 0.0
    %2261 = vmatpush1.xpose.msra.mxu0 0.0
    %2262 = vmatprep.subr.mxu0 0.0
    %2263 = vmatpush1.xpose.msra.mxu0 0.0
    %2264 = vmatprep.subr.mxu0 0.0
    %2265 = vmatpush1.xpose.msra.mxu0 0.0
    %2266 = vmatprep.subr.mxu0 0.0
    %2267 = vmatpush1.xpose.msra.mxu0 0.0
    %2268 = vmatprep.subr.mxu0 0.0
    %2269 = vmatpush1.xpose.msra.mxu0 0.0
    %2270 = vmatprep.subr.mxu0 0.0
    %2271 = vmatpush1.xpose.msra.mxu0 0.0
    %2272 = vmatprep.subr.mxu0 0.0
    %2273 = vmatpush1.xpose.msra.mxu0 0.0
    %2274 = vmatprep.subr.mxu0 0.0
    %2275 = vmatpush1.xpose.msra.mxu0 0.0
    %2276 = vmatprep.subr.mxu0 0.0
    %2277 = vmatpush1.xpose.msra.mxu0 0.0
    %2278 = vmatprep.subr.mxu0 0.0
    %2279 = vmatpush1.xpose.msra.mxu0 0.0
    %2280 = vmatprep.subr.mxu0 0.0
    %2281 = vmatpush1.xpose.msra.mxu0 0.0
    %2282 = vmatprep.subr.mxu0 0.0
    %2283 = vmatpush1.xpose.msra.mxu0 0.0
    %2284 = vmatprep.subr.mxu0 0.0
    %2285 = vmatpush1.xpose.msra.mxu0 0.0
    %2286 = vmatprep.subr.mxu0 0.0
    %2287 = vmatpush1.xpose.msra.mxu0 0.0
    %2288 = vmatprep.subr.mxu0 0.0
    %2289 = vmatpush1.xpose.msra.mxu0 0.0
    %2290 = vmatprep.subr.mxu0 0.0
    %2291 = vmatpush1.xpose.msra.mxu0 0.0
    %2292 = vmatprep.subr.mxu0 0.0
    %2293 = vmatpush1.xpose.msra.mxu0 0.0
    %2294 = vmatprep.subr.mxu0 0.0
    %2295 = vmatpush1.xpose.msra.mxu0 0.0
    %2296 = vmatprep.subr.mxu0 0.0
    %2297 = vmatpush1.xpose.msra.mxu0 0.0
    %2298 = vmatprep.subr.mxu0 0.0
    %2299 = vmatpush1.xpose.msra.mxu0 0.0
    %2300 = vmatprep.subr.mxu0 0.0
    %2301 = vmatpush1.xpose.msra.mxu0 0.0
    %2302 = vmatprep.subr.mxu0 0.0
    %2303 = vmatpush1.xpose.msra.mxu0 0.0
    %2304 = vmatprep.mubr.f32.mxu0 0.0
    %2305 = vmatmul.mubr.f32.gmra.mrb[0].mxu0 %v2238
    %v2306 = vpop.f32.mrb[0].mxu0
    %v2307 = vadd.f32 0.0, %v2306
    %v2308 = vpop.f32.mrb[0].mxu0
    %2309 = vdwg.mxu0
    %2311 = vrot.lane.b32.xlu0 %v42, 127
    %v2312 = vpop.permute.xlu0 %2311
    %v2313 = vsel %vm54, %v2312, 0
    %2315 = vmatprep.subr.mxu0 0.0
    %2316 = vmatpush1.xpose.msra.mxu0 %v2313
    %2317 = vmatprep.subr.mxu0 0.0
    %2318 = vmatpush1.xpose.msra.mxu0 0.0
    %2319 = vmatprep.subr.mxu0 0.0
    %2320 = vmatpush1.xpose.msra.mxu0 0.0
    %2321 = vmatprep.subr.mxu0 0.0
    %2322 = vmatpush1.xpose.msra.mxu0 0.0
    %2323 = vmatprep.subr.mxu0 0.0
    %2324 = vmatpush1.xpose.msra.mxu0 0.0
    %2325 = vmatprep.subr.mxu0 0.0
    %2326 = vmatpush1.xpose.msra.mxu0 0.0
    %2327 = vmatprep.subr.mxu0 0.0
    %2328 = vmatpush1.xpose.msra.mxu0 0.0
    %2329 = vmatprep.subr.mxu0 0.0
    %2330 = vmatpush1.xpose.msra.mxu0 0.0
    %2331 = vmatprep.subr.mxu0 0.0
    %2332 = vmatpush1.xpose.msra.mxu0 0.0
    %2333 = vmatprep.subr.mxu0 0.0
    %2334 = vmatpush1.xpose.msra.mxu0 0.0
    %2335 = vmatprep.subr.mxu0 0.0
    %2336 = vmatpush1.xpose.msra.mxu0 0.0
    %2337 = vmatprep.subr.mxu0 0.0
    %2338 = vmatpush1.xpose.msra.mxu0 0.0
    %2339 = vmatprep.subr.mxu0 0.0
    %2340 = vmatpush1.xpose.msra.mxu0 0.0
    %2341 = vmatprep.subr.mxu0 0.0
    %2342 = vmatpush1.xpose.msra.mxu0 0.0
    %2343 = vmatprep.subr.mxu0 0.0
    %2344 = vmatpush1.xpose.msra.mxu0 0.0
    %2345 = vmatprep.subr.mxu0 0.0
    %2346 = vmatpush1.xpose.msra.mxu0 0.0
    %2347 = vmatprep.subr.mxu0 0.0
    %2348 = vmatpush1.xpose.msra.mxu0 0.0
    %2349 = vmatprep.subr.mxu0 0.0
    %2350 = vmatpush1.xpose.msra.mxu0 0.0
    %2351 = vmatprep.subr.mxu0 0.0
    %2352 = vmatpush1.xpose.msra.mxu0 0.0
    %2353 = vmatprep.subr.mxu0 0.0
    %2354 = vmatpush1.xpose.msra.mxu0 0.0
    %2355 = vmatprep.subr.mxu0 0.0
    %2356 = vmatpush1.xpose.msra.mxu0 0.0
    %2357 = vmatprep.subr.mxu0 0.0
    %2358 = vmatpush1.xpose.msra.mxu0 0.0
    %2359 = vmatprep.subr.mxu0 0.0
    %2360 = vmatpush1.xpose.msra.mxu0 0.0
    %2361 = vmatprep.subr.mxu0 0.0
    %2362 = vmatpush1.xpose.msra.mxu0 0.0
    %2363 = vmatprep.subr.mxu0 0.0
    %2364 = vmatpush1.xpose.msra.mxu0 0.0
    %2365 = vmatprep.subr.mxu0 0.0
    %2366 = vmatpush1.xpose.msra.mxu0 0.0
    %2367 = vmatprep.subr.mxu0 0.0
    %2368 = vmatpush1.xpose.msra.mxu0 0.0
    %2369 = vmatprep.subr.mxu0 0.0
    %2370 = vmatpush1.xpose.msra.mxu0 0.0
    %2371 = vmatprep.subr.mxu0 0.0
    %2372 = vmatpush1.xpose.msra.mxu0 0.0
    %2373 = vmatprep.subr.mxu0 0.0
    %2374 = vmatpush1.xpose.msra.mxu0 0.0
    %2375 = vmatprep.subr.mxu0 0.0
    %2376 = vmatpush1.xpose.msra.mxu0 0.0
    %2377 = vmatprep.subr.mxu0 0.0
    %2378 = vmatpush1.xpose.msra.mxu0 0.0
    %2379 = vmatprep.mubr.f32.mxu0 0.0
    %2380 = vmatmul.mubr.f32.gmra.mrb[0].mxu0 %v2313
    %v2381 = vpop.f32.mrb[0].mxu0
    %v2382 = vadd.f32 0.0, %v2381
    %v2383 = vpop.f32.mrb[0].mxu0
    %2384 = vdwg.mxu0
    %2386 = vrot.lane.b32.xlu0 %v43, 127
    %v2387 = vpop.permute.xlu0 %2386
    %v2388 = vsel %vm54, %v2387, 0
    %2390 = vmatprep.subr.mxu0 0.0
    %2391 = vmatpush1.xpose.msra.mxu0 %v2388
    %2392 = vmatprep.subr.mxu0 0.0
    %2393 = vmatpush1.xpose.msra.mxu0 0.0
    %2394 = vmatprep.subr.mxu0 0.0
    %2395 = vmatpush1.xpose.msra.mxu0 0.0
    %2396 = vmatprep.subr.mxu0 0.0
    %2397 = vmatpush1.xpose.msra.mxu0 0.0
    %2398 = vmatprep.subr.mxu0 0.0
    %2399 = vmatpush1.xpose.msra.mxu0 0.0
    %2400 = vmatprep.subr.mxu0 0.0
    %2401 = vmatpush1.xpose.msra.mxu0 0.0
    %2402 = vmatprep.subr.mxu0 0.0
    %2403 = vmatpush1.xpose.msra.mxu0 0.0
    %2404 = vmatprep.subr.mxu0 0.0
    %2405 = vmatpush1.xpose.msra.mxu0 0.0
    %2406 = vmatprep.subr.mxu0 0.0
    %2407 = vmatpush1.xpose.msra.mxu0 0.0
    %2408 = vmatprep.subr.mxu0 0.0
    %2409 = vmatpush1.xpose.msra.mxu0 0.0
    %2410 = vmatprep.subr.mxu0 0.0
    %2411 = vmatpush1.xpose.msra.mxu0 0.0
    %2412 = vmatprep.subr.mxu0 0.0
    %2413 = vmatpush1.xpose.msra.mxu0 0.0
    %2414 = vmatprep.subr.mxu0 0.0
    %2415 = vmatpush1.xpose.msra.mxu0 0.0
    %2416 = vmatprep.subr.mxu0 0.0
    %2417 = vmatpush1.xpose.msra.mxu0 0.0
    %2418 = vmatprep.subr.mxu0 0.0
    %2419 = vmatpush1.xpose.msra.mxu0 0.0
    %2420 = vmatprep.subr.mxu0 0.0
    %2421 = vmatpush1.xpose.msra.mxu0 0.0
    %2422 = vmatprep.subr.mxu0 0.0
    %2423 = vmatpush1.xpose.msra.mxu0 0.0
    %2424 = vmatprep.subr.mxu0 0.0
    %2425 = vmatpush1.xpose.msra.mxu0 0.0
    %2426 = vmatprep.subr.mxu0 0.0
    %2427 = vmatpush1.xpose.msra.mxu0 0.0
    %2428 = vmatprep.subr.mxu0 0.0
    %2429 = vmatpush1.xpose.msra.mxu0 0.0
    %2430 = vmatprep.subr.mxu0 0.0
    %2431 = vmatpush1.xpose.msra.mxu0 0.0
    %2432 = vmatprep.subr.mxu0 0.0
    %2433 = vmatpush1.xpose.msra.mxu0 0.0
    %2434 = vmatprep.subr.mxu0 0.0
    %2435 = vmatpush1.xpose.msra.mxu0 0.0
    %2436 = vmatprep.subr.mxu0 0.0
    %2437 = vmatpush1.xpose.msra.mxu0 0.0
    %2438 = vmatprep.subr.mxu0 0.0
    %2439 = vmatpush1.xpose.msra.mxu0 0.0
    %2440 = vmatprep.subr.mxu0 0.0
    %2441 = vmatpush1.xpose.msra.mxu0 0.0
    %2442 = vmatprep.subr.mxu0 0.0
    %2443 = vmatpush1.xpose.msra.mxu0 0.0
    %2444 = vmatprep.subr.mxu0 0.0
    %2445 = vmatpush1.xpose.msra.mxu0 0.0
    %2446 = vmatprep.subr.mxu0 0.0
    %2447 = vmatpush1.xpose.msra.mxu0 0.0
    %2448 = vmatprep.subr.mxu0 0.0
    %2449 = vmatpush1.xpose.msra.mxu0 0.0
    %2450 = vmatprep.subr.mxu0 0.0
    %2451 = vmatpush1.xpose.msra.mxu0 0.0
    %2452 = vmatprep.subr.mxu0 0.0
    %2453 = vmatpush1.xpose.msra.mxu0 0.0
    %2454 = vmatprep.mubr.f32.mxu0 0.0
    %2455 = vmatmul.mubr.f32.gmra.mrb[0].mxu0 %v2388
    %v2456 = vpop.f32.mrb[0].mxu0
    %v2457 = vadd.f32 0.0, %v2456
    %v2458 = vpop.f32.mrb[0].mxu0
    %2459 = vdwg.mxu0
    %2461 = vrot.lane.b32.xlu0 %v44, 127
    %v2462 = vpop.permute.xlu0 %2461
    %v2463 = vsel %vm54, %v2462, 0
    %2465 = vmatprep.subr.mxu0 0.0
    %2466 = vmatpush1.xpose.msra.mxu0 %v2463
    %2467 = vmatprep.subr.mxu0 0.0
    %2468 = vmatpush1.xpose.msra.mxu0 0.0
    %2469 = vmatprep.subr.mxu0 0.0
    %2470 = vmatpush1.xpose.msra.mxu0 0.0
    %2471 = vmatprep.subr.mxu0 0.0
    %2472 = vmatpush1.xpose.msra.mxu0 0.0
    %2473 = vmatprep.subr.mxu0 0.0
    %2474 = vmatpush1.xpose.msra.mxu0 0.0
    %2475 = vmatprep.subr.mxu0 0.0
    %2476 = vmatpush1.xpose.msra.mxu0 0.0
    %2477 = vmatprep.subr.mxu0 0.0
    %2478 = vmatpush1.xpose.msra.mxu0 0.0
    %2479 = vmatprep.subr.mxu0 0.0
    %2480 = vmatpush1.xpose.msra.mxu0 0.0
    %2481 = vmatprep.subr.mxu0 0.0
    %2482 = vmatpush1.xpose.msra.mxu0 0.0
    %2483 = vmatprep.subr.mxu0 0.0
    %2484 = vmatpush1.xpose.msra.mxu0 0.0
    %2485 = vmatprep.subr.mxu0 0.0
    %2486 = vmatpush1.xpose.msra.mxu0 0.0
    %2487 = vmatprep.subr.mxu0 0.0
    %2488 = vmatpush1.xpose.msra.mxu0 0.0
    %2489 = vmatprep.subr.mxu0 0.0
    %2490 = vmatpush1.xpose.msra.mxu0 0.0
    %2491 = vmatprep.subr.mxu0 0.0
    %2492 = vmatpush1.xpose.msra.mxu0 0.0
    %2493 = vmatprep.subr.mxu0 0.0
    %2494 = vmatpush1.xpose.msra.mxu0 0.0
    %2495 = vmatprep.subr.mxu0 0.0
    %2496 = vmatpush1.xpose.msra.mxu0 0.0
    %2497 = vmatprep.subr.mxu0 0.0
    %2498 = vmatpush1.xpose.msra.mxu0 0.0
    %2499 = vmatprep.subr.mxu0 0.0
    %2500 = vmatpush1.xpose.msra.mxu0 0.0
    %2501 = vmatprep.subr.mxu0 0.0
    %2502 = vmatpush1.xpose.msra.mxu0 0.0
    %2503 = vmatprep.subr.mxu0 0.0
    %2504 = vmatpush1.xpose.msra.mxu0 0.0
    %2505 = vmatprep.subr.mxu0 0.0
    %2506 = vmatpush1.xpose.msra.mxu0 0.0
    %2507 = vmatprep.subr.mxu0 0.0
    %2508 = vmatpush1.xpose.msra.mxu0 0.0
    %2509 = vmatprep.subr.mxu0 0.0
    %2510 = vmatpush1.xpose.msra.mxu0 0.0
    %2511 = vmatprep.subr.mxu0 0.0
    %2512 = vmatpush1.xpose.msra.mxu0 0.0
    %2513 = vmatprep.subr.mxu0 0.0
    %2514 = vmatpush1.xpose.msra.mxu0 0.0
    %2515 = vmatprep.subr.mxu0 0.0
    %2516 = vmatpush1.xpose.msra.mxu0 0.0
    %2517 = vmatprep.subr.mxu0 0.0
    %2518 = vmatpush1.xpose.msra.mxu0 0.0
    %2519 = vmatprep.subr.mxu0 0.0
    %2520 = vmatpush1.xpose.msra.mxu0 0.0
    %2521 = vmatprep.subr.mxu0 0.0
    %2522 = vmatpush1.xpose.msra.mxu0 0.0
    %2523 = vmatprep.subr.mxu0 0.0
    %2524 = vmatpush1.xpose.msra.mxu0 0.0
    %2525 = vmatprep.subr.mxu0 0.0
    %2526 = vmatpush1.xpose.msra.mxu0 0.0
    %2527 = vmatprep.subr.mxu0 0.0
    %2528 = vmatpush1.xpose.msra.mxu0 0.0
    %2529 = vmatprep.mubr.f32.mxu0 0.0
    %2530 = vmatmul.mubr.f32.gmra.mrb[0].mxu0 %v2463
    %v2531 = vpop.f32.mrb[0].mxu0
    %v2532 = vadd.f32 0.0, %v2531
    %v2533 = vpop.f32.mrb[0].mxu0
    %2534 = vdwg.mxu0
    %2536 = vrot.lane.b32.xlu0 %v45, 127
    %v2537 = vpop.permute.xlu0 %2536
    %v2538 = vsel %vm54, %v2537, 0
    %2540 = vmatprep.subr.mxu0 0.0
    %2541 = vmatpush1.xpose.msra.mxu0 %v2538
    %2542 = vmatprep.subr.mxu0 0.0
    %2543 = vmatpush1.xpose.msra.mxu0 0.0
    %2544 = vmatprep.subr.mxu0 0.0
    %2545 = vmatpush1.xpose.msra.mxu0 0.0
    %2546 = vmatprep.subr.mxu0 0.0
    %2547 = vmatpush1.xpose.msra.mxu0 0.0
    %2548 = vmatprep.subr.mxu0 0.0
    %2549 = vmatpush1.xpose.msra.mxu0 0.0
    %2550 = vmatprep.subr.mxu0 0.0
    %2551 = vmatpush1.xpose.msra.mxu0 0.0
    %2552 = vmatprep.subr.mxu0 0.0
    %2553 = vmatpush1.xpose.msra.mxu0 0.0
    %2554 = vmatprep.subr.mxu0 0.0
    %2555 = vmatpush1.xpose.msra.mxu0 0.0
    %2556 = vmatprep.subr.mxu0 0.0
    %2557 = vmatpush1.xpose.msra.mxu0 0.0
    %2558 = vmatprep.subr.mxu0 0.0
    %2559 = vmatpush1.xpose.msra.mxu0 0.0
    %2560 = vmatprep.subr.mxu0 0.0
    %2561 = vmatpush1.xpose.msra.mxu0 0.0
    %2562 = vmatprep.subr.mxu0 0.0
    %2563 = vmatpush1.xpose.msra.mxu0 0.0
    %2564 = vmatprep.subr.mxu0 0.0
    %2565 = vmatpush1.xpose.msra.mxu0 0.0
    %2566 = vmatprep.subr.mxu0 0.0
    %2567 = vmatpush1.xpose.msra.mxu0 0.0
    %2568 = vmatprep.subr.mxu0 0.0
    %2569 = vmatpush1.xpose.msra.mxu0 0.0
    %2570 = vmatprep.subr.mxu0 0.0
    %2571 = vmatpush1.xpose.msra.mxu0 0.0
    %2572 = vmatprep.subr.mxu0 0.0
    %2573 = vmatpush1.xpose.msra.mxu0 0.0
    %2574 = vmatprep.subr.mxu0 0.0
    %2575 = vmatpush1.xpose.msra.mxu0 0.0
    %2576 = vmatprep.subr.mxu0 0.0
    %2577 = vmatpush1.xpose.msra.mxu0 0.0
    %2578 = vmatprep.subr.mxu0 0.0
    %2579 = vmatpush1.xpose.msra.mxu0 0.0
    %2580 = vmatprep.subr.mxu0 0.0
    %2581 = vmatpush1.xpose.msra.mxu0 0.0
    %2582 = vmatprep.subr.mxu0 0.0
    %2583 = vmatpush1.xpose.msra.mxu0 0.0
    %2584 = vmatprep.subr.mxu0 0.0
    %2585 = vmatpush1.xpose.msra.mxu0 0.0
    %2586 = vmatprep.subr.mxu0 0.0
    %2587 = vmatpush1.xpose.msra.mxu0 0.0
    %2588 = vmatprep.subr.mxu0 0.0
    %2589 = vmatpush1.xpose.msra.mxu0 0.0
    %2590 = vmatprep.subr.mxu0 0.0
    %2591 = vmatpush1.xpose.msra.mxu0 0.0
    %2592 = vmatprep.subr.mxu0 0.0
    %2593 = vmatpush1.xpose.msra.mxu0 0.0
    %2594 = vmatprep.subr.mxu0 0.0
    %2595 = vmatpush1.xpose.msra.mxu0 0.0
    %2596 = vmatprep.subr.mxu0 0.0
    %2597 = vmatpush1.xpose.msra.mxu0 0.0
    %2598 = vmatprep.subr.mxu0 0.0
    %2599 = vmatpush1.xpose.msra.mxu0 0.0
    %2600 = vmatprep.subr.mxu0 0.0
    %2601 = vmatpush1.xpose.msra.mxu0 0.0
    %2602 = vmatprep.subr.mxu0 0.0
    %2603 = vmatpush1.xpose.msra.mxu0 0.0
    %2604 = vmatprep.mubr.f32.mxu0 0.0
    %2605 = vmatmul.mubr.f32.gmra.mrb[0].mxu0 %v2538
    %v2606 = vpop.f32.mrb[0].mxu0
    %v2607 = vadd.f32 0.0, %v2606
    %v2608 = vpop.f32.mrb[0].mxu0
    %2609 = vdwg.mxu0
    %v2610 = vmul.f32 %v40, %v40
    %v2611 = vmul.f32 %v41, %v41
    %v2612 = vmul.f32 %v42, %v42
    %v2613 = vmul.f32 %v43, %v43
    %v2614 = vmul.f32 %v44, %v44
    %v2615 = vmul.f32 %v45, %v45
    %2617 = vrot.lane.b32.xlu0 %v2610, 127
    %v2618 = vpop.permute.xlu0 %2617
    %v2619 = vsel %vm54, %v2618, 0
    %2621 = vmatprep.subr.mxu0 0.0
    %2622 = vmatpush1.xpose.msra.mxu0 %v2619
    %2623 = vmatprep.subr.mxu0 0.0
    %2624 = vmatpush1.xpose.msra.mxu0 0.0
    %2625 = vmatprep.subr.mxu0 0.0
    %2626 = vmatpush1.xpose.msra.mxu0 0.0
    %2627 = vmatprep.subr.mxu0 0.0
    %2628 = vmatpush1.xpose.msra.mxu0 0.0
    %2629 = vmatprep.subr.mxu0 0.0
    %2630 = vmatpush1.xpose.msra.mxu0 0.0
    %2631 = vmatprep.subr.mxu0 0.0
    %2632 = vmatpush1.xpose.msra.mxu0 0.0
    %2633 = vmatprep.subr.mxu0 0.0
    %2634 = vmatpush1.xpose.msra.mxu0 0.0
    %2635 = vmatprep.subr.mxu0 0.0
    %2636 = vmatpush1.xpose.msra.mxu0 0.0
    %2637 = vmatprep.subr.mxu0 0.0
    %2638 = vmatpush1.xpose.msra.mxu0 0.0
    %2639 = vmatprep.subr.mxu0 0.0
    %2640 = vmatpush1.xpose.msra.mxu0 0.0
    %2641 = vmatprep.subr.mxu0 0.0
    %2642 = vmatpush1.xpose.msra.mxu0 0.0
    %2643 = vmatprep.subr.mxu0 0.0
    %2644 = vmatpush1.xpose.msra.mxu0 0.0
    %2645 = vmatprep.subr.mxu0 0.0
    %2646 = vmatpush1.xpose.msra.mxu0 0.0
    %2647 = vmatprep.subr.mxu0 0.0
    %2648 = vmatpush1.xpose.msra.mxu0 0.0
    %2649 = vmatprep.subr.mxu0 0.0
    %2650 = vmatpush1.xpose.msra.mxu0 0.0
    %2651 = vmatprep.subr.mxu0 0.0
    %2652 = vmatpush1.xpose.msra.mxu0 0.0
    %2653 = vmatprep.subr.mxu0 0.0
    %2654 = vmatpush1.xpose.msra.mxu0 0.0
    %2655 = vmatprep.subr.mxu0 0.0
    %2656 = vmatpush1.xpose.msra.mxu0 0.0
    %2657 = vmatprep.subr.mxu0 0.0
    %2658 = vmatpush1.xpose.msra.mxu0 0.0
    %2659 = vmatprep.subr.mxu0 0.0
    %2660 = vmatpush1.xpose.msra.mxu0 0.0
    %2661 = vmatprep.subr.mxu0 0.0
    %2662 = vmatpush1.xpose.msra.mxu0 0.0
    %2663 = vmatprep.subr.mxu0 0.0
    %2664 = vmatpush1.xpose.msra.mxu0 0.0
    %2665 = vmatprep.subr.mxu0 0.0
    %2666 = vmatpush1.xpose.msra.mxu0 0.0
    %2667 = vmatprep.subr.mxu0 0.0
    %2668 = vmatpush1.xpose.msra.mxu0 0.0
    %2669 = vmatprep.subr.mxu0 0.0
    %2670 = vmatpush1.xpose.msra.mxu0 0.0
    %2671 = vmatprep.subr.mxu0 0.0
    %2672 = vmatpush1.xpose.msra.mxu0 0.0
    %2673 = vmatprep.subr.mxu0 0.0
    %2674 = vmatpush1.xpose.msra.mxu0 0.0
    %2675 = vmatprep.subr.mxu0 0.0
    %2676 = vmatpush1.xpose.msra.mxu0 0.0
    %2677 = vmatprep.subr.mxu0 0.0
    %2678 = vmatpush1.xpose.msra.mxu0 0.0
    %2679 = vmatprep.subr.mxu0 0.0
    %2680 = vmatpush1.xpose.msra.mxu0 0.0
    %2681 = vmatprep.subr.mxu0 0.0
    %2682 = vmatpush1.xpose.msra.mxu0 0.0
    %2683 = vmatprep.subr.mxu0 0.0
    %2684 = vmatpush1.xpose.msra.mxu0 0.0
    %2685 = vmatprep.mubr.f32.mxu0 0.0
    %2686 = vmatmul.mubr.f32.gmra.mrb[0].mxu0 %v648
    %v2687 = vpop.f32.mrb[0].mxu0
    %v2688 = vadd.f32 0.0, %v2687
    %v2689 = vpop.f32.mrb[0].mxu0
    %2690 = vdwg.mxu0
    %2692 = vrot.lane.b32.xlu0 %v2611, 127
    %v2693 = vpop.permute.xlu0 %2692
    %v2694 = vsel %vm54, %v2693, 0
    %2696 = vmatprep.subr.mxu0 0.0
    %2697 = vmatpush1.xpose.msra.mxu0 %v2694
    %2698 = vmatprep.subr.mxu0 0.0
    %2699 = vmatpush1.xpose.msra.mxu0 0.0
    %2700 = vmatprep.subr.mxu0 0.0
    %2701 = vmatpush1.xpose.msra.mxu0 0.0
    %2702 = vmatprep.subr.mxu0 0.0
    %2703 = vmatpush1.xpose.msra.mxu0 0.0
    %2704 = vmatprep.subr.mxu0 0.0
    %2705 = vmatpush1.xpose.msra.mxu0 0.0
    %2706 = vmatprep.subr.mxu0 0.0
    %2707 = vmatpush1.xpose.msra.mxu0 0.0
    %2708 = vmatprep.subr.mxu0 0.0
    %2709 = vmatpush1.xpose.msra.mxu0 0.0
    %2710 = vmatprep.subr.mxu0 0.0
    %2711 = vmatpush1.xpose.msra.mxu0 0.0
    %2712 = vmatprep.subr.mxu0 0.0
    %2713 = vmatpush1.xpose.msra.mxu0 0.0
    %2714 = vmatprep.subr.mxu0 0.0
    %2715 = vmatpush1.xpose.msra.mxu0 0.0
    %2716 = vmatprep.subr.mxu0 0.0
    %2717 = vmatpush1.xpose.msra.mxu0 0.0
    %2718 = vmatprep.subr.mxu0 0.0
    %2719 = vmatpush1.xpose.msra.mxu0 0.0
    %2720 = vmatprep.subr.mxu0 0.0
    %2721 = vmatpush1.xpose.msra.mxu0 0.0
    %2722 = vmatprep.subr.mxu0 0.0
    %2723 = vmatpush1.xpose.msra.mxu0 0.0
    %2724 = vmatprep.subr.mxu0 0.0
    %2725 = vmatpush1.xpose.msra.mxu0 0.0
    %2726 = vmatprep.subr.mxu0 0.0
    %2727 = vmatpush1.xpose.msra.mxu0 0.0
    %2728 = vmatprep.subr.mxu0 0.0
    %2729 = vmatpush1.xpose.msra.mxu0 0.0
    %2730 = vmatprep.subr.mxu0 0.0
    %2731 = vmatpush1.xpose.msra.mxu0 0.0
    %2732 = vmatprep.subr.mxu0 0.0
    %2733 = vmatpush1.xpose.msra.mxu0 0.0
    %2734 = vmatprep.subr.mxu0 0.0
    %2735 = vmatpush1.xpose.msra.mxu0 0.0
    %2736 = vmatprep.subr.mxu0 0.0
    %2737 = vmatpush1.xpose.msra.mxu0 0.0
    %2738 = vmatprep.subr.mxu0 0.0
    %2739 = vmatpush1.xpose.msra.mxu0 0.0
    %2740 = vmatprep.subr.mxu0 0.0
    %2741 = vmatpush1.xpose.msra.mxu0 0.0
    %2742 = vmatprep.subr.mxu0 0.0
    %2743 = vmatpush1.xpose.msra.mxu0 0.0
    %2744 = vmatprep.subr.mxu0 0.0
    %2745 = vmatpush1.xpose.msra.mxu0 0.0
    %2746 = vmatprep.subr.mxu0 0.0
    %2747 = vmatpush1.xpose.msra.mxu0 0.0
    %2748 = vmatprep.subr.mxu0 0.0
    %2749 = vmatpush1.xpose.msra.mxu0 0.0
    %2750 = vmatprep.subr.mxu0 0.0
    %2751 = vmatpush1.xpose.msra.mxu0 0.0
    %2752 = vmatprep.subr.mxu0 0.0
    %2753 = vmatpush1.xpose.msra.mxu0 0.0
    %2754 = vmatprep.subr.mxu0 0.0
    %2755 = vmatpush1.xpose.msra.mxu0 0.0
    %2756 = vmatprep.subr.mxu0 0.0
    %2757 = vmatpush1.xpose.msra.mxu0 0.0
    %2758 = vmatprep.subr.mxu0 0.0
    %2759 = vmatpush1.xpose.msra.mxu0 0.0
    %2760 = vmatprep.mubr.f32.mxu0 0.0
    %2761 = vmatmul.mubr.f32.gmra.mrb[0].mxu0 %v648
    %v2762 = vpop.f32.mrb[0].mxu0
    %v2763 = vadd.f32 0.0, %v2762
    %v2764 = vpop.f32.mrb[0].mxu0
    %2765 = vdwg.mxu0
    %2767 = vrot.lane.b32.xlu0 %v2612, 127
    %v2768 = vpop.permute.xlu0 %2767
    %v2769 = vsel %vm54, %v2768, 0
    %2771 = vmatprep.subr.mxu0 0.0
    %2772 = vmatpush1.xpose.msra.mxu0 %v2769
    %2773 = vmatprep.subr.mxu0 0.0
    %2774 = vmatpush1.xpose.msra.mxu0 0.0
    %2775 = vmatprep.subr.mxu0 0.0
    %2776 = vmatpush1.xpose.msra.mxu0 0.0
    %2777 = vmatprep.subr.mxu0 0.0
    %2778 = vmatpush1.xpose.msra.mxu0 0.0
    %2779 = vmatprep.subr.mxu0 0.0
    %2780 = vmatpush1.xpose.msra.mxu0 0.0
    %2781 = vmatprep.subr.mxu0 0.0
    %2782 = vmatpush1.xpose.msra.mxu0 0.0
    %2783 = vmatprep.subr.mxu0 0.0
    %2784 = vmatpush1.xpose.msra.mxu0 0.0
    %2785 = vmatprep.subr.mxu0 0.0
    %2786 = vmatpush1.xpose.msra.mxu0 0.0
    %2787 = vmatprep.subr.mxu0 0.0
    %2788 = vmatpush1.xpose.msra.mxu0 0.0
    %2789 = vmatprep.subr.mxu0 0.0
    %2790 = vmatpush1.xpose.msra.mxu0 0.0
    %2791 = vmatprep.subr.mxu0 0.0
    %2792 = vmatpush1.xpose.msra.mxu0 0.0
    %2793 = vmatprep.subr.mxu0 0.0
    %2794 = vmatpush1.xpose.msra.mxu0 0.0
    %2795 = vmatprep.subr.mxu0 0.0
    %2796 = vmatpush1.xpose.msra.mxu0 0.0
    %2797 = vmatprep.subr.mxu0 0.0
    %2798 = vmatpush1.xpose.msra.mxu0 0.0
    %2799 = vmatprep.subr.mxu0 0.0
    %2800 = vmatpush1.xpose.msra.mxu0 0.0
    %2801 = vmatprep.subr.mxu0 0.0
    %2802 = vmatpush1.xpose.msra.mxu0 0.0
    %2803 = vmatprep.subr.mxu0 0.0
    %2804 = vmatpush1.xpose.msra.mxu0 0.0
    %2805 = vmatprep.subr.mxu0 0.0
    %2806 = vmatpush1.xpose.msra.mxu0 0.0
    %2807 = vmatprep.subr.mxu0 0.0
    %2808 = vmatpush1.xpose.msra.mxu0 0.0
    %2809 = vmatprep.subr.mxu0 0.0
    %2810 = vmatpush1.xpose.msra.mxu0 0.0
    %2811 = vmatprep.subr.mxu0 0.0
    %2812 = vmatpush1.xpose.msra.mxu0 0.0
    %2813 = vmatprep.subr.mxu0 0.0
    %2814 = vmatpush1.xpose.msra.mxu0 0.0
    %2815 = vmatprep.subr.mxu0 0.0
    %2816 = vmatpush1.xpose.msra.mxu0 0.0
    %2817 = vmatprep.subr.mxu0 0.0
    %2818 = vmatpush1.xpose.msra.mxu0 0.0
    %2819 = vmatprep.subr.mxu0 0.0
    %2820 = vmatpush1.xpose.msra.mxu0 0.0
    %2821 = vmatprep.subr.mxu0 0.0
    %2822 = vmatpush1.xpose.msra.mxu0 0.0
    %2823 = vmatprep.subr.mxu0 0.0
    %2824 = vmatpush1.xpose.msra.mxu0 0.0
    %2825 = vmatprep.subr.mxu0 0.0
    %2826 = vmatpush1.xpose.msra.mxu0 0.0
    %2827 = vmatprep.subr.mxu0 0.0
    %2828 = vmatpush1.xpose.msra.mxu0 0.0
    %2829 = vmatprep.subr.mxu0 0.0
    %2830 = vmatpush1.xpose.msra.mxu0 0.0
    %2831 = vmatprep.subr.mxu0 0.0
    %2832 = vmatpush1.xpose.msra.mxu0 0.0
    %2833 = vmatprep.subr.mxu0 0.0
    %2834 = vmatpush1.xpose.msra.mxu0 0.0
    %2835 = vmatprep.mubr.f32.mxu0 0.0
    %2836 = vmatmul.mubr.f32.gmra.mrb[0].mxu0 %v648
    %v2837 = vpop.f32.mrb[0].mxu0
    %v2838 = vadd.f32 0.0, %v2837
    %v2839 = vpop.f32.mrb[0].mxu0
    %2840 = vdwg.mxu0
    %2842 = vrot.lane.b32.xlu0 %v2613, 127
    %v2843 = vpop.permute.xlu0 %2842
    %v2844 = vsel %vm54, %v2843, 0
    %2846 = vmatprep.subr.mxu0 0.0
    %2847 = vmatpush1.xpose.msra.mxu0 %v2844
    %2848 = vmatprep.subr.mxu0 0.0
    %2849 = vmatpush1.xpose.msra.mxu0 0.0
    %2850 = vmatprep.subr.mxu0 0.0
    %2851 = vmatpush1.xpose.msra.mxu0 0.0
    %2852 = vmatprep.subr.mxu0 0.0
    %2853 = vmatpush1.xpose.msra.mxu0 0.0
    %2854 = vmatprep.subr.mxu0 0.0
    %2855 = vmatpush1.xpose.msra.mxu0 0.0
    %2856 = vmatprep.subr.mxu0 0.0
    %2857 = vmatpush1.xpose.msra.mxu0 0.0
    %2858 = vmatprep.subr.mxu0 0.0
    %2859 = vmatpush1.xpose.msra.mxu0 0.0
    %2860 = vmatprep.subr.mxu0 0.0
    %2861 = vmatpush1.xpose.msra.mxu0 0.0
    %2862 = vmatprep.subr.mxu0 0.0
    %2863 = vmatpush1.xpose.msra.mxu0 0.0
    %2864 = vmatprep.subr.mxu0 0.0
    %2865 = vmatpush1.xpose.msra.mxu0 0.0
    %2866 = vmatprep.subr.mxu0 0.0
    %2867 = vmatpush1.xpose.msra.mxu0 0.0
    %2868 = vmatprep.subr.mxu0 0.0
    %2869 = vmatpush1.xpose.msra.mxu0 0.0
    %2870 = vmatprep.subr.mxu0 0.0
    %2871 = vmatpush1.xpose.msra.mxu0 0.0
    %2872 = vmatprep.subr.mxu0 0.0
    %2873 = vmatpush1.xpose.msra.mxu0 0.0
    %2874 = vmatprep.subr.mxu0 0.0
    %2875 = vmatpush1.xpose.msra.mxu0 0.0
    %2876 = vmatprep.subr.mxu0 0.0
    %2877 = vmatpush1.xpose.msra.mxu0 0.0
    %2878 = vmatprep.subr.mxu0 0.0
    %2879 = vmatpush1.xpose.msra.mxu0 0.0
    %2880 = vmatprep.subr.mxu0 0.0
    %2881 = vmatpush1.xpose.msra.mxu0 0.0
    %2882 = vmatprep.subr.mxu0 0.0
    %2883 = vmatpush1.xpose.msra.mxu0 0.0
    %2884 = vmatprep.subr.mxu0 0.0
    %2885 = vmatpush1.xpose.msra.mxu0 0.0
    %2886 = vmatprep.subr.mxu0 0.0
    %2887 = vmatpush1.xpose.msra.mxu0 0.0
    %2888 = vmatprep.subr.mxu0 0.0
    %2889 = vmatpush1.xpose.msra.mxu0 0.0
    %2890 = vmatprep.subr.mxu0 0.0
    %2891 = vmatpush1.xpose.msra.mxu0 0.0
    %2892 = vmatprep.subr.mxu0 0.0
    %2893 = vmatpush1.xpose.msra.mxu0 0.0
    %2894 = vmatprep.subr.mxu0 0.0
    %2895 = vmatpush1.xpose.msra.mxu0 0.0
    %2896 = vmatprep.subr.mxu0 0.0
    %2897 = vmatpush1.xpose.msra.mxu0 0.0
    %2898 = vmatprep.subr.mxu0 0.0
    %2899 = vmatpush1.xpose.msra.mxu0 0.0
    %2900 = vmatprep.subr.mxu0 0.0
    %2901 = vmatpush1.xpose.msra.mxu0 0.0
    %2902 = vmatprep.subr.mxu0 0.0
    %2903 = vmatpush1.xpose.msra.mxu0 0.0
    %2904 = vmatprep.subr.mxu0 0.0
    %2905 = vmatpush1.xpose.msra.mxu0 0.0
    %2906 = vmatprep.subr.mxu0 0.0
    %2907 = vmatpush1.xpose.msra.mxu0 0.0
    %2908 = vmatprep.subr.mxu0 0.0
    %2909 = vmatpush1.xpose.msra.mxu0 0.0
    %2910 = vmatprep.mubr.f32.mxu0 0.0
    %2911 = vmatmul.mubr.f32.gmra.mrb[0].mxu0 %v648
    %v2912 = vpop.f32.mrb[0].mxu0
    %v2913 = vadd.f32 0.0, %v2912
    %v2914 = vpop.f32.mrb[0].mxu0
    %2915 = vdwg.mxu0
    %2917 = vrot.lane.b32.xlu0 %v2614, 127
    %v2918 = vpop.permute.xlu0 %2917
    %v2919 = vsel %vm54, %v2918, 0
    %2921 = vmatprep.subr.mxu0 0.0
    %2922 = vmatpush1.xpose.msra.mxu0 %v2919
    %2923 = vmatprep.subr.mxu0 0.0
    %2924 = vmatpush1.xpose.msra.mxu0 0.0
    %2925 = vmatprep.subr.mxu0 0.0
    %2926 = vmatpush1.xpose.msra.mxu0 0.0
    %2927 = vmatprep.subr.mxu0 0.0
    %2928 = vmatpush1.xpose.msra.mxu0 0.0
    %2929 = vmatprep.subr.mxu0 0.0
    %2930 = vmatpush1.xpose.msra.mxu0 0.0
    %2931 = vmatprep.subr.mxu0 0.0
    %2932 = vmatpush1.xpose.msra.mxu0 0.0
    %2933 = vmatprep.subr.mxu0 0.0
    %2934 = vmatpush1.xpose.msra.mxu0 0.0
    %2935 = vmatprep.subr.mxu0 0.0
    %2936 = vmatpush1.xpose.msra.mxu0 0.0
    %2937 = vmatprep.subr.mxu0 0.0
    %2938 = vmatpush1.xpose.msra.mxu0 0.0
    %2939 = vmatprep.subr.mxu0 0.0
    %2940 = vmatpush1.xpose.msra.mxu0 0.0
    %2941 = vmatprep.subr.mxu0 0.0
    %2942 = vmatpush1.xpose.msra.mxu0 0.0
    %2943 = vmatprep.subr.mxu0 0.0
    %2944 = vmatpush1.xpose.msra.mxu0 0.0
    %2945 = vmatprep.subr.mxu0 0.0
    %2946 = vmatpush1.xpose.msra.mxu0 0.0
    %2947 = vmatprep.subr.mxu0 0.0
    %2948 = vmatpush1.xpose.msra.mxu0 0.0
    %2949 = vmatprep.subr.mxu0 0.0
    %2950 = vmatpush1.xpose.msra.mxu0 0.0
    %2951 = vmatprep.subr.mxu0 0.0
    %2952 = vmatpush1.xpose.msra.mxu0 0.0
    %2953 = vmatprep.subr.mxu0 0.0
    %2954 = vmatpush1.xpose.msra.mxu0 0.0
    %2955 = vmatprep.subr.mxu0 0.0
    %2956 = vmatpush1.xpose.msra.mxu0 0.0
    %2957 = vmatprep.subr.mxu0 0.0
    %2958 = vmatpush1.xpose.msra.mxu0 0.0
    %2959 = vmatprep.subr.mxu0 0.0
    %2960 = vmatpush1.xpose.msra.mxu0 0.0
    %2961 = vmatprep.subr.mxu0 0.0
    %2962 = vmatpush1.xpose.msra.mxu0 0.0
    %2963 = vmatprep.subr.mxu0 0.0
    %2964 = vmatpush1.xpose.msra.mxu0 0.0
    %2965 = vmatprep.subr.mxu0 0.0
    %2966 = vmatpush1.xpose.msra.mxu0 0.0
    %2967 = vmatprep.subr.mxu0 0.0
    %2968 = vmatpush1.xpose.msra.mxu0 0.0
    %2969 = vmatprep.subr.mxu0 0.0
    %2970 = vmatpush1.xpose.msra.mxu0 0.0
    %2971 = vmatprep.subr.mxu0 0.0
    %2972 = vmatpush1.xpose.msra.mxu0 0.0
    %2973 = vmatprep.subr.mxu0 0.0
    %2974 = vmatpush1.xpose.msra.mxu0 0.0
    %2975 = vmatprep.subr.mxu0 0.0
    %2976 = vmatpush1.xpose.msra.mxu0 0.0
    %2977 = vmatprep.subr.mxu0 0.0
    %2978 = vmatpush1.xpose.msra.mxu0 0.0
    %2979 = vmatprep.subr.mxu0 0.0
    %2980 = vmatpush1.xpose.msra.mxu0 0.0
    %2981 = vmatprep.subr.mxu0 0.0
    %2982 = vmatpush1.xpose.msra.mxu0 0.0
    %2983 = vmatprep.subr.mxu0 0.0
    %2984 = vmatpush1.xpose.msra.mxu0 0.0
    %2985 = vmatprep.mubr.f32.mxu0 0.0
    %2986 = vmatmul.mubr.f32.gmra.mrb[0].mxu0 %v648
    %v2987 = vpop.f32.mrb[0].mxu0
    %v2988 = vadd.f32 0.0, %v2987
    %v2989 = vpop.f32.mrb[0].mxu0
    %2990 = vdwg.mxu0
    %2992 = vrot.lane.b32.xlu0 %v2615, 127
    %v2993 = vpop.permute.xlu0 %2992
    %v2994 = vsel %vm54, %v2993, 0
    %2996 = vmatprep.subr.mxu0 0.0
    %2997 = vmatpush1.xpose.msra.mxu0 %v2994
    %2998 = vmatprep.subr.mxu0 0.0
    %2999 = vmatpush1.xpose.msra.mxu0 0.0
    %3000 = vmatprep.subr.mxu0 0.0
    %3001 = vmatpush1.xpose.msra.mxu0 0.0
    %3002 = vmatprep.subr.mxu0 0.0
    %3003 = vmatpush1.xpose.msra.mxu0 0.0
    %3004 = vmatprep.subr.mxu0 0.0
    %3005 = vmatpush1.xpose.msra.mxu0 0.0
    %3006 = vmatprep.subr.mxu0 0.0
    %3007 = vmatpush1.xpose.msra.mxu0 0.0
    %3008 = vmatprep.subr.mxu0 0.0
    %3009 = vmatpush1.xpose.msra.mxu0 0.0
    %3010 = vmatprep.subr.mxu0 0.0
    %3011 = vmatpush1.xpose.msra.mxu0 0.0
    %3012 = vmatprep.subr.mxu0 0.0
    %3013 = vmatpush1.xpose.msra.mxu0 0.0
    %3014 = vmatprep.subr.mxu0 0.0
    %3015 = vmatpush1.xpose.msra.mxu0 0.0
    %3016 = vmatprep.subr.mxu0 0.0
    %3017 = vmatpush1.xpose.msra.mxu0 0.0
    %3018 = vmatprep.subr.mxu0 0.0
    %3019 = vmatpush1.xpose.msra.mxu0 0.0
    %3020 = vmatprep.subr.mxu0 0.0
    %3021 = vmatpush1.xpose.msra.mxu0 0.0
    %3022 = vmatprep.subr.mxu0 0.0
    %3023 = vmatpush1.xpose.msra.mxu0 0.0
    %3024 = vmatprep.subr.mxu0 0.0
    %3025 = vmatpush1.xpose.msra.mxu0 0.0
    %3026 = vmatprep.subr.mxu0 0.0
    %3027 = vmatpush1.xpose.msra.mxu0 0.0
    %3028 = vmatprep.subr.mxu0 0.0
    %3029 = vmatpush1.xpose.msra.mxu0 0.0
    %3030 = vmatprep.subr.mxu0 0.0
    %3031 = vmatpush1.xpose.msra.mxu0 0.0
    %3032 = vmatprep.subr.mxu0 0.0
    %3033 = vmatpush1.xpose.msra.mxu0 0.0
    %3034 = vmatprep.subr.mxu0 0.0
    %3035 = vmatpush1.xpose.msra.mxu0 0.0
    %3036 = vmatprep.subr.mxu0 0.0
    %3037 = vmatpush1.xpose.msra.mxu0 0.0
    %3038 = vmatprep.subr.mxu0 0.0
    %3039 = vmatpush1.xpose.msra.mxu0 0.0
    %3040 = vmatprep.subr.mxu0 0.0
    %3041 = vmatpush1.xpose.msra.mxu0 0.0
    %3042 = vmatprep.subr.mxu0 0.0
    %3043 = vmatpush1.xpose.msra.mxu0 0.0
    %3044 = vmatprep.subr.mxu0 0.0
    %3045 = vmatpush1.xpose.msra.mxu0 0.0
    %3046 = vmatprep.subr.mxu0 0.0
    %3047 = vmatpush1.xpose.msra.mxu0 0.0
    %3048 = vmatprep.subr.mxu0 0.0
    %3049 = vmatpush1.xpose.msra.mxu0 0.0
    %3050 = vmatprep.subr.mxu0 0.0
    %3051 = vmatpush1.xpose.msra.mxu0 0.0
    %3052 = vmatprep.subr.mxu0 0.0
    %3053 = vmatpush1.xpose.msra.mxu0 0.0
    %3054 = vmatprep.subr.mxu0 0.0
    %3055 = vmatpush1.xpose.msra.mxu0 0.0
    %3056 = vmatprep.subr.mxu0 0.0
    %3057 = vmatpush1.xpose.msra.mxu0 0.0
    %3058 = vmatprep.subr.mxu0 0.0
    %3059 = vmatpush1.xpose.msra.mxu0 0.0
    %3060 = vmatprep.mubr.f32.mxu0 0.0
    %3061 = vmatmul.mubr.f32.gmra.mrb[0].mxu0 %v648
    %v3062 = vpop.f32.mrb[0].mxu0
    %v3063 = vadd.f32 0.0, %v3062
    %v3064 = vpop.f32.mrb[0].mxu0
    %3065 = vdwg.mxu0
    %v3072 = vsel %vm54, %v2618, 0.0
    %3073 = vadd.xlane.f32.xlu0 %v3072
    %v3074 = vpop.xlane.xlu0 %3073
    %v3075 = vsel %vm54, %v2693, 0.0
    %3076 = vadd.xlane.f32.xlu0 %v3075
    %v3077 = vpop.xlane.xlu0 %3076
    %v3078 = vsel %vm54, %v2768, 0.0
    %3079 = vadd.xlane.f32.xlu0 %v3078
    %v3080 = vpop.xlane.xlu0 %3079
    %v3081 = vsel %vm54, %v2843, 0.0
    %3082 = vadd.xlane.f32.xlu0 %v3081
    %v3083 = vpop.xlane.xlu0 %3082
    %v3084 = vsel %vm54, %v2918, 0.0
    %3085 = vadd.xlane.f32.xlu0 %v3084
    %v3086 = vpop.xlane.xlu0 %3085
    %v3087 = vsel %vm54, %v2993, 0.0
    %3088 = vadd.xlane.f32.xlu0 %v3087
    %v3089 = vpop.xlane.xlu0 %3088
    %v3090 = vrsqrt.pop %v3074
    %v3091 = vmul.f32 %v3074, %v3090
    %vm3092 = vcmp.eq.f32.partialorder %v3074, inf
    %v3093 = vsel %vm3092, %v3074, %v3091
    %vm3094 = vcmp.eq.f32.partialorder %v3074, 0.0
    %v3095 = vand.u32 %v3074, 2147483648
    %v3096 = vsel %vm3094, %v3095, %v3093
    %v3097 = vrsqrt.pop %v3077
    %v3098 = vmul.f32 %v3077, %v3097
    %vm3099 = vcmp.eq.f32.partialorder %v3077, inf
    %v3100 = vsel %vm3099, %v3077, %v3098
    %vm3101 = vcmp.eq.f32.partialorder %v3077, 0.0
    %v3102 = vand.u32 %v3077, 2147483648
    %v3103 = vsel %vm3101, %v3102, %v3100
    %v3104 = vrsqrt.pop %v3080
    %v3105 = vmul.f32 %v3080, %v3104
    %vm3106 = vcmp.eq.f32.partialorder %v3080, inf
    %v3107 = vsel %vm3106, %v3080, %v3105
    %vm3108 = vcmp.eq.f32.partialorder %v3080, 0.0
    %v3109 = vand.u32 %v3080, 2147483648
    %v3110 = vsel %vm3108, %v3109, %v3107
    %v3111 = vrsqrt.pop %v3083
    %v3112 = vmul.f32 %v3083, %v3111
    %vm3113 = vcmp.eq.f32.partialorder %v3083, inf
    %v3114 = vsel %vm3113, %v3083, %v3112
    %vm3115 = vcmp.eq.f32.partialorder %v3083, 0.0
    %v3116 = vand.u32 %v3083, 2147483648
    %v3117 = vsel %vm3115, %v3116, %v3114
    %v3118 = vrsqrt.pop %v3086
    %v3119 = vmul.f32 %v3086, %v3118
    %vm3120 = vcmp.eq.f32.partialorder %v3086, inf
    %v3121 = vsel %vm3120, %v3086, %v3119
    %vm3122 = vcmp.eq.f32.partialorder %v3086, 0.0
    %v3123 = vand.u32 %v3086, 2147483648
    %v3124 = vsel %vm3122, %v3123, %v3121
    %v3125 = vrsqrt.pop %v3089
    %v3126 = vmul.f32 %v3089, %v3125
    %vm3127 = vcmp.eq.f32.partialorder %v3089, inf
    %v3128 = vsel %vm3127, %v3089, %v3126
    %vm3129 = vcmp.eq.f32.partialorder %v3089, 0.0
    %v3130 = vand.u32 %v3089, 2147483648
    %v3131 = vsel %vm3129, %v3130, %v3128
    %v3132 = vrsqrt.pop %v2688
    %v3133 = vmul.f32 %v2688, %v3132
    %vm3134 = vcmp.eq.f32.partialorder %v2688, inf
    %v3135 = vsel %vm3134, %v2688, %v3133
    %vm3136 = vcmp.eq.f32.partialorder %v2688, 0.0
    %v3137 = vand.u32 %v2688, 2147483648
    %v3138 = vsel %vm3136, %v3137, %v3135
    %v3139 = vrsqrt.pop %v2763
    %v3140 = vmul.f32 %v2763, %v3139
    %vm3141 = vcmp.eq.f32.partialorder %v2763, inf
    %v3142 = vsel %vm3141, %v2763, %v3140
    %vm3143 = vcmp.eq.f32.partialorder %v2763, 0.0
    %v3144 = vand.u32 %v2763, 2147483648
    %v3145 = vsel %vm3143, %v3144, %v3142
    %v3146 = vrsqrt.pop %v2838
    %v3147 = vmul.f32 %v2838, %v3146
    %vm3148 = vcmp.eq.f32.partialorder %v2838, inf
    %v3149 = vsel %vm3148, %v2838, %v3147
    %vm3150 = vcmp.eq.f32.partialorder %v2838, 0.0
    %v3151 = vand.u32 %v2838, 2147483648
    %v3152 = vsel %vm3150, %v3151, %v3149
    %v3153 = vrsqrt.pop %v2913
    %v3154 = vmul.f32 %v2913, %v3153
    %vm3155 = vcmp.eq.f32.partialorder %v2913, inf
    %v3156 = vsel %vm3155, %v2913, %v3154
    %vm3157 = vcmp.eq.f32.partialorder %v2913, 0.0
    %v3158 = vand.u32 %v2913, 2147483648
    %v3159 = vsel %vm3157, %v3158, %v3156
    %v3160 = vrsqrt.pop %v2988
    %v3161 = vmul.f32 %v2988, %v3160
    %vm3162 = vcmp.eq.f32.partialorder %v2988, inf
    %v3163 = vsel %vm3162, %v2988, %v3161
    %vm3164 = vcmp.eq.f32.partialorder %v2988, 0.0
    %v3165 = vand.u32 %v2988, 2147483648
    %v3166 = vsel %vm3164, %v3165, %v3163
    %v3167 = vrsqrt.pop %v3063
    %v3168 = vmul.f32 %v3063, %v3167
    %vm3169 = vcmp.eq.f32.partialorder %v3063, inf
    %v3170 = vsel %vm3169, %v3063, %v3168
    %vm3171 = vcmp.eq.f32.partialorder %v3063, 0.0
    %v3172 = vand.u32 %v3063, 2147483648
    %v3173 = vsel %vm3171, %v3172, %v3170
    %v3174 = vmul.f32 %v3096, %v3138
    %v3175 = vmul.f32 %v3103, %v3145
    %v3176 = vmul.f32 %v3110, %v3152
    %v3177 = vmul.f32 %v3117, %v3159
    %v3178 = vmul.f32 %v3124, %v3166
    %v3179 = vmul.f32 %v3131, %v3173
    %v3180 = vmax.f32 %v3174, 1e-08
    %v3181 = vmax.f32 %v3175, 1e-08
    %v3182 = vmax.f32 %v3176, 1e-08
    %v3183 = vmax.f32 %v3177, 1e-08
    %v3184 = vmax.f32 %v3178, 1e-08
    %v3185 = vmax.f32 %v3179, 1e-08
    %v3186 = vrcp.pop %v3180
    %v3187 = vmul.f32 %v2232, %v3186
    %v3188 = vrcp.pop %v3181
    %v3189 = vmul.f32 %v2307, %v3188
    %v3190 = vrcp.pop %v3182
    %v3191 = vmul.f32 %v2382, %v3190
    %v3192 = vrcp.pop %v3183
    %v3193 = vmul.f32 %v2457, %v3192
    %v3194 = vrcp.pop %v3184
    %v3195 = vmul.f32 %v2532, %v3194
    %v3196 = vrcp.pop %v3185
    %v3197 = vmul.f32 %v2607, %v3196
    %v3198 = vmax.f32 %v3187, -1.0
    %v3199 = vmax.f32 %v3189, -1.0
    %v3200 = vmax.f32 %v3191, -1.0
    %v3201 = vmax.f32 %v3193, -1.0
    %v3202 = vmax.f32 %v3195, -1.0
    %v3203 = vmax.f32 %v3197, -1.0
    %v3204 = vmin.f32 %v3198, 1.0
    %v3205 = vmin.f32 %v3199, 1.0
    %v3206 = vmin.f32 %v3200, 1.0
    %v3207 = vmin.f32 %v3201, 1.0
    %v3208 = vmin.f32 %v3202, 1.0
    %v3209 = vmin.f32 %v3203, 1.0
    %vm3210 = vcmp.lt.f32.partialorder %v3204, 0.9848077
    %vm3211 = vcmp.lt.f32.partialorder %v3205, 0.9848077
    %vm3212 = vcmp.lt.f32.partialorder %v3206, 0.9848077
    %vm3213 = vcmp.lt.f32.partialorder %v3207, 0.9848077
    %vm3214 = vcmp.lt.f32.partialorder %v3208, 0.9848077
    %vm3215 = vcmp.lt.f32.partialorder %v3209, 0.9848077
    %v3216 = vsel %vm3210, 1.0, 0.0
    %v3217 = vsel %vm3211, 1.0, 0.0
    %v3218 = vsel %vm3212, 1.0, 0.0
    %v3219 = vsel %vm3213, 1.0, 0.0
    %v3220 = vsel %vm3214, 1.0, 0.0
    %v3221 = vsel %vm3215, 1.0, 0.0
    %vm3222 = vcmp.ge.s32.totalorder %v2060, 1
    %vm3223 = vcmp.ge.s32.totalorder %v2062, 1
    %vm3224 = vmand %vm3222, %vm3223
    %v3225 = vsel %vm3224, %v3216, 0.0
    %v3226 = vsel %vm3224, %v3217, 0.0
    %v3227 = vsel %vm3224, %v3218, 0.0
    %v3228 = vsel %vm3224, %v3219, 0.0
    %v3229 = vsel %vm3224, %v3220, 0.0
    %v3230 = vsel %vm3224, %v3221, 0.0
    %v3231 = vadd.f32 %v3225, %v2154
    %v3232 = vadd.f32 %v3226, %v2155
    %v3233 = vadd.f32 %v3227, %v2156
    %v3234 = vadd.f32 %v3228, %v2157
    %v3235 = vadd.f32 %v3229, %v2158
    %v3236 = vadd.f32 %v3230, %v2159
    %v3237 = vld [vmem:[%s4] sm:$0x1]
    %v3238 = vld [vmem:[%s4 + $0x1] sm:$0x1]
    %v3239 = vld [vmem:[%s4 + $0x2] sm:$0x1]
    %v3240 = vld [vmem:[%s4 + $0x3] sm:$0x1]
    %v3241 = vld [vmem:[%s4 + $0x4] sm:$0x1]
    %v3242 = vld [vmem:[%s4 + $0x5] sm:$0x1]
    %v3243 = vld [vmem:[%s4 + $0x6] sm:$0x1]
    %v3244 = vld [vmem:[%s4 + $0x7] sm:$0x1]
    %v3245 = vld [vmem:[%s4 + $0x8] sm:$0x1]
    %v3246 = vld [vmem:[%s4 + $0x9] sm:$0x1]
    %v3247 = vld [vmem:[%s4 + $0xa] sm:$0x1]
    %v3248 = vld [vmem:[%s4 + $0xb] sm:$0x1]
    %v3249 = vld [vmem:[%s4 + $0xc] sm:$0x1]
    %v3250 = vld [vmem:[%s4 + $0xd] sm:$0x1]
    %v3251 = vld [vmem:[%s4 + $0xe] sm:$0x1]
    %v3252 = vld [vmem:[%s4 + $0xf] sm:$0x1]
    %v3253 = vld [vmem:[%s5] sm:$0x1]
    %v3254 = vld [vmem:[%s5 + $0x1] sm:$0x1]
    %v3255 = vld [vmem:[%s5 + $0x2] sm:$0x1]
    %v3256 = vld [vmem:[%s5 + $0x3] sm:$0x1]
    %v3257 = vld [vmem:[%s5 + $0x4] sm:$0x1]
    %v3258 = vld [vmem:[%s5 + $0x5] sm:$0x1]
    %v3259 = vld [vmem:[%s5 + $0x6] sm:$0x1]
    %v3260 = vld [vmem:[%s5 + $0x7] sm:$0x1]
    %3261 = vset.pattern.permute.xlu0 0
    %3262 = vperm.xlu0 %3261, %v32
    %v3263 = vpop.permute.xlu0 %3262
    %3265 = vset.pattern.permute.xlu0 0
    %3266 = vperm.xlu0 %3265, %v33
    %v3267 = vpop.permute.xlu0 %3266
    %3269 = vset.pattern.permute.xlu0 0
    %3270 = vperm.xlu0 %3269, %v34
    %v3271 = vpop.permute.xlu0 %3270
    %3273 = vset.pattern.permute.xlu0 0
    %3274 = vperm.xlu0 %3273, %v35
    %v3275 = vpop.permute.xlu0 %3274
    %3277 = vset.pattern.permute.xlu0 0
    %3278 = vperm.xlu0 %3277, %v36
    %v3279 = vpop.permute.xlu0 %3278
    %3281 = vset.pattern.permute.xlu0 0
    %3282 = vperm.xlu0 %3281, %v37
    %v3283 = vpop.permute.xlu0 %3282
    %3285 = vset.pattern.permute.xlu0 0
    %3286 = vperm.xlu0 %3285, %v38
    %v3287 = vpop.permute.xlu0 %3286
    %3289 = vset.pattern.permute.xlu0 0
    %3290 = vperm.xlu0 %3289, %v39
    %v3291 = vpop.permute.xlu0 %3290
    %v3297 = vlaneseq
    %v3298 = vshrl.u32 %v3297, 7
    %v3299 = vsub.s32 0, %v3298
    %v3300 = vrot.slane %v3237, %v3299
    %v3301 = vlaneseq
    %v3302 = vshrl.u32 %v3301, 7
    %v3303 = vsub.s32 0, %v3302
    %v3304 = vrot.slane %v3238, %v3303
    %v3305 = vlaneseq
    %v3306 = vshrl.u32 %v3305, 7
    %v3307 = vsub.s32 0, %v3306
    %v3308 = vrot.slane %v3239, %v3307
    %v3309 = vlaneseq
    %v3310 = vshrl.u32 %v3309, 7
    %v3311 = vsub.s32 0, %v3310
    %v3312 = vrot.slane %v3240, %v3311
    %v3317 = vmul.f32 %v3263, %v3300
    %v3318 = vmul.f32 %v3263, %v3304
    %v3319 = vmul.f32 %v3263, %v3308
    %v3320 = vmul.f32 %v3263, %v3312
    %v3321 = vmul.f32 %v3267, %v3300
    %v3322 = vmul.f32 %v3267, %v3304
    %v3323 = vmul.f32 %v3267, %v3308
    %v3324 = vmul.f32 %v3267, %v3312
    %v3325 = vmul.f32 %v3271, %v3300
    %v3326 = vmul.f32 %v3271, %v3304
    %v3327 = vmul.f32 %v3271, %v3308
    %v3328 = vmul.f32 %v3271, %v3312
    %v3329 = vmul.f32 %v3275, %v3300
    %v3330 = vmul.f32 %v3275, %v3304
    %v3331 = vmul.f32 %v3275, %v3308
    %v3332 = vmul.f32 %v3275, %v3312
    %v3333 = vmul.f32 %v3279, %v3300
    %v3334 = vmul.f32 %v3279, %v3304
    %v3335 = vmul.f32 %v3279, %v3308
    %v3336 = vmul.f32 %v3279, %v3312
    %v3337 = vmul.f32 %v3283, %v3300
    %v3338 = vmul.f32 %v3283, %v3304
    %v3339 = vmul.f32 %v3283, %v3308
    %v3340 = vmul.f32 %v3283, %v3312
    %v3341 = vmul.f32 %v3287, %v3300
    %v3342 = vmul.f32 %v3287, %v3304
    %v3343 = vmul.f32 %v3287, %v3308
    %v3344 = vmul.f32 %v3287, %v3312
    %v3345 = vmul.f32 %v3291, %v3300
    %v3346 = vmul.f32 %v3291, %v3304
    %v3347 = vmul.f32 %v3291, %v3308
    %v3348 = vmul.f32 %v3291, %v3312
    %v3353 = vlaneseq
    %v3354 = vshrl.u32 %v3353, 7
    %v3355 = vsub.s32 0, %v3354
    %v3356 = vrot.slane %v3253, %v3355
    %v3357 = vlaneseq
    %v3358 = vshrl.u32 %v3357, 7
    %v3359 = vsub.s32 0, %v3358
    %v3360 = vrot.slane %v3254, %v3359
    %v3361 = vlaneseq
    %v3362 = vshrl.u32 %v3361, 7
    %v3363 = vsub.s32 0, %v3362
    %v3364 = vrot.slane %v3255, %v3363
    %v3365 = vlaneseq
    %v3366 = vshrl.u32 %v3365, 7
    %v3367 = vsub.s32 0, %v3366
    %v3368 = vrot.slane %v3256, %v3367
    %v3373 = vadd.f32 %v3317, %v3356
    %v3374 = vadd.f32 %v3318, %v3360
    %v3375 = vadd.f32 %v3319, %v3364
    %v3376 = vadd.f32 %v3320, %v3368
    %v3377 = vadd.f32 %v3321, %v3356
    %v3378 = vadd.f32 %v3322, %v3360
    %v3379 = vadd.f32 %v3323, %v3364
    %v3380 = vadd.f32 %v3324, %v3368
    %v3381 = vadd.f32 %v3325, %v3356
    %v3382 = vadd.f32 %v3326, %v3360
    %v3383 = vadd.f32 %v3327, %v3364
    %v3384 = vadd.f32 %v3328, %v3368
    %v3385 = vadd.f32 %v3329, %v3356
    %v3386 = vadd.f32 %v3330, %v3360
    %v3387 = vadd.f32 %v3331, %v3364
    %v3388 = vadd.f32 %v3332, %v3368
    %v3389 = vadd.f32 %v3333, %v3356
    %v3390 = vadd.f32 %v3334, %v3360
    %v3391 = vadd.f32 %v3335, %v3364
    %v3392 = vadd.f32 %v3336, %v3368
    %v3393 = vadd.f32 %v3337, %v3356
    %v3394 = vadd.f32 %v3338, %v3360
    %v3395 = vadd.f32 %v3339, %v3364
    %v3396 = vadd.f32 %v3340, %v3368
    %v3397 = vadd.f32 %v3341, %v3356
    %v3398 = vadd.f32 %v3342, %v3360
    %v3399 = vadd.f32 %v3343, %v3364
    %v3400 = vadd.f32 %v3344, %v3368
    %v3401 = vadd.f32 %v3345, %v3356
    %v3402 = vadd.f32 %v3346, %v3360
    %v3403 = vadd.f32 %v3347, %v3364
    %v3404 = vadd.f32 %v3348, %v3368
    %3405 = vset.pattern.permute.xlu0 1
    %3406 = vperm.xlu0 %3405, %v32
    %v3407 = vpop.permute.xlu0 %3406
    %3409 = vset.pattern.permute.xlu0 1
    %3410 = vperm.xlu0 %3409, %v33
    %v3411 = vpop.permute.xlu0 %3410
    %3413 = vset.pattern.permute.xlu0 1
    %3414 = vperm.xlu0 %3413, %v34
    %v3415 = vpop.permute.xlu0 %3414
    %3417 = vset.pattern.permute.xlu0 1
    %3418 = vperm.xlu0 %3417, %v35
    %v3419 = vpop.permute.xlu0 %3418
    %3421 = vset.pattern.permute.xlu0 1
    %3422 = vperm.xlu0 %3421, %v36
    %v3423 = vpop.permute.xlu0 %3422
    %3425 = vset.pattern.permute.xlu0 1
    %3426 = vperm.xlu0 %3425, %v37
    %v3427 = vpop.permute.xlu0 %3426
    %3429 = vset.pattern.permute.xlu0 1
    %3430 = vperm.xlu0 %3429, %v38
    %v3431 = vpop.permute.xlu0 %3430
    %3433 = vset.pattern.permute.xlu0 1
    %3434 = vperm.xlu0 %3433, %v39
    %v3435 = vpop.permute.xlu0 %3434
    %v3441 = vlaneseq
    %v3442 = vshrl.u32 %v3441, 7
    %v3443 = vsub.s32 0, %v3442
    %v3444 = vrot.slane %v3241, %v3443
    %v3445 = vlaneseq
    %v3446 = vshrl.u32 %v3445, 7
    %v3447 = vsub.s32 0, %v3446
    %v3448 = vrot.slane %v3242, %v3447
    %v3449 = vlaneseq
    %v3450 = vshrl.u32 %v3449, 7
    %v3451 = vsub.s32 0, %v3450
    %v3452 = vrot.slane %v3243, %v3451
    %v3453 = vlaneseq
    %v3454 = vshrl.u32 %v3453, 7
    %v3455 = vsub.s32 0, %v3454
    %v3456 = vrot.slane %v3244, %v3455
    %v3461 = vmul.f32 %v3407, %v3444
    %v3462 = vmul.f32 %v3407, %v3448
    %v3463 = vmul.f32 %v3407, %v3452
    %v3464 = vmul.f32 %v3407, %v3456
    %v3465 = vmul.f32 %v3411, %v3444
    %v3466 = vmul.f32 %v3411, %v3448
    %v3467 = vmul.f32 %v3411, %v3452
    %v3468 = vmul.f32 %v3411, %v3456
    %v3469 = vmul.f32 %v3415, %v3444
    %v3470 = vmul.f32 %v3415, %v3448
    %v3471 = vmul.f32 %v3415, %v3452
    %v3472 = vmul.f32 %v3415, %v3456
    %v3473 = vmul.f32 %v3419, %v3444
    %v3474 = vmul.f32 %v3419, %v3448
    %v3475 = vmul.f32 %v3419, %v3452
    %v3476 = vmul.f32 %v3419, %v3456
    %v3477 = vmul.f32 %v3423, %v3444
    %v3478 = vmul.f32 %v3423, %v3448
    %v3479 = vmul.f32 %v3423, %v3452
    %v3480 = vmul.f32 %v3423, %v3456
    %v3481 = vmul.f32 %v3427, %v3444
    %v3482 = vmul.f32 %v3427, %v3448
    %v3483 = vmul.f32 %v3427, %v3452
    %v3484 = vmul.f32 %v3427, %v3456
    %v3485 = vmul.f32 %v3431, %v3444
    %v3486 = vmul.f32 %v3431, %v3448
    %v3487 = vmul.f32 %v3431, %v3452
    %v3488 = vmul.f32 %v3431, %v3456
    %v3489 = vmul.f32 %v3435, %v3444
    %v3490 = vmul.f32 %v3435, %v3448
    %v3491 = vmul.f32 %v3435, %v3452
    %v3492 = vmul.f32 %v3435, %v3456
    %v3493 = vadd.f32 %v3373, %v3461
    %v3494 = vadd.f32 %v3374, %v3462
    %v3495 = vadd.f32 %v3375, %v3463
    %v3496 = vadd.f32 %v3376, %v3464
    %v3497 = vadd.f32 %v3377, %v3465
    %v3498 = vadd.f32 %v3378, %v3466
    %v3499 = vadd.f32 %v3379, %v3467
    %v3500 = vadd.f32 %v3380, %v3468
    %v3501 = vadd.f32 %v3381, %v3469
    %v3502 = vadd.f32 %v3382, %v3470
    %v3503 = vadd.f32 %v3383, %v3471
    %v3504 = vadd.f32 %v3384, %v3472
    %v3505 = vadd.f32 %v3385, %v3473
    %v3506 = vadd.f32 %v3386, %v3474
    %v3507 = vadd.f32 %v3387, %v3475
    %v3508 = vadd.f32 %v3388, %v3476
    %v3509 = vadd.f32 %v3389, %v3477
    %v3510 = vadd.f32 %v3390, %v3478
    %v3511 = vadd.f32 %v3391, %v3479
    %v3512 = vadd.f32 %v3392, %v3480
    %v3513 = vadd.f32 %v3393, %v3481
    %v3514 = vadd.f32 %v3394, %v3482
    %v3515 = vadd.f32 %v3395, %v3483
    %v3516 = vadd.f32 %v3396, %v3484
    %v3517 = vadd.f32 %v3397, %v3485
    %v3518 = vadd.f32 %v3398, %v3486
    %v3519 = vadd.f32 %v3399, %v3487
    %v3520 = vadd.f32 %v3400, %v3488
    %v3521 = vadd.f32 %v3401, %v3489
    %v3522 = vadd.f32 %v3402, %v3490
    %v3523 = vadd.f32 %v3403, %v3491
    %v3524 = vadd.f32 %v3404, %v3492
    %v3529 = vlaneseq
    %v3530 = vshrl.u32 %v3529, 7
    %v3531 = vsub.s32 0, %v3530
    %v3532 = vrot.slane %v3245, %v3531
    %v3533 = vlaneseq
    %v3534 = vshrl.u32 %v3533, 7
    %v3535 = vsub.s32 0, %v3534
    %v3536 = vrot.slane %v3246, %v3535
    %v3537 = vlaneseq
    %v3538 = vshrl.u32 %v3537, 7
    %v3539 = vsub.s32 0, %v3538
    %v3540 = vrot.slane %v3247, %v3539
    %v3541 = vlaneseq
    %v3542 = vshrl.u32 %v3541, 7
    %v3543 = vsub.s32 0, %v3542
    %v3544 = vrot.slane %v3248, %v3543
    %v3549 = vmul.f32 %v3263, %v3532
    %v3550 = vmul.f32 %v3263, %v3536
    %v3551 = vmul.f32 %v3263, %v3540
    %v3552 = vmul.f32 %v3263, %v3544
    %v3553 = vmul.f32 %v3267, %v3532
    %v3554 = vmul.f32 %v3267, %v3536
    %v3555 = vmul.f32 %v3267, %v3540
    %v3556 = vmul.f32 %v3267, %v3544
    %v3557 = vmul.f32 %v3271, %v3532
    %v3558 = vmul.f32 %v3271, %v3536
    %v3559 = vmul.f32 %v3271, %v3540
    %v3560 = vmul.f32 %v3271, %v3544
    %v3561 = vmul.f32 %v3275, %v3532
    %v3562 = vmul.f32 %v3275, %v3536
    %v3563 = vmul.f32 %v3275, %v3540
    %v3564 = vmul.f32 %v3275, %v3544
    %v3565 = vmul.f32 %v3279, %v3532
    %v3566 = vmul.f32 %v3279, %v3536
    %v3567 = vmul.f32 %v3279, %v3540
    %v3568 = vmul.f32 %v3279, %v3544
    %v3569 = vmul.f32 %v3283, %v3532
    %v3570 = vmul.f32 %v3283, %v3536
    %v3571 = vmul.f32 %v3283, %v3540
    %v3572 = vmul.f32 %v3283, %v3544
    %v3573 = vmul.f32 %v3287, %v3532
    %v3574 = vmul.f32 %v3287, %v3536
    %v3575 = vmul.f32 %v3287, %v3540
    %v3576 = vmul.f32 %v3287, %v3544
    %v3577 = vmul.f32 %v3291, %v3532
    %v3578 = vmul.f32 %v3291, %v3536
    %v3579 = vmul.f32 %v3291, %v3540
    %v3580 = vmul.f32 %v3291, %v3544
    %v3585 = vlaneseq
    %v3586 = vshrl.u32 %v3585, 7
    %v3587 = vsub.s32 0, %v3586
    %v3588 = vrot.slane %v3257, %v3587
    %v3589 = vlaneseq
    %v3590 = vshrl.u32 %v3589, 7
    %v3591 = vsub.s32 0, %v3590
    %v3592 = vrot.slane %v3258, %v3591
    %v3593 = vlaneseq
    %v3594 = vshrl.u32 %v3593, 7
    %v3595 = vsub.s32 0, %v3594
    %v3596 = vrot.slane %v3259, %v3595
    %v3597 = vlaneseq
    %v3598 = vshrl.u32 %v3597, 7
    %v3599 = vsub.s32 0, %v3598
    %v3600 = vrot.slane %v3260, %v3599
    %v3605 = vadd.f32 %v3549, %v3588
    %v3606 = vadd.f32 %v3550, %v3592
    %v3607 = vadd.f32 %v3551, %v3596
    %v3608 = vadd.f32 %v3552, %v3600
    %v3609 = vadd.f32 %v3553, %v3588
    %v3610 = vadd.f32 %v3554, %v3592
    %v3611 = vadd.f32 %v3555, %v3596
    %v3612 = vadd.f32 %v3556, %v3600
    %v3613 = vadd.f32 %v3557, %v3588
    %v3614 = vadd.f32 %v3558, %v3592
    %v3615 = vadd.f32 %v3559, %v3596
    %v3616 = vadd.f32 %v3560, %v3600
    %v3617 = vadd.f32 %v3561, %v3588
    %v3618 = vadd.f32 %v3562, %v3592
    %v3619 = vadd.f32 %v3563, %v3596
    %v3620 = vadd.f32 %v3564, %v3600
    %v3621 = vadd.f32 %v3565, %v3588
    %v3622 = vadd.f32 %v3566, %v3592
    %v3623 = vadd.f32 %v3567, %v3596
    %v3624 = vadd.f32 %v3568, %v3600
    %v3625 = vadd.f32 %v3569, %v3588
    %v3626 = vadd.f32 %v3570, %v3592
    %v3627 = vadd.f32 %v3571, %v3596
    %v3628 = vadd.f32 %v3572, %v3600
    %v3629 = vadd.f32 %v3573, %v3588
    %v3630 = vadd.f32 %v3574, %v3592
    %v3631 = vadd.f32 %v3575, %v3596
    %v3632 = vadd.f32 %v3576, %v3600
    %v3633 = vadd.f32 %v3577, %v3588
    %v3634 = vadd.f32 %v3578, %v3592
    %v3635 = vadd.f32 %v3579, %v3596
    %v3636 = vadd.f32 %v3580, %v3600
    %v3641 = vlaneseq
    %v3642 = vshrl.u32 %v3641, 7
    %v3643 = vsub.s32 0, %v3642
    %v3644 = vrot.slane %v3249, %v3643
    %v3645 = vlaneseq
    %v3646 = vshrl.u32 %v3645, 7
    %v3647 = vsub.s32 0, %v3646
    %v3648 = vrot.slane %v3250, %v3647
    %v3649 = vlaneseq
    %v3650 = vshrl.u32 %v3649, 7
    %v3651 = vsub.s32 0, %v3650
    %v3652 = vrot.slane %v3251, %v3651
    %v3653 = vlaneseq
    %v3654 = vshrl.u32 %v3653, 7
    %v3655 = vsub.s32 0, %v3654
    %v3656 = vrot.slane %v3252, %v3655
    %v3661 = vmul.f32 %v3407, %v3644
    %v3662 = vmul.f32 %v3407, %v3648
    %v3663 = vmul.f32 %v3407, %v3652
    %v3664 = vmul.f32 %v3407, %v3656
    %v3665 = vmul.f32 %v3411, %v3644
    %v3666 = vmul.f32 %v3411, %v3648
    %v3667 = vmul.f32 %v3411, %v3652
    %v3668 = vmul.f32 %v3411, %v3656
    %v3669 = vmul.f32 %v3415, %v3644
    %v3670 = vmul.f32 %v3415, %v3648
    %v3671 = vmul.f32 %v3415, %v3652
    %v3672 = vmul.f32 %v3415, %v3656
    %v3673 = vmul.f32 %v3419, %v3644
    %v3674 = vmul.f32 %v3419, %v3648
    %v3675 = vmul.f32 %v3419, %v3652
    %v3676 = vmul.f32 %v3419, %v3656
    %v3677 = vmul.f32 %v3423, %v3644
    %v3678 = vmul.f32 %v3423, %v3648
    %v3679 = vmul.f32 %v3423, %v3652
    %v3680 = vmul.f32 %v3423, %v3656
    %v3681 = vmul.f32 %v3427, %v3644
    %v3682 = vmul.f32 %v3427, %v3648
    %v3683 = vmul.f32 %v3427, %v3652
    %v3684 = vmul.f32 %v3427, %v3656
    %v3685 = vmul.f32 %v3431, %v3644
    %v3686 = vmul.f32 %v3431, %v3648
    %v3687 = vmul.f32 %v3431, %v3652
    %v3688 = vmul.f32 %v3431, %v3656
    %v3689 = vmul.f32 %v3435, %v3644
    %v3690 = vmul.f32 %v3435, %v3648
    %v3691 = vmul.f32 %v3435, %v3652
    %v3692 = vmul.f32 %v3435, %v3656
    %v3693 = vadd.f32 %v3605, %v3661
    %v3694 = vadd.f32 %v3606, %v3662
    %v3695 = vadd.f32 %v3607, %v3663
    %v3696 = vadd.f32 %v3608, %v3664
    %v3697 = vadd.f32 %v3609, %v3665
    %v3698 = vadd.f32 %v3610, %v3666
    %v3699 = vadd.f32 %v3611, %v3667
    %v3700 = vadd.f32 %v3612, %v3668
    %v3701 = vadd.f32 %v3613, %v3669
    %v3702 = vadd.f32 %v3614, %v3670
    %v3703 = vadd.f32 %v3615, %v3671
    %v3704 = vadd.f32 %v3616, %v3672
    %v3705 = vadd.f32 %v3617, %v3673
    %v3706 = vadd.f32 %v3618, %v3674
    %v3707 = vadd.f32 %v3619, %v3675
    %v3708 = vadd.f32 %v3620, %v3676
    %v3709 = vadd.f32 %v3621, %v3677
    %v3710 = vadd.f32 %v3622, %v3678
    %v3711 = vadd.f32 %v3623, %v3679
    %v3712 = vadd.f32 %v3624, %v3680
    %v3713 = vadd.f32 %v3625, %v3681
    %v3714 = vadd.f32 %v3626, %v3682
    %v3715 = vadd.f32 %v3627, %v3683
    %v3716 = vadd.f32 %v3628, %v3684
    %v3717 = vadd.f32 %v3629, %v3685
    %v3718 = vadd.f32 %v3630, %v3686
    %v3719 = vadd.f32 %v3631, %v3687
    %v3720 = vadd.f32 %v3632, %v3688
    %v3721 = vadd.f32 %v3633, %v3689
    %v3722 = vadd.f32 %v3634, %v3690
    %v3723 = vadd.f32 %v3635, %v3691
    %v3724 = vadd.f32 %v3636, %v3692
    %vm3725 = vcmask 130048
    %v3727 = vsel %vm3725, %v3493, 0
    %v3730 = vsel %vm3725, %v3693, 0
    %3732 = vmatprep.subr.mxu0 0.0
    %3733 = vmatpush1.xpose.msra.mxu0 %v3730
    %3734 = vmatprep.subr.mxu0 0.0
    %3735 = vmatpush1.xpose.msra.mxu0 0.0
    %3736 = vmatprep.subr.mxu0 0.0
    %3737 = vmatpush1.xpose.msra.mxu0 0.0
    %3738 = vmatprep.subr.mxu0 0.0
    %3739 = vmatpush1.xpose.msra.mxu0 0.0
    %3740 = vmatprep.subr.mxu0 0.0
    %3741 = vmatpush1.xpose.msra.mxu0 0.0
    %3742 = vmatprep.subr.mxu0 0.0
    %3743 = vmatpush1.xpose.msra.mxu0 0.0
    %3744 = vmatprep.subr.mxu0 0.0
    %3745 = vmatpush1.xpose.msra.mxu0 0.0
    %3746 = vmatprep.subr.mxu0 0.0
    %3747 = vmatpush1.xpose.msra.mxu0 0.0
    %3748 = vmatprep.subr.mxu0 0.0
    %3749 = vmatpush1.xpose.msra.mxu0 0.0
    %3750 = vmatprep.subr.mxu0 0.0
    %3751 = vmatpush1.xpose.msra.mxu0 0.0
    %3752 = vmatprep.subr.mxu0 0.0
    %3753 = vmatpush1.xpose.msra.mxu0 0.0
    %3754 = vmatprep.subr.mxu0 0.0
    %3755 = vmatpush1.xpose.msra.mxu0 0.0
    %3756 = vmatprep.subr.mxu0 0.0
    %3757 = vmatpush1.xpose.msra.mxu0 0.0
    %3758 = vmatprep.subr.mxu0 0.0
    %3759 = vmatpush1.xpose.msra.mxu0 0.0
    %3760 = vmatprep.subr.mxu0 0.0
    %3761 = vmatpush1.xpose.msra.mxu0 0.0
    %3762 = vmatprep.subr.mxu0 0.0
    %3763 = vmatpush1.xpose.msra.mxu0 0.0
    %3764 = vmatprep.subr.mxu0 0.0
    %3765 = vmatpush1.xpose.msra.mxu0 0.0
    %3766 = vmatprep.subr.mxu0 0.0
    %3767 = vmatpush1.xpose.msra.mxu0 0.0
    %3768 = vmatprep.subr.mxu0 0.0
    %3769 = vmatpush1.xpose.msra.mxu0 0.0
    %3770 = vmatprep.subr.mxu0 0.0
    %3771 = vmatpush1.xpose.msra.mxu0 0.0
    %3772 = vmatprep.subr.mxu0 0.0
    %3773 = vmatpush1.xpose.msra.mxu0 0.0
    %3774 = vmatprep.subr.mxu0 0.0
    %3775 = vmatpush1.xpose.msra.mxu0 0.0
    %3776 = vmatprep.subr.mxu0 0.0
    %3777 = vmatpush1.xpose.msra.mxu0 0.0
    %3778 = vmatprep.subr.mxu0 0.0
    %3779 = vmatpush1.xpose.msra.mxu0 0.0
    %3780 = vmatprep.subr.mxu0 0.0
    %3781 = vmatpush1.xpose.msra.mxu0 0.0
    %3782 = vmatprep.subr.mxu0 0.0
    %3783 = vmatpush1.xpose.msra.mxu0 0.0
    %3784 = vmatprep.subr.mxu0 0.0
    %3785 = vmatpush1.xpose.msra.mxu0 0.0
    %3786 = vmatprep.subr.mxu0 0.0
    %3787 = vmatpush1.xpose.msra.mxu0 0.0
    %3788 = vmatprep.subr.mxu0 0.0
    %3789 = vmatpush1.xpose.msra.mxu0 0.0
    %3790 = vmatprep.subr.mxu0 0.0
    %3791 = vmatpush1.xpose.msra.mxu0 0.0
    %3792 = vmatprep.subr.mxu0 0.0
    %3793 = vmatpush1.xpose.msra.mxu0 0.0
    %3794 = vmatprep.subr.mxu0 0.0
    %3795 = vmatpush1.xpose.msra.mxu0 0.0
    %3796 = vmatprep.mubr.f32.mxu0 0.0
    %3797 = vmatmul.mubr.f32.gmra.mrb[0].mxu0 %v3727
    %v3798 = vpop.f32.mrb[0].mxu0
    %v3799 = vadd.f32 0.0, %v3798
    %v3800 = vpop.f32.mrb[0].mxu0
    %3801 = vdwg.mxu0
    %v3803 = vsel %vm3725, %v3494, 0
    %v3806 = vsel %vm3725, %v3694, 0
    %3808 = vmatprep.subr.mxu0 0.0
    %3809 = vmatpush1.xpose.msra.mxu0 %v3806
    %3810 = vmatprep.subr.mxu0 0.0
    %3811 = vmatpush1.xpose.msra.mxu0 0.0
    %3812 = vmatprep.subr.mxu0 0.0
    %3813 = vmatpush1.xpose.msra.mxu0 0.0
    %3814 = vmatprep.subr.mxu0 0.0
    %3815 = vmatpush1.xpose.msra.mxu0 0.0
    %3816 = vmatprep.subr.mxu0 0.0
    %3817 = vmatpush1.xpose.msra.mxu0 0.0
    %3818 = vmatprep.subr.mxu0 0.0
    %3819 = vmatpush1.xpose.msra.mxu0 0.0
    %3820 = vmatprep.subr.mxu0 0.0
    %3821 = vmatpush1.xpose.msra.mxu0 0.0
    %3822 = vmatprep.subr.mxu0 0.0
    %3823 = vmatpush1.xpose.msra.mxu0 0.0
    %3824 = vmatprep.subr.mxu0 0.0
    %3825 = vmatpush1.xpose.msra.mxu0 0.0
    %3826 = vmatprep.subr.mxu0 0.0
    %3827 = vmatpush1.xpose.msra.mxu0 0.0
    %3828 = vmatprep.subr.mxu0 0.0
    %3829 = vmatpush1.xpose.msra.mxu0 0.0
    %3830 = vmatprep.subr.mxu0 0.0
    %3831 = vmatpush1.xpose.msra.mxu0 0.0
    %3832 = vmatprep.subr.mxu0 0.0
    %3833 = vmatpush1.xpose.msra.mxu0 0.0
    %3834 = vmatprep.subr.mxu0 0.0
    %3835 = vmatpush1.xpose.msra.mxu0 0.0
    %3836 = vmatprep.subr.mxu0 0.0
    %3837 = vmatpush1.xpose.msra.mxu0 0.0
    %3838 = vmatprep.subr.mxu0 0.0
    %3839 = vmatpush1.xpose.msra.mxu0 0.0
    %3840 = vmatprep.subr.mxu0 0.0
    %3841 = vmatpush1.xpose.msra.mxu0 0.0
    %3842 = vmatprep.subr.mxu0 0.0
    %3843 = vmatpush1.xpose.msra.mxu0 0.0
    %3844 = vmatprep.subr.mxu0 0.0
    %3845 = vmatpush1.xpose.msra.mxu0 0.0
    %3846 = vmatprep.subr.mxu0 0.0
    %3847 = vmatpush1.xpose.msra.mxu0 0.0
    %3848 = vmatprep.subr.mxu0 0.0
    %3849 = vmatpush1.xpose.msra.mxu0 0.0
    %3850 = vmatprep.subr.mxu0 0.0
    %3851 = vmatpush1.xpose.msra.mxu0 0.0
    %3852 = vmatprep.subr.mxu0 0.0
    %3853 = vmatpush1.xpose.msra.mxu0 0.0
    %3854 = vmatprep.subr.mxu0 0.0
    %3855 = vmatpush1.xpose.msra.mxu0 0.0
    %3856 = vmatprep.subr.mxu0 0.0
    %3857 = vmatpush1.xpose.msra.mxu0 0.0
    %3858 = vmatprep.subr.mxu0 0.0
    %3859 = vmatpush1.xpose.msra.mxu0 0.0
    %3860 = vmatprep.subr.mxu0 0.0
    %3861 = vmatpush1.xpose.msra.mxu0 0.0
    %3862 = vmatprep.subr.mxu0 0.0
    %3863 = vmatpush1.xpose.msra.mxu0 0.0
    %3864 = vmatprep.subr.mxu0 0.0
    %3865 = vmatpush1.xpose.msra.mxu0 0.0
    %3866 = vmatprep.subr.mxu0 0.0
    %3867 = vmatpush1.xpose.msra.mxu0 0.0
    %3868 = vmatprep.subr.mxu0 0.0
    %3869 = vmatpush1.xpose.msra.mxu0 0.0
    %3870 = vmatprep.subr.mxu0 0.0
    %3871 = vmatpush1.xpose.msra.mxu0 0.0
    %3872 = vmatprep.mubr.f32.mxu0 0.0
    %3873 = vmatmul.mubr.f32.gmra.mrb[0].mxu0 %v3803
    %v3874 = vpop.f32.mrb[0].mxu0
    %v3875 = vadd.f32 0.0, %v3874
    %v3876 = vpop.f32.mrb[0].mxu0
    %3877 = vdwg.mxu0
    %v3879 = vsel %vm3725, %v3495, 0
    %v3882 = vsel %vm3725, %v3695, 0
    %3884 = vmatprep.subr.mxu0 0.0
    %3885 = vmatpush1.xpose.msra.mxu0 %v3882
    %3886 = vmatprep.subr.mxu0 0.0
    %3887 = vmatpush1.xpose.msra.mxu0 0.0
    %3888 = vmatprep.subr.mxu0 0.0
    %3889 = vmatpush1.xpose.msra.mxu0 0.0
    %3890 = vmatprep.subr.mxu0 0.0
    %3891 = vmatpush1.xpose.msra.mxu0 0.0
    %3892 = vmatprep.subr.mxu0 0.0
    %3893 = vmatpush1.xpose.msra.mxu0 0.0
    %3894 = vmatprep.subr.mxu0 0.0
    %3895 = vmatpush1.xpose.msra.mxu0 0.0
    %3896 = vmatprep.subr.mxu0 0.0
    %3897 = vmatpush1.xpose.msra.mxu0 0.0
    %3898 = vmatprep.subr.mxu0 0.0
    %3899 = vmatpush1.xpose.msra.mxu0 0.0
    %3900 = vmatprep.subr.mxu0 0.0
    %3901 = vmatpush1.xpose.msra.mxu0 0.0
    %3902 = vmatprep.subr.mxu0 0.0
    %3903 = vmatpush1.xpose.msra.mxu0 0.0
    %3904 = vmatprep.subr.mxu0 0.0
    %3905 = vmatpush1.xpose.msra.mxu0 0.0
    %3906 = vmatprep.subr.mxu0 0.0
    %3907 = vmatpush1.xpose.msra.mxu0 0.0
    %3908 = vmatprep.subr.mxu0 0.0
    %3909 = vmatpush1.xpose.msra.mxu0 0.0
    %3910 = vmatprep.subr.mxu0 0.0
    %3911 = vmatpush1.xpose.msra.mxu0 0.0
    %3912 = vmatprep.subr.mxu0 0.0
    %3913 = vmatpush1.xpose.msra.mxu0 0.0
    %3914 = vmatprep.subr.mxu0 0.0
    %3915 = vmatpush1.xpose.msra.mxu0 0.0
    %3916 = vmatprep.subr.mxu0 0.0
    %3917 = vmatpush1.xpose.msra.mxu0 0.0
    %3918 = vmatprep.subr.mxu0 0.0
    %3919 = vmatpush1.xpose.msra.mxu0 0.0
    %3920 = vmatprep.subr.mxu0 0.0
    %3921 = vmatpush1.xpose.msra.mxu0 0.0
    %3922 = vmatprep.subr.mxu0 0.0
    %3923 = vmatpush1.xpose.msra.mxu0 0.0
    %3924 = vmatprep.subr.mxu0 0.0
    %3925 = vmatpush1.xpose.msra.mxu0 0.0
    %3926 = vmatprep.subr.mxu0 0.0
    %3927 = vmatpush1.xpose.msra.mxu0 0.0
    %3928 = vmatprep.subr.mxu0 0.0
    %3929 = vmatpush1.xpose.msra.mxu0 0.0
    %3930 = vmatprep.subr.mxu0 0.0
    %3931 = vmatpush1.xpose.msra.mxu0 0.0
    %3932 = vmatprep.subr.mxu0 0.0
    %3933 = vmatpush1.xpose.msra.mxu0 0.0
    %3934 = vmatprep.subr.mxu0 0.0
    %3935 = vmatpush1.xpose.msra.mxu0 0.0
    %3936 = vmatprep.subr.mxu0 0.0
    %3937 = vmatpush1.xpose.msra.mxu0 0.0
    %3938 = vmatprep.subr.mxu0 0.0
    %3939 = vmatpush1.xpose.msra.mxu0 0.0
    %3940 = vmatprep.subr.mxu0 0.0
    %3941 = vmatpush1.xpose.msra.mxu0 0.0
    %3942 = vmatprep.subr.mxu0 0.0
    %3943 = vmatpush1.xpose.msra.mxu0 0.0
    %3944 = vmatprep.subr.mxu0 0.0
    %3945 = vmatpush1.xpose.msra.mxu0 0.0
    %3946 = vmatprep.subr.mxu0 0.0
    %3947 = vmatpush1.xpose.msra.mxu0 0.0
    %3948 = vmatprep.mubr.f32.mxu0 0.0
    %3949 = vmatmul.mubr.f32.gmra.mrb[0].mxu0 %v3879
    %v3950 = vpop.f32.mrb[0].mxu0
    %v3951 = vadd.f32 0.0, %v3950
    %v3952 = vpop.f32.mrb[0].mxu0
    %3953 = vdwg.mxu0
    %v3955 = vsel %vm3725, %v3496, 0
    %v3958 = vsel %vm3725, %v3696, 0
    %3960 = vmatprep.subr.mxu0 0.0
    %3961 = vmatpush1.xpose.msra.mxu0 %v3958
    %3962 = vmatprep.subr.mxu0 0.0
    %3963 = vmatpush1.xpose.msra.mxu0 0.0
    %3964 = vmatprep.subr.mxu0 0.0
    %3965 = vmatpush1.xpose.msra.mxu0 0.0
    %3966 = vmatprep.subr.mxu0 0.0
    %3967 = vmatpush1.xpose.msra.mxu0 0.0
    %3968 = vmatprep.subr.mxu0 0.0
    %3969 = vmatpush1.xpose.msra.mxu0 0.0
    %3970 = vmatprep.subr.mxu0 0.0
    %3971 = vmatpush1.xpose.msra.mxu0 0.0
    %3972 = vmatprep.subr.mxu0 0.0
    %3973 = vmatpush1.xpose.msra.mxu0 0.0
    %3974 = vmatprep.subr.mxu0 0.0
    %3975 = vmatpush1.xpose.msra.mxu0 0.0
    %3976 = vmatprep.subr.mxu0 0.0
    %3977 = vmatpush1.xpose.msra.mxu0 0.0
    %3978 = vmatprep.subr.mxu0 0.0
    %3979 = vmatpush1.xpose.msra.mxu0 0.0
    %3980 = vmatprep.subr.mxu0 0.0
    %3981 = vmatpush1.xpose.msra.mxu0 0.0
    %3982 = vmatprep.subr.mxu0 0.0
    %3983 = vmatpush1.xpose.msra.mxu0 0.0
    %3984 = vmatprep.subr.mxu0 0.0
    %3985 = vmatpush1.xpose.msra.mxu0 0.0
    %3986 = vmatprep.subr.mxu0 0.0
    %3987 = vmatpush1.xpose.msra.mxu0 0.0
    %3988 = vmatprep.subr.mxu0 0.0
    %3989 = vmatpush1.xpose.msra.mxu0 0.0
    %3990 = vmatprep.subr.mxu0 0.0
    %3991 = vmatpush1.xpose.msra.mxu0 0.0
    %3992 = vmatprep.subr.mxu0 0.0
    %3993 = vmatpush1.xpose.msra.mxu0 0.0
    %3994 = vmatprep.subr.mxu0 0.0
    %3995 = vmatpush1.xpose.msra.mxu0 0.0
    %3996 = vmatprep.subr.mxu0 0.0
    %3997 = vmatpush1.xpose.msra.mxu0 0.0
    %3998 = vmatprep.subr.mxu0 0.0
    %3999 = vmatpush1.xpose.msra.mxu0 0.0
    %4000 = vmatprep.subr.mxu0 0.0
    %4001 = vmatpush1.xpose.msra.mxu0 0.0
    %4002 = vmatprep.subr.mxu0 0.0
    %4003 = vmatpush1.xpose.msra.mxu0 0.0
    %4004 = vmatprep.subr.mxu0 0.0
    %4005 = vmatpush1.xpose.msra.mxu0 0.0
    %4006 = vmatprep.subr.mxu0 0.0
    %4007 = vmatpush1.xpose.msra.mxu0 0.0
    %4008 = vmatprep.subr.mxu0 0.0
    %4009 = vmatpush1.xpose.msra.mxu0 0.0
    %4010 = vmatprep.subr.mxu0 0.0
    %4011 = vmatpush1.xpose.msra.mxu0 0.0
    %4012 = vmatprep.subr.mxu0 0.0
    %4013 = vmatpush1.xpose.msra.mxu0 0.0
    %4014 = vmatprep.subr.mxu0 0.0
    %4015 = vmatpush1.xpose.msra.mxu0 0.0
    %4016 = vmatprep.subr.mxu0 0.0
    %4017 = vmatpush1.xpose.msra.mxu0 0.0
    %4018 = vmatprep.subr.mxu0 0.0
    %4019 = vmatpush1.xpose.msra.mxu0 0.0
    %4020 = vmatprep.subr.mxu0 0.0
    %4021 = vmatpush1.xpose.msra.mxu0 0.0
    %4022 = vmatprep.subr.mxu0 0.0
    %4023 = vmatpush1.xpose.msra.mxu0 0.0
    %4024 = vmatprep.mubr.f32.mxu0 0.0
    %4025 = vmatmul.mubr.f32.gmra.mrb[0].mxu0 %v3955
    %v4026 = vpop.f32.mrb[0].mxu0
    %v4027 = vadd.f32 0.0, %v4026
    %v4028 = vpop.f32.mrb[0].mxu0
    %4029 = vdwg.mxu0
    %v4031 = vsel %vm3725, %v3497, 0
    %v4034 = vsel %vm3725, %v3697, 0
    %4036 = vmatprep.subr.mxu0 0.0
    %4037 = vmatpush1.xpose.msra.mxu0 %v4034
    %4038 = vmatprep.subr.mxu0 0.0
    %4039 = vmatpush1.xpose.msra.mxu0 0.0
    %4040 = vmatprep.subr.mxu0 0.0
    %4041 = vmatpush1.xpose.msra.mxu0 0.0
    %4042 = vmatprep.subr.mxu0 0.0
    %4043 = vmatpush1.xpose.msra.mxu0 0.0
    %4044 = vmatprep.subr.mxu0 0.0
    %4045 = vmatpush1.xpose.msra.mxu0 0.0
    %4046 = vmatprep.subr.mxu0 0.0
    %4047 = vmatpush1.xpose.msra.mxu0 0.0
    %4048 = vmatprep.subr.mxu0 0.0
    %4049 = vmatpush1.xpose.msra.mxu0 0.0
    %4050 = vmatprep.subr.mxu0 0.0
    %4051 = vmatpush1.xpose.msra.mxu0 0.0
    %4052 = vmatprep.subr.mxu0 0.0
    %4053 = vmatpush1.xpose.msra.mxu0 0.0
    %4054 = vmatprep.subr.mxu0 0.0
    %4055 = vmatpush1.xpose.msra.mxu0 0.0
    %4056 = vmatprep.subr.mxu0 0.0
    %4057 = vmatpush1.xpose.msra.mxu0 0.0
    %4058 = vmatprep.subr.mxu0 0.0
    %4059 = vmatpush1.xpose.msra.mxu0 0.0
    %4060 = vmatprep.subr.mxu0 0.0
    %4061 = vmatpush1.xpose.msra.mxu0 0.0
    %4062 = vmatprep.subr.mxu0 0.0
    %4063 = vmatpush1.xpose.msra.mxu0 0.0
    %4064 = vmatprep.subr.mxu0 0.0
    %4065 = vmatpush1.xpose.msra.mxu0 0.0
    %4066 = vmatprep.subr.mxu0 0.0
    %4067 = vmatpush1.xpose.msra.mxu0 0.0
    %4068 = vmatprep.subr.mxu0 0.0
    %4069 = vmatpush1.xpose.msra.mxu0 0.0
    %4070 = vmatprep.subr.mxu0 0.0
    %4071 = vmatpush1.xpose.msra.mxu0 0.0
    %4072 = vmatprep.subr.mxu0 0.0
    %4073 = vmatpush1.xpose.msra.mxu0 0.0
    %4074 = vmatprep.subr.mxu0 0.0
    %4075 = vmatpush1.xpose.msra.mxu0 0.0
    %4076 = vmatprep.subr.mxu0 0.0
    %4077 = vmatpush1.xpose.msra.mxu0 0.0
    %4078 = vmatprep.subr.mxu0 0.0
    %4079 = vmatpush1.xpose.msra.mxu0 0.0
    %4080 = vmatprep.subr.mxu0 0.0
    %4081 = vmatpush1.xpose.msra.mxu0 0.0
    %4082 = vmatprep.subr.mxu0 0.0
    %4083 = vmatpush1.xpose.msra.mxu0 0.0
    %4084 = vmatprep.subr.mxu0 0.0
    %4085 = vmatpush1.xpose.msra.mxu0 0.0
    %4086 = vmatprep.subr.mxu0 0.0
    %4087 = vmatpush1.xpose.msra.mxu0 0.0
    %4088 = vmatprep.subr.mxu0 0.0
    %4089 = vmatpush1.xpose.msra.mxu0 0.0
    %4090 = vmatprep.subr.mxu0 0.0
    %4091 = vmatpush1.xpose.msra.mxu0 0.0
    %4092 = vmatprep.subr.mxu0 0.0
    %4093 = vmatpush1.xpose.msra.mxu0 0.0
    %4094 = vmatprep.subr.mxu0 0.0
    %4095 = vmatpush1.xpose.msra.mxu0 0.0
    %4096 = vmatprep.subr.mxu0 0.0
    %4097 = vmatpush1.xpose.msra.mxu0 0.0
    %4098 = vmatprep.subr.mxu0 0.0
    %4099 = vmatpush1.xpose.msra.mxu0 0.0
    %4100 = vmatprep.mubr.f32.mxu0 0.0
    %4101 = vmatmul.mubr.f32.gmra.mrb[0].mxu0 %v4031
    %v4102 = vpop.f32.mrb[0].mxu0
    %v4103 = vadd.f32 0.0, %v4102
    %v4104 = vpop.f32.mrb[0].mxu0
    %4105 = vdwg.mxu0
    %v4107 = vsel %vm3725, %v3498, 0
    %v4110 = vsel %vm3725, %v3698, 0
    %4112 = vmatprep.subr.mxu0 0.0
    %4113 = vmatpush1.xpose.msra.mxu0 %v4110
    %4114 = vmatprep.subr.mxu0 0.0
    %4115 = vmatpush1.xpose.msra.mxu0 0.0
    %4116 = vmatprep.subr.mxu0 0.0
    %4117 = vmatpush1.xpose.msra.mxu0 0.0
    %4118 = vmatprep.subr.mxu0 0.0
    %4119 = vmatpush1.xpose.msra.mxu0 0.0
    %4120 = vmatprep.subr.mxu0 0.0
    %4121 = vmatpush1.xpose.msra.mxu0 0.0
    %4122 = vmatprep.subr.mxu0 0.0
    %4123 = vmatpush1.xpose.msra.mxu0 0.0
    %4124 = vmatprep.subr.mxu0 0.0
    %4125 = vmatpush1.xpose.msra.mxu0 0.0
    %4126 = vmatprep.subr.mxu0 0.0
    %4127 = vmatpush1.xpose.msra.mxu0 0.0
    %4128 = vmatprep.subr.mxu0 0.0
    %4129 = vmatpush1.xpose.msra.mxu0 0.0
    %4130 = vmatprep.subr.mxu0 0.0
    %4131 = vmatpush1.xpose.msra.mxu0 0.0
    %4132 = vmatprep.subr.mxu0 0.0
    %4133 = vmatpush1.xpose.msra.mxu0 0.0
    %4134 = vmatprep.subr.mxu0 0.0
    %4135 = vmatpush1.xpose.msra.mxu0 0.0
    %4136 = vmatprep.subr.mxu0 0.0
    %4137 = vmatpush1.xpose.msra.mxu0 0.0
    %4138 = vmatprep.subr.mxu0 0.0
    %4139 = vmatpush1.xpose.msra.mxu0 0.0
    %4140 = vmatprep.subr.mxu0 0.0
    %4141 = vmatpush1.xpose.msra.mxu0 0.0
    %4142 = vmatprep.subr.mxu0 0.0
    %4143 = vmatpush1.xpose.msra.mxu0 0.0
    %4144 = vmatprep.subr.mxu0 0.0
    %4145 = vmatpush1.xpose.msra.mxu0 0.0
    %4146 = vmatprep.subr.mxu0 0.0
    %4147 = vmatpush1.xpose.msra.mxu0 0.0
    %4148 = vmatprep.subr.mxu0 0.0
    %4149 = vmatpush1.xpose.msra.mxu0 0.0
    %4150 = vmatprep.subr.mxu0 0.0
    %4151 = vmatpush1.xpose.msra.mxu0 0.0
    %4152 = vmatprep.subr.mxu0 0.0
    %4153 = vmatpush1.xpose.msra.mxu0 0.0
    %4154 = vmatprep.subr.mxu0 0.0
    %4155 = vmatpush1.xpose.msra.mxu0 0.0
    %4156 = vmatprep.subr.mxu0 0.0
    %4157 = vmatpush1.xpose.msra.mxu0 0.0
    %4158 = vmatprep.subr.mxu0 0.0
    %4159 = vmatpush1.xpose.msra.mxu0 0.0
    %4160 = vmatprep.subr.mxu0 0.0
    %4161 = vmatpush1.xpose.msra.mxu0 0.0
    %4162 = vmatprep.subr.mxu0 0.0
    %4163 = vmatpush1.xpose.msra.mxu0 0.0
    %4164 = vmatprep.subr.mxu0 0.0
    %4165 = vmatpush1.xpose.msra.mxu0 0.0
    %4166 = vmatprep.subr.mxu0 0.0
    %4167 = vmatpush1.xpose.msra.mxu0 0.0
    %4168 = vmatprep.subr.mxu0 0.0
    %4169 = vmatpush1.xpose.msra.mxu0 0.0
    %4170 = vmatprep.subr.mxu0 0.0
    %4171 = vmatpush1.xpose.msra.mxu0 0.0
    %4172 = vmatprep.subr.mxu0 0.0
    %4173 = vmatpush1.xpose.msra.mxu0 0.0
    %4174 = vmatprep.subr.mxu0 0.0
    %4175 = vmatpush1.xpose.msra.mxu0 0.0
    %4176 = vmatprep.mubr.f32.mxu0 0.0
    %4177 = vmatmul.mubr.f32.gmra.mrb[0].mxu0 %v4107
    %v4178 = vpop.f32.mrb[0].mxu0
    %v4179 = vadd.f32 0.0, %v4178
    %v4180 = vpop.f32.mrb[0].mxu0
    %4181 = vdwg.mxu0
    %v4183 = vsel %vm3725, %v3499, 0
    %v4186 = vsel %vm3725, %v3699, 0
    %4188 = vmatprep.subr.mxu0 0.0
    %4189 = vmatpush1.xpose.msra.mxu0 %v4186
    %4190 = vmatprep.subr.mxu0 0.0
    %4191 = vmatpush1.xpose.msra.mxu0 0.0
    %4192 = vmatprep.subr.mxu0 0.0
    %4193 = vmatpush1.xpose.msra.mxu0 0.0
    %4194 = vmatprep.subr.mxu0 0.0
    %4195 = vmatpush1.xpose.msra.mxu0 0.0
    %4196 = vmatprep.subr.mxu0 0.0
    %4197 = vmatpush1.xpose.msra.mxu0 0.0
    %4198 = vmatprep.subr.mxu0 0.0
    %4199 = vmatpush1.xpose.msra.mxu0 0.0
    %4200 = vmatprep.subr.mxu0 0.0
    %4201 = vmatpush1.xpose.msra.mxu0 0.0
    %4202 = vmatprep.subr.mxu0 0.0
    %4203 = vmatpush1.xpose.msra.mxu0 0.0
    %4204 = vmatprep.subr.mxu0 0.0
    %4205 = vmatpush1.xpose.msra.mxu0 0.0
    %4206 = vmatprep.subr.mxu0 0.0
    %4207 = vmatpush1.xpose.msra.mxu0 0.0
    %4208 = vmatprep.subr.mxu0 0.0
    %4209 = vmatpush1.xpose.msra.mxu0 0.0
    %4210 = vmatprep.subr.mxu0 0.0
    %4211 = vmatpush1.xpose.msra.mxu0 0.0
    %4212 = vmatprep.subr.mxu0 0.0
    %4213 = vmatpush1.xpose.msra.mxu0 0.0
    %4214 = vmatprep.subr.mxu0 0.0
    %4215 = vmatpush1.xpose.msra.mxu0 0.0
    %4216 = vmatprep.subr.mxu0 0.0
    %4217 = vmatpush1.xpose.msra.mxu0 0.0
    %4218 = vmatprep.subr.mxu0 0.0
    %4219 = vmatpush1.xpose.msra.mxu0 0.0
    %4220 = vmatprep.subr.mxu0 0.0
    %4221 = vmatpush1.xpose.msra.mxu0 0.0
    %4222 = vmatprep.subr.mxu0 0.0
    %4223 = vmatpush1.xpose.msra.mxu0 0.0
    %4224 = vmatprep.subr.mxu0 0.0
    %4225 = vmatpush1.xpose.msra.mxu0 0.0
    %4226 = vmatprep.subr.mxu0 0.0
    %4227 = vmatpush1.xpose.msra.mxu0 0.0
    %4228 = vmatprep.subr.mxu0 0.0
    %4229 = vmatpush1.xpose.msra.mxu0 0.0
    %4230 = vmatprep.subr.mxu0 0.0
    %4231 = vmatpush1.xpose.msra.mxu0 0.0
    %4232 = vmatprep.subr.mxu0 0.0
    %4233 = vmatpush1.xpose.msra.mxu0 0.0
    %4234 = vmatprep.subr.mxu0 0.0
    %4235 = vmatpush1.xpose.msra.mxu0 0.0
    %4236 = vmatprep.subr.mxu0 0.0
    %4237 = vmatpush1.xpose.msra.mxu0 0.0
    %4238 = vmatprep.subr.mxu0 0.0
    %4239 = vmatpush1.xpose.msra.mxu0 0.0
    %4240 = vmatprep.subr.mxu0 0.0
    %4241 = vmatpush1.xpose.msra.mxu0 0.0
    %4242 = vmatprep.subr.mxu0 0.0
    %4243 = vmatpush1.xpose.msra.mxu0 0.0
    %4244 = vmatprep.subr.mxu0 0.0
    %4245 = vmatpush1.xpose.msra.mxu0 0.0
    %4246 = vmatprep.subr.mxu0 0.0
    %4247 = vmatpush1.xpose.msra.mxu0 0.0
    %4248 = vmatprep.subr.mxu0 0.0
    %4249 = vmatpush1.xpose.msra.mxu0 0.0
    %4250 = vmatprep.subr.mxu0 0.0
    %4251 = vmatpush1.xpose.msra.mxu0 0.0
    %4252 = vmatprep.mubr.f32.mxu0 0.0
    %4253 = vmatmul.mubr.f32.gmra.mrb[0].mxu0 %v4183
    %v4254 = vpop.f32.mrb[0].mxu0
    %v4255 = vadd.f32 0.0, %v4254
    %v4256 = vpop.f32.mrb[0].mxu0
    %4257 = vdwg.mxu0
    %v4259 = vsel %vm3725, %v3500, 0
    %v4262 = vsel %vm3725, %v3700, 0
    %4264 = vmatprep.subr.mxu0 0.0
    %4265 = vmatpush1.xpose.msra.mxu0 %v4262
    %4266 = vmatprep.subr.mxu0 0.0
    %4267 = vmatpush1.xpose.msra.mxu0 0.0
    %4268 = vmatprep.subr.mxu0 0.0
    %4269 = vmatpush1.xpose.msra.mxu0 0.0
    %4270 = vmatprep.subr.mxu0 0.0
    %4271 = vmatpush1.xpose.msra.mxu0 0.0
    %4272 = vmatprep.subr.mxu0 0.0
    %4273 = vmatpush1.xpose.msra.mxu0 0.0
    %4274 = vmatprep.subr.mxu0 0.0
    %4275 = vmatpush1.xpose.msra.mxu0 0.0
    %4276 = vmatprep.subr.mxu0 0.0
    %4277 = vmatpush1.xpose.msra.mxu0 0.0
    %4278 = vmatprep.subr.mxu0 0.0
    %4279 = vmatpush1.xpose.msra.mxu0 0.0
    %4280 = vmatprep.subr.mxu0 0.0
    %4281 = vmatpush1.xpose.msra.mxu0 0.0
    %4282 = vmatprep.subr.mxu0 0.0
    %4283 = vmatpush1.xpose.msra.mxu0 0.0
    %4284 = vmatprep.subr.mxu0 0.0
    %4285 = vmatpush1.xpose.msra.mxu0 0.0
    %4286 = vmatprep.subr.mxu0 0.0
    %4287 = vmatpush1.xpose.msra.mxu0 0.0
    %4288 = vmatprep.subr.mxu0 0.0
    %4289 = vmatpush1.xpose.msra.mxu0 0.0
    %4290 = vmatprep.subr.mxu0 0.0
    %4291 = vmatpush1.xpose.msra.mxu0 0.0
    %4292 = vmatprep.subr.mxu0 0.0
    %4293 = vmatpush1.xpose.msra.mxu0 0.0
    %4294 = vmatprep.subr.mxu0 0.0
    %4295 = vmatpush1.xpose.msra.mxu0 0.0
    %4296 = vmatprep.subr.mxu0 0.0
    %4297 = vmatpush1.xpose.msra.mxu0 0.0
    %4298 = vmatprep.subr.mxu0 0.0
    %4299 = vmatpush1.xpose.msra.mxu0 0.0
    %4300 = vmatprep.subr.mxu0 0.0
    %4301 = vmatpush1.xpose.msra.mxu0 0.0
    %4302 = vmatprep.subr.mxu0 0.0
    %4303 = vmatpush1.xpose.msra.mxu0 0.0
    %4304 = vmatprep.subr.mxu0 0.0
    %4305 = vmatpush1.xpose.msra.mxu0 0.0
    %4306 = vmatprep.subr.mxu0 0.0
    %4307 = vmatpush1.xpose.msra.mxu0 0.0
    %4308 = vmatprep.subr.mxu0 0.0
    %4309 = vmatpush1.xpose.msra.mxu0 0.0
    %4310 = vmatprep.subr.mxu0 0.0
    %4311 = vmatpush1.xpose.msra.mxu0 0.0
    %4312 = vmatprep.subr.mxu0 0.0
    %4313 = vmatpush1.xpose.msra.mxu0 0.0
    %4314 = vmatprep.subr.mxu0 0.0
    %4315 = vmatpush1.xpose.msra.mxu0 0.0
    %4316 = vmatprep.subr.mxu0 0.0
    %4317 = vmatpush1.xpose.msra.mxu0 0.0
    %4318 = vmatprep.subr.mxu0 0.0
    %4319 = vmatpush1.xpose.msra.mxu0 0.0
    %4320 = vmatprep.subr.mxu0 0.0
    %4321 = vmatpush1.xpose.msra.mxu0 0.0
    %4322 = vmatprep.subr.mxu0 0.0
    %4323 = vmatpush1.xpose.msra.mxu0 0.0
    %4324 = vmatprep.subr.mxu0 0.0
    %4325 = vmatpush1.xpose.msra.mxu0 0.0
    %4326 = vmatprep.subr.mxu0 0.0
    %4327 = vmatpush1.xpose.msra.mxu0 0.0
    %4328 = vmatprep.mubr.f32.mxu0 0.0
    %4329 = vmatmul.mubr.f32.gmra.mrb[0].mxu0 %v4259
    %v4330 = vpop.f32.mrb[0].mxu0
    %v4331 = vadd.f32 0.0, %v4330
    %v4332 = vpop.f32.mrb[0].mxu0
    %4333 = vdwg.mxu0
    %v4335 = vsel %vm3725, %v3501, 0
    %v4338 = vsel %vm3725, %v3701, 0
    %4340 = vmatprep.subr.mxu0 0.0
    %4341 = vmatpush1.xpose.msra.mxu0 %v4338
    %4342 = vmatprep.subr.mxu0 0.0
    %4343 = vmatpush1.xpose.msra.mxu0 0.0
    %4344 = vmatprep.subr.mxu0 0.0
    %4345 = vmatpush1.xpose.msra.mxu0 0.0
    %4346 = vmatprep.subr.mxu0 0.0
    %4347 = vmatpush1.xpose.msra.mxu0 0.0
    %4348 = vmatprep.subr.mxu0 0.0
    %4349 = vmatpush1.xpose.msra.mxu0 0.0
    %4350 = vmatprep.subr.mxu0 0.0
    %4351 = vmatpush1.xpose.msra.mxu0 0.0
    %4352 = vmatprep.subr.mxu0 0.0
    %4353 = vmatpush1.xpose.msra.mxu0 0.0
    %4354 = vmatprep.subr.mxu0 0.0
    %4355 = vmatpush1.xpose.msra.mxu0 0.0
    %4356 = vmatprep.subr.mxu0 0.0
    %4357 = vmatpush1.xpose.msra.mxu0 0.0
    %4358 = vmatprep.subr.mxu0 0.0
    %4359 = vmatpush1.xpose.msra.mxu0 0.0
    %4360 = vmatprep.subr.mxu0 0.0
    %4361 = vmatpush1.xpose.msra.mxu0 0.0
    %4362 = vmatprep.subr.mxu0 0.0
    %4363 = vmatpush1.xpose.msra.mxu0 0.0
    %4364 = vmatprep.subr.mxu0 0.0
    %4365 = vmatpush1.xpose.msra.mxu0 0.0
    %4366 = vmatprep.subr.mxu0 0.0
    %4367 = vmatpush1.xpose.msra.mxu0 0.0
    %4368 = vmatprep.subr.mxu0 0.0
    %4369 = vmatpush1.xpose.msra.mxu0 0.0
    %4370 = vmatprep.subr.mxu0 0.0
    %4371 = vmatpush1.xpose.msra.mxu0 0.0
    %4372 = vmatprep.subr.mxu0 0.0
    %4373 = vmatpush1.xpose.msra.mxu0 0.0
    %4374 = vmatprep.subr.mxu0 0.0
    %4375 = vmatpush1.xpose.msra.mxu0 0.0
    %4376 = vmatprep.subr.mxu0 0.0
    %4377 = vmatpush1.xpose.msra.mxu0 0.0
    %4378 = vmatprep.subr.mxu0 0.0
    %4379 = vmatpush1.xpose.msra.mxu0 0.0
    %4380 = vmatprep.subr.mxu0 0.0
    %4381 = vmatpush1.xpose.msra.mxu0 0.0
    %4382 = vmatprep.subr.mxu0 0.0
    %4383 = vmatpush1.xpose.msra.mxu0 0.0
    %4384 = vmatprep.subr.mxu0 0.0
    %4385 = vmatpush1.xpose.msra.mxu0 0.0
    %4386 = vmatprep.subr.mxu0 0.0
    %4387 = vmatpush1.xpose.msra.mxu0 0.0
    %4388 = vmatprep.subr.mxu0 0.0
    %4389 = vmatpush1.xpose.msra.mxu0 0.0
    %4390 = vmatprep.subr.mxu0 0.0
    %4391 = vmatpush1.xpose.msra.mxu0 0.0
    %4392 = vmatprep.subr.mxu0 0.0
    %4393 = vmatpush1.xpose.msra.mxu0 0.0
    %4394 = vmatprep.subr.mxu0 0.0
    %4395 = vmatpush1.xpose.msra.mxu0 0.0
    %4396 = vmatprep.subr.mxu0 0.0
    %4397 = vmatpush1.xpose.msra.mxu0 0.0
    %4398 = vmatprep.subr.mxu0 0.0
    %4399 = vmatpush1.xpose.msra.mxu0 0.0
    %4400 = vmatprep.subr.mxu0 0.0
    %4401 = vmatpush1.xpose.msra.mxu0 0.0
    %4402 = vmatprep.subr.mxu0 0.0
    %4403 = vmatpush1.xpose.msra.mxu0 0.0
    %4404 = vmatprep.mubr.f32.mxu0 0.0
    %4405 = vmatmul.mubr.f32.gmra.mrb[0].mxu0 %v4335
    %v4406 = vpop.f32.mrb[0].mxu0
    %v4407 = vadd.f32 0.0, %v4406
    %v4408 = vpop.f32.mrb[0].mxu0
    %4409 = vdwg.mxu0
    %v4411 = vsel %vm3725, %v3502, 0
    %v4414 = vsel %vm3725, %v3702, 0
    %4416 = vmatprep.subr.mxu0 0.0
    %4417 = vmatpush1.xpose.msra.mxu0 %v4414
    %4418 = vmatprep.subr.mxu0 0.0
    %4419 = vmatpush1.xpose.msra.mxu0 0.0
    %4420 = vmatprep.subr.mxu0 0.0
    %4421 = vmatpush1.xpose.msra.mxu0 0.0
    %4422 = vmatprep.subr.mxu0 0.0
    %4423 = vmatpush1.xpose.msra.mxu0 0.0
    %4424 = vmatprep.subr.mxu0 0.0
    %4425 = vmatpush1.xpose.msra.mxu0 0.0
    %4426 = vmatprep.subr.mxu0 0.0
    %4427 = vmatpush1.xpose.msra.mxu0 0.0
    %4428 = vmatprep.subr.mxu0 0.0
    %4429 = vmatpush1.xpose.msra.mxu0 0.0
    %4430 = vmatprep.subr.mxu0 0.0
    %4431 = vmatpush1.xpose.msra.mxu0 0.0
    %4432 = vmatprep.subr.mxu0 0.0
    %4433 = vmatpush1.xpose.msra.mxu0 0.0
    %4434 = vmatprep.subr.mxu0 0.0
    %4435 = vmatpush1.xpose.msra.mxu0 0.0
    %4436 = vmatprep.subr.mxu0 0.0
    %4437 = vmatpush1.xpose.msra.mxu0 0.0
    %4438 = vmatprep.subr.mxu0 0.0
    %4439 = vmatpush1.xpose.msra.mxu0 0.0
    %4440 = vmatprep.subr.mxu0 0.0
    %4441 = vmatpush1.xpose.msra.mxu0 0.0
    %4442 = vmatprep.subr.mxu0 0.0
    %4443 = vmatpush1.xpose.msra.mxu0 0.0
    %4444 = vmatprep.subr.mxu0 0.0
    %4445 = vmatpush1.xpose.msra.mxu0 0.0
    %4446 = vmatprep.subr.mxu0 0.0
    %4447 = vmatpush1.xpose.msra.mxu0 0.0
    %4448 = vmatprep.subr.mxu0 0.0
    %4449 = vmatpush1.xpose.msra.mxu0 0.0
    %4450 = vmatprep.subr.mxu0 0.0
    %4451 = vmatpush1.xpose.msra.mxu0 0.0
    %4452 = vmatprep.subr.mxu0 0.0
    %4453 = vmatpush1.xpose.msra.mxu0 0.0
    %4454 = vmatprep.subr.mxu0 0.0
    %4455 = vmatpush1.xpose.msra.mxu0 0.0
    %4456 = vmatprep.subr.mxu0 0.0
    %4457 = vmatpush1.xpose.msra.mxu0 0.0
    %4458 = vmatprep.subr.mxu0 0.0
    %4459 = vmatpush1.xpose.msra.mxu0 0.0
    %4460 = vmatprep.subr.mxu0 0.0
    %4461 = vmatpush1.xpose.msra.mxu0 0.0
    %4462 = vmatprep.subr.mxu0 0.0
    %4463 = vmatpush1.xpose.msra.mxu0 0.0
    %4464 = vmatprep.subr.mxu0 0.0
    %4465 = vmatpush1.xpose.msra.mxu0 0.0
    %4466 = vmatprep.subr.mxu0 0.0
    %4467 = vmatpush1.xpose.msra.mxu0 0.0
    %4468 = vmatprep.subr.mxu0 0.0
    %4469 = vmatpush1.xpose.msra.mxu0 0.0
    %4470 = vmatprep.subr.mxu0 0.0
    %4471 = vmatpush1.xpose.msra.mxu0 0.0
    %4472 = vmatprep.subr.mxu0 0.0
    %4473 = vmatpush1.xpose.msra.mxu0 0.0
    %4474 = vmatprep.subr.mxu0 0.0
    %4475 = vmatpush1.xpose.msra.mxu0 0.0
    %4476 = vmatprep.subr.mxu0 0.0
    %4477 = vmatpush1.xpose.msra.mxu0 0.0
    %4478 = vmatprep.subr.mxu0 0.0
    %4479 = vmatpush1.xpose.msra.mxu0 0.0
    %4480 = vmatprep.mubr.f32.mxu0 0.0
    %4481 = vmatmul.mubr.f32.gmra.mrb[0].mxu0 %v4411
    %v4482 = vpop.f32.mrb[0].mxu0
    %v4483 = vadd.f32 0.0, %v4482
    %v4484 = vpop.f32.mrb[0].mxu0
    %4485 = vdwg.mxu0
    %v4487 = vsel %vm3725, %v3503, 0
    %v4490 = vsel %vm3725, %v3703, 0
    %4492 = vmatprep.subr.mxu0 0.0
    %4493 = vmatpush1.xpose.msra.mxu0 %v4490
    %4494 = vmatprep.subr.mxu0 0.0
    %4495 = vmatpush1.xpose.msra.mxu0 0.0
    %4496 = vmatprep.subr.mxu0 0.0
    %4497 = vmatpush1.xpose.msra.mxu0 0.0
    %4498 = vmatprep.subr.mxu0 0.0
    %4499 = vmatpush1.xpose.msra.mxu0 0.0
    %4500 = vmatprep.subr.mxu0 0.0
    %4501 = vmatpush1.xpose.msra.mxu0 0.0
    %4502 = vmatprep.subr.mxu0 0.0
    %4503 = vmatpush1.xpose.msra.mxu0 0.0
    %4504 = vmatprep.subr.mxu0 0.0
    %4505 = vmatpush1.xpose.msra.mxu0 0.0
    %4506 = vmatprep.subr.mxu0 0.0
    %4507 = vmatpush1.xpose.msra.mxu0 0.0
    %4508 = vmatprep.subr.mxu0 0.0
    %4509 = vmatpush1.xpose.msra.mxu0 0.0
    %4510 = vmatprep.subr.mxu0 0.0
    %4511 = vmatpush1.xpose.msra.mxu0 0.0
    %4512 = vmatprep.subr.mxu0 0.0
    %4513 = vmatpush1.xpose.msra.mxu0 0.0
    %4514 = vmatprep.subr.mxu0 0.0
    %4515 = vmatpush1.xpose.msra.mxu0 0.0
    %4516 = vmatprep.subr.mxu0 0.0
    %4517 = vmatpush1.xpose.msra.mxu0 0.0
    %4518 = vmatprep.subr.mxu0 0.0
    %4519 = vmatpush1.xpose.msra.mxu0 0.0
    %4520 = vmatprep.subr.mxu0 0.0
    %4521 = vmatpush1.xpose.msra.mxu0 0.0
    %4522 = vmatprep.subr.mxu0 0.0
    %4523 = vmatpush1.xpose.msra.mxu0 0.0
    %4524 = vmatprep.subr.mxu0 0.0
    %4525 = vmatpush1.xpose.msra.mxu0 0.0
    %4526 = vmatprep.subr.mxu0 0.0
    %4527 = vmatpush1.xpose.msra.mxu0 0.0
    %4528 = vmatprep.subr.mxu0 0.0
    %4529 = vmatpush1.xpose.msra.mxu0 0.0
    %4530 = vmatprep.subr.mxu0 0.0
    %4531 = vmatpush1.xpose.msra.mxu0 0.0
    %4532 = vmatprep.subr.mxu0 0.0
    %4533 = vmatpush1.xpose.msra.mxu0 0.0
    %4534 = vmatprep.subr.mxu0 0.0
    %4535 = vmatpush1.xpose.msra.mxu0 0.0
    %4536 = vmatprep.subr.mxu0 0.0
    %4537 = vmatpush1.xpose.msra.mxu0 0.0
    %4538 = vmatprep.subr.mxu0 0.0
    %4539 = vmatpush1.xpose.msra.mxu0 0.0
    %4540 = vmatprep.subr.mxu0 0.0
    %4541 = vmatpush1.xpose.msra.mxu0 0.0
    %4542 = vmatprep.subr.mxu0 0.0
    %4543 = vmatpush1.xpose.msra.mxu0 0.0
    %4544 = vmatprep.subr.mxu0 0.0
    %4545 = vmatpush1.xpose.msra.mxu0 0.0
    %4546 = vmatprep.subr.mxu0 0.0
    %4547 = vmatpush1.xpose.msra.mxu0 0.0
    %4548 = vmatprep.subr.mxu0 0.0
    %4549 = vmatpush1.xpose.msra.mxu0 0.0
    %4550 = vmatprep.subr.mxu0 0.0
    %4551 = vmatpush1.xpose.msra.mxu0 0.0
    %4552 = vmatprep.subr.mxu0 0.0
    %4553 = vmatpush1.xpose.msra.mxu0 0.0
    %4554 = vmatprep.subr.mxu0 0.0
    %4555 = vmatpush1.xpose.msra.mxu0 0.0
    %4556 = vmatprep.mubr.f32.mxu0 0.0
    %4557 = vmatmul.mubr.f32.gmra.mrb[0].mxu0 %v4487
    %v4558 = vpop.f32.mrb[0].mxu0
    %v4559 = vadd.f32 0.0, %v4558
    %v4560 = vpop.f32.mrb[0].mxu0
    %4561 = vdwg.mxu0
    %v4563 = vsel %vm3725, %v3504, 0
    %v4566 = vsel %vm3725, %v3704, 0
    %4568 = vmatprep.subr.mxu0 0.0
    %4569 = vmatpush1.xpose.msra.mxu0 %v4566
    %4570 = vmatprep.subr.mxu0 0.0
    %4571 = vmatpush1.xpose.msra.mxu0 0.0
    %4572 = vmatprep.subr.mxu0 0.0
    %4573 = vmatpush1.xpose.msra.mxu0 0.0
    %4574 = vmatprep.subr.mxu0 0.0
    %4575 = vmatpush1.xpose.msra.mxu0 0.0
    %4576 = vmatprep.subr.mxu0 0.0
    %4577 = vmatpush1.xpose.msra.mxu0 0.0
    %4578 = vmatprep.subr.mxu0 0.0
    %4579 = vmatpush1.xpose.msra.mxu0 0.0
    %4580 = vmatprep.subr.mxu0 0.0
    %4581 = vmatpush1.xpose.msra.mxu0 0.0
    %4582 = vmatprep.subr.mxu0 0.0
    %4583 = vmatpush1.xpose.msra.mxu0 0.0
    %4584 = vmatprep.subr.mxu0 0.0
    %4585 = vmatpush1.xpose.msra.mxu0 0.0
    %4586 = vmatprep.subr.mxu0 0.0
    %4587 = vmatpush1.xpose.msra.mxu0 0.0
    %4588 = vmatprep.subr.mxu0 0.0
    %4589 = vmatpush1.xpose.msra.mxu0 0.0
    %4590 = vmatprep.subr.mxu0 0.0
    %4591 = vmatpush1.xpose.msra.mxu0 0.0
    %4592 = vmatprep.subr.mxu0 0.0
    %4593 = vmatpush1.xpose.msra.mxu0 0.0
    %4594 = vmatprep.subr.mxu0 0.0
    %4595 = vmatpush1.xpose.msra.mxu0 0.0
    %4596 = vmatprep.subr.mxu0 0.0
    %4597 = vmatpush1.xpose.msra.mxu0 0.0
    %4598 = vmatprep.subr.mxu0 0.0
    %4599 = vmatpush1.xpose.msra.mxu0 0.0
    %4600 = vmatprep.subr.mxu0 0.0
    %4601 = vmatpush1.xpose.msra.mxu0 0.0
    %4602 = vmatprep.subr.mxu0 0.0
    %4603 = vmatpush1.xpose.msra.mxu0 0.0
    %4604 = vmatprep.subr.mxu0 0.0
    %4605 = vmatpush1.xpose.msra.mxu0 0.0
    %4606 = vmatprep.subr.mxu0 0.0
    %4607 = vmatpush1.xpose.msra.mxu0 0.0
    %4608 = vmatprep.subr.mxu0 0.0
    %4609 = vmatpush1.xpose.msra.mxu0 0.0
    %4610 = vmatprep.subr.mxu0 0.0
    %4611 = vmatpush1.xpose.msra.mxu0 0.0
    %4612 = vmatprep.subr.mxu0 0.0
    %4613 = vmatpush1.xpose.msra.mxu0 0.0
    %4614 = vmatprep.subr.mxu0 0.0
    %4615 = vmatpush1.xpose.msra.mxu0 0.0
    %4616 = vmatprep.subr.mxu0 0.0
    %4617 = vmatpush1.xpose.msra.mxu0 0.0
    %4618 = vmatprep.subr.mxu0 0.0
    %4619 = vmatpush1.xpose.msra.mxu0 0.0
    %4620 = vmatprep.subr.mxu0 0.0
    %4621 = vmatpush1.xpose.msra.mxu0 0.0
    %4622 = vmatprep.subr.mxu0 0.0
    %4623 = vmatpush1.xpose.msra.mxu0 0.0
    %4624 = vmatprep.subr.mxu0 0.0
    %4625 = vmatpush1.xpose.msra.mxu0 0.0
    %4626 = vmatprep.subr.mxu0 0.0
    %4627 = vmatpush1.xpose.msra.mxu0 0.0
    %4628 = vmatprep.subr.mxu0 0.0
    %4629 = vmatpush1.xpose.msra.mxu0 0.0
    %4630 = vmatprep.subr.mxu0 0.0
    %4631 = vmatpush1.xpose.msra.mxu0 0.0
    %4632 = vmatprep.mubr.f32.mxu0 0.0
    %4633 = vmatmul.mubr.f32.gmra.mrb[0].mxu0 %v4563
    %v4634 = vpop.f32.mrb[0].mxu0
    %v4635 = vadd.f32 0.0, %v4634
    %v4636 = vpop.f32.mrb[0].mxu0
    %4637 = vdwg.mxu0
    %v4639 = vsel %vm3725, %v3505, 0
    %v4642 = vsel %vm3725, %v3705, 0
    %4644 = vmatprep.subr.mxu0 0.0
    %4645 = vmatpush1.xpose.msra.mxu0 %v4642
    %4646 = vmatprep.subr.mxu0 0.0
    %4647 = vmatpush1.xpose.msra.mxu0 0.0
    %4648 = vmatprep.subr.mxu0 0.0
    %4649 = vmatpush1.xpose.msra.mxu0 0.0
    %4650 = vmatprep.subr.mxu0 0.0
    %4651 = vmatpush1.xpose.msra.mxu0 0.0
    %4652 = vmatprep.subr.mxu0 0.0
    %4653 = vmatpush1.xpose.msra.mxu0 0.0
    %4654 = vmatprep.subr.mxu0 0.0
    %4655 = vmatpush1.xpose.msra.mxu0 0.0
    %4656 = vmatprep.subr.mxu0 0.0
    %4657 = vmatpush1.xpose.msra.mxu0 0.0
    %4658 = vmatprep.subr.mxu0 0.0
    %4659 = vmatpush1.xpose.msra.mxu0 0.0
    %4660 = vmatprep.subr.mxu0 0.0
    %4661 = vmatpush1.xpose.msra.mxu0 0.0
    %4662 = vmatprep.subr.mxu0 0.0
    %4663 = vmatpush1.xpose.msra.mxu0 0.0
    %4664 = vmatprep.subr.mxu0 0.0
    %4665 = vmatpush1.xpose.msra.mxu0 0.0
    %4666 = vmatprep.subr.mxu0 0.0
    %4667 = vmatpush1.xpose.msra.mxu0 0.0
    %4668 = vmatprep.subr.mxu0 0.0
    %4669 = vmatpush1.xpose.msra.mxu0 0.0
    %4670 = vmatprep.subr.mxu0 0.0
    %4671 = vmatpush1.xpose.msra.mxu0 0.0
    %4672 = vmatprep.subr.mxu0 0.0
    %4673 = vmatpush1.xpose.msra.mxu0 0.0
    %4674 = vmatprep.subr.mxu0 0.0
    %4675 = vmatpush1.xpose.msra.mxu0 0.0
    %4676 = vmatprep.subr.mxu0 0.0
    %4677 = vmatpush1.xpose.msra.mxu0 0.0
    %4678 = vmatprep.subr.mxu0 0.0
    %4679 = vmatpush1.xpose.msra.mxu0 0.0
    %4680 = vmatprep.subr.mxu0 0.0
    %4681 = vmatpush1.xpose.msra.mxu0 0.0
    %4682 = vmatprep.subr.mxu0 0.0
    %4683 = vmatpush1.xpose.msra.mxu0 0.0
    %4684 = vmatprep.subr.mxu0 0.0
    %4685 = vmatpush1.xpose.msra.mxu0 0.0
    %4686 = vmatprep.subr.mxu0 0.0
    %4687 = vmatpush1.xpose.msra.mxu0 0.0
    %4688 = vmatprep.subr.mxu0 0.0
    %4689 = vmatpush1.xpose.msra.mxu0 0.0
    %4690 = vmatprep.subr.mxu0 0.0
    %4691 = vmatpush1.xpose.msra.mxu0 0.0
    %4692 = vmatprep.subr.mxu0 0.0
    %4693 = vmatpush1.xpose.msra.mxu0 0.0
    %4694 = vmatprep.subr.mxu0 0.0
    %4695 = vmatpush1.xpose.msra.mxu0 0.0
    %4696 = vmatprep.subr.mxu0 0.0
    %4697 = vmatpush1.xpose.msra.mxu0 0.0
    %4698 = vmatprep.subr.mxu0 0.0
    %4699 = vmatpush1.xpose.msra.mxu0 0.0
    %4700 = vmatprep.subr.mxu0 0.0
    %4701 = vmatpush1.xpose.msra.mxu0 0.0
    %4702 = vmatprep.subr.mxu0 0.0
    %4703 = vmatpush1.xpose.msra.mxu0 0.0
    %4704 = vmatprep.subr.mxu0 0.0
    %4705 = vmatpush1.xpose.msra.mxu0 0.0
    %4706 = vmatprep.subr.mxu0 0.0
    %4707 = vmatpush1.xpose.msra.mxu0 0.0
    %4708 = vmatprep.mubr.f32.mxu0 0.0
    %4709 = vmatmul.mubr.f32.gmra.mrb[0].mxu0 %v4639
    %v4710 = vpop.f32.mrb[0].mxu0
    %v4711 = vadd.f32 0.0, %v4710
    %v4712 = vpop.f32.mrb[0].mxu0
    %4713 = vdwg.mxu0
    %v4715 = vsel %vm3725, %v3506, 0
    %v4718 = vsel %vm3725, %v3706, 0
    %4720 = vmatprep.subr.mxu0 0.0
    %4721 = vmatpush1.xpose.msra.mxu0 %v4718
    %4722 = vmatprep.subr.mxu0 0.0
    %4723 = vmatpush1.xpose.msra.mxu0 0.0
    %4724 = vmatprep.subr.mxu0 0.0
    %4725 = vmatpush1.xpose.msra.mxu0 0.0
    %4726 = vmatprep.subr.mxu0 0.0
    %4727 = vmatpush1.xpose.msra.mxu0 0.0
    %4728 = vmatprep.subr.mxu0 0.0
    %4729 = vmatpush1.xpose.msra.mxu0 0.0
    %4730 = vmatprep.subr.mxu0 0.0
    %4731 = vmatpush1.xpose.msra.mxu0 0.0
    %4732 = vmatprep.subr.mxu0 0.0
    %4733 = vmatpush1.xpose.msra.mxu0 0.0
    %4734 = vmatprep.subr.mxu0 0.0
    %4735 = vmatpush1.xpose.msra.mxu0 0.0
    %4736 = vmatprep.subr.mxu0 0.0
    %4737 = vmatpush1.xpose.msra.mxu0 0.0
    %4738 = vmatprep.subr.mxu0 0.0
    %4739 = vmatpush1.xpose.msra.mxu0 0.0
    %4740 = vmatprep.subr.mxu0 0.0
    %4741 = vmatpush1.xpose.msra.mxu0 0.0
    %4742 = vmatprep.subr.mxu0 0.0
    %4743 = vmatpush1.xpose.msra.mxu0 0.0
    %4744 = vmatprep.subr.mxu0 0.0
    %4745 = vmatpush1.xpose.msra.mxu0 0.0
    %4746 = vmatprep.subr.mxu0 0.0
    %4747 = vmatpush1.xpose.msra.mxu0 0.0
    %4748 = vmatprep.subr.mxu0 0.0
    %4749 = vmatpush1.xpose.msra.mxu0 0.0
    %4750 = vmatprep.subr.mxu0 0.0
    %4751 = vmatpush1.xpose.msra.mxu0 0.0
    %4752 = vmatprep.subr.mxu0 0.0
    %4753 = vmatpush1.xpose.msra.mxu0 0.0
    %4754 = vmatprep.subr.mxu0 0.0
    %4755 = vmatpush1.xpose.msra.mxu0 0.0
    %4756 = vmatprep.subr.mxu0 0.0
    %4757 = vmatpush1.xpose.msra.mxu0 0.0
    %4758 = vmatprep.subr.mxu0 0.0
    %4759 = vmatpush1.xpose.msra.mxu0 0.0
    %4760 = vmatprep.subr.mxu0 0.0
    %4761 = vmatpush1.xpose.msra.mxu0 0.0
    %4762 = vmatprep.subr.mxu0 0.0
    %4763 = vmatpush1.xpose.msra.mxu0 0.0
    %4764 = vmatprep.subr.mxu0 0.0
    %4765 = vmatpush1.xpose.msra.mxu0 0.0
    %4766 = vmatprep.subr.mxu0 0.0
    %4767 = vmatpush1.xpose.msra.mxu0 0.0
    %4768 = vmatprep.subr.mxu0 0.0
    %4769 = vmatpush1.xpose.msra.mxu0 0.0
    %4770 = vmatprep.subr.mxu0 0.0
    %4771 = vmatpush1.xpose.msra.mxu0 0.0
    %4772 = vmatprep.subr.mxu0 0.0
    %4773 = vmatpush1.xpose.msra.mxu0 0.0
    %4774 = vmatprep.subr.mxu0 0.0
    %4775 = vmatpush1.xpose.msra.mxu0 0.0
    %4776 = vmatprep.subr.mxu0 0.0
    %4777 = vmatpush1.xpose.msra.mxu0 0.0
    %4778 = vmatprep.subr.mxu0 0.0
    %4779 = vmatpush1.xpose.msra.mxu0 0.0
    %4780 = vmatprep.subr.mxu0 0.0
    %4781 = vmatpush1.xpose.msra.mxu0 0.0
    %4782 = vmatprep.subr.mxu0 0.0
    %4783 = vmatpush1.xpose.msra.mxu0 0.0
    %4784 = vmatprep.mubr.f32.mxu0 0.0
    %4785 = vmatmul.mubr.f32.gmra.mrb[0].mxu0 %v4715
    %v4786 = vpop.f32.mrb[0].mxu0
    %v4787 = vadd.f32 0.0, %v4786
    %v4788 = vpop.f32.mrb[0].mxu0
    %4789 = vdwg.mxu0
    %v4791 = vsel %vm3725, %v3507, 0
    %v4794 = vsel %vm3725, %v3707, 0
    %4796 = vmatprep.subr.mxu0 0.0
    %4797 = vmatpush1.xpose.msra.mxu0 %v4794
    %4798 = vmatprep.subr.mxu0 0.0
    %4799 = vmatpush1.xpose.msra.mxu0 0.0
    %4800 = vmatprep.subr.mxu0 0.0
    %4801 = vmatpush1.xpose.msra.mxu0 0.0
    %4802 = vmatprep.subr.mxu0 0.0
    %4803 = vmatpush1.xpose.msra.mxu0 0.0
    %4804 = vmatprep.subr.mxu0 0.0
    %4805 = vmatpush1.xpose.msra.mxu0 0.0
    %4806 = vmatprep.subr.mxu0 0.0
    %4807 = vmatpush1.xpose.msra.mxu0 0.0
    %4808 = vmatprep.subr.mxu0 0.0
    %4809 = vmatpush1.xpose.msra.mxu0 0.0
    %4810 = vmatprep.subr.mxu0 0.0
    %4811 = vmatpush1.xpose.msra.mxu0 0.0
    %4812 = vmatprep.subr.mxu0 0.0
    %4813 = vmatpush1.xpose.msra.mxu0 0.0
    %4814 = vmatprep.subr.mxu0 0.0
    %4815 = vmatpush1.xpose.msra.mxu0 0.0
    %4816 = vmatprep.subr.mxu0 0.0
    %4817 = vmatpush1.xpose.msra.mxu0 0.0
    %4818 = vmatprep.subr.mxu0 0.0
    %4819 = vmatpush1.xpose.msra.mxu0 0.0
    %4820 = vmatprep.subr.mxu0 0.0
    %4821 = vmatpush1.xpose.msra.mxu0 0.0
    %4822 = vmatprep.subr.mxu0 0.0
    %4823 = vmatpush1.xpose.msra.mxu0 0.0
    %4824 = vmatprep.subr.mxu0 0.0
    %4825 = vmatpush1.xpose.msra.mxu0 0.0
    %4826 = vmatprep.subr.mxu0 0.0
    %4827 = vmatpush1.xpose.msra.mxu0 0.0
    %4828 = vmatprep.subr.mxu0 0.0
    %4829 = vmatpush1.xpose.msra.mxu0 0.0
    %4830 = vmatprep.subr.mxu0 0.0
    %4831 = vmatpush1.xpose.msra.mxu0 0.0
    %4832 = vmatprep.subr.mxu0 0.0
    %4833 = vmatpush1.xpose.msra.mxu0 0.0
    %4834 = vmatprep.subr.mxu0 0.0
    %4835 = vmatpush1.xpose.msra.mxu0 0.0
    %4836 = vmatprep.subr.mxu0 0.0
    %4837 = vmatpush1.xpose.msra.mxu0 0.0
    %4838 = vmatprep.subr.mxu0 0.0
    %4839 = vmatpush1.xpose.msra.mxu0 0.0
    %4840 = vmatprep.subr.mxu0 0.0
    %4841 = vmatpush1.xpose.msra.mxu0 0.0
    %4842 = vmatprep.subr.mxu0 0.0
    %4843 = vmatpush1.xpose.msra.mxu0 0.0
    %4844 = vmatprep.subr.mxu0 0.0
    %4845 = vmatpush1.xpose.msra.mxu0 0.0
    %4846 = vmatprep.subr.mxu0 0.0
    %4847 = vmatpush1.xpose.msra.mxu0 0.0
    %4848 = vmatprep.subr.mxu0 0.0
    %4849 = vmatpush1.xpose.msra.mxu0 0.0
    %4850 = vmatprep.subr.mxu0 0.0
    %4851 = vmatpush1.xpose.msra.mxu0 0.0
    %4852 = vmatprep.subr.mxu0 0.0
    %4853 = vmatpush1.xpose.msra.mxu0 0.0
    %4854 = vmatprep.subr.mxu0 0.0
    %4855 = vmatpush1.xpose.msra.mxu0 0.0
    %4856 = vmatprep.subr.mxu0 0.0
    %4857 = vmatpush1.xpose.msra.mxu0 0.0
    %4858 = vmatprep.subr.mxu0 0.0
    %4859 = vmatpush1.xpose.msra.mxu0 0.0
    %4860 = vmatprep.mubr.f32.mxu0 0.0
    %4861 = vmatmul.mubr.f32.gmra.mrb[0].mxu0 %v4791
    %v4862 = vpop.f32.mrb[0].mxu0
    %v4863 = vadd.f32 0.0, %v4862
    %v4864 = vpop.f32.mrb[0].mxu0
    %4865 = vdwg.mxu0
    %v4867 = vsel %vm3725, %v3508, 0
    %v4870 = vsel %vm3725, %v3708, 0
    %4872 = vmatprep.subr.mxu0 0.0
    %4873 = vmatpush1.xpose.msra.mxu0 %v4870
    %4874 = vmatprep.subr.mxu0 0.0
    %4875 = vmatpush1.xpose.msra.mxu0 0.0
    %4876 = vmatprep.subr.mxu0 0.0
    %4877 = vmatpush1.xpose.msra.mxu0 0.0
    %4878 = vmatprep.subr.mxu0 0.0
    %4879 = vmatpush1.xpose.msra.mxu0 0.0
    %4880 = vmatprep.subr.mxu0 0.0
    %4881 = vmatpush1.xpose.msra.mxu0 0.0
    %4882 = vmatprep.subr.mxu0 0.0
    %4883 = vmatpush1.xpose.msra.mxu0 0.0
    %4884 = vmatprep.subr.mxu0 0.0
    %4885 = vmatpush1.xpose.msra.mxu0 0.0
    %4886 = vmatprep.subr.mxu0 0.0
    %4887 = vmatpush1.xpose.msra.mxu0 0.0
    %4888 = vmatprep.subr.mxu0 0.0
    %4889 = vmatpush1.xpose.msra.mxu0 0.0
    %4890 = vmatprep.subr.mxu0 0.0
    %4891 = vmatpush1.xpose.msra.mxu0 0.0
    %4892 = vmatprep.subr.mxu0 0.0
    %4893 = vmatpush1.xpose.msra.mxu0 0.0
    %4894 = vmatprep.subr.mxu0 0.0
    %4895 = vmatpush1.xpose.msra.mxu0 0.0
    %4896 = vmatprep.subr.mxu0 0.0
    %4897 = vmatpush1.xpose.msra.mxu0 0.0
    %4898 = vmatprep.subr.mxu0 0.0
    %4899 = vmatpush1.xpose.msra.mxu0 0.0
    %4900 = vmatprep.subr.mxu0 0.0
    %4901 = vmatpush1.xpose.msra.mxu0 0.0
    %4902 = vmatprep.subr.mxu0 0.0
    %4903 = vmatpush1.xpose.msra.mxu0 0.0
    %4904 = vmatprep.subr.mxu0 0.0
    %4905 = vmatpush1.xpose.msra.mxu0 0.0
    %4906 = vmatprep.subr.mxu0 0.0
    %4907 = vmatpush1.xpose.msra.mxu0 0.0
    %4908 = vmatprep.subr.mxu0 0.0
    %4909 = vmatpush1.xpose.msra.mxu0 0.0
    %4910 = vmatprep.subr.mxu0 0.0
    %4911 = vmatpush1.xpose.msra.mxu0 0.0
    %4912 = vmatprep.subr.mxu0 0.0
    %4913 = vmatpush1.xpose.msra.mxu0 0.0
    %4914 = vmatprep.subr.mxu0 0.0
    %4915 = vmatpush1.xpose.msra.mxu0 0.0
    %4916 = vmatprep.subr.mxu0 0.0
    %4917 = vmatpush1.xpose.msra.mxu0 0.0
    %4918 = vmatprep.subr.mxu0 0.0
    %4919 = vmatpush1.xpose.msra.mxu0 0.0
    %4920 = vmatprep.subr.mxu0 0.0
    %4921 = vmatpush1.xpose.msra.mxu0 0.0
    %4922 = vmatprep.subr.mxu0 0.0
    %4923 = vmatpush1.xpose.msra.mxu0 0.0
    %4924 = vmatprep.subr.mxu0 0.0
    %4925 = vmatpush1.xpose.msra.mxu0 0.0
    %4926 = vmatprep.subr.mxu0 0.0
    %4927 = vmatpush1.xpose.msra.mxu0 0.0
    %4928 = vmatprep.subr.mxu0 0.0
    %4929 = vmatpush1.xpose.msra.mxu0 0.0
    %4930 = vmatprep.subr.mxu0 0.0
    %4931 = vmatpush1.xpose.msra.mxu0 0.0
    %4932 = vmatprep.subr.mxu0 0.0
    %4933 = vmatpush1.xpose.msra.mxu0 0.0
    %4934 = vmatprep.subr.mxu0 0.0
    %4935 = vmatpush1.xpose.msra.mxu0 0.0
    %4936 = vmatprep.mubr.f32.mxu0 0.0
    %4937 = vmatmul.mubr.f32.gmra.mrb[0].mxu0 %v4867
    %v4938 = vpop.f32.mrb[0].mxu0
    %v4939 = vadd.f32 0.0, %v4938
    %v4940 = vpop.f32.mrb[0].mxu0
    %4941 = vdwg.mxu0
    %v4943 = vsel %vm3725, %v3509, 0
    %v4946 = vsel %vm3725, %v3709, 0
    %4948 = vmatprep.subr.mxu0 0.0
    %4949 = vmatpush1.xpose.msra.mxu0 %v4946
    %4950 = vmatprep.subr.mxu0 0.0
    %4951 = vmatpush1.xpose.msra.mxu0 0.0
    %4952 = vmatprep.subr.mxu0 0.0
    %4953 = vmatpush1.xpose.msra.mxu0 0.0
    %4954 = vmatprep.subr.mxu0 0.0
    %4955 = vmatpush1.xpose.msra.mxu0 0.0
    %4956 = vmatprep.subr.mxu0 0.0
    %4957 = vmatpush1.xpose.msra.mxu0 0.0
    %4958 = vmatprep.subr.mxu0 0.0
    %4959 = vmatpush1.xpose.msra.mxu0 0.0
    %4960 = vmatprep.subr.mxu0 0.0
    %4961 = vmatpush1.xpose.msra.mxu0 0.0
    %4962 = vmatprep.subr.mxu0 0.0
    %4963 = vmatpush1.xpose.msra.mxu0 0.0
    %4964 = vmatprep.subr.mxu0 0.0
    %4965 = vmatpush1.xpose.msra.mxu0 0.0
    %4966 = vmatprep.subr.mxu0 0.0
    %4967 = vmatpush1.xpose.msra.mxu0 0.0
    %4968 = vmatprep.subr.mxu0 0.0
    %4969 = vmatpush1.xpose.msra.mxu0 0.0
    %4970 = vmatprep.subr.mxu0 0.0
    %4971 = vmatpush1.xpose.msra.mxu0 0.0
    %4972 = vmatprep.subr.mxu0 0.0
    %4973 = vmatpush1.xpose.msra.mxu0 0.0
    %4974 = vmatprep.subr.mxu0 0.0
    %4975 = vmatpush1.xpose.msra.mxu0 0.0
    %4976 = vmatprep.subr.mxu0 0.0
    %4977 = vmatpush1.xpose.msra.mxu0 0.0
    %4978 = vmatprep.subr.mxu0 0.0
    %4979 = vmatpush1.xpose.msra.mxu0 0.0
    %4980 = vmatprep.subr.mxu0 0.0
    %4981 = vmatpush1.xpose.msra.mxu0 0.0
    %4982 = vmatprep.subr.mxu0 0.0
    %4983 = vmatpush1.xpose.msra.mxu0 0.0
    %4984 = vmatprep.subr.mxu0 0.0
    %4985 = vmatpush1.xpose.msra.mxu0 0.0
    %4986 = vmatprep.subr.mxu0 0.0
    %4987 = vmatpush1.xpose.msra.mxu0 0.0
    %4988 = vmatprep.subr.mxu0 0.0
    %4989 = vmatpush1.xpose.msra.mxu0 0.0
    %4990 = vmatprep.subr.mxu0 0.0
    %4991 = vmatpush1.xpose.msra.mxu0 0.0
    %4992 = vmatprep.subr.mxu0 0.0
    %4993 = vmatpush1.xpose.msra.mxu0 0.0
    %4994 = vmatprep.subr.mxu0 0.0
    %4995 = vmatpush1.xpose.msra.mxu0 0.0
    %4996 = vmatprep.subr.mxu0 0.0
    %4997 = vmatpush1.xpose.msra.mxu0 0.0
    %4998 = vmatprep.subr.mxu0 0.0
    %4999 = vmatpush1.xpose.msra.mxu0 0.0
    %5000 = vmatprep.subr.mxu0 0.0
    %5001 = vmatpush1.xpose.msra.mxu0 0.0
    %5002 = vmatprep.subr.mxu0 0.0
    %5003 = vmatpush1.xpose.msra.mxu0 0.0
    %5004 = vmatprep.subr.mxu0 0.0
    %5005 = vmatpush1.xpose.msra.mxu0 0.0
    %5006 = vmatprep.subr.mxu0 0.0
    %5007 = vmatpush1.xpose.msra.mxu0 0.0
    %5008 = vmatprep.subr.mxu0 0.0
    %5009 = vmatpush1.xpose.msra.mxu0 0.0
    %5010 = vmatprep.subr.mxu0 0.0
    %5011 = vmatpush1.xpose.msra.mxu0 0.0
    %5012 = vmatprep.mubr.f32.mxu0 0.0
    %5013 = vmatmul.mubr.f32.gmra.mrb[0].mxu0 %v4943
    %v5014 = vpop.f32.mrb[0].mxu0
    %v5015 = vadd.f32 0.0, %v5014
    %v5016 = vpop.f32.mrb[0].mxu0
    %5017 = vdwg.mxu0
    %v5019 = vsel %vm3725, %v3510, 0
    %v5022 = vsel %vm3725, %v3710, 0
    %5024 = vmatprep.subr.mxu0 0.0
    %5025 = vmatpush1.xpose.msra.mxu0 %v5022
    %5026 = vmatprep.subr.mxu0 0.0
    %5027 = vmatpush1.xpose.msra.mxu0 0.0
    %5028 = vmatprep.subr.mxu0 0.0
    %5029 = vmatpush1.xpose.msra.mxu0 0.0
    %5030 = vmatprep.subr.mxu0 0.0
    %5031 = vmatpush1.xpose.msra.mxu0 0.0
    %5032 = vmatprep.subr.mxu0 0.0
    %5033 = vmatpush1.xpose.msra.mxu0 0.0
    %5034 = vmatprep.subr.mxu0 0.0
    %5035 = vmatpush1.xpose.msra.mxu0 0.0
    %5036 = vmatprep.subr.mxu0 0.0
    %5037 = vmatpush1.xpose.msra.mxu0 0.0
    %5038 = vmatprep.subr.mxu0 0.0
    %5039 = vmatpush1.xpose.msra.mxu0 0.0
    %5040 = vmatprep.subr.mxu0 0.0
    %5041 = vmatpush1.xpose.msra.mxu0 0.0
    %5042 = vmatprep.subr.mxu0 0.0
    %5043 = vmatpush1.xpose.msra.mxu0 0.0
    %5044 = vmatprep.subr.mxu0 0.0
    %5045 = vmatpush1.xpose.msra.mxu0 0.0
    %5046 = vmatprep.subr.mxu0 0.0
    %5047 = vmatpush1.xpose.msra.mxu0 0.0
    %5048 = vmatprep.subr.mxu0 0.0
    %5049 = vmatpush1.xpose.msra.mxu0 0.0
    %5050 = vmatprep.subr.mxu0 0.0
    %5051 = vmatpush1.xpose.msra.mxu0 0.0
    %5052 = vmatprep.subr.mxu0 0.0
    %5053 = vmatpush1.xpose.msra.mxu0 0.0
    %5054 = vmatprep.subr.mxu0 0.0
    %5055 = vmatpush1.xpose.msra.mxu0 0.0
    %5056 = vmatprep.subr.mxu0 0.0
    %5057 = vmatpush1.xpose.msra.mxu0 0.0
    %5058 = vmatprep.subr.mxu0 0.0
    %5059 = vmatpush1.xpose.msra.mxu0 0.0
    %5060 = vmatprep.subr.mxu0 0.0
    %5061 = vmatpush1.xpose.msra.mxu0 0.0
    %5062 = vmatprep.subr.mxu0 0.0
    %5063 = vmatpush1.xpose.msra.mxu0 0.0
    %5064 = vmatprep.subr.mxu0 0.0
    %5065 = vmatpush1.xpose.msra.mxu0 0.0
    %5066 = vmatprep.subr.mxu0 0.0
    %5067 = vmatpush1.xpose.msra.mxu0 0.0
    %5068 = vmatprep.subr.mxu0 0.0
    %5069 = vmatpush1.xpose.msra.mxu0 0.0
    %5070 = vmatprep.subr.mxu0 0.0
    %5071 = vmatpush1.xpose.msra.mxu0 0.0
    %5072 = vmatprep.subr.mxu0 0.0
    %5073 = vmatpush1.xpose.msra.mxu0 0.0
    %5074 = vmatprep.subr.mxu0 0.0
    %5075 = vmatpush1.xpose.msra.mxu0 0.0
    %5076 = vmatprep.subr.mxu0 0.0
    %5077 = vmatpush1.xpose.msra.mxu0 0.0
    %5078 = vmatprep.subr.mxu0 0.0
    %5079 = vmatpush1.xpose.msra.mxu0 0.0
    %5080 = vmatprep.subr.mxu0 0.0
    %5081 = vmatpush1.xpose.msra.mxu0 0.0
    %5082 = vmatprep.subr.mxu0 0.0
    %5083 = vmatpush1.xpose.msra.mxu0 0.0
    %5084 = vmatprep.subr.mxu0 0.0
    %5085 = vmatpush1.xpose.msra.mxu0 0.0
    %5086 = vmatprep.subr.mxu0 0.0
    %5087 = vmatpush1.xpose.msra.mxu0 0.0
    %5088 = vmatprep.mubr.f32.mxu0 0.0
    %5089 = vmatmul.mubr.f32.gmra.mrb[0].mxu0 %v5019
    %v5090 = vpop.f32.mrb[0].mxu0
    %v5091 = vadd.f32 0.0, %v5090
    %v5092 = vpop.f32.mrb[0].mxu0
    %5093 = vdwg.mxu0
    %v5095 = vsel %vm3725, %v3511, 0
    %v5098 = vsel %vm3725, %v3711, 0
    %5100 = vmatprep.subr.mxu0 0.0
    %5101 = vmatpush1.xpose.msra.mxu0 %v5098
    %5102 = vmatprep.subr.mxu0 0.0
    %5103 = vmatpush1.xpose.msra.mxu0 0.0
    %5104 = vmatprep.subr.mxu0 0.0
    %5105 = vmatpush1.xpose.msra.mxu0 0.0
    %5106 = vmatprep.subr.mxu0 0.0
    %5107 = vmatpush1.xpose.msra.mxu0 0.0
    %5108 = vmatprep.subr.mxu0 0.0
    %5109 = vmatpush1.xpose.msra.mxu0 0.0
    %5110 = vmatprep.subr.mxu0 0.0
    %5111 = vmatpush1.xpose.msra.mxu0 0.0
    %5112 = vmatprep.subr.mxu0 0.0
    %5113 = vmatpush1.xpose.msra.mxu0 0.0
    %5114 = vmatprep.subr.mxu0 0.0
    %5115 = vmatpush1.xpose.msra.mxu0 0.0
    %5116 = vmatprep.subr.mxu0 0.0
    %5117 = vmatpush1.xpose.msra.mxu0 0.0
    %5118 = vmatprep.subr.mxu0 0.0
    %5119 = vmatpush1.xpose.msra.mxu0 0.0
    %5120 = vmatprep.subr.mxu0 0.0
    %5121 = vmatpush1.xpose.msra.mxu0 0.0
    %5122 = vmatprep.subr.mxu0 0.0
    %5123 = vmatpush1.xpose.msra.mxu0 0.0
    %5124 = vmatprep.subr.mxu0 0.0
    %5125 = vmatpush1.xpose.msra.mxu0 0.0
    %5126 = vmatprep.subr.mxu0 0.0
    %5127 = vmatpush1.xpose.msra.mxu0 0.0
    %5128 = vmatprep.subr.mxu0 0.0
    %5129 = vmatpush1.xpose.msra.mxu0 0.0
    %5130 = vmatprep.subr.mxu0 0.0
    %5131 = vmatpush1.xpose.msra.mxu0 0.0
    %5132 = vmatprep.subr.mxu0 0.0
    %5133 = vmatpush1.xpose.msra.mxu0 0.0
    %5134 = vmatprep.subr.mxu0 0.0
    %5135 = vmatpush1.xpose.msra.mxu0 0.0
    %5136 = vmatprep.subr.mxu0 0.0
    %5137 = vmatpush1.xpose.msra.mxu0 0.0
    %5138 = vmatprep.subr.mxu0 0.0
    %5139 = vmatpush1.xpose.msra.mxu0 0.0
    %5140 = vmatprep.subr.mxu0 0.0
    %5141 = vmatpush1.xpose.msra.mxu0 0.0
    %5142 = vmatprep.subr.mxu0 0.0
    %5143 = vmatpush1.xpose.msra.mxu0 0.0
    %5144 = vmatprep.subr.mxu0 0.0
    %5145 = vmatpush1.xpose.msra.mxu0 0.0
    %5146 = vmatprep.subr.mxu0 0.0
    %5147 = vmatpush1.xpose.msra.mxu0 0.0
    %5148 = vmatprep.subr.mxu0 0.0
    %5149 = vmatpush1.xpose.msra.mxu0 0.0
    %5150 = vmatprep.subr.mxu0 0.0
    %5151 = vmatpush1.xpose.msra.mxu0 0.0
    %5152 = vmatprep.subr.mxu0 0.0
    %5153 = vmatpush1.xpose.msra.mxu0 0.0
    %5154 = vmatprep.subr.mxu0 0.0
    %5155 = vmatpush1.xpose.msra.mxu0 0.0
    %5156 = vmatprep.subr.mxu0 0.0
    %5157 = vmatpush1.xpose.msra.mxu0 0.0
    %5158 = vmatprep.subr.mxu0 0.0
    %5159 = vmatpush1.xpose.msra.mxu0 0.0
    %5160 = vmatprep.subr.mxu0 0.0
    %5161 = vmatpush1.xpose.msra.mxu0 0.0
    %5162 = vmatprep.subr.mxu0 0.0
    %5163 = vmatpush1.xpose.msra.mxu0 0.0
    %5164 = vmatprep.mubr.f32.mxu0 0.0
    %5165 = vmatmul.mubr.f32.gmra.mrb[0].mxu0 %v5095
    %v5166 = vpop.f32.mrb[0].mxu0
    %v5167 = vadd.f32 0.0, %v5166
    %v5168 = vpop.f32.mrb[0].mxu0
    %5169 = vdwg.mxu0
    %v5171 = vsel %vm3725, %v3512, 0
    %v5174 = vsel %vm3725, %v3712, 0
    %5176 = vmatprep.subr.mxu0 0.0
    %5177 = vmatpush1.xpose.msra.mxu0 %v5174
    %5178 = vmatprep.subr.mxu0 0.0
    %5179 = vmatpush1.xpose.msra.mxu0 0.0
    %5180 = vmatprep.subr.mxu0 0.0
    %5181 = vmatpush1.xpose.msra.mxu0 0.0
    %5182 = vmatprep.subr.mxu0 0.0
    %5183 = vmatpush1.xpose.msra.mxu0 0.0
    %5184 = vmatprep.subr.mxu0 0.0
    %5185 = vmatpush1.xpose.msra.mxu0 0.0
    %5186 = vmatprep.subr.mxu0 0.0
    %5187 = vmatpush1.xpose.msra.mxu0 0.0
    %5188 = vmatprep.subr.mxu0 0.0
    %5189 = vmatpush1.xpose.msra.mxu0 0.0
    %5190 = vmatprep.subr.mxu0 0.0
    %5191 = vmatpush1.xpose.msra.mxu0 0.0
    %5192 = vmatprep.subr.mxu0 0.0
    %5193 = vmatpush1.xpose.msra.mxu0 0.0
    %5194 = vmatprep.subr.mxu0 0.0
    %5195 = vmatpush1.xpose.msra.mxu0 0.0
    %5196 = vmatprep.subr.mxu0 0.0
    %5197 = vmatpush1.xpose.msra.mxu0 0.0
    %5198 = vmatprep.subr.mxu0 0.0
    %5199 = vmatpush1.xpose.msra.mxu0 0.0
    %5200 = vmatprep.subr.mxu0 0.0
    %5201 = vmatpush1.xpose.msra.mxu0 0.0
    %5202 = vmatprep.subr.mxu0 0.0
    %5203 = vmatpush1.xpose.msra.mxu0 0.0
    %5204 = vmatprep.subr.mxu0 0.0
    %5205 = vmatpush1.xpose.msra.mxu0 0.0
    %5206 = vmatprep.subr.mxu0 0.0
    %5207 = vmatpush1.xpose.msra.mxu0 0.0
    %5208 = vmatprep.subr.mxu0 0.0
    %5209 = vmatpush1.xpose.msra.mxu0 0.0
    %5210 = vmatprep.subr.mxu0 0.0
    %5211 = vmatpush1.xpose.msra.mxu0 0.0
    %5212 = vmatprep.subr.mxu0 0.0
    %5213 = vmatpush1.xpose.msra.mxu0 0.0
    %5214 = vmatprep.subr.mxu0 0.0
    %5215 = vmatpush1.xpose.msra.mxu0 0.0
    %5216 = vmatprep.subr.mxu0 0.0
    %5217 = vmatpush1.xpose.msra.mxu0 0.0
    %5218 = vmatprep.subr.mxu0 0.0
    %5219 = vmatpush1.xpose.msra.mxu0 0.0
    %5220 = vmatprep.subr.mxu0 0.0
    %5221 = vmatpush1.xpose.msra.mxu0 0.0
    %5222 = vmatprep.subr.mxu0 0.0
    %5223 = vmatpush1.xpose.msra.mxu0 0.0
    %5224 = vmatprep.subr.mxu0 0.0
    %5225 = vmatpush1.xpose.msra.mxu0 0.0
    %5226 = vmatprep.subr.mxu0 0.0
    %5227 = vmatpush1.xpose.msra.mxu0 0.0
    %5228 = vmatprep.subr.mxu0 0.0
    %5229 = vmatpush1.xpose.msra.mxu0 0.0
    %5230 = vmatprep.subr.mxu0 0.0
    %5231 = vmatpush1.xpose.msra.mxu0 0.0
    %5232 = vmatprep.subr.mxu0 0.0
    %5233 = vmatpush1.xpose.msra.mxu0 0.0
    %5234 = vmatprep.subr.mxu0 0.0
    %5235 = vmatpush1.xpose.msra.mxu0 0.0
    %5236 = vmatprep.subr.mxu0 0.0
    %5237 = vmatpush1.xpose.msra.mxu0 0.0
    %5238 = vmatprep.subr.mxu0 0.0
    %5239 = vmatpush1.xpose.msra.mxu0 0.0
    %5240 = vmatprep.mubr.f32.mxu0 0.0
    %5241 = vmatmul.mubr.f32.gmra.mrb[0].mxu0 %v5171
    %v5242 = vpop.f32.mrb[0].mxu0
    %v5243 = vadd.f32 0.0, %v5242
    %v5244 = vpop.f32.mrb[0].mxu0
    %5245 = vdwg.mxu0
    %v5247 = vsel %vm3725, %v3513, 0
    %v5250 = vsel %vm3725, %v3713, 0
    %5252 = vmatprep.subr.mxu0 0.0
    %5253 = vmatpush1.xpose.msra.mxu0 %v5250
    %5254 = vmatprep.subr.mxu0 0.0
    %5255 = vmatpush1.xpose.msra.mxu0 0.0
    %5256 = vmatprep.subr.mxu0 0.0
    %5257 = vmatpush1.xpose.msra.mxu0 0.0
    %5258 = vmatprep.subr.mxu0 0.0
    %5259 = vmatpush1.xpose.msra.mxu0 0.0
    %5260 = vmatprep.subr.mxu0 0.0
    %5261 = vmatpush1.xpose.msra.mxu0 0.0
    %5262 = vmatprep.subr.mxu0 0.0
    %5263 = vmatpush1.xpose.msra.mxu0 0.0
    %5264 = vmatprep.subr.mxu0 0.0
    %5265 = vmatpush1.xpose.msra.mxu0 0.0
    %5266 = vmatprep.subr.mxu0 0.0
    %5267 = vmatpush1.xpose.msra.mxu0 0.0
    %5268 = vmatprep.subr.mxu0 0.0
    %5269 = vmatpush1.xpose.msra.mxu0 0.0
    %5270 = vmatprep.subr.mxu0 0.0
    %5271 = vmatpush1.xpose.msra.mxu0 0.0
    %5272 = vmatprep.subr.mxu0 0.0
    %5273 = vmatpush1.xpose.msra.mxu0 0.0
    %5274 = vmatprep.subr.mxu0 0.0
    %5275 = vmatpush1.xpose.msra.mxu0 0.0
    %5276 = vmatprep.subr.mxu0 0.0
    %5277 = vmatpush1.xpose.msra.mxu0 0.0
    %5278 = vmatprep.subr.mxu0 0.0
    %5279 = vmatpush1.xpose.msra.mxu0 0.0
    %5280 = vmatprep.subr.mxu0 0.0
    %5281 = vmatpush1.xpose.msra.mxu0 0.0
    %5282 = vmatprep.subr.mxu0 0.0
    %5283 = vmatpush1.xpose.msra.mxu0 0.0
    %5284 = vmatprep.subr.mxu0 0.0
    %5285 = vmatpush1.xpose.msra.mxu0 0.0
    %5286 = vmatprep.subr.mxu0 0.0
    %5287 = vmatpush1.xpose.msra.mxu0 0.0
    %5288 = vmatprep.subr.mxu0 0.0
    %5289 = vmatpush1.xpose.msra.mxu0 0.0
    %5290 = vmatprep.subr.mxu0 0.0
    %5291 = vmatpush1.xpose.msra.mxu0 0.0
    %5292 = vmatprep.subr.mxu0 0.0
    %5293 = vmatpush1.xpose.msra.mxu0 0.0
    %5294 = vmatprep.subr.mxu0 0.0
    %5295 = vmatpush1.xpose.msra.mxu0 0.0
    %5296 = vmatprep.subr.mxu0 0.0
    %5297 = vmatpush1.xpose.msra.mxu0 0.0
    %5298 = vmatprep.subr.mxu0 0.0
    %5299 = vmatpush1.xpose.msra.mxu0 0.0
    %5300 = vmatprep.subr.mxu0 0.0
    %5301 = vmatpush1.xpose.msra.mxu0 0.0
    %5302 = vmatprep.subr.mxu0 0.0
    %5303 = vmatpush1.xpose.msra.mxu0 0.0
    %5304 = vmatprep.subr.mxu0 0.0
    %5305 = vmatpush1.xpose.msra.mxu0 0.0
    %5306 = vmatprep.subr.mxu0 0.0
    %5307 = vmatpush1.xpose.msra.mxu0 0.0
    %5308 = vmatprep.subr.mxu0 0.0
    %5309 = vmatpush1.xpose.msra.mxu0 0.0
    %5310 = vmatprep.subr.mxu0 0.0
    %5311 = vmatpush1.xpose.msra.mxu0 0.0
    %5312 = vmatprep.subr.mxu0 0.0
    %5313 = vmatpush1.xpose.msra.mxu0 0.0
    %5314 = vmatprep.subr.mxu0 0.0
    %5315 = vmatpush1.xpose.msra.mxu0 0.0
    %5316 = vmatprep.mubr.f32.mxu0 0.0
    %5317 = vmatmul.mubr.f32.gmra.mrb[0].mxu0 %v5247
    %v5318 = vpop.f32.mrb[0].mxu0
    %v5319 = vadd.f32 0.0, %v5318
    %v5320 = vpop.f32.mrb[0].mxu0
    %5321 = vdwg.mxu0
    %v5323 = vsel %vm3725, %v3514, 0
    %v5326 = vsel %vm3725, %v3714, 0
    %5328 = vmatprep.subr.mxu0 0.0
    %5329 = vmatpush1.xpose.msra.mxu0 %v5326
    %5330 = vmatprep.subr.mxu0 0.0
    %5331 = vmatpush1.xpose.msra.mxu0 0.0
    %5332 = vmatprep.subr.mxu0 0.0
    %5333 = vmatpush1.xpose.msra.mxu0 0.0
    %5334 = vmatprep.subr.mxu0 0.0
    %5335 = vmatpush1.xpose.msra.mxu0 0.0
    %5336 = vmatprep.subr.mxu0 0.0
    %5337 = vmatpush1.xpose.msra.mxu0 0.0
    %5338 = vmatprep.subr.mxu0 0.0
    %5339 = vmatpush1.xpose.msra.mxu0 0.0
    %5340 = vmatprep.subr.mxu0 0.0
    %5341 = vmatpush1.xpose.msra.mxu0 0.0
    %5342 = vmatprep.subr.mxu0 0.0
    %5343 = vmatpush1.xpose.msra.mxu0 0.0
    %5344 = vmatprep.subr.mxu0 0.0
    %5345 = vmatpush1.xpose.msra.mxu0 0.0
    %5346 = vmatprep.subr.mxu0 0.0
    %5347 = vmatpush1.xpose.msra.mxu0 0.0
    %5348 = vmatprep.subr.mxu0 0.0
    %5349 = vmatpush1.xpose.msra.mxu0 0.0
    %5350 = vmatprep.subr.mxu0 0.0
    %5351 = vmatpush1.xpose.msra.mxu0 0.0
    %5352 = vmatprep.subr.mxu0 0.0
    %5353 = vmatpush1.xpose.msra.mxu0 0.0
    %5354 = vmatprep.subr.mxu0 0.0
    %5355 = vmatpush1.xpose.msra.mxu0 0.0
    %5356 = vmatprep.subr.mxu0 0.0
    %5357 = vmatpush1.xpose.msra.mxu0 0.0
    %5358 = vmatprep.subr.mxu0 0.0
    %5359 = vmatpush1.xpose.msra.mxu0 0.0
    %5360 = vmatprep.subr.mxu0 0.0
    %5361 = vmatpush1.xpose.msra.mxu0 0.0
    %5362 = vmatprep.subr.mxu0 0.0
    %5363 = vmatpush1.xpose.msra.mxu0 0.0
    %5364 = vmatprep.subr.mxu0 0.0
    %5365 = vmatpush1.xpose.msra.mxu0 0.0
    %5366 = vmatprep.subr.mxu0 0.0
    %5367 = vmatpush1.xpose.msra.mxu0 0.0
    %5368 = vmatprep.subr.mxu0 0.0
    %5369 = vmatpush1.xpose.msra.mxu0 0.0
    %5370 = vmatprep.subr.mxu0 0.0
    %5371 = vmatpush1.xpose.msra.mxu0 0.0
    %5372 = vmatprep.subr.mxu0 0.0
    %5373 = vmatpush1.xpose.msra.mxu0 0.0
    %5374 = vmatprep.subr.mxu0 0.0
    %5375 = vmatpush1.xpose.msra.mxu0 0.0
    %5376 = vmatprep.subr.mxu0 0.0
    %5377 = vmatpush1.xpose.msra.mxu0 0.0
    %5378 = vmatprep.subr.mxu0 0.0
    %5379 = vmatpush1.xpose.msra.mxu0 0.0
    %5380 = vmatprep.subr.mxu0 0.0
    %5381 = vmatpush1.xpose.msra.mxu0 0.0
    %5382 = vmatprep.subr.mxu0 0.0
    %5383 = vmatpush1.xpose.msra.mxu0 0.0
    %5384 = vmatprep.subr.mxu0 0.0
    %5385 = vmatpush1.xpose.msra.mxu0 0.0
    %5386 = vmatprep.subr.mxu0 0.0
    %5387 = vmatpush1.xpose.msra.mxu0 0.0
    %5388 = vmatprep.subr.mxu0 0.0
    %5389 = vmatpush1.xpose.msra.mxu0 0.0
    %5390 = vmatprep.subr.mxu0 0.0
    %5391 = vmatpush1.xpose.msra.mxu0 0.0
    %5392 = vmatprep.mubr.f32.mxu0 0.0
    %5393 = vmatmul.mubr.f32.gmra.mrb[0].mxu0 %v5323
    %v5394 = vpop.f32.mrb[0].mxu0
    %v5395 = vadd.f32 0.0, %v5394
    %v5396 = vpop.f32.mrb[0].mxu0
    %5397 = vdwg.mxu0
    %v5399 = vsel %vm3725, %v3515, 0
    %v5402 = vsel %vm3725, %v3715, 0
    %5404 = vmatprep.subr.mxu0 0.0
    %5405 = vmatpush1.xpose.msra.mxu0 %v5402
    %5406 = vmatprep.subr.mxu0 0.0
    %5407 = vmatpush1.xpose.msra.mxu0 0.0
    %5408 = vmatprep.subr.mxu0 0.0
    %5409 = vmatpush1.xpose.msra.mxu0 0.0
    %5410 = vmatprep.subr.mxu0 0.0
    %5411 = vmatpush1.xpose.msra.mxu0 0.0
    %5412 = vmatprep.subr.mxu0 0.0
    %5413 = vmatpush1.xpose.msra.mxu0 0.0
    %5414 = vmatprep.subr.mxu0 0.0
    %5415 = vmatpush1.xpose.msra.mxu0 0.0
    %5416 = vmatprep.subr.mxu0 0.0
    %5417 = vmatpush1.xpose.msra.mxu0 0.0
    %5418 = vmatprep.subr.mxu0 0.0
    %5419 = vmatpush1.xpose.msra.mxu0 0.0
    %5420 = vmatprep.subr.mxu0 0.0
    %5421 = vmatpush1.xpose.msra.mxu0 0.0
    %5422 = vmatprep.subr.mxu0 0.0
    %5423 = vmatpush1.xpose.msra.mxu0 0.0
    %5424 = vmatprep.subr.mxu0 0.0
    %5425 = vmatpush1.xpose.msra.mxu0 0.0
    %5426 = vmatprep.subr.mxu0 0.0
    %5427 = vmatpush1.xpose.msra.mxu0 0.0
    %5428 = vmatprep.subr.mxu0 0.0
    %5429 = vmatpush1.xpose.msra.mxu0 0.0
    %5430 = vmatprep.subr.mxu0 0.0
    %5431 = vmatpush1.xpose.msra.mxu0 0.0
    %5432 = vmatprep.subr.mxu0 0.0
    %5433 = vmatpush1.xpose.msra.mxu0 0.0
    %5434 = vmatprep.subr.mxu0 0.0
    %5435 = vmatpush1.xpose.msra.mxu0 0.0
    %5436 = vmatprep.subr.mxu0 0.0
    %5437 = vmatpush1.xpose.msra.mxu0 0.0
    %5438 = vmatprep.subr.mxu0 0.0
    %5439 = vmatpush1.xpose.msra.mxu0 0.0
    %5440 = vmatprep.subr.mxu0 0.0
    %5441 = vmatpush1.xpose.msra.mxu0 0.0
    %5442 = vmatprep.subr.mxu0 0.0
    %5443 = vmatpush1.xpose.msra.mxu0 0.0
    %5444 = vmatprep.subr.mxu0 0.0
    %5445 = vmatpush1.xpose.msra.mxu0 0.0
    %5446 = vmatprep.subr.mxu0 0.0
    %5447 = vmatpush1.xpose.msra.mxu0 0.0
    %5448 = vmatprep.subr.mxu0 0.0
    %5449 = vmatpush1.xpose.msra.mxu0 0.0
    %5450 = vmatprep.subr.mxu0 0.0
    %5451 = vmatpush1.xpose.msra.mxu0 0.0
    %5452 = vmatprep.subr.mxu0 0.0
    %5453 = vmatpush1.xpose.msra.mxu0 0.0
    %5454 = vmatprep.subr.mxu0 0.0
    %5455 = vmatpush1.xpose.msra.mxu0 0.0
    %5456 = vmatprep.subr.mxu0 0.0
    %5457 = vmatpush1.xpose.msra.mxu0 0.0
    %5458 = vmatprep.subr.mxu0 0.0
    %5459 = vmatpush1.xpose.msra.mxu0 0.0
    %5460 = vmatprep.subr.mxu0 0.0
    %5461 = vmatpush1.xpose.msra.mxu0 0.0
    %5462 = vmatprep.subr.mxu0 0.0
    %5463 = vmatpush1.xpose.msra.mxu0 0.0
    %5464 = vmatprep.subr.mxu0 0.0
    %5465 = vmatpush1.xpose.msra.mxu0 0.0
    %5466 = vmatprep.subr.mxu0 0.0
    %5467 = vmatpush1.xpose.msra.mxu0 0.0
    %5468 = vmatprep.mubr.f32.mxu0 0.0
    %5469 = vmatmul.mubr.f32.gmra.mrb[0].mxu0 %v5399
    %v5470 = vpop.f32.mrb[0].mxu0
    %v5471 = vadd.f32 0.0, %v5470
    %v5472 = vpop.f32.mrb[0].mxu0
    %5473 = vdwg.mxu0
    %v5475 = vsel %vm3725, %v3516, 0
    %v5478 = vsel %vm3725, %v3716, 0
    %5480 = vmatprep.subr.mxu0 0.0
    %5481 = vmatpush1.xpose.msra.mxu0 %v5478
    %5482 = vmatprep.subr.mxu0 0.0
    %5483 = vmatpush1.xpose.msra.mxu0 0.0
    %5484 = vmatprep.subr.mxu0 0.0
    %5485 = vmatpush1.xpose.msra.mxu0 0.0
    %5486 = vmatprep.subr.mxu0 0.0
    %5487 = vmatpush1.xpose.msra.mxu0 0.0
    %5488 = vmatprep.subr.mxu0 0.0
    %5489 = vmatpush1.xpose.msra.mxu0 0.0
    %5490 = vmatprep.subr.mxu0 0.0
    %5491 = vmatpush1.xpose.msra.mxu0 0.0
    %5492 = vmatprep.subr.mxu0 0.0
    %5493 = vmatpush1.xpose.msra.mxu0 0.0
    %5494 = vmatprep.subr.mxu0 0.0
    %5495 = vmatpush1.xpose.msra.mxu0 0.0
    %5496 = vmatprep.subr.mxu0 0.0
    %5497 = vmatpush1.xpose.msra.mxu0 0.0
    %5498 = vmatprep.subr.mxu0 0.0
    %5499 = vmatpush1.xpose.msra.mxu0 0.0
    %5500 = vmatprep.subr.mxu0 0.0
    %5501 = vmatpush1.xpose.msra.mxu0 0.0
    %5502 = vmatprep.subr.mxu0 0.0
    %5503 = vmatpush1.xpose.msra.mxu0 0.0
    %5504 = vmatprep.subr.mxu0 0.0
    %5505 = vmatpush1.xpose.msra.mxu0 0.0
    %5506 = vmatprep.subr.mxu0 0.0
    %5507 = vmatpush1.xpose.msra.mxu0 0.0
    %5508 = vmatprep.subr.mxu0 0.0
    %5509 = vmatpush1.xpose.msra.mxu0 0.0
    %5510 = vmatprep.subr.mxu0 0.0
    %5511 = vmatpush1.xpose.msra.mxu0 0.0
    %5512 = vmatprep.subr.mxu0 0.0
    %5513 = vmatpush1.xpose.msra.mxu0 0.0
    %5514 = vmatprep.subr.mxu0 0.0
    %5515 = vmatpush1.xpose.msra.mxu0 0.0
    %5516 = vmatprep.subr.mxu0 0.0
    %5517 = vmatpush1.xpose.msra.mxu0 0.0
    %5518 = vmatprep.subr.mxu0 0.0
    %5519 = vmatpush1.xpose.msra.mxu0 0.0
    %5520 = vmatprep.subr.mxu0 0.0
    %5521 = vmatpush1.xpose.msra.mxu0 0.0
    %5522 = vmatprep.subr.mxu0 0.0
    %5523 = vmatpush1.xpose.msra.mxu0 0.0
    %5524 = vmatprep.subr.mxu0 0.0
    %5525 = vmatpush1.xpose.msra.mxu0 0.0
    %5526 = vmatprep.subr.mxu0 0.0
    %5527 = vmatpush1.xpose.msra.mxu0 0.0
    %5528 = vmatprep.subr.mxu0 0.0
    %5529 = vmatpush1.xpose.msra.mxu0 0.0
    %5530 = vmatprep.subr.mxu0 0.0
    %5531 = vmatpush1.xpose.msra.mxu0 0.0
    %5532 = vmatprep.subr.mxu0 0.0
    %5533 = vmatpush1.xpose.msra.mxu0 0.0
    %5534 = vmatprep.subr.mxu0 0.0
    %5535 = vmatpush1.xpose.msra.mxu0 0.0
    %5536 = vmatprep.subr.mxu0 0.0
    %5537 = vmatpush1.xpose.msra.mxu0 0.0
    %5538 = vmatprep.subr.mxu0 0.0
    %5539 = vmatpush1.xpose.msra.mxu0 0.0
    %5540 = vmatprep.subr.mxu0 0.0
    %5541 = vmatpush1.xpose.msra.mxu0 0.0
    %5542 = vmatprep.subr.mxu0 0.0
    %5543 = vmatpush1.xpose.msra.mxu0 0.0
    %5544 = vmatprep.mubr.f32.mxu0 0.0
    %5545 = vmatmul.mubr.f32.gmra.mrb[0].mxu0 %v5475
    %v5546 = vpop.f32.mrb[0].mxu0
    %v5547 = vadd.f32 0.0, %v5546
    %v5548 = vpop.f32.mrb[0].mxu0
    %5549 = vdwg.mxu0
    %v5551 = vsel %vm3725, %v3517, 0
    %v5554 = vsel %vm3725, %v3717, 0
    %5556 = vmatprep.subr.mxu0 0.0
    %5557 = vmatpush1.xpose.msra.mxu0 %v5554
    %5558 = vmatprep.subr.mxu0 0.0
    %5559 = vmatpush1.xpose.msra.mxu0 0.0
    %5560 = vmatprep.subr.mxu0 0.0
    %5561 = vmatpush1.xpose.msra.mxu0 0.0
    %5562 = vmatprep.subr.mxu0 0.0
    %5563 = vmatpush1.xpose.msra.mxu0 0.0
    %5564 = vmatprep.subr.mxu0 0.0
    %5565 = vmatpush1.xpose.msra.mxu0 0.0
    %5566 = vmatprep.subr.mxu0 0.0
    %5567 = vmatpush1.xpose.msra.mxu0 0.0
    %5568 = vmatprep.subr.mxu0 0.0
    %5569 = vmatpush1.xpose.msra.mxu0 0.0
    %5570 = vmatprep.subr.mxu0 0.0
    %5571 = vmatpush1.xpose.msra.mxu0 0.0
    %5572 = vmatprep.subr.mxu0 0.0
    %5573 = vmatpush1.xpose.msra.mxu0 0.0
    %5574 = vmatprep.subr.mxu0 0.0
    %5575 = vmatpush1.xpose.msra.mxu0 0.0
    %5576 = vmatprep.subr.mxu0 0.0
    %5577 = vmatpush1.xpose.msra.mxu0 0.0
    %5578 = vmatprep.subr.mxu0 0.0
    %5579 = vmatpush1.xpose.msra.mxu0 0.0
    %5580 = vmatprep.subr.mxu0 0.0
    %5581 = vmatpush1.xpose.msra.mxu0 0.0
    %5582 = vmatprep.subr.mxu0 0.0
    %5583 = vmatpush1.xpose.msra.mxu0 0.0
    %5584 = vmatprep.subr.mxu0 0.0
    %5585 = vmatpush1.xpose.msra.mxu0 0.0
    %5586 = vmatprep.subr.mxu0 0.0
    %5587 = vmatpush1.xpose.msra.mxu0 0.0
    %5588 = vmatprep.subr.mxu0 0.0
    %5589 = vmatpush1.xpose.msra.mxu0 0.0
    %5590 = vmatprep.subr.mxu0 0.0
    %5591 = vmatpush1.xpose.msra.mxu0 0.0
    %5592 = vmatprep.subr.mxu0 0.0
    %5593 = vmatpush1.xpose.msra.mxu0 0.0
    %5594 = vmatprep.subr.mxu0 0.0
    %5595 = vmatpush1.xpose.msra.mxu0 0.0
    %5596 = vmatprep.subr.mxu0 0.0
    %5597 = vmatpush1.xpose.msra.mxu0 0.0
    %5598 = vmatprep.subr.mxu0 0.0
    %5599 = vmatpush1.xpose.msra.mxu0 0.0
    %5600 = vmatprep.subr.mxu0 0.0
    %5601 = vmatpush1.xpose.msra.mxu0 0.0
    %5602 = vmatprep.subr.mxu0 0.0
    %5603 = vmatpush1.xpose.msra.mxu0 0.0
    %5604 = vmatprep.subr.mxu0 0.0
    %5605 = vmatpush1.xpose.msra.mxu0 0.0
    %5606 = vmatprep.subr.mxu0 0.0
    %5607 = vmatpush1.xpose.msra.mxu0 0.0
    %5608 = vmatprep.subr.mxu0 0.0
    %5609 = vmatpush1.xpose.msra.mxu0 0.0
    %5610 = vmatprep.subr.mxu0 0.0
    %5611 = vmatpush1.xpose.msra.mxu0 0.0
    %5612 = vmatprep.subr.mxu0 0.0
    %5613 = vmatpush1.xpose.msra.mxu0 0.0
    %5614 = vmatprep.subr.mxu0 0.0
    %5615 = vmatpush1.xpose.msra.mxu0 0.0
    %5616 = vmatprep.subr.mxu0 0.0
    %5617 = vmatpush1.xpose.msra.mxu0 0.0
    %5618 = vmatprep.subr.mxu0 0.0
    %5619 = vmatpush1.xpose.msra.mxu0 0.0
    %5620 = vmatprep.mubr.f32.mxu0 0.0
    %5621 = vmatmul.mubr.f32.gmra.mrb[0].mxu0 %v5551
    %v5622 = vpop.f32.mrb[0].mxu0
    %v5623 = vadd.f32 0.0, %v5622
    %v5624 = vpop.f32.mrb[0].mxu0
    %5625 = vdwg.mxu0
    %v5627 = vsel %vm3725, %v3518, 0
    %v5630 = vsel %vm3725, %v3718, 0
    %5632 = vmatprep.subr.mxu0 0.0
    %5633 = vmatpush1.xpose.msra.mxu0 %v5630
    %5634 = vmatprep.subr.mxu0 0.0
    %5635 = vmatpush1.xpose.msra.mxu0 0.0
    %5636 = vmatprep.subr.mxu0 0.0
    %5637 = vmatpush1.xpose.msra.mxu0 0.0
    %5638 = vmatprep.subr.mxu0 0.0
    %5639 = vmatpush1.xpose.msra.mxu0 0.0
    %5640 = vmatprep.subr.mxu0 0.0
    %5641 = vmatpush1.xpose.msra.mxu0 0.0
    %5642 = vmatprep.subr.mxu0 0.0
    %5643 = vmatpush1.xpose.msra.mxu0 0.0
    %5644 = vmatprep.subr.mxu0 0.0
    %5645 = vmatpush1.xpose.msra.mxu0 0.0
    %5646 = vmatprep.subr.mxu0 0.0
    %5647 = vmatpush1.xpose.msra.mxu0 0.0
    %5648 = vmatprep.subr.mxu0 0.0
    %5649 = vmatpush1.xpose.msra.mxu0 0.0
    %5650 = vmatprep.subr.mxu0 0.0
    %5651 = vmatpush1.xpose.msra.mxu0 0.0
    %5652 = vmatprep.subr.mxu0 0.0
    %5653 = vmatpush1.xpose.msra.mxu0 0.0
    %5654 = vmatprep.subr.mxu0 0.0
    %5655 = vmatpush1.xpose.msra.mxu0 0.0
    %5656 = vmatprep.subr.mxu0 0.0
    %5657 = vmatpush1.xpose.msra.mxu0 0.0
    %5658 = vmatprep.subr.mxu0 0.0
    %5659 = vmatpush1.xpose.msra.mxu0 0.0
    %5660 = vmatprep.subr.mxu0 0.0
    %5661 = vmatpush1.xpose.msra.mxu0 0.0
    %5662 = vmatprep.subr.mxu0 0.0
    %5663 = vmatpush1.xpose.msra.mxu0 0.0
    %5664 = vmatprep.subr.mxu0 0.0
    %5665 = vmatpush1.xpose.msra.mxu0 0.0
    %5666 = vmatprep.subr.mxu0 0.0
    %5667 = vmatpush1.xpose.msra.mxu0 0.0
    %5668 = vmatprep.subr.mxu0 0.0
    %5669 = vmatpush1.xpose.msra.mxu0 0.0
    %5670 = vmatprep.subr.mxu0 0.0
    %5671 = vmatpush1.xpose.msra.mxu0 0.0
    %5672 = vmatprep.subr.mxu0 0.0
    %5673 = vmatpush1.xpose.msra.mxu0 0.0
    %5674 = vmatprep.subr.mxu0 0.0
    %5675 = vmatpush1.xpose.msra.mxu0 0.0
    %5676 = vmatprep.subr.mxu0 0.0
    %5677 = vmatpush1.xpose.msra.mxu0 0.0
    %5678 = vmatprep.subr.mxu0 0.0
    %5679 = vmatpush1.xpose.msra.mxu0 0.0
    %5680 = vmatprep.subr.mxu0 0.0
    %5681 = vmatpush1.xpose.msra.mxu0 0.0
    %5682 = vmatprep.subr.mxu0 0.0
    %5683 = vmatpush1.xpose.msra.mxu0 0.0
    %5684 = vmatprep.subr.mxu0 0.0
    %5685 = vmatpush1.xpose.msra.mxu0 0.0
    %5686 = vmatprep.subr.mxu0 0.0
    %5687 = vmatpush1.xpose.msra.mxu0 0.0
    %5688 = vmatprep.subr.mxu0 0.0
    %5689 = vmatpush1.xpose.msra.mxu0 0.0
    %5690 = vmatprep.subr.mxu0 0.0
    %5691 = vmatpush1.xpose.msra.mxu0 0.0
    %5692 = vmatprep.subr.mxu0 0.0
    %5693 = vmatpush1.xpose.msra.mxu0 0.0
    %5694 = vmatprep.subr.mxu0 0.0
    %5695 = vmatpush1.xpose.msra.mxu0 0.0
    %5696 = vmatprep.mubr.f32.mxu0 0.0
    %5697 = vmatmul.mubr.f32.gmra.mrb[0].mxu0 %v5627
    %v5698 = vpop.f32.mrb[0].mxu0
    %v5699 = vadd.f32 0.0, %v5698
    %v5700 = vpop.f32.mrb[0].mxu0
    %5701 = vdwg.mxu0
    %v5703 = vsel %vm3725, %v3519, 0
    %v5706 = vsel %vm3725, %v3719, 0
    %5708 = vmatprep.subr.mxu0 0.0
    %5709 = vmatpush1.xpose.msra.mxu0 %v5706
    %5710 = vmatprep.subr.mxu0 0.0
    %5711 = vmatpush1.xpose.msra.mxu0 0.0
    %5712 = vmatprep.subr.mxu0 0.0
    %5713 = vmatpush1.xpose.msra.mxu0 0.0
    %5714 = vmatprep.subr.mxu0 0.0
    %5715 = vmatpush1.xpose.msra.mxu0 0.0
    %5716 = vmatprep.subr.mxu0 0.0
    %5717 = vmatpush1.xpose.msra.mxu0 0.0
    %5718 = vmatprep.subr.mxu0 0.0
    %5719 = vmatpush1.xpose.msra.mxu0 0.0
    %5720 = vmatprep.subr.mxu0 0.0
    %5721 = vmatpush1.xpose.msra.mxu0 0.0
    %5722 = vmatprep.subr.mxu0 0.0
    %5723 = vmatpush1.xpose.msra.mxu0 0.0
    %5724 = vmatprep.subr.mxu0 0.0
    %5725 = vmatpush1.xpose.msra.mxu0 0.0
    %5726 = vmatprep.subr.mxu0 0.0
    %5727 = vmatpush1.xpose.msra.mxu0 0.0
    %5728 = vmatprep.subr.mxu0 0.0
    %5729 = vmatpush1.xpose.msra.mxu0 0.0
    %5730 = vmatprep.subr.mxu0 0.0
    %5731 = vmatpush1.xpose.msra.mxu0 0.0
    %5732 = vmatprep.subr.mxu0 0.0
    %5733 = vmatpush1.xpose.msra.mxu0 0.0
    %5734 = vmatprep.subr.mxu0 0.0
    %5735 = vmatpush1.xpose.msra.mxu0 0.0
    %5736 = vmatprep.subr.mxu0 0.0
    %5737 = vmatpush1.xpose.msra.mxu0 0.0
    %5738 = vmatprep.subr.mxu0 0.0
    %5739 = vmatpush1.xpose.msra.mxu0 0.0
    %5740 = vmatprep.subr.mxu0 0.0
    %5741 = vmatpush1.xpose.msra.mxu0 0.0
    %5742 = vmatprep.subr.mxu0 0.0
    %5743 = vmatpush1.xpose.msra.mxu0 0.0
    %5744 = vmatprep.subr.mxu0 0.0
    %5745 = vmatpush1.xpose.msra.mxu0 0.0
    %5746 = vmatprep.subr.mxu0 0.0
    %5747 = vmatpush1.xpose.msra.mxu0 0.0
    %5748 = vmatprep.subr.mxu0 0.0
    %5749 = vmatpush1.xpose.msra.mxu0 0.0
    %5750 = vmatprep.subr.mxu0 0.0
    %5751 = vmatpush1.xpose.msra.mxu0 0.0
    %5752 = vmatprep.subr.mxu0 0.0
    %5753 = vmatpush1.xpose.msra.mxu0 0.0
    %5754 = vmatprep.subr.mxu0 0.0
    %5755 = vmatpush1.xpose.msra.mxu0 0.0
    %5756 = vmatprep.subr.mxu0 0.0
    %5757 = vmatpush1.xpose.msra.mxu0 0.0
    %5758 = vmatprep.subr.mxu0 0.0
    %5759 = vmatpush1.xpose.msra.mxu0 0.0
    %5760 = vmatprep.subr.mxu0 0.0
    %5761 = vmatpush1.xpose.msra.mxu0 0.0
    %5762 = vmatprep.subr.mxu0 0.0
    %5763 = vmatpush1.xpose.msra.mxu0 0.0
    %5764 = vmatprep.subr.mxu0 0.0
    %5765 = vmatpush1.xpose.msra.mxu0 0.0
    %5766 = vmatprep.subr.mxu0 0.0
    %5767 = vmatpush1.xpose.msra.mxu0 0.0
    %5768 = vmatprep.subr.mxu0 0.0
    %5769 = vmatpush1.xpose.msra.mxu0 0.0
    %5770 = vmatprep.subr.mxu0 0.0
    %5771 = vmatpush1.xpose.msra.mxu0 0.0
    %5772 = vmatprep.mubr.f32.mxu0 0.0
    %5773 = vmatmul.mubr.f32.gmra.mrb[0].mxu0 %v5703
    %v5774 = vpop.f32.mrb[0].mxu0
    %v5775 = vadd.f32 0.0, %v5774
    %v5776 = vpop.f32.mrb[0].mxu0
    %5777 = vdwg.mxu0
    %v5779 = vsel %vm3725, %v3520, 0
    %v5782 = vsel %vm3725, %v3720, 0
    %5784 = vmatprep.subr.mxu0 0.0
    %5785 = vmatpush1.xpose.msra.mxu0 %v5782
    %5786 = vmatprep.subr.mxu0 0.0
    %5787 = vmatpush1.xpose.msra.mxu0 0.0
    %5788 = vmatprep.subr.mxu0 0.0
    %5789 = vmatpush1.xpose.msra.mxu0 0.0
    %5790 = vmatprep.subr.mxu0 0.0
    %5791 = vmatpush1.xpose.msra.mxu0 0.0
    %5792 = vmatprep.subr.mxu0 0.0
    %5793 = vmatpush1.xpose.msra.mxu0 0.0
    %5794 = vmatprep.subr.mxu0 0.0
    %5795 = vmatpush1.xpose.msra.mxu0 0.0
    %5796 = vmatprep.subr.mxu0 0.0
    %5797 = vmatpush1.xpose.msra.mxu0 0.0
    %5798 = vmatprep.subr.mxu0 0.0
    %5799 = vmatpush1.xpose.msra.mxu0 0.0
    %5800 = vmatprep.subr.mxu0 0.0
    %5801 = vmatpush1.xpose.msra.mxu0 0.0
    %5802 = vmatprep.subr.mxu0 0.0
    %5803 = vmatpush1.xpose.msra.mxu0 0.0
    %5804 = vmatprep.subr.mxu0 0.0
    %5805 = vmatpush1.xpose.msra.mxu0 0.0
    %5806 = vmatprep.subr.mxu0 0.0
    %5807 = vmatpush1.xpose.msra.mxu0 0.0
    %5808 = vmatprep.subr.mxu0 0.0
    %5809 = vmatpush1.xpose.msra.mxu0 0.0
    %5810 = vmatprep.subr.mxu0 0.0
    %5811 = vmatpush1.xpose.msra.mxu0 0.0
    %5812 = vmatprep.subr.mxu0 0.0
    %5813 = vmatpush1.xpose.msra.mxu0 0.0
    %5814 = vmatprep.subr.mxu0 0.0
    %5815 = vmatpush1.xpose.msra.mxu0 0.0
    %5816 = vmatprep.subr.mxu0 0.0
    %5817 = vmatpush1.xpose.msra.mxu0 0.0
    %5818 = vmatprep.subr.mxu0 0.0
    %5819 = vmatpush1.xpose.msra.mxu0 0.0
    %5820 = vmatprep.subr.mxu0 0.0
    %5821 = vmatpush1.xpose.msra.mxu0 0.0
    %5822 = vmatprep.subr.mxu0 0.0
    %5823 = vmatpush1.xpose.msra.mxu0 0.0
    %5824 = vmatprep.subr.mxu0 0.0
    %5825 = vmatpush1.xpose.msra.mxu0 0.0
    %5826 = vmatprep.subr.mxu0 0.0
    %5827 = vmatpush1.xpose.msra.mxu0 0.0
    %5828 = vmatprep.subr.mxu0 0.0
    %5829 = vmatpush1.xpose.msra.mxu0 0.0
    %5830 = vmatprep.subr.mxu0 0.0
    %5831 = vmatpush1.xpose.msra.mxu0 0.0
    %5832 = vmatprep.subr.mxu0 0.0
    %5833 = vmatpush1.xpose.msra.mxu0 0.0
    %5834 = vmatprep.subr.mxu0 0.0
    %5835 = vmatpush1.xpose.msra.mxu0 0.0
    %5836 = vmatprep.subr.mxu0 0.0
    %5837 = vmatpush1.xpose.msra.mxu0 0.0
    %5838 = vmatprep.subr.mxu0 0.0
    %5839 = vmatpush1.xpose.msra.mxu0 0.0
    %5840 = vmatprep.subr.mxu0 0.0
    %5841 = vmatpush1.xpose.msra.mxu0 0.0
    %5842 = vmatprep.subr.mxu0 0.0
    %5843 = vmatpush1.xpose.msra.mxu0 0.0
    %5844 = vmatprep.subr.mxu0 0.0
    %5845 = vmatpush1.xpose.msra.mxu0 0.0
    %5846 = vmatprep.subr.mxu0 0.0
    %5847 = vmatpush1.xpose.msra.mxu0 0.0
    %5848 = vmatprep.mubr.f32.mxu0 0.0
    %5849 = vmatmul.mubr.f32.gmra.mrb[0].mxu0 %v5779
    %v5850 = vpop.f32.mrb[0].mxu0
    %v5851 = vadd.f32 0.0, %v5850
    %v5852 = vpop.f32.mrb[0].mxu0
    %5853 = vdwg.mxu0
    %v5855 = vsel %vm3725, %v3521, 0
    %v5858 = vsel %vm3725, %v3721, 0
    %5860 = vmatprep.subr.mxu0 0.0
    %5861 = vmatpush1.xpose.msra.mxu0 %v5858
    %5862 = vmatprep.subr.mxu0 0.0
    %5863 = vmatpush1.xpose.msra.mxu0 0.0
    %5864 = vmatprep.subr.mxu0 0.0
    %5865 = vmatpush1.xpose.msra.mxu0 0.0
    %5866 = vmatprep.subr.mxu0 0.0
    %5867 = vmatpush1.xpose.msra.mxu0 0.0
    %5868 = vmatprep.subr.mxu0 0.0
    %5869 = vmatpush1.xpose.msra.mxu0 0.0
    %5870 = vmatprep.subr.mxu0 0.0
    %5871 = vmatpush1.xpose.msra.mxu0 0.0
    %5872 = vmatprep.subr.mxu0 0.0
    %5873 = vmatpush1.xpose.msra.mxu0 0.0
    %5874 = vmatprep.subr.mxu0 0.0
    %5875 = vmatpush1.xpose.msra.mxu0 0.0
    %5876 = vmatprep.subr.mxu0 0.0
    %5877 = vmatpush1.xpose.msra.mxu0 0.0
    %5878 = vmatprep.subr.mxu0 0.0
    %5879 = vmatpush1.xpose.msra.mxu0 0.0
    %5880 = vmatprep.subr.mxu0 0.0
    %5881 = vmatpush1.xpose.msra.mxu0 0.0
    %5882 = vmatprep.subr.mxu0 0.0
    %5883 = vmatpush1.xpose.msra.mxu0 0.0
    %5884 = vmatprep.subr.mxu0 0.0
    %5885 = vmatpush1.xpose.msra.mxu0 0.0
    %5886 = vmatprep.subr.mxu0 0.0
    %5887 = vmatpush1.xpose.msra.mxu0 0.0
    %5888 = vmatprep.subr.mxu0 0.0
    %5889 = vmatpush1.xpose.msra.mxu0 0.0
    %5890 = vmatprep.subr.mxu0 0.0
    %5891 = vmatpush1.xpose.msra.mxu0 0.0
    %5892 = vmatprep.subr.mxu0 0.0
    %5893 = vmatpush1.xpose.msra.mxu0 0.0
    %5894 = vmatprep.subr.mxu0 0.0
    %5895 = vmatpush1.xpose.msra.mxu0 0.0
    %5896 = vmatprep.subr.mxu0 0.0
    %5897 = vmatpush1.xpose.msra.mxu0 0.0
    %5898 = vmatprep.subr.mxu0 0.0
    %5899 = vmatpush1.xpose.msra.mxu0 0.0
    %5900 = vmatprep.subr.mxu0 0.0
    %5901 = vmatpush1.xpose.msra.mxu0 0.0
    %5902 = vmatprep.subr.mxu0 0.0
    %5903 = vmatpush1.xpose.msra.mxu0 0.0
    %5904 = vmatprep.subr.mxu0 0.0
    %5905 = vmatpush1.xpose.msra.mxu0 0.0
    %5906 = vmatprep.subr.mxu0 0.0
    %5907 = vmatpush1.xpose.msra.mxu0 0.0
    %5908 = vmatprep.subr.mxu0 0.0
    %5909 = vmatpush1.xpose.msra.mxu0 0.0
    %5910 = vmatprep.subr.mxu0 0.0
    %5911 = vmatpush1.xpose.msra.mxu0 0.0
    %5912 = vmatprep.subr.mxu0 0.0
    %5913 = vmatpush1.xpose.msra.mxu0 0.0
    %5914 = vmatprep.subr.mxu0 0.0
    %5915 = vmatpush1.xpose.msra.mxu0 0.0
    %5916 = vmatprep.subr.mxu0 0.0
    %5917 = vmatpush1.xpose.msra.mxu0 0.0
    %5918 = vmatprep.subr.mxu0 0.0
    %5919 = vmatpush1.xpose.msra.mxu0 0.0
    %5920 = vmatprep.subr.mxu0 0.0
    %5921 = vmatpush1.xpose.msra.mxu0 0.0
    %5922 = vmatprep.subr.mxu0 0.0
    %5923 = vmatpush1.xpose.msra.mxu0 0.0
    %5924 = vmatprep.mubr.f32.mxu0 0.0
    %5925 = vmatmul.mubr.f32.gmra.mrb[0].mxu0 %v5855
    %v5926 = vpop.f32.mrb[0].mxu0
    %v5927 = vadd.f32 0.0, %v5926
    %v5928 = vpop.f32.mrb[0].mxu0
    %5929 = vdwg.mxu0
    %v5931 = vsel %vm3725, %v3522, 0
    %v5934 = vsel %vm3725, %v3722, 0
    %5936 = vmatprep.subr.mxu0 0.0
    %5937 = vmatpush1.xpose.msra.mxu0 %v5934
    %5938 = vmatprep.subr.mxu0 0.0
    %5939 = vmatpush1.xpose.msra.mxu0 0.0
    %5940 = vmatprep.subr.mxu0 0.0
    %5941 = vmatpush1.xpose.msra.mxu0 0.0
    %5942 = vmatprep.subr.mxu0 0.0
    %5943 = vmatpush1.xpose.msra.mxu0 0.0
    %5944 = vmatprep.subr.mxu0 0.0
    %5945 = vmatpush1.xpose.msra.mxu0 0.0
    %5946 = vmatprep.subr.mxu0 0.0
    %5947 = vmatpush1.xpose.msra.mxu0 0.0
    %5948 = vmatprep.subr.mxu0 0.0
    %5949 = vmatpush1.xpose.msra.mxu0 0.0
    %5950 = vmatprep.subr.mxu0 0.0
    %5951 = vmatpush1.xpose.msra.mxu0 0.0
    %5952 = vmatprep.subr.mxu0 0.0
    %5953 = vmatpush1.xpose.msra.mxu0 0.0
    %5954 = vmatprep.subr.mxu0 0.0
    %5955 = vmatpush1.xpose.msra.mxu0 0.0
    %5956 = vmatprep.subr.mxu0 0.0
    %5957 = vmatpush1.xpose.msra.mxu0 0.0
    %5958 = vmatprep.subr.mxu0 0.0
    %5959 = vmatpush1.xpose.msra.mxu0 0.0
    %5960 = vmatprep.subr.mxu0 0.0
    %5961 = vmatpush1.xpose.msra.mxu0 0.0
    %5962 = vmatprep.subr.mxu0 0.0
    %5963 = vmatpush1.xpose.msra.mxu0 0.0
    %5964 = vmatprep.subr.mxu0 0.0
    %5965 = vmatpush1.xpose.msra.mxu0 0.0
    %5966 = vmatprep.subr.mxu0 0.0
    %5967 = vmatpush1.xpose.msra.mxu0 0.0
    %5968 = vmatprep.subr.mxu0 0.0
    %5969 = vmatpush1.xpose.msra.mxu0 0.0
    %5970 = vmatprep.subr.mxu0 0.0
    %5971 = vmatpush1.xpose.msra.mxu0 0.0
    %5972 = vmatprep.subr.mxu0 0.0
    %5973 = vmatpush1.xpose.msra.mxu0 0.0
    %5974 = vmatprep.subr.mxu0 0.0
    %5975 = vmatpush1.xpose.msra.mxu0 0.0
    %5976 = vmatprep.subr.mxu0 0.0
    %5977 = vmatpush1.xpose.msra.mxu0 0.0
    %5978 = vmatprep.subr.mxu0 0.0
    %5979 = vmatpush1.xpose.msra.mxu0 0.0
    %5980 = vmatprep.subr.mxu0 0.0
    %5981 = vmatpush1.xpose.msra.mxu0 0.0
    %5982 = vmatprep.subr.mxu0 0.0
    %5983 = vmatpush1.xpose.msra.mxu0 0.0
    %5984 = vmatprep.subr.mxu0 0.0
    %5985 = vmatpush1.xpose.msra.mxu0 0.0
    %5986 = vmatprep.subr.mxu0 0.0
    %5987 = vmatpush1.xpose.msra.mxu0 0.0
    %5988 = vmatprep.subr.mxu0 0.0
    %5989 = vmatpush1.xpose.msra.mxu0 0.0
    %5990 = vmatprep.subr.mxu0 0.0
    %5991 = vmatpush1.xpose.msra.mxu0 0.0
    %5992 = vmatprep.subr.mxu0 0.0
    %5993 = vmatpush1.xpose.msra.mxu0 0.0
    %5994 = vmatprep.subr.mxu0 0.0
    %5995 = vmatpush1.xpose.msra.mxu0 0.0
    %5996 = vmatprep.subr.mxu0 0.0
    %5997 = vmatpush1.xpose.msra.mxu0 0.0
    %5998 = vmatprep.subr.mxu0 0.0
    %5999 = vmatpush1.xpose.msra.mxu0 0.0
    %6000 = vmatprep.mubr.f32.mxu0 0.0
    %6001 = vmatmul.mubr.f32.gmra.mrb[0].mxu0 %v5931
    %v6002 = vpop.f32.mrb[0].mxu0
    %v6003 = vadd.f32 0.0, %v6002
    %v6004 = vpop.f32.mrb[0].mxu0
    %6005 = vdwg.mxu0
    %v6007 = vsel %vm3725, %v3523, 0
    %v6010 = vsel %vm3725, %v3723, 0
    %6012 = vmatprep.subr.mxu0 0.0
    %6013 = vmatpush1.xpose.msra.mxu0 %v6010
    %6014 = vmatprep.subr.mxu0 0.0
    %6015 = vmatpush1.xpose.msra.mxu0 0.0
    %6016 = vmatprep.subr.mxu0 0.0
    %6017 = vmatpush1.xpose.msra.mxu0 0.0
    %6018 = vmatprep.subr.mxu0 0.0
    %6019 = vmatpush1.xpose.msra.mxu0 0.0
    %6020 = vmatprep.subr.mxu0 0.0
    %6021 = vmatpush1.xpose.msra.mxu0 0.0
    %6022 = vmatprep.subr.mxu0 0.0
    %6023 = vmatpush1.xpose.msra.mxu0 0.0
    %6024 = vmatprep.subr.mxu0 0.0
    %6025 = vmatpush1.xpose.msra.mxu0 0.0
    %6026 = vmatprep.subr.mxu0 0.0
    %6027 = vmatpush1.xpose.msra.mxu0 0.0
    %6028 = vmatprep.subr.mxu0 0.0
    %6029 = vmatpush1.xpose.msra.mxu0 0.0
    %6030 = vmatprep.subr.mxu0 0.0
    %6031 = vmatpush1.xpose.msra.mxu0 0.0
    %6032 = vmatprep.subr.mxu0 0.0
    %6033 = vmatpush1.xpose.msra.mxu0 0.0
    %6034 = vmatprep.subr.mxu0 0.0
    %6035 = vmatpush1.xpose.msra.mxu0 0.0
    %6036 = vmatprep.subr.mxu0 0.0
    %6037 = vmatpush1.xpose.msra.mxu0 0.0
    %6038 = vmatprep.subr.mxu0 0.0
    %6039 = vmatpush1.xpose.msra.mxu0 0.0
    %6040 = vmatprep.subr.mxu0 0.0
    %6041 = vmatpush1.xpose.msra.mxu0 0.0
    %6042 = vmatprep.subr.mxu0 0.0
    %6043 = vmatpush1.xpose.msra.mxu0 0.0
    %6044 = vmatprep.subr.mxu0 0.0
    %6045 = vmatpush1.xpose.msra.mxu0 0.0
    %6046 = vmatprep.subr.mxu0 0.0
    %6047 = vmatpush1.xpose.msra.mxu0 0.0
    %6048 = vmatprep.subr.mxu0 0.0
    %6049 = vmatpush1.xpose.msra.mxu0 0.0
    %6050 = vmatprep.subr.mxu0 0.0
    %6051 = vmatpush1.xpose.msra.mxu0 0.0
    %6052 = vmatprep.subr.mxu0 0.0
    %6053 = vmatpush1.xpose.msra.mxu0 0.0
    %6054 = vmatprep.subr.mxu0 0.0
    %6055 = vmatpush1.xpose.msra.mxu0 0.0
    %6056 = vmatprep.subr.mxu0 0.0
    %6057 = vmatpush1.xpose.msra.mxu0 0.0
    %6058 = vmatprep.subr.mxu0 0.0
    %6059 = vmatpush1.xpose.msra.mxu0 0.0
    %6060 = vmatprep.subr.mxu0 0.0
    %6061 = vmatpush1.xpose.msra.mxu0 0.0
    %6062 = vmatprep.subr.mxu0 0.0
    %6063 = vmatpush1.xpose.msra.mxu0 0.0
    %6064 = vmatprep.subr.mxu0 0.0
    %6065 = vmatpush1.xpose.msra.mxu0 0.0
    %6066 = vmatprep.subr.mxu0 0.0
    %6067 = vmatpush1.xpose.msra.mxu0 0.0
    %6068 = vmatprep.subr.mxu0 0.0
    %6069 = vmatpush1.xpose.msra.mxu0 0.0
    %6070 = vmatprep.subr.mxu0 0.0
    %6071 = vmatpush1.xpose.msra.mxu0 0.0
    %6072 = vmatprep.subr.mxu0 0.0
    %6073 = vmatpush1.xpose.msra.mxu0 0.0
    %6074 = vmatprep.subr.mxu0 0.0
    %6075 = vmatpush1.xpose.msra.mxu0 0.0
    %6076 = vmatprep.mubr.f32.mxu0 0.0
    %6077 = vmatmul.mubr.f32.gmra.mrb[0].mxu0 %v6007
    %v6078 = vpop.f32.mrb[0].mxu0
    %v6079 = vadd.f32 0.0, %v6078
    %v6080 = vpop.f32.mrb[0].mxu0
    %6081 = vdwg.mxu0
    %v6083 = vsel %vm3725, %v3524, 0
    %v6086 = vsel %vm3725, %v3724, 0
    %6088 = vmatprep.subr.mxu0 0.0
    %6089 = vmatpush1.xpose.msra.mxu0 %v6086
    %6090 = vmatprep.subr.mxu0 0.0
    %6091 = vmatpush1.xpose.msra.mxu0 0.0
    %6092 = vmatprep.subr.mxu0 0.0
    %6093 = vmatpush1.xpose.msra.mxu0 0.0
    %6094 = vmatprep.subr.mxu0 0.0
    %6095 = vmatpush1.xpose.msra.mxu0 0.0
    %6096 = vmatprep.subr.mxu0 0.0
    %6097 = vmatpush1.xpose.msra.mxu0 0.0
    %6098 = vmatprep.subr.mxu0 0.0
    %6099 = vmatpush1.xpose.msra.mxu0 0.0
    %6100 = vmatprep.subr.mxu0 0.0
    %6101 = vmatpush1.xpose.msra.mxu0 0.0
    %6102 = vmatprep.subr.mxu0 0.0
    %6103 = vmatpush1.xpose.msra.mxu0 0.0
    %6104 = vmatprep.subr.mxu0 0.0
    %6105 = vmatpush1.xpose.msra.mxu0 0.0
    %6106 = vmatprep.subr.mxu0 0.0
    %6107 = vmatpush1.xpose.msra.mxu0 0.0
    %6108 = vmatprep.subr.mxu0 0.0
    %6109 = vmatpush1.xpose.msra.mxu0 0.0
    %6110 = vmatprep.subr.mxu0 0.0
    %6111 = vmatpush1.xpose.msra.mxu0 0.0
    %6112 = vmatprep.subr.mxu0 0.0
    %6113 = vmatpush1.xpose.msra.mxu0 0.0
    %6114 = vmatprep.subr.mxu0 0.0
    %6115 = vmatpush1.xpose.msra.mxu0 0.0
    %6116 = vmatprep.subr.mxu0 0.0
    %6117 = vmatpush1.xpose.msra.mxu0 0.0
    %6118 = vmatprep.subr.mxu0 0.0
    %6119 = vmatpush1.xpose.msra.mxu0 0.0
    %6120 = vmatprep.subr.mxu0 0.0
    %6121 = vmatpush1.xpose.msra.mxu0 0.0
    %6122 = vmatprep.subr.mxu0 0.0
    %6123 = vmatpush1.xpose.msra.mxu0 0.0
    %6124 = vmatprep.subr.mxu0 0.0
    %6125 = vmatpush1.xpose.msra.mxu0 0.0
    %6126 = vmatprep.subr.mxu0 0.0
    %6127 = vmatpush1.xpose.msra.mxu0 0.0
    %6128 = vmatprep.subr.mxu0 0.0
    %6129 = vmatpush1.xpose.msra.mxu0 0.0
    %6130 = vmatprep.subr.mxu0 0.0
    %6131 = vmatpush1.xpose.msra.mxu0 0.0
    %6132 = vmatprep.subr.mxu0 0.0
    %6133 = vmatpush1.xpose.msra.mxu0 0.0
    %6134 = vmatprep.subr.mxu0 0.0
    %6135 = vmatpush1.xpose.msra.mxu0 0.0
    %6136 = vmatprep.subr.mxu0 0.0
    %6137 = vmatpush1.xpose.msra.mxu0 0.0
    %6138 = vmatprep.subr.mxu0 0.0
    %6139 = vmatpush1.xpose.msra.mxu0 0.0
    %6140 = vmatprep.subr.mxu0 0.0
    %6141 = vmatpush1.xpose.msra.mxu0 0.0
    %6142 = vmatprep.subr.mxu0 0.0
    %6143 = vmatpush1.xpose.msra.mxu0 0.0
    %6144 = vmatprep.subr.mxu0 0.0
    %6145 = vmatpush1.xpose.msra.mxu0 0.0
    %6146 = vmatprep.subr.mxu0 0.0
    %6147 = vmatpush1.xpose.msra.mxu0 0.0
    %6148 = vmatprep.subr.mxu0 0.0
    %6149 = vmatpush1.xpose.msra.mxu0 0.0
    %6150 = vmatprep.subr.mxu0 0.0
    %6151 = vmatpush1.xpose.msra.mxu0 0.0
    %6152 = vmatprep.mubr.f32.mxu0 0.0
    %6153 = vmatmul.mubr.f32.gmra.mrb[0].mxu0 %v6083
    %v6154 = vpop.f32.mrb[0].mxu0
    %v6155 = vadd.f32 0.0, %v6154
    %v6156 = vpop.f32.mrb[0].mxu0
    %6157 = vdwg.mxu0
    %v6158 = vmul.f32 %v3799, 0.125
    %v6159 = vmul.f32 %v3875, 0.125
    %v6160 = vmul.f32 %v3951, 0.125
    %v6161 = vmul.f32 %v4027, 0.125
    %v6162 = vmul.f32 %v4103, 0.125
    %v6163 = vmul.f32 %v4179, 0.125
    %v6164 = vmul.f32 %v4255, 0.125
    %v6165 = vmul.f32 %v4331, 0.125
    %v6166 = vmul.f32 %v4407, 0.125
    %v6167 = vmul.f32 %v4483, 0.125
    %v6168 = vmul.f32 %v4559, 0.125
    %v6169 = vmul.f32 %v4635, 0.125
    %v6170 = vmul.f32 %v4711, 0.125
    %v6171 = vmul.f32 %v4787, 0.125
    %v6172 = vmul.f32 %v4863, 0.125
    %v6173 = vmul.f32 %v4939, 0.125
    %v6174 = vmul.f32 %v5015, 0.125
    %v6175 = vmul.f32 %v5091, 0.125
    %v6176 = vmul.f32 %v5167, 0.125
    %v6177 = vmul.f32 %v5243, 0.125
    %v6178 = vmul.f32 %v5319, 0.125
    %v6179 = vmul.f32 %v5395, 0.125
    %v6180 = vmul.f32 %v5471, 0.125
    %v6181 = vmul.f32 %v5547, 0.125
    %v6182 = vmul.f32 %v5623, 0.125
    %v6183 = vmul.f32 %v5699, 0.125
    %v6184 = vmul.f32 %v5775, 0.125
    %v6185 = vmul.f32 %v5851, 0.125
    %v6186 = vmul.f32 %v5927, 0.125
    %v6187 = vmul.f32 %v6003, 0.125
    %v6188 = vmul.f32 %v6079, 0.125
    %v6189 = vmul.f32 %v6155, 0.125
    %vm6190 = vcmask 46080
    %v6191 = vsel %vm6190, %v6158, -inf
    %6192 = vmax.xlane.f32.xlu0 %v6191
    %v6193 = vpop.xlane.xlu0 %6192
    %v6194 = vsel %vm6190, %v6159, -inf
    %6195 = vmax.xlane.f32.xlu0 %v6194
    %v6196 = vpop.xlane.xlu0 %6195
    %v6197 = vsel %vm6190, %v6160, -inf
    %6198 = vmax.xlane.f32.xlu0 %v6197
    %v6199 = vpop.xlane.xlu0 %6198
    %v6200 = vsel %vm6190, %v6161, -inf
    %6201 = vmax.xlane.f32.xlu0 %v6200
    %v6202 = vpop.xlane.xlu0 %6201
    %v6203 = vsel %vm6190, %v6162, -inf
    %6204 = vmax.xlane.f32.xlu0 %v6203
    %v6205 = vpop.xlane.xlu0 %6204
    %v6206 = vsel %vm6190, %v6163, -inf
    %6207 = vmax.xlane.f32.xlu0 %v6206
    %v6208 = vpop.xlane.xlu0 %6207
    %v6209 = vsel %vm6190, %v6164, -inf
    %6210 = vmax.xlane.f32.xlu0 %v6209
    %v6211 = vpop.xlane.xlu0 %6210
    %v6212 = vsel %vm6190, %v6165, -inf
    %6213 = vmax.xlane.f32.xlu0 %v6212
    %v6214 = vpop.xlane.xlu0 %6213
    %v6215 = vsel %vm6190, %v6166, -inf
    %6216 = vmax.xlane.f32.xlu0 %v6215
    %v6217 = vpop.xlane.xlu0 %6216
    %v6218 = vsel %vm6190, %v6167, -inf
    %6219 = vmax.xlane.f32.xlu0 %v6218
    %v6220 = vpop.xlane.xlu0 %6219
    %v6221 = vsel %vm6190, %v6168, -inf
    %6222 = vmax.xlane.f32.xlu0 %v6221
    %v6223 = vpop.xlane.xlu0 %6222
    %v6224 = vsel %vm6190, %v6169, -inf
    %6225 = vmax.xlane.f32.xlu0 %v6224
    %v6226 = vpop.xlane.xlu0 %6225
    %v6227 = vsel %vm6190, %v6170, -inf
    %6228 = vmax.xlane.f32.xlu0 %v6227
    %v6229 = vpop.xlane.xlu0 %6228
    %v6230 = vsel %vm6190, %v6171, -inf
    %6231 = vmax.xlane.f32.xlu0 %v6230
    %v6232 = vpop.xlane.xlu0 %6231
    %v6233 = vsel %vm6190, %v6172, -inf
    %6234 = vmax.xlane.f32.xlu0 %v6233
    %v6235 = vpop.xlane.xlu0 %6234
    %v6236 = vsel %vm6190, %v6173, -inf
    %6237 = vmax.xlane.f32.xlu0 %v6236
    %v6238 = vpop.xlane.xlu0 %6237
    %v6239 = vsel %vm6190, %v6174, -inf
    %6240 = vmax.xlane.f32.xlu0 %v6239
    %v6241 = vpop.xlane.xlu0 %6240
    %v6242 = vsel %vm6190, %v6175, -inf
    %6243 = vmax.xlane.f32.xlu0 %v6242
    %v6244 = vpop.xlane.xlu0 %6243
    %v6245 = vsel %vm6190, %v6176, -inf
    %6246 = vmax.xlane.f32.xlu0 %v6245
    %v6247 = vpop.xlane.xlu0 %6246
    %v6248 = vsel %vm6190, %v6177, -inf
    %6249 = vmax.xlane.f32.xlu0 %v6248
    %v6250 = vpop.xlane.xlu0 %6249
    %v6251 = vsel %vm6190, %v6178, -inf
    %6252 = vmax.xlane.f32.xlu0 %v6251
    %v6253 = vpop.xlane.xlu0 %6252
    %v6254 = vsel %vm6190, %v6179, -inf
    %6255 = vmax.xlane.f32.xlu0 %v6254
    %v6256 = vpop.xlane.xlu0 %6255
    %v6257 = vsel %vm6190, %v6180, -inf
    %6258 = vmax.xlane.f32.xlu0 %v6257
    %v6259 = vpop.xlane.xlu0 %6258
    %v6260 = vsel %vm6190, %v6181, -inf
    %6261 = vmax.xlane.f32.xlu0 %v6260
    %v6262 = vpop.xlane.xlu0 %6261
    %v6263 = vsel %vm6190, %v6182, -inf
    %6264 = vmax.xlane.f32.xlu0 %v6263
    %v6265 = vpop.xlane.xlu0 %6264
    %v6266 = vsel %vm6190, %v6183, -inf
    %6267 = vmax.xlane.f32.xlu0 %v6266
    %v6268 = vpop.xlane.xlu0 %6267
    %v6269 = vsel %vm6190, %v6184, -inf
    %6270 = vmax.xlane.f32.xlu0 %v6269
    %v6271 = vpop.xlane.xlu0 %6270
    %v6272 = vsel %vm6190, %v6185, -inf
    %6273 = vmax.xlane.f32.xlu0 %v6272
    %v6274 = vpop.xlane.xlu0 %6273
    %v6275 = vsel %vm6190, %v6186, -inf
    %6276 = vmax.xlane.f32.xlu0 %v6275
    %v6277 = vpop.xlane.xlu0 %6276
    %v6278 = vsel %vm6190, %v6187, -inf
    %6279 = vmax.xlane.f32.xlu0 %v6278
    %v6280 = vpop.xlane.xlu0 %6279
    %v6281 = vsel %vm6190, %v6188, -inf
    %6282 = vmax.xlane.f32.xlu0 %v6281
    %v6283 = vpop.xlane.xlu0 %6282
    %v6284 = vsel %vm6190, %v6189, -inf
    %6285 = vmax.xlane.f32.xlu0 %v6284
    %v6286 = vpop.xlane.xlu0 %6285
    %v6287 = vsub.f32 %v6158, %v6193
    %v6288 = vsub.f32 %v6159, %v6196
    %v6289 = vsub.f32 %v6160, %v6199
    %v6290 = vsub.f32 %v6161, %v6202
    %v6291 = vsub.f32 %v6162, %v6205
    %v6292 = vsub.f32 %v6163, %v6208
    %v6293 = vsub.f32 %v6164, %v6211
    %v6294 = vsub.f32 %v6165, %v6214
    %v6295 = vsub.f32 %v6166, %v6217
    %v6296 = vsub.f32 %v6167, %v6220
    %v6297 = vsub.f32 %v6168, %v6223
    %v6298 = vsub.f32 %v6169, %v6226
    %v6299 = vsub.f32 %v6170, %v6229
    %v6300 = vsub.f32 %v6171, %v6232
    %v6301 = vsub.f32 %v6172, %v6235
    %v6302 = vsub.f32 %v6173, %v6238
    %v6303 = vsub.f32 %v6174, %v6241
    %v6304 = vsub.f32 %v6175, %v6244
    %v6305 = vsub.f32 %v6176, %v6247
    %v6306 = vsub.f32 %v6177, %v6250
    %v6307 = vsub.f32 %v6178, %v6253
    %v6308 = vsub.f32 %v6179, %v6256
    %v6309 = vsub.f32 %v6180, %v6259
    %v6310 = vsub.f32 %v6181, %v6262
    %v6311 = vsub.f32 %v6182, %v6265
    %v6312 = vsub.f32 %v6183, %v6268
    %v6313 = vsub.f32 %v6184, %v6271
    %v6314 = vsub.f32 %v6185, %v6274
    %v6315 = vsub.f32 %v6186, %v6277
    %v6316 = vsub.f32 %v6187, %v6280
    %v6317 = vsub.f32 %v6188, %v6283
    %v6318 = vsub.f32 %v6189, %v6286
    %v6319 = vmul.f32 %v6287, 1.442695
    %v6320 = vpow.pop %v6319
    %v6321 = vmul.f32 %v6288, 1.442695
    %v6322 = vpow.pop %v6321
    %v6323 = vmul.f32 %v6289, 1.442695
    %v6324 = vpow.pop %v6323
    %v6325 = vmul.f32 %v6290, 1.442695
    %v6326 = vpow.pop %v6325
    %v6327 = vmul.f32 %v6291, 1.442695
    %v6328 = vpow.pop %v6327
    %v6329 = vmul.f32 %v6292, 1.442695
    %v6330 = vpow.pop %v6329
    %v6331 = vmul.f32 %v6293, 1.442695
    %v6332 = vpow.pop %v6331
    %v6333 = vmul.f32 %v6294, 1.442695
    %v6334 = vpow.pop %v6333
    %v6335 = vmul.f32 %v6295, 1.442695
    %v6336 = vpow.pop %v6335
    %v6337 = vmul.f32 %v6296, 1.442695
    %v6338 = vpow.pop %v6337
    %v6339 = vmul.f32 %v6297, 1.442695
    %v6340 = vpow.pop %v6339
    %v6341 = vmul.f32 %v6298, 1.442695
    %v6342 = vpow.pop %v6341
    %v6343 = vmul.f32 %v6299, 1.442695
    %v6344 = vpow.pop %v6343
    %v6345 = vmul.f32 %v6300, 1.442695
    %v6346 = vpow.pop %v6345
    %v6347 = vmul.f32 %v6301, 1.442695
    %v6348 = vpow.pop %v6347
    %v6349 = vmul.f32 %v6302, 1.442695
    %v6350 = vpow.pop %v6349
    %v6351 = vmul.f32 %v6303, 1.442695
    %v6352 = vpow.pop %v6351
    %v6353 = vmul.f32 %v6304, 1.442695
    %v6354 = vpow.pop %v6353
    %v6355 = vmul.f32 %v6305, 1.442695
    %v6356 = vpow.pop %v6355
    %v6357 = vmul.f32 %v6306, 1.442695
    %v6358 = vpow.pop %v6357
    %v6359 = vmul.f32 %v6307, 1.442695
    %v6360 = vpow.pop %v6359
    %v6361 = vmul.f32 %v6308, 1.442695
    %v6362 = vpow.pop %v6361
    %v6363 = vmul.f32 %v6309, 1.442695
    %v6364 = vpow.pop %v6363
    %v6365 = vmul.f32 %v6310, 1.442695
    %v6366 = vpow.pop %v6365
    %v6367 = vmul.f32 %v6311, 1.442695
    %v6368 = vpow.pop %v6367
    %v6369 = vmul.f32 %v6312, 1.442695
    %v6370 = vpow.pop %v6369
    %v6371 = vmul.f32 %v6313, 1.442695
    %v6372 = vpow.pop %v6371
    %v6373 = vmul.f32 %v6314, 1.442695
    %v6374 = vpow.pop %v6373
    %v6375 = vmul.f32 %v6315, 1.442695
    %v6376 = vpow.pop %v6375
    %v6377 = vmul.f32 %v6316, 1.442695
    %v6378 = vpow.pop %v6377
    %v6379 = vmul.f32 %v6317, 1.442695
    %v6380 = vpow.pop %v6379
    %v6381 = vmul.f32 %v6318, 1.442695
    %v6382 = vpow.pop %v6381
    %v6383 = vsel %vm6190, %v6320, 0.0
    %6384 = vadd.xlane.f32.xlu0 %v6383
    %v6385 = vpop.xlane.xlu0 %6384
    %v6386 = vsel %vm6190, %v6322, 0.0
    %6387 = vadd.xlane.f32.xlu0 %v6386
    %v6388 = vpop.xlane.xlu0 %6387
    %v6389 = vsel %vm6190, %v6324, 0.0
    %6390 = vadd.xlane.f32.xlu0 %v6389
    %v6391 = vpop.xlane.xlu0 %6390
    %v6392 = vsel %vm6190, %v6326, 0.0
    %6393 = vadd.xlane.f32.xlu0 %v6392
    %v6394 = vpop.xlane.xlu0 %6393
    %v6395 = vsel %vm6190, %v6328, 0.0
    %6396 = vadd.xlane.f32.xlu0 %v6395
    %v6397 = vpop.xlane.xlu0 %6396
    %v6398 = vsel %vm6190, %v6330, 0.0
    %6399 = vadd.xlane.f32.xlu0 %v6398
    %v6400 = vpop.xlane.xlu0 %6399
    %v6401 = vsel %vm6190, %v6332, 0.0
    %6402 = vadd.xlane.f32.xlu0 %v6401
    %v6403 = vpop.xlane.xlu0 %6402
    %v6404 = vsel %vm6190, %v6334, 0.0
    %6405 = vadd.xlane.f32.xlu0 %v6404
    %v6406 = vpop.xlane.xlu0 %6405
    %v6407 = vsel %vm6190, %v6336, 0.0
    %6408 = vadd.xlane.f32.xlu0 %v6407
    %v6409 = vpop.xlane.xlu0 %6408
    %v6410 = vsel %vm6190, %v6338, 0.0
    %6411 = vadd.xlane.f32.xlu0 %v6410
    %v6412 = vpop.xlane.xlu0 %6411
    %v6413 = vsel %vm6190, %v6340, 0.0
    %6414 = vadd.xlane.f32.xlu0 %v6413
    %v6415 = vpop.xlane.xlu0 %6414
    %v6416 = vsel %vm6190, %v6342, 0.0
    %6417 = vadd.xlane.f32.xlu0 %v6416
    %v6418 = vpop.xlane.xlu0 %6417
    %v6419 = vsel %vm6190, %v6344, 0.0
    %6420 = vadd.xlane.f32.xlu0 %v6419
    %v6421 = vpop.xlane.xlu0 %6420
    %v6422 = vsel %vm6190, %v6346, 0.0
    %6423 = vadd.xlane.f32.xlu0 %v6422
    %v6424 = vpop.xlane.xlu0 %6423
    %v6425 = vsel %vm6190, %v6348, 0.0
    %6426 = vadd.xlane.f32.xlu0 %v6425
    %v6427 = vpop.xlane.xlu0 %6426
    %v6428 = vsel %vm6190, %v6350, 0.0
    %6429 = vadd.xlane.f32.xlu0 %v6428
    %v6430 = vpop.xlane.xlu0 %6429
    %v6431 = vsel %vm6190, %v6352, 0.0
    %6432 = vadd.xlane.f32.xlu0 %v6431
    %v6433 = vpop.xlane.xlu0 %6432
    %v6434 = vsel %vm6190, %v6354, 0.0
    %6435 = vadd.xlane.f32.xlu0 %v6434
    %v6436 = vpop.xlane.xlu0 %6435
    %v6437 = vsel %vm6190, %v6356, 0.0
    %6438 = vadd.xlane.f32.xlu0 %v6437
    %v6439 = vpop.xlane.xlu0 %6438
    %v6440 = vsel %vm6190, %v6358, 0.0
    %6441 = vadd.xlane.f32.xlu0 %v6440
    %v6442 = vpop.xlane.xlu0 %6441
    %v6443 = vsel %vm6190, %v6360, 0.0
    %6444 = vadd.xlane.f32.xlu0 %v6443
    %v6445 = vpop.xlane.xlu0 %6444
    %v6446 = vsel %vm6190, %v6362, 0.0
    %6447 = vadd.xlane.f32.xlu0 %v6446
    %v6448 = vpop.xlane.xlu0 %6447
    %v6449 = vsel %vm6190, %v6364, 0.0
    %6450 = vadd.xlane.f32.xlu0 %v6449
    %v6451 = vpop.xlane.xlu0 %6450
    %v6452 = vsel %vm6190, %v6366, 0.0
    %6453 = vadd.xlane.f32.xlu0 %v6452
    %v6454 = vpop.xlane.xlu0 %6453
    %v6455 = vsel %vm6190, %v6368, 0.0
    %6456 = vadd.xlane.f32.xlu0 %v6455
    %v6457 = vpop.xlane.xlu0 %6456
    %v6458 = vsel %vm6190, %v6370, 0.0
    %6459 = vadd.xlane.f32.xlu0 %v6458
    %v6460 = vpop.xlane.xlu0 %6459
    %v6461 = vsel %vm6190, %v6372, 0.0
    %6462 = vadd.xlane.f32.xlu0 %v6461
    %v6463 = vpop.xlane.xlu0 %6462
    %v6464 = vsel %vm6190, %v6374, 0.0
    %6465 = vadd.xlane.f32.xlu0 %v6464
    %v6466 = vpop.xlane.xlu0 %6465
    %v6467 = vsel %vm6190, %v6376, 0.0
    %6468 = vadd.xlane.f32.xlu0 %v6467
    %v6469 = vpop.xlane.xlu0 %6468
    %v6470 = vsel %vm6190, %v6378, 0.0
    %6471 = vadd.xlane.f32.xlu0 %v6470
    %v6472 = vpop.xlane.xlu0 %6471
    %v6473 = vsel %vm6190, %v6380, 0.0
    %6474 = vadd.xlane.f32.xlu0 %v6473
    %v6475 = vpop.xlane.xlu0 %6474
    %v6476 = vsel %vm6190, %v6382, 0.0
    %6477 = vadd.xlane.f32.xlu0 %v6476
    %v6478 = vpop.xlane.xlu0 %6477
    %v6479 = vrcp.pop %v6385
    %v6480 = vrcp.pop %v6388
    %v6481 = vrcp.pop %v6391
    %v6482 = vrcp.pop %v6394
    %v6483 = vrcp.pop %v6397
    %v6484 = vrcp.pop %v6400
    %v6485 = vrcp.pop %v6403
    %v6486 = vrcp.pop %v6406
    %v6487 = vrcp.pop %v6409
    %v6488 = vrcp.pop %v6412
    %v6489 = vrcp.pop %v6415
    %v6490 = vrcp.pop %v6418
    %v6491 = vrcp.pop %v6421
    %v6492 = vrcp.pop %v6424
    %v6493 = vrcp.pop %v6427
    %v6494 = vrcp.pop %v6430
    %v6495 = vrcp.pop %v6433
    %v6496 = vrcp.pop %v6436
    %v6497 = vrcp.pop %v6439
    %v6498 = vrcp.pop %v6442
    %v6499 = vrcp.pop %v6445
    %v6500 = vrcp.pop %v6448
    %v6501 = vrcp.pop %v6451
    %v6502 = vrcp.pop %v6454
    %v6503 = vrcp.pop %v6457
    %v6504 = vrcp.pop %v6460
    %v6505 = vrcp.pop %v6463
    %v6506 = vrcp.pop %v6466
    %v6507 = vrcp.pop %v6469
    %v6508 = vrcp.pop %v6472
    %v6509 = vrcp.pop %v6475
    %v6510 = vrcp.pop %v6478
    %v6511 = vmul.f32 %v6320, %v6479
    %v6512 = vmul.f32 %v6322, %v6480
    %v6513 = vmul.f32 %v6324, %v6481
    %v6514 = vmul.f32 %v6326, %v6482
    %v6515 = vmul.f32 %v6328, %v6483
    %v6516 = vmul.f32 %v6330, %v6484
    %v6517 = vmul.f32 %v6332, %v6485
    %v6518 = vmul.f32 %v6334, %v6486
    %v6519 = vmul.f32 %v6336, %v6487
    %v6520 = vmul.f32 %v6338, %v6488
    %v6521 = vmul.f32 %v6340, %v6489
    %v6522 = vmul.f32 %v6342, %v6490
    %v6523 = vmul.f32 %v6344, %v6491
    %v6524 = vmul.f32 %v6346, %v6492
    %v6525 = vmul.f32 %v6348, %v6493
    %v6526 = vmul.f32 %v6350, %v6494
    %v6527 = vmul.f32 %v6352, %v6495
    %v6528 = vmul.f32 %v6354, %v6496
    %v6529 = vmul.f32 %v6356, %v6497
    %v6530 = vmul.f32 %v6358, %v6498
    %v6531 = vmul.f32 %v6360, %v6499
    %v6532 = vmul.f32 %v6362, %v6500
    %v6533 = vmul.f32 %v6364, %v6501
    %v6534 = vmul.f32 %v6366, %v6502
    %v6535 = vmul.f32 %v6368, %v6503
    %v6536 = vmul.f32 %v6370, %v6504
    %v6537 = vmul.f32 %v6372, %v6505
    %v6538 = vmul.f32 %v6374, %v6506
    %v6539 = vmul.f32 %v6376, %v6507
    %v6540 = vmul.f32 %v6378, %v6508
    %v6541 = vmul.f32 %v6380, %v6509
    %v6542 = vmul.f32 %v6382, %v6510
    %v6543 = vmul.f32 %v6511, %v2146
    %v6544 = vmul.f32 %v6512, %v2146
    %v6545 = vmul.f32 %v6513, %v2146
    %v6546 = vmul.f32 %v6514, %v2146
    %v6547 = vmul.f32 %v6515, %v2147
    %v6548 = vmul.f32 %v6516, %v2147
    %v6549 = vmul.f32 %v6517, %v2147
    %v6550 = vmul.f32 %v6518, %v2147
    %v6551 = vmul.f32 %v6519, %v2148
    %v6552 = vmul.f32 %v6520, %v2148
    %v6553 = vmul.f32 %v6521, %v2148
    %v6554 = vmul.f32 %v6522, %v2148
    %v6555 = vmul.f32 %v6523, %v2149
    %v6556 = vmul.f32 %v6524, %v2149
    %v6557 = vmul.f32 %v6525, %v2149
    %v6558 = vmul.f32 %v6526, %v2149
    %v6559 = vmul.f32 %v6527, %v2150
    %v6560 = vmul.f32 %v6528, %v2150
    %v6561 = vmul.f32 %v6529, %v2150
    %v6562 = vmul.f32 %v6530, %v2150
    %v6563 = vmul.f32 %v6531, %v2151
    %v6564 = vmul.f32 %v6532, %v2151
    %v6565 = vmul.f32 %v6533, %v2151
    %v6566 = vmul.f32 %v6534, %v2151
    %v6567 = vmul.f32 %v6535, %v2152
    %v6568 = vmul.f32 %v6536, %v2152
    %v6569 = vmul.f32 %v6537, %v2152
    %v6570 = vmul.f32 %v6538, %v2152
    %v6571 = vmul.f32 %v6539, %v2153
    %v6572 = vmul.f32 %v6540, %v2153
    %v6573 = vmul.f32 %v6541, %v2153
    %v6574 = vmul.f32 %v6542, %v2153
    %v6575 = vmul.f32 %v6543, 1.442695
    %v6576 = vpow.pop %v6575
    %v6577 = vmul.f32 %v6544, 1.442695
    %v6578 = vpow.pop %v6577
    %v6579 = vmul.f32 %v6545, 1.442695
    %v6580 = vpow.pop %v6579
    %v6581 = vmul.f32 %v6546, 1.442695
    %v6582 = vpow.pop %v6581
    %v6583 = vmul.f32 %v6547, 1.442695
    %v6584 = vpow.pop %v6583
    %v6585 = vmul.f32 %v6548, 1.442695
    %v6586 = vpow.pop %v6585
    %v6587 = vmul.f32 %v6549, 1.442695
    %v6588 = vpow.pop %v6587
    %v6589 = vmul.f32 %v6550, 1.442695
    %v6590 = vpow.pop %v6589
    %v6591 = vmul.f32 %v6551, 1.442695
    %v6592 = vpow.pop %v6591
    %v6593 = vmul.f32 %v6552, 1.442695
    %v6594 = vpow.pop %v6593
    %v6595 = vmul.f32 %v6553, 1.442695
    %v6596 = vpow.pop %v6595
    %v6597 = vmul.f32 %v6554, 1.442695
    %v6598 = vpow.pop %v6597
    %v6599 = vmul.f32 %v6555, 1.442695
    %v6600 = vpow.pop %v6599
    %v6601 = vmul.f32 %v6556, 1.442695
    %v6602 = vpow.pop %v6601
    %v6603 = vmul.f32 %v6557, 1.442695
    %v6604 = vpow.pop %v6603
    %v6605 = vmul.f32 %v6558, 1.442695
    %v6606 = vpow.pop %v6605
    %v6607 = vmul.f32 %v6559, 1.442695
    %v6608 = vpow.pop %v6607
    %v6609 = vmul.f32 %v6560, 1.442695
    %v6610 = vpow.pop %v6609
    %v6611 = vmul.f32 %v6561, 1.442695
    %v6612 = vpow.pop %v6611
    %v6613 = vmul.f32 %v6562, 1.442695
    %v6614 = vpow.pop %v6613
    %v6615 = vmul.f32 %v6563, 1.442695
    %v6616 = vpow.pop %v6615
    %v6617 = vmul.f32 %v6564, 1.442695
    %v6618 = vpow.pop %v6617
    %v6619 = vmul.f32 %v6565, 1.442695
    %v6620 = vpow.pop %v6619
    %v6621 = vmul.f32 %v6566, 1.442695
    %v6622 = vpow.pop %v6621
    %v6623 = vmul.f32 %v6567, 1.442695
    %v6624 = vpow.pop %v6623
    %v6625 = vmul.f32 %v6568, 1.442695
    %v6626 = vpow.pop %v6625
    %v6627 = vmul.f32 %v6569, 1.442695
    %v6628 = vpow.pop %v6627
    %v6629 = vmul.f32 %v6570, 1.442695
    %v6630 = vpow.pop %v6629
    %v6631 = vmul.f32 %v6571, 1.442695
    %v6632 = vpow.pop %v6631
    %v6633 = vmul.f32 %v6572, 1.442695
    %v6634 = vpow.pop %v6633
    %v6635 = vmul.f32 %v6573, 1.442695
    %v6636 = vpow.pop %v6635
    %v6637 = vmul.f32 %v6574, 1.442695
    %v6638 = vpow.pop %v6637
    %v6639 = vsel %vm6190, %v6576, 0.0
    %6640 = vadd.xlane.f32.xlu0 %v6639
    %v6641 = vpop.xlane.xlu0 %6640
    %v6642 = vsel %vm6190, %v6578, 0.0
    %6643 = vadd.xlane.f32.xlu0 %v6642
    %v6644 = vpop.xlane.xlu0 %6643
    %v6645 = vsel %vm6190, %v6580, 0.0
    %6646 = vadd.xlane.f32.xlu0 %v6645
    %v6647 = vpop.xlane.xlu0 %6646
    %v6648 = vsel %vm6190, %v6582, 0.0
    %6649 = vadd.xlane.f32.xlu0 %v6648
    %v6650 = vpop.xlane.xlu0 %6649
    %v6651 = vsel %vm6190, %v6584, 0.0
    %6652 = vadd.xlane.f32.xlu0 %v6651
    %v6653 = vpop.xlane.xlu0 %6652
    %v6654 = vsel %vm6190, %v6586, 0.0
    %6655 = vadd.xlane.f32.xlu0 %v6654
    %v6656 = vpop.xlane.xlu0 %6655
    %v6657 = vsel %vm6190, %v6588, 0.0
    %6658 = vadd.xlane.f32.xlu0 %v6657
    %v6659 = vpop.xlane.xlu0 %6658
    %v6660 = vsel %vm6190, %v6590, 0.0
    %6661 = vadd.xlane.f32.xlu0 %v6660
    %v6662 = vpop.xlane.xlu0 %6661
    %v6663 = vsel %vm6190, %v6592, 0.0
    %6664 = vadd.xlane.f32.xlu0 %v6663
    %v6665 = vpop.xlane.xlu0 %6664
    %v6666 = vsel %vm6190, %v6594, 0.0
    %6667 = vadd.xlane.f32.xlu0 %v6666
    %v6668 = vpop.xlane.xlu0 %6667
    %v6669 = vsel %vm6190, %v6596, 0.0
    %6670 = vadd.xlane.f32.xlu0 %v6669
    %v6671 = vpop.xlane.xlu0 %6670
    %v6672 = vsel %vm6190, %v6598, 0.0
    %6673 = vadd.xlane.f32.xlu0 %v6672
    %v6674 = vpop.xlane.xlu0 %6673
    %v6675 = vsel %vm6190, %v6600, 0.0
    %6676 = vadd.xlane.f32.xlu0 %v6675
    %v6677 = vpop.xlane.xlu0 %6676
    %v6678 = vsel %vm6190, %v6602, 0.0
    %6679 = vadd.xlane.f32.xlu0 %v6678
    %v6680 = vpop.xlane.xlu0 %6679
    %v6681 = vsel %vm6190, %v6604, 0.0
    %6682 = vadd.xlane.f32.xlu0 %v6681
    %v6683 = vpop.xlane.xlu0 %6682
    %v6684 = vsel %vm6190, %v6606, 0.0
    %6685 = vadd.xlane.f32.xlu0 %v6684
    %v6686 = vpop.xlane.xlu0 %6685
    %v6687 = vsel %vm6190, %v6608, 0.0
    %6688 = vadd.xlane.f32.xlu0 %v6687
    %v6689 = vpop.xlane.xlu0 %6688
    %v6690 = vsel %vm6190, %v6610, 0.0
    %6691 = vadd.xlane.f32.xlu0 %v6690
    %v6692 = vpop.xlane.xlu0 %6691
    %v6693 = vsel %vm6190, %v6612, 0.0
    %6694 = vadd.xlane.f32.xlu0 %v6693
    %v6695 = vpop.xlane.xlu0 %6694
    %v6696 = vsel %vm6190, %v6614, 0.0
    %6697 = vadd.xlane.f32.xlu0 %v6696
    %v6698 = vpop.xlane.xlu0 %6697
    %v6699 = vsel %vm6190, %v6616, 0.0
    %6700 = vadd.xlane.f32.xlu0 %v6699
    %v6701 = vpop.xlane.xlu0 %6700
    %v6702 = vsel %vm6190, %v6618, 0.0
    %6703 = vadd.xlane.f32.xlu0 %v6702
    %v6704 = vpop.xlane.xlu0 %6703
    %v6705 = vsel %vm6190, %v6620, 0.0
    %6706 = vadd.xlane.f32.xlu0 %v6705
    %v6707 = vpop.xlane.xlu0 %6706
    %v6708 = vsel %vm6190, %v6622, 0.0
    %6709 = vadd.xlane.f32.xlu0 %v6708
    %v6710 = vpop.xlane.xlu0 %6709
    %v6711 = vsel %vm6190, %v6624, 0.0
    %6712 = vadd.xlane.f32.xlu0 %v6711
    %v6713 = vpop.xlane.xlu0 %6712
    %v6714 = vsel %vm6190, %v6626, 0.0
    %6715 = vadd.xlane.f32.xlu0 %v6714
    %v6716 = vpop.xlane.xlu0 %6715
    %v6717 = vsel %vm6190, %v6628, 0.0
    %6718 = vadd.xlane.f32.xlu0 %v6717
    %v6719 = vpop.xlane.xlu0 %6718
    %v6720 = vsel %vm6190, %v6630, 0.0
    %6721 = vadd.xlane.f32.xlu0 %v6720
    %v6722 = vpop.xlane.xlu0 %6721
    %v6723 = vsel %vm6190, %v6632, 0.0
    %6724 = vadd.xlane.f32.xlu0 %v6723
    %v6725 = vpop.xlane.xlu0 %6724
    %v6726 = vsel %vm6190, %v6634, 0.0
    %6727 = vadd.xlane.f32.xlu0 %v6726
    %v6728 = vpop.xlane.xlu0 %6727
    %v6729 = vsel %vm6190, %v6636, 0.0
    %6730 = vadd.xlane.f32.xlu0 %v6729
    %v6731 = vpop.xlane.xlu0 %6730
    %v6732 = vsel %vm6190, %v6638, 0.0
    %6733 = vadd.xlane.f32.xlu0 %v6732
    %v6734 = vpop.xlane.xlu0 %6733
    %v6735 = vrcp.pop %v6641
    %v6736 = vrcp.pop %v6644
    %v6737 = vrcp.pop %v6647
    %v6738 = vrcp.pop %v6650
    %v6739 = vrcp.pop %v6653
    %v6740 = vrcp.pop %v6656
    %v6741 = vrcp.pop %v6659
    %v6742 = vrcp.pop %v6662
    %v6743 = vrcp.pop %v6665
    %v6744 = vrcp.pop %v6668
    %v6745 = vrcp.pop %v6671
    %v6746 = vrcp.pop %v6674
    %v6747 = vrcp.pop %v6677
    %v6748 = vrcp.pop %v6680
    %v6749 = vrcp.pop %v6683
    %v6750 = vrcp.pop %v6686
    %v6751 = vrcp.pop %v6689
    %v6752 = vrcp.pop %v6692
    %v6753 = vrcp.pop %v6695
    %v6754 = vrcp.pop %v6698
    %v6755 = vrcp.pop %v6701
    %v6756 = vrcp.pop %v6704
    %v6757 = vrcp.pop %v6707
    %v6758 = vrcp.pop %v6710
    %v6759 = vrcp.pop %v6713
    %v6760 = vrcp.pop %v6716
    %v6761 = vrcp.pop %v6719
    %v6762 = vrcp.pop %v6722
    %v6763 = vrcp.pop %v6725
    %v6764 = vrcp.pop %v6728
    %v6765 = vrcp.pop %v6731
    %v6766 = vrcp.pop %v6734
    %v6767 = vmul.f32 %v6576, %v6735
    %v6768 = vmul.f32 %v6578, %v6736
    %v6769 = vmul.f32 %v6580, %v6737
    %v6770 = vmul.f32 %v6582, %v6738
    %v6771 = vmul.f32 %v6584, %v6739
    %v6772 = vmul.f32 %v6586, %v6740
    %v6773 = vmul.f32 %v6588, %v6741
    %v6774 = vmul.f32 %v6590, %v6742
    %v6775 = vmul.f32 %v6592, %v6743
    %v6776 = vmul.f32 %v6594, %v6744
    %v6777 = vmul.f32 %v6596, %v6745
    %v6778 = vmul.f32 %v6598, %v6746
    %v6779 = vmul.f32 %v6600, %v6747
    %v6780 = vmul.f32 %v6602, %v6748
    %v6781 = vmul.f32 %v6604, %v6749
    %v6782 = vmul.f32 %v6606, %v6750
    %v6783 = vmul.f32 %v6608, %v6751
    %v6784 = vmul.f32 %v6610, %v6752
    %v6785 = vmul.f32 %v6612, %v6753
    %v6786 = vmul.f32 %v6614, %v6754
    %v6787 = vmul.f32 %v6616, %v6755
    %v6788 = vmul.f32 %v6618, %v6756
    %v6789 = vmul.f32 %v6620, %v6757
    %v6790 = vmul.f32 %v6622, %v6758
    %v6791 = vmul.f32 %v6624, %v6759
    %v6792 = vmul.f32 %v6626, %v6760
    %v6793 = vmul.f32 %v6628, %v6761
    %v6794 = vmul.f32 %v6630, %v6762
    %v6795 = vmul.f32 %v6632, %v6763
    %v6796 = vmul.f32 %v6634, %v6764
    %v6797 = vmul.f32 %v6636, %v6765
    %v6798 = vmul.f32 %v6638, %v6766
    %6799 = vst.msk [vmem:[%s8] sm:$0x3f] %vm6190, %v6767
    %6800 = vst.msk [vmem:[%s8 + $0x8] sm:$0x3f] %vm6190, %v6768
    %6801 = vst.msk [vmem:[%s8 + $0x10] sm:$0x3f] %vm6190, %v6769
    %6802 = vst.msk [vmem:[%s8 + $0x18] sm:$0x3f] %vm6190, %v6770
    %6803 = vst.msk [vmem:[%s8 + $0x20] sm:$0x3f] %vm6190, %v6771
    %6804 = vst.msk [vmem:[%s8 + $0x28] sm:$0x3f] %vm6190, %v6772
    %6805 = vst.msk [vmem:[%s8 + $0x30] sm:$0x3f] %vm6190, %v6773
    %6806 = vst.msk [vmem:[%s8 + $0x38] sm:$0x3f] %vm6190, %v6774
    %6807 = vst.msk [vmem:[%s8 + $0x40] sm:$0x3f] %vm6190, %v6775
    %6808 = vst.msk [vmem:[%s8 + $0x48] sm:$0x3f] %vm6190, %v6776
    %6809 = vst.msk [vmem:[%s8 + $0x50] sm:$0x3f] %vm6190, %v6777
    %6810 = vst.msk [vmem:[%s8 + $0x58] sm:$0x3f] %vm6190, %v6778
    %6811 = vst.msk [vmem:[%s8 + $0x60] sm:$0x3f] %vm6190, %v6779
    %6812 = vst.msk [vmem:[%s8 + $0x68] sm:$0x3f] %vm6190, %v6780
    %6813 = vst.msk [vmem:[%s8 + $0x70] sm:$0x3f] %vm6190, %v6781
    %6814 = vst.msk [vmem:[%s8 + $0x78] sm:$0x3f] %vm6190, %v6782
    %6815 = vst.msk [vmem:[%s8 + $0x80] sm:$0x3f] %vm6190, %v6783
    %6816 = vst.msk [vmem:[%s8 + $0x88] sm:$0x3f] %vm6190, %v6784
    %6817 = vst.msk [vmem:[%s8 + $0x90] sm:$0x3f] %vm6190, %v6785
    %6818 = vst.msk [vmem:[%s8 + $0x98] sm:$0x3f] %vm6190, %v6786
    %6819 = vst.msk [vmem:[%s8 + $0xa0] sm:$0x3f] %vm6190, %v6787
    %6820 = vst.msk [vmem:[%s8 + $0xa8] sm:$0x3f] %vm6190, %v6788
    %6821 = vst.msk [vmem:[%s8 + $0xb0] sm:$0x3f] %vm6190, %v6789
    %6822 = vst.msk [vmem:[%s8 + $0xb8] sm:$0x3f] %vm6190, %v6790
    %6823 = vst.msk [vmem:[%s8 + $0xc0] sm:$0x3f] %vm6190, %v6791
    %6824 = vst.msk [vmem:[%s8 + $0xc8] sm:$0x3f] %vm6190, %v6792
    %6825 = vst.msk [vmem:[%s8 + $0xd0] sm:$0x3f] %vm6190, %v6793
    %6826 = vst.msk [vmem:[%s8 + $0xd8] sm:$0x3f] %vm6190, %v6794
    %6827 = vst.msk [vmem:[%s8 + $0xe0] sm:$0x3f] %vm6190, %v6795
    %6828 = vst.msk [vmem:[%s8 + $0xe8] sm:$0x3f] %vm6190, %v6796
    %6829 = vst.msk [vmem:[%s8 + $0xf0] sm:$0x3f] %vm6190, %v6797
    %6830 = vst.msk [vmem:[%s8 + $0xf8] sm:$0x3f] %vm6190, %v6798
    %v6831 = vld [vmem:[%s6] sm:$0x1]
    %v6832 = vld [vmem:[%s6 + $0x1] sm:$0x1]
    %v6833 = vld [vmem:[%s6 + $0x2] sm:$0x1]
    %v6834 = vld [vmem:[%s6 + $0x3] sm:$0x1]
    %v6835 = vld [vmem:[%s6 + $0x4] sm:$0x1]
    %v6836 = vld [vmem:[%s6 + $0x5] sm:$0x1]
    %v6837 = vld [vmem:[%s6 + $0x6] sm:$0x1]
    %v6838 = vld [vmem:[%s6 + $0x7] sm:$0x1]
    %v6839 = vld [vmem:[%s6 + $0x8] sm:$0x1]
    %v6840 = vld [vmem:[%s6 + $0x9] sm:$0x1]
    %v6841 = vld [vmem:[%s6 + $0xa] sm:$0x1]
    %v6842 = vld [vmem:[%s6 + $0xb] sm:$0x1]
    %v6843 = vld [vmem:[%s6 + $0xc] sm:$0x1]
    %v6844 = vld [vmem:[%s6 + $0xd] sm:$0x1]
    %v6845 = vld [vmem:[%s6 + $0xe] sm:$0x1]
    %v6846 = vld [vmem:[%s6 + $0xf] sm:$0x1]
    %v6847 = vld [vmem:[%s6 + $0x10] sm:$0x1]
    %v6848 = vld [vmem:[%s6 + $0x11] sm:$0x1]
    %v6849 = vld [vmem:[%s6 + $0x12] sm:$0x1]
    %v6850 = vld [vmem:[%s6 + $0x13] sm:$0x1]
    %v6851 = vld [vmem:[%s6 + $0x14] sm:$0x1]
    %v6852 = vld [vmem:[%s6 + $0x15] sm:$0x1]
    %v6853 = vld [vmem:[%s6 + $0x16] sm:$0x1]
    %v6854 = vld [vmem:[%s6 + $0x17] sm:$0x1]
    %v6855 = vld [vmem:[%s7] sm:$0x1]
    %v6856 = vld [vmem:[%s7 + $0x1] sm:$0x1]
    %v6857 = vld [vmem:[%s7 + $0x2] sm:$0x1]
    %v6858 = vld [vmem:[%s7 + $0x3] sm:$0x1]
    %v6859 = vld [vmem:[%s7 + $0x4] sm:$0x1]
    %v6860 = vld [vmem:[%s7 + $0x5] sm:$0x1]
    %v6861 = vld [vmem:[%s7 + $0x6] sm:$0x1]
    %v6862 = vld [vmem:[%s7 + $0x7] sm:$0x1]
    %6863 = vset.pattern.permute.xlu0 0
    %6864 = vperm.xlu0 %6863, %v40
    %v6865 = vpop.permute.xlu0 %6864
    %6867 = vset.pattern.permute.xlu0 0
    %6868 = vperm.xlu0 %6867, %v41
    %v6869 = vpop.permute.xlu0 %6868
    %6871 = vset.pattern.permute.xlu0 0
    %6872 = vperm.xlu0 %6871, %v42
    %v6873 = vpop.permute.xlu0 %6872
    %6875 = vset.pattern.permute.xlu0 0
    %6876 = vperm.xlu0 %6875, %v43
    %v6877 = vpop.permute.xlu0 %6876
    %6879 = vset.pattern.permute.xlu0 0
    %6880 = vperm.xlu0 %6879, %v44
    %v6881 = vpop.permute.xlu0 %6880
    %6883 = vset.pattern.permute.xlu0 0
    %6884 = vperm.xlu0 %6883, %v45
    %v6885 = vpop.permute.xlu0 %6884
    %v6891 = vlaneseq
    %v6892 = vshrl.u32 %v6891, 7
    %v6893 = vsub.s32 0, %v6892
    %v6894 = vrot.slane %v6831, %v6893
    %v6895 = vlaneseq
    %v6896 = vshrl.u32 %v6895, 7
    %v6897 = vsub.s32 0, %v6896
    %v6898 = vrot.slane %v6832, %v6897
    %v6899 = vlaneseq
    %v6900 = vshrl.u32 %v6899, 7
    %v6901 = vsub.s32 0, %v6900
    %v6902 = vrot.slane %v6833, %v6901
    %v6903 = vlaneseq
    %v6904 = vshrl.u32 %v6903, 7
    %v6905 = vsub.s32 0, %v6904
    %v6906 = vrot.slane %v6834, %v6905
    %v6911 = vmul.f32 %v6865, %v6894
    %v6912 = vmul.f32 %v6865, %v6898
    %v6913 = vmul.f32 %v6865, %v6902
    %v6914 = vmul.f32 %v6865, %v6906
    %v6915 = vmul.f32 %v6869, %v6894
    %v6916 = vmul.f32 %v6869, %v6898
    %v6917 = vmul.f32 %v6869, %v6902
    %v6918 = vmul.f32 %v6869, %v6906
    %v6919 = vmul.f32 %v6873, %v6894
    %v6920 = vmul.f32 %v6873, %v6898
    %v6921 = vmul.f32 %v6873, %v6902
    %v6922 = vmul.f32 %v6873, %v6906
    %v6923 = vmul.f32 %v6877, %v6894
    %v6924 = vmul.f32 %v6877, %v6898
    %v6925 = vmul.f32 %v6877, %v6902
    %v6926 = vmul.f32 %v6877, %v6906
    %v6927 = vmul.f32 %v6881, %v6894
    %v6928 = vmul.f32 %v6881, %v6898
    %v6929 = vmul.f32 %v6881, %v6902
    %v6930 = vmul.f32 %v6881, %v6906
    %v6931 = vmul.f32 %v6885, %v6894
    %v6932 = vmul.f32 %v6885, %v6898
    %v6933 = vmul.f32 %v6885, %v6902
    %v6934 = vmul.f32 %v6885, %v6906
    %v6939 = vlaneseq
    %v6940 = vshrl.u32 %v6939, 7
    %v6941 = vsub.s32 0, %v6940
    %v6942 = vrot.slane %v6855, %v6941
    %v6943 = vlaneseq
    %v6944 = vshrl.u32 %v6943, 7
    %v6945 = vsub.s32 0, %v6944
    %v6946 = vrot.slane %v6856, %v6945
    %v6947 = vlaneseq
    %v6948 = vshrl.u32 %v6947, 7
    %v6949 = vsub.s32 0, %v6948
    %v6950 = vrot.slane %v6857, %v6949
    %v6951 = vlaneseq
    %v6952 = vshrl.u32 %v6951, 7
    %v6953 = vsub.s32 0, %v6952
    %v6954 = vrot.slane %v6858, %v6953
    %v6959 = vadd.f32 %v6911, %v6942
    %v6960 = vadd.f32 %v6912, %v6946
    %v6961 = vadd.f32 %v6913, %v6950
    %v6962 = vadd.f32 %v6914, %v6954
    %v6963 = vadd.f32 %v6915, %v6942
    %v6964 = vadd.f32 %v6916, %v6946
    %v6965 = vadd.f32 %v6917, %v6950
    %v6966 = vadd.f32 %v6918, %v6954
    %v6967 = vadd.f32 %v6919, %v6942
    %v6968 = vadd.f32 %v6920, %v6946
    %v6969 = vadd.f32 %v6921, %v6950
    %v6970 = vadd.f32 %v6922, %v6954
    %v6971 = vadd.f32 %v6923, %v6942
    %v6972 = vadd.f32 %v6924, %v6946
    %v6973 = vadd.f32 %v6925, %v6950
    %v6974 = vadd.f32 %v6926, %v6954
    %v6975 = vadd.f32 %v6927, %v6942
    %v6976 = vadd.f32 %v6928, %v6946
    %v6977 = vadd.f32 %v6929, %v6950
    %v6978 = vadd.f32 %v6930, %v6954
    %v6979 = vadd.f32 %v6931, %v6942
    %v6980 = vadd.f32 %v6932, %v6946
    %v6981 = vadd.f32 %v6933, %v6950
    %v6982 = vadd.f32 %v6934, %v6954
    %6983 = vset.pattern.permute.xlu0 1
    %6984 = vperm.xlu0 %6983, %v40
    %v6985 = vpop.permute.xlu0 %6984
    %6987 = vset.pattern.permute.xlu0 1
    %6988 = vperm.xlu0 %6987, %v41
    %v6989 = vpop.permute.xlu0 %6988
    %6991 = vset.pattern.permute.xlu0 1
    %6992 = vperm.xlu0 %6991, %v42
    %v6993 = vpop.permute.xlu0 %6992
    %6995 = vset.pattern.permute.xlu0 1
    %6996 = vperm.xlu0 %6995, %v43
    %v6997 = vpop.permute.xlu0 %6996
    %6999 = vset.pattern.permute.xlu0 1
    %7000 = vperm.xlu0 %6999, %v44
    %v7001 = vpop.permute.xlu0 %7000
    %7003 = vset.pattern.permute.xlu0 1
    %7004 = vperm.xlu0 %7003, %v45
    %v7005 = vpop.permute.xlu0 %7004
    %v7011 = vlaneseq
    %v7012 = vshrl.u32 %v7011, 7
    %v7013 = vsub.s32 0, %v7012
    %v7014 = vrot.slane %v6835, %v7013
    %v7015 = vlaneseq
    %v7016 = vshrl.u32 %v7015, 7
    %v7017 = vsub.s32 0, %v7016
    %v7018 = vrot.slane %v6836, %v7017
    %v7019 = vlaneseq
    %v7020 = vshrl.u32 %v7019, 7
    %v7021 = vsub.s32 0, %v7020
    %v7022 = vrot.slane %v6837, %v7021
    %v7023 = vlaneseq
    %v7024 = vshrl.u32 %v7023, 7
    %v7025 = vsub.s32 0, %v7024
    %v7026 = vrot.slane %v6838, %v7025
    %v7031 = vmul.f32 %v6985, %v7014
    %v7032 = vmul.f32 %v6985, %v7018
    %v7033 = vmul.f32 %v6985, %v7022
    %v7034 = vmul.f32 %v6985, %v7026
    %v7035 = vmul.f32 %v6989, %v7014
    %v7036 = vmul.f32 %v6989, %v7018
    %v7037 = vmul.f32 %v6989, %v7022
    %v7038 = vmul.f32 %v6989, %v7026
    %v7039 = vmul.f32 %v6993, %v7014
    %v7040 = vmul.f32 %v6993, %v7018
    %v7041 = vmul.f32 %v6993, %v7022
    %v7042 = vmul.f32 %v6993, %v7026
    %v7043 = vmul.f32 %v6997, %v7014
    %v7044 = vmul.f32 %v6997, %v7018
    %v7045 = vmul.f32 %v6997, %v7022
    %v7046 = vmul.f32 %v6997, %v7026
    %v7047 = vmul.f32 %v7001, %v7014
    %v7048 = vmul.f32 %v7001, %v7018
    %v7049 = vmul.f32 %v7001, %v7022
    %v7050 = vmul.f32 %v7001, %v7026
    %v7051 = vmul.f32 %v7005, %v7014
    %v7052 = vmul.f32 %v7005, %v7018
    %v7053 = vmul.f32 %v7005, %v7022
    %v7054 = vmul.f32 %v7005, %v7026
    %v7055 = vadd.f32 %v6959, %v7031
    %v7056 = vadd.f32 %v6960, %v7032
    %v7057 = vadd.f32 %v6961, %v7033
    %v7058 = vadd.f32 %v6962, %v7034
    %v7059 = vadd.f32 %v6963, %v7035
    %v7060 = vadd.f32 %v6964, %v7036
    %v7061 = vadd.f32 %v6965, %v7037
    %v7062 = vadd.f32 %v6966, %v7038
    %v7063 = vadd.f32 %v6967, %v7039
    %v7064 = vadd.f32 %v6968, %v7040
    %v7065 = vadd.f32 %v6969, %v7041
    %v7066 = vadd.f32 %v6970, %v7042
    %v7067 = vadd.f32 %v6971, %v7043
    %v7068 = vadd.f32 %v6972, %v7044
    %v7069 = vadd.f32 %v6973, %v7045
    %v7070 = vadd.f32 %v6974, %v7046
    %v7071 = vadd.f32 %v6975, %v7047
    %v7072 = vadd.f32 %v6976, %v7048
    %v7073 = vadd.f32 %v6977, %v7049
    %v7074 = vadd.f32 %v6978, %v7050
    %v7075 = vadd.f32 %v6979, %v7051
    %v7076 = vadd.f32 %v6980, %v7052
    %v7077 = vadd.f32 %v6981, %v7053
    %v7078 = vadd.f32 %v6982, %v7054
    %7079 = vset.pattern.permute.xlu0 2
    %7080 = vperm.xlu0 %7079, %v40
    %v7081 = vpop.permute.xlu0 %7080
    %7083 = vset.pattern.permute.xlu0 2
    %7084 = vperm.xlu0 %7083, %v41
    %v7085 = vpop.permute.xlu0 %7084
    %7087 = vset.pattern.permute.xlu0 2
    %7088 = vperm.xlu0 %7087, %v42
    %v7089 = vpop.permute.xlu0 %7088
    %7091 = vset.pattern.permute.xlu0 2
    %7092 = vperm.xlu0 %7091, %v43
    %v7093 = vpop.permute.xlu0 %7092
    %7095 = vset.pattern.permute.xlu0 2
    %7096 = vperm.xlu0 %7095, %v44
    %v7097 = vpop.permute.xlu0 %7096
    %7099 = vset.pattern.permute.xlu0 2
    %7100 = vperm.xlu0 %7099, %v45
    %v7101 = vpop.permute.xlu0 %7100
    %v7107 = vlaneseq
    %v7108 = vshrl.u32 %v7107, 7
    %v7109 = vsub.s32 0, %v7108
    %v7110 = vrot.slane %v6839, %v7109
    %v7111 = vlaneseq
    %v7112 = vshrl.u32 %v7111, 7
    %v7113 = vsub.s32 0, %v7112
    %v7114 = vrot.slane %v6840, %v7113
    %v7115 = vlaneseq
    %v7116 = vshrl.u32 %v7115, 7
    %v7117 = vsub.s32 0, %v7116
    %v7118 = vrot.slane %v6841, %v7117
    %v7119 = vlaneseq
    %v7120 = vshrl.u32 %v7119, 7
    %v7121 = vsub.s32 0, %v7120
    %v7122 = vrot.slane %v6842, %v7121
    %v7127 = vmul.f32 %v7081, %v7110
    %v7128 = vmul.f32 %v7081, %v7114
    %v7129 = vmul.f32 %v7081, %v7118
    %v7130 = vmul.f32 %v7081, %v7122
    %v7131 = vmul.f32 %v7085, %v7110
    %v7132 = vmul.f32 %v7085, %v7114
    %v7133 = vmul.f32 %v7085, %v7118
    %v7134 = vmul.f32 %v7085, %v7122
    %v7135 = vmul.f32 %v7089, %v7110
    %v7136 = vmul.f32 %v7089, %v7114
    %v7137 = vmul.f32 %v7089, %v7118
    %v7138 = vmul.f32 %v7089, %v7122
    %v7139 = vmul.f32 %v7093, %v7110
    %v7140 = vmul.f32 %v7093, %v7114
    %v7141 = vmul.f32 %v7093, %v7118
    %v7142 = vmul.f32 %v7093, %v7122
    %v7143 = vmul.f32 %v7097, %v7110
    %v7144 = vmul.f32 %v7097, %v7114
    %v7145 = vmul.f32 %v7097, %v7118
    %v7146 = vmul.f32 %v7097, %v7122
    %v7147 = vmul.f32 %v7101, %v7110
    %v7148 = vmul.f32 %v7101, %v7114
    %v7149 = vmul.f32 %v7101, %v7118
    %v7150 = vmul.f32 %v7101, %v7122
    %v7151 = vadd.f32 %v7055, %v7127
    %v7152 = vadd.f32 %v7056, %v7128
    %v7153 = vadd.f32 %v7057, %v7129
    %v7154 = vadd.f32 %v7058, %v7130
    %v7155 = vadd.f32 %v7059, %v7131
    %v7156 = vadd.f32 %v7060, %v7132
    %v7157 = vadd.f32 %v7061, %v7133
    %v7158 = vadd.f32 %v7062, %v7134
    %v7159 = vadd.f32 %v7063, %v7135
    %v7160 = vadd.f32 %v7064, %v7136
    %v7161 = vadd.f32 %v7065, %v7137
    %v7162 = vadd.f32 %v7066, %v7138
    %v7163 = vadd.f32 %v7067, %v7139
    %v7164 = vadd.f32 %v7068, %v7140
    %v7165 = vadd.f32 %v7069, %v7141
    %v7166 = vadd.f32 %v7070, %v7142
    %v7167 = vadd.f32 %v7071, %v7143
    %v7168 = vadd.f32 %v7072, %v7144
    %v7169 = vadd.f32 %v7073, %v7145
    %v7170 = vadd.f32 %v7074, %v7146
    %v7171 = vadd.f32 %v7075, %v7147
    %v7172 = vadd.f32 %v7076, %v7148
    %v7173 = vadd.f32 %v7077, %v7149
    %v7174 = vadd.f32 %v7078, %v7150
    %v7179 = vlaneseq
    %v7180 = vshrl.u32 %v7179, 7
    %v7181 = vsub.s32 0, %v7180
    %v7182 = vrot.slane %v6843, %v7181
    %v7183 = vlaneseq
    %v7184 = vshrl.u32 %v7183, 7
    %v7185 = vsub.s32 0, %v7184
    %v7186 = vrot.slane %v6844, %v7185
    %v7187 = vlaneseq
    %v7188 = vshrl.u32 %v7187, 7
    %v7189 = vsub.s32 0, %v7188
    %v7190 = vrot.slane %v6845, %v7189
    %v7191 = vlaneseq
    %v7192 = vshrl.u32 %v7191, 7
    %v7193 = vsub.s32 0, %v7192
    %v7194 = vrot.slane %v6846, %v7193
    %v7199 = vmul.f32 %v6865, %v7182
    %v7200 = vmul.f32 %v6865, %v7186
    %v7201 = vmul.f32 %v6865, %v7190
    %v7202 = vmul.f32 %v6865, %v7194
    %v7203 = vmul.f32 %v6869, %v7182
    %v7204 = vmul.f32 %v6869, %v7186
    %v7205 = vmul.f32 %v6869, %v7190
    %v7206 = vmul.f32 %v6869, %v7194
    %v7207 = vmul.f32 %v6873, %v7182
    %v7208 = vmul.f32 %v6873, %v7186
    %v7209 = vmul.f32 %v6873, %v7190
    %v7210 = vmul.f32 %v6873, %v7194
    %v7211 = vmul.f32 %v6877, %v7182
    %v7212 = vmul.f32 %v6877, %v7186
    %v7213 = vmul.f32 %v6877, %v7190
    %v7214 = vmul.f32 %v6877, %v7194
    %v7215 = vmul.f32 %v6881, %v7182
    %v7216 = vmul.f32 %v6881, %v7186
    %v7217 = vmul.f32 %v6881, %v7190
    %v7218 = vmul.f32 %v6881, %v7194
    %v7219 = vmul.f32 %v6885, %v7182
    %v7220 = vmul.f32 %v6885, %v7186
    %v7221 = vmul.f32 %v6885, %v7190
    %v7222 = vmul.f32 %v6885, %v7194
    %v7227 = vlaneseq
    %v7228 = vshrl.u32 %v7227, 7
    %v7229 = vsub.s32 0, %v7228
    %v7230 = vrot.slane %v6859, %v7229
    %v7231 = vlaneseq
    %v7232 = vshrl.u32 %v7231, 7
    %v7233 = vsub.s32 0, %v7232
    %v7234 = vrot.slane %v6860, %v7233
    %v7235 = vlaneseq
    %v7236 = vshrl.u32 %v7235, 7
    %v7237 = vsub.s32 0, %v7236
    %v7238 = vrot.slane %v6861, %v7237
    %v7239 = vlaneseq
    %v7240 = vshrl.u32 %v7239, 7
    %v7241 = vsub.s32 0, %v7240
    %v7242 = vrot.slane %v6862, %v7241
    %v7247 = vadd.f32 %v7199, %v7230
    %v7248 = vadd.f32 %v7200, %v7234
    %v7249 = vadd.f32 %v7201, %v7238
    %v7250 = vadd.f32 %v7202, %v7242
    %v7251 = vadd.f32 %v7203, %v7230
    %v7252 = vadd.f32 %v7204, %v7234
    %v7253 = vadd.f32 %v7205, %v7238
    %v7254 = vadd.f32 %v7206, %v7242
    %v7255 = vadd.f32 %v7207, %v7230
    %v7256 = vadd.f32 %v7208, %v7234
    %v7257 = vadd.f32 %v7209, %v7238
    %v7258 = vadd.f32 %v7210, %v7242
    %v7259 = vadd.f32 %v7211, %v7230
    %v7260 = vadd.f32 %v7212, %v7234
    %v7261 = vadd.f32 %v7213, %v7238
    %v7262 = vadd.f32 %v7214, %v7242
    %v7263 = vadd.f32 %v7215, %v7230
    %v7264 = vadd.f32 %v7216, %v7234
    %v7265 = vadd.f32 %v7217, %v7238
    %v7266 = vadd.f32 %v7218, %v7242
    %v7267 = vadd.f32 %v7219, %v7230
    %v7268 = vadd.f32 %v7220, %v7234
    %v7269 = vadd.f32 %v7221, %v7238
    %v7270 = vadd.f32 %v7222, %v7242
    %v7275 = vlaneseq
    %v7276 = vshrl.u32 %v7275, 7
    %v7277 = vsub.s32 0, %v7276
    %v7278 = vrot.slane %v6847, %v7277
    %v7279 = vlaneseq
    %v7280 = vshrl.u32 %v7279, 7
    %v7281 = vsub.s32 0, %v7280
    %v7282 = vrot.slane %v6848, %v7281
    %v7283 = vlaneseq
    %v7284 = vshrl.u32 %v7283, 7
    %v7285 = vsub.s32 0, %v7284
    %v7286 = vrot.slane %v6849, %v7285
    %v7287 = vlaneseq
    %v7288 = vshrl.u32 %v7287, 7
    %v7289 = vsub.s32 0, %v7288
    %v7290 = vrot.slane %v6850, %v7289
    %v7295 = vmul.f32 %v6985, %v7278
    %v7296 = vmul.f32 %v6985, %v7282
    %v7297 = vmul.f32 %v6985, %v7286
    %v7298 = vmul.f32 %v6985, %v7290
    %v7299 = vmul.f32 %v6989, %v7278
    %v7300 = vmul.f32 %v6989, %v7282
    %v7301 = vmul.f32 %v6989, %v7286
    %v7302 = vmul.f32 %v6989, %v7290
    %v7303 = vmul.f32 %v6993, %v7278
    %v7304 = vmul.f32 %v6993, %v7282
    %v7305 = vmul.f32 %v6993, %v7286
    %v7306 = vmul.f32 %v6993, %v7290
    %v7307 = vmul.f32 %v6997, %v7278
    %v7308 = vmul.f32 %v6997, %v7282
    %v7309 = vmul.f32 %v6997, %v7286
    %v7310 = vmul.f32 %v6997, %v7290
    %v7311 = vmul.f32 %v7001, %v7278
    %v7312 = vmul.f32 %v7001, %v7282
    %v7313 = vmul.f32 %v7001, %v7286
    %v7314 = vmul.f32 %v7001, %v7290
    %v7315 = vmul.f32 %v7005, %v7278
    %v7316 = vmul.f32 %v7005, %v7282
    %v7317 = vmul.f32 %v7005, %v7286
    %v7318 = vmul.f32 %v7005, %v7290
    %v7319 = vadd.f32 %v7247, %v7295
    %v7320 = vadd.f32 %v7248, %v7296
    %v7321 = vadd.f32 %v7249, %v7297
    %v7322 = vadd.f32 %v7250, %v7298
    %v7323 = vadd.f32 %v7251, %v7299
    %v7324 = vadd.f32 %v7252, %v7300
    %v7325 = vadd.f32 %v7253, %v7301
    %v7326 = vadd.f32 %v7254, %v7302
    %v7327 = vadd.f32 %v7255, %v7303
    %v7328 = vadd.f32 %v7256, %v7304
    %v7329 = vadd.f32 %v7257, %v7305
    %v7330 = vadd.f32 %v7258, %v7306
    %v7331 = vadd.f32 %v7259, %v7307
    %v7332 = vadd.f32 %v7260, %v7308
    %v7333 = vadd.f32 %v7261, %v7309
    %v7334 = vadd.f32 %v7262, %v7310
    %v7335 = vadd.f32 %v7263, %v7311
    %v7336 = vadd.f32 %v7264, %v7312
    %v7337 = vadd.f32 %v7265, %v7313
    %v7338 = vadd.f32 %v7266, %v7314
    %v7339 = vadd.f32 %v7267, %v7315
    %v7340 = vadd.f32 %v7268, %v7316
    %v7341 = vadd.f32 %v7269, %v7317
    %v7342 = vadd.f32 %v7270, %v7318
    %v7347 = vlaneseq
    %v7348 = vshrl.u32 %v7347, 7
    %v7349 = vsub.s32 0, %v7348
    %v7350 = vrot.slane %v6851, %v7349
    %v7351 = vlaneseq
    %v7352 = vshrl.u32 %v7351, 7
    %v7353 = vsub.s32 0, %v7352
    %v7354 = vrot.slane %v6852, %v7353
    %v7355 = vlaneseq
    %v7356 = vshrl.u32 %v7355, 7
    %v7357 = vsub.s32 0, %v7356
    %v7358 = vrot.slane %v6853, %v7357
    %v7359 = vlaneseq
    %v7360 = vshrl.u32 %v7359, 7
    %v7361 = vsub.s32 0, %v7360
    %v7362 = vrot.slane %v6854, %v7361
    %v7367 = vmul.f32 %v7081, %v7350
    %v7368 = vmul.f32 %v7081, %v7354
    %v7369 = vmul.f32 %v7081, %v7358
    %v7370 = vmul.f32 %v7081, %v7362
    %v7371 = vmul.f32 %v7085, %v7350
    %v7372 = vmul.f32 %v7085, %v7354
    %v7373 = vmul.f32 %v7085, %v7358
    %v7374 = vmul.f32 %v7085, %v7362
    %v7375 = vmul.f32 %v7089, %v7350
    %v7376 = vmul.f32 %v7089, %v7354
    %v7377 = vmul.f32 %v7089, %v7358
    %v7378 = vmul.f32 %v7089, %v7362
    %v7379 = vmul.f32 %v7093, %v7350
    %v7380 = vmul.f32 %v7093, %v7354
    %v7381 = vmul.f32 %v7093, %v7358
    %v7382 = vmul.f32 %v7093, %v7362
    %v7383 = vmul.f32 %v7097, %v7350
    %v7384 = vmul.f32 %v7097, %v7354
    %v7385 = vmul.f32 %v7097, %v7358
    %v7386 = vmul.f32 %v7097, %v7362
    %v7387 = vmul.f32 %v7101, %v7350
    %v7388 = vmul.f32 %v7101, %v7354
    %v7389 = vmul.f32 %v7101, %v7358
    %v7390 = vmul.f32 %v7101, %v7362
    %v7391 = vadd.f32 %v7319, %v7367
    %v7392 = vadd.f32 %v7320, %v7368
    %v7393 = vadd.f32 %v7321, %v7369
    %v7394 = vadd.f32 %v7322, %v7370
    %v7395 = vadd.f32 %v7323, %v7371
    %v7396 = vadd.f32 %v7324, %v7372
    %v7397 = vadd.f32 %v7325, %v7373
    %v7398 = vadd.f32 %v7326, %v7374
    %v7399 = vadd.f32 %v7327, %v7375
    %v7400 = vadd.f32 %v7328, %v7376
    %v7401 = vadd.f32 %v7329, %v7377
    %v7402 = vadd.f32 %v7330, %v7378
    %v7403 = vadd.f32 %v7331, %v7379
    %v7404 = vadd.f32 %v7332, %v7380
    %v7405 = vadd.f32 %v7333, %v7381
    %v7406 = vadd.f32 %v7334, %v7382
    %v7407 = vadd.f32 %v7335, %v7383
    %v7408 = vadd.f32 %v7336, %v7384
    %v7409 = vadd.f32 %v7337, %v7385
    %v7410 = vadd.f32 %v7338, %v7386
    %v7411 = vadd.f32 %v7339, %v7387
    %v7412 = vadd.f32 %v7340, %v7388
    %v7413 = vadd.f32 %v7341, %v7389
    %v7414 = vadd.f32 %v7342, %v7390
    %v7416 = vsel %vm3725, %v7151, 0
    %v7419 = vsel %vm3725, %v7391, 0
    %7421 = vmatprep.subr.mxu0 0.0
    %7422 = vmatpush1.xpose.msra.mxu0 %v7419
    %7423 = vmatprep.subr.mxu0 0.0
    %7424 = vmatpush1.xpose.msra.mxu0 0.0
    %7425 = vmatprep.subr.mxu0 0.0
    %7426 = vmatpush1.xpose.msra.mxu0 0.0
    %7427 = vmatprep.subr.mxu0 0.0
    %7428 = vmatpush1.xpose.msra.mxu0 0.0
    %7429 = vmatprep.subr.mxu0 0.0
    %7430 = vmatpush1.xpose.msra.mxu0 0.0
    %7431 = vmatprep.subr.mxu0 0.0
    %7432 = vmatpush1.xpose.msra.mxu0 0.0
    %7433 = vmatprep.subr.mxu0 0.0
    %7434 = vmatpush1.xpose.msra.mxu0 0.0
    %7435 = vmatprep.subr.mxu0 0.0
    %7436 = vmatpush1.xpose.msra.mxu0 0.0
    %7437 = vmatprep.subr.mxu0 0.0
    %7438 = vmatpush1.xpose.msra.mxu0 0.0
    %7439 = vmatprep.subr.mxu0 0.0
    %7440 = vmatpush1.xpose.msra.mxu0 0.0
    %7441 = vmatprep.subr.mxu0 0.0
    %7442 = vmatpush1.xpose.msra.mxu0 0.0
    %7443 = vmatprep.subr.mxu0 0.0
    %7444 = vmatpush1.xpose.msra.mxu0 0.0
    %7445 = vmatprep.subr.mxu0 0.0
    %7446 = vmatpush1.xpose.msra.mxu0 0.0
    %7447 = vmatprep.subr.mxu0 0.0
    %7448 = vmatpush1.xpose.msra.mxu0 0.0
    %7449 = vmatprep.subr.mxu0 0.0
    %7450 = vmatpush1.xpose.msra.mxu0 0.0
    %7451 = vmatprep.subr.mxu0 0.0
    %7452 = vmatpush1.xpose.msra.mxu0 0.0
    %7453 = vmatprep.subr.mxu0 0.0
    %7454 = vmatpush1.xpose.msra.mxu0 0.0
    %7455 = vmatprep.subr.mxu0 0.0
    %7456 = vmatpush1.xpose.msra.mxu0 0.0
    %7457 = vmatprep.subr.mxu0 0.0
    %7458 = vmatpush1.xpose.msra.mxu0 0.0
    %7459 = vmatprep.subr.mxu0 0.0
    %7460 = vmatpush1.xpose.msra.mxu0 0.0
    %7461 = vmatprep.subr.mxu0 0.0
    %7462 = vmatpush1.xpose.msra.mxu0 0.0
    %7463 = vmatprep.subr.mxu0 0.0
    %7464 = vmatpush1.xpose.msra.mxu0 0.0
    %7465 = vmatprep.subr.mxu0 0.0
    %7466 = vmatpush1.xpose.msra.mxu0 0.0
    %7467 = vmatprep.subr.mxu0 0.0
    %7468 = vmatpush1.xpose.msra.mxu0 0.0
    %7469 = vmatprep.subr.mxu0 0.0
    %7470 = vmatpush1.xpose.msra.mxu0 0.0
    %7471 = vmatprep.subr.mxu0 0.0
    %7472 = vmatpush1.xpose.msra.mxu0 0.0
    %7473 = vmatprep.subr.mxu0 0.0
    %7474 = vmatpush1.xpose.msra.mxu0 0.0
    %7475 = vmatprep.subr.mxu0 0.0
    %7476 = vmatpush1.xpose.msra.mxu0 0.0
    %7477 = vmatprep.subr.mxu0 0.0
    %7478 = vmatpush1.xpose.msra.mxu0 0.0
    %7479 = vmatprep.subr.mxu0 0.0
    %7480 = vmatpush1.xpose.msra.mxu0 0.0
    %7481 = vmatprep.subr.mxu0 0.0
    %7482 = vmatpush1.xpose.msra.mxu0 0.0
    %7483 = vmatprep.subr.mxu0 0.0
    %7484 = vmatpush1.xpose.msra.mxu0 0.0
    %7485 = vmatprep.mubr.f32.mxu0 0.0
    %7486 = vmatmul.mubr.f32.gmra.mrb[0].mxu0 %v7416
    %v7487 = vpop.f32.mrb[0].mxu0
    %v7488 = vadd.f32 0.0, %v7487
    %v7489 = vpop.f32.mrb[0].mxu0
    %7490 = vdwg.mxu0
    %v7492 = vsel %vm3725, %v7152, 0
    %v7495 = vsel %vm3725, %v7392, 0
    %7497 = vmatprep.subr.mxu0 0.0
    %7498 = vmatpush1.xpose.msra.mxu0 %v7495
    %7499 = vmatprep.subr.mxu0 0.0
    %7500 = vmatpush1.xpose.msra.mxu0 0.0
    %7501 = vmatprep.subr.mxu0 0.0
    %7502 = vmatpush1.xpose.msra.mxu0 0.0
    %7503 = vmatprep.subr.mxu0 0.0
    %7504 = vmatpush1.xpose.msra.mxu0 0.0
    %7505 = vmatprep.subr.mxu0 0.0
    %7506 = vmatpush1.xpose.msra.mxu0 0.0
    %7507 = vmatprep.subr.mxu0 0.0
    %7508 = vmatpush1.xpose.msra.mxu0 0.0
    %7509 = vmatprep.subr.mxu0 0.0
    %7510 = vmatpush1.xpose.msra.mxu0 0.0
    %7511 = vmatprep.subr.mxu0 0.0
    %7512 = vmatpush1.xpose.msra.mxu0 0.0
    %7513 = vmatprep.subr.mxu0 0.0
    %7514 = vmatpush1.xpose.msra.mxu0 0.0
    %7515 = vmatprep.subr.mxu0 0.0
    %7516 = vmatpush1.xpose.msra.mxu0 0.0
    %7517 = vmatprep.subr.mxu0 0.0
    %7518 = vmatpush1.xpose.msra.mxu0 0.0
    %7519 = vmatprep.subr.mxu0 0.0
    %7520 = vmatpush1.xpose.msra.mxu0 0.0
    %7521 = vmatprep.subr.mxu0 0.0
    %7522 = vmatpush1.xpose.msra.mxu0 0.0
    %7523 = vmatprep.subr.mxu0 0.0
    %7524 = vmatpush1.xpose.msra.mxu0 0.0
    %7525 = vmatprep.subr.mxu0 0.0
    %7526 = vmatpush1.xpose.msra.mxu0 0.0
    %7527 = vmatprep.subr.mxu0 0.0
    %7528 = vmatpush1.xpose.msra.mxu0 0.0
    %7529 = vmatprep.subr.mxu0 0.0
    %7530 = vmatpush1.xpose.msra.mxu0 0.0
    %7531 = vmatprep.subr.mxu0 0.0
    %7532 = vmatpush1.xpose.msra.mxu0 0.0
    %7533 = vmatprep.subr.mxu0 0.0
    %7534 = vmatpush1.xpose.msra.mxu0 0.0
    %7535 = vmatprep.subr.mxu0 0.0
    %7536 = vmatpush1.xpose.msra.mxu0 0.0
    %7537 = vmatprep.subr.mxu0 0.0
    %7538 = vmatpush1.xpose.msra.mxu0 0.0
    %7539 = vmatprep.subr.mxu0 0.0
    %7540 = vmatpush1.xpose.msra.mxu0 0.0
    %7541 = vmatprep.subr.mxu0 0.0
    %7542 = vmatpush1.xpose.msra.mxu0 0.0
    %7543 = vmatprep.subr.mxu0 0.0
    %7544 = vmatpush1.xpose.msra.mxu0 0.0
    %7545 = vmatprep.subr.mxu0 0.0
    %7546 = vmatpush1.xpose.msra.mxu0 0.0
    %7547 = vmatprep.subr.mxu0 0.0
    %7548 = vmatpush1.xpose.msra.mxu0 0.0
    %7549 = vmatprep.subr.mxu0 0.0
    %7550 = vmatpush1.xpose.msra.mxu0 0.0
    %7551 = vmatprep.subr.mxu0 0.0
    %7552 = vmatpush1.xpose.msra.mxu0 0.0
    %7553 = vmatprep.subr.mxu0 0.0
    %7554 = vmatpush1.xpose.msra.mxu0 0.0
    %7555 = vmatprep.subr.mxu0 0.0
    %7556 = vmatpush1.xpose.msra.mxu0 0.0
    %7557 = vmatprep.subr.mxu0 0.0
    %7558 = vmatpush1.xpose.msra.mxu0 0.0
    %7559 = vmatprep.subr.mxu0 0.0
    %7560 = vmatpush1.xpose.msra.mxu0 0.0
    %7561 = vmatprep.mubr.f32.mxu0 0.0
    %7562 = vmatmul.mubr.f32.gmra.mrb[0].mxu0 %v7492
    %v7563 = vpop.f32.mrb[0].mxu0
    %v7564 = vadd.f32 0.0, %v7563
    %v7565 = vpop.f32.mrb[0].mxu0
    %7566 = vdwg.mxu0
    %v7568 = vsel %vm3725, %v7153, 0
    %v7571 = vsel %vm3725, %v7393, 0
    %7573 = vmatprep.subr.mxu0 0.0
    %7574 = vmatpush1.xpose.msra.mxu0 %v7571
    %7575 = vmatprep.subr.mxu0 0.0
    %7576 = vmatpush1.xpose.msra.mxu0 0.0
    %7577 = vmatprep.subr.mxu0 0.0
    %7578 = vmatpush1.xpose.msra.mxu0 0.0
    %7579 = vmatprep.subr.mxu0 0.0
    %7580 = vmatpush1.xpose.msra.mxu0 0.0
    %7581 = vmatprep.subr.mxu0 0.0
    %7582 = vmatpush1.xpose.msra.mxu0 0.0
    %7583 = vmatprep.subr.mxu0 0.0
    %7584 = vmatpush1.xpose.msra.mxu0 0.0
    %7585 = vmatprep.subr.mxu0 0.0
    %7586 = vmatpush1.xpose.msra.mxu0 0.0
    %7587 = vmatprep.subr.mxu0 0.0
    %7588 = vmatpush1.xpose.msra.mxu0 0.0
    %7589 = vmatprep.subr.mxu0 0.0
    %7590 = vmatpush1.xpose.msra.mxu0 0.0
    %7591 = vmatprep.subr.mxu0 0.0
    %7592 = vmatpush1.xpose.msra.mxu0 0.0
    %7593 = vmatprep.subr.mxu0 0.0
    %7594 = vmatpush1.xpose.msra.mxu0 0.0
    %7595 = vmatprep.subr.mxu0 0.0
    %7596 = vmatpush1.xpose.msra.mxu0 0.0
    %7597 = vmatprep.subr.mxu0 0.0
    %7598 = vmatpush1.xpose.msra.mxu0 0.0
    %7599 = vmatprep.subr.mxu0 0.0
    %7600 = vmatpush1.xpose.msra.mxu0 0.0
    %7601 = vmatprep.subr.mxu0 0.0
    %7602 = vmatpush1.xpose.msra.mxu0 0.0
    %7603 = vmatprep.subr.mxu0 0.0
    %7604 = vmatpush1.xpose.msra.mxu0 0.0
    %7605 = vmatprep.subr.mxu0 0.0
    %7606 = vmatpush1.xpose.msra.mxu0 0.0
    %7607 = vmatprep.subr.mxu0 0.0
    %7608 = vmatpush1.xpose.msra.mxu0 0.0
    %7609 = vmatprep.subr.mxu0 0.0
    %7610 = vmatpush1.xpose.msra.mxu0 0.0
    %7611 = vmatprep.subr.mxu0 0.0
    %7612 = vmatpush1.xpose.msra.mxu0 0.0
    %7613 = vmatprep.subr.mxu0 0.0
    %7614 = vmatpush1.xpose.msra.mxu0 0.0
    %7615 = vmatprep.subr.mxu0 0.0
    %7616 = vmatpush1.xpose.msra.mxu0 0.0
    %7617 = vmatprep.subr.mxu0 0.0
    %7618 = vmatpush1.xpose.msra.mxu0 0.0
    %7619 = vmatprep.subr.mxu0 0.0
    %7620 = vmatpush1.xpose.msra.mxu0 0.0
    %7621 = vmatprep.subr.mxu0 0.0
    %7622 = vmatpush1.xpose.msra.mxu0 0.0
    %7623 = vmatprep.subr.mxu0 0.0
    %7624 = vmatpush1.xpose.msra.mxu0 0.0
    %7625 = vmatprep.subr.mxu0 0.0
    %7626 = vmatpush1.xpose.msra.mxu0 0.0
    %7627 = vmatprep.subr.mxu0 0.0
    %7628 = vmatpush1.xpose.msra.mxu0 0.0
    %7629 = vmatprep.subr.mxu0 0.0
    %7630 = vmatpush1.xpose.msra.mxu0 0.0
    %7631 = vmatprep.subr.mxu0 0.0
    %7632 = vmatpush1.xpose.msra.mxu0 0.0
    %7633 = vmatprep.subr.mxu0 0.0
    %7634 = vmatpush1.xpose.msra.mxu0 0.0
    %7635 = vmatprep.subr.mxu0 0.0
    %7636 = vmatpush1.xpose.msra.mxu0 0.0
    %7637 = vmatprep.mubr.f32.mxu0 0.0
    %7638 = vmatmul.mubr.f32.gmra.mrb[0].mxu0 %v7568
    %v7639 = vpop.f32.mrb[0].mxu0
    %v7640 = vadd.f32 0.0, %v7639
    %v7641 = vpop.f32.mrb[0].mxu0
    %7642 = vdwg.mxu0
    %v7644 = vsel %vm3725, %v7154, 0
    %v7647 = vsel %vm3725, %v7394, 0
    %7649 = vmatprep.subr.mxu0 0.0
    %7650 = vmatpush1.xpose.msra.mxu0 %v7647
    %7651 = vmatprep.subr.mxu0 0.0
    %7652 = vmatpush1.xpose.msra.mxu0 0.0
    %7653 = vmatprep.subr.mxu0 0.0
    %7654 = vmatpush1.xpose.msra.mxu0 0.0
    %7655 = vmatprep.subr.mxu0 0.0
    %7656 = vmatpush1.xpose.msra.mxu0 0.0
    %7657 = vmatprep.subr.mxu0 0.0
    %7658 = vmatpush1.xpose.msra.mxu0 0.0
    %7659 = vmatprep.subr.mxu0 0.0
    %7660 = vmatpush1.xpose.msra.mxu0 0.0
    %7661 = vmatprep.subr.mxu0 0.0
    %7662 = vmatpush1.xpose.msra.mxu0 0.0
    %7663 = vmatprep.subr.mxu0 0.0
    %7664 = vmatpush1.xpose.msra.mxu0 0.0
    %7665 = vmatprep.subr.mxu0 0.0
    %7666 = vmatpush1.xpose.msra.mxu0 0.0
    %7667 = vmatprep.subr.mxu0 0.0
    %7668 = vmatpush1.xpose.msra.mxu0 0.0
    %7669 = vmatprep.subr.mxu0 0.0
    %7670 = vmatpush1.xpose.msra.mxu0 0.0
    %7671 = vmatprep.subr.mxu0 0.0
    %7672 = vmatpush1.xpose.msra.mxu0 0.0
    %7673 = vmatprep.subr.mxu0 0.0
    %7674 = vmatpush1.xpose.msra.mxu0 0.0
    %7675 = vmatprep.subr.mxu0 0.0
    %7676 = vmatpush1.xpose.msra.mxu0 0.0
    %7677 = vmatprep.subr.mxu0 0.0
    %7678 = vmatpush1.xpose.msra.mxu0 0.0
    %7679 = vmatprep.subr.mxu0 0.0
    %7680 = vmatpush1.xpose.msra.mxu0 0.0
    %7681 = vmatprep.subr.mxu0 0.0
    %7682 = vmatpush1.xpose.msra.mxu0 0.0
    %7683 = vmatprep.subr.mxu0 0.0
    %7684 = vmatpush1.xpose.msra.mxu0 0.0
    %7685 = vmatprep.subr.mxu0 0.0
    %7686 = vmatpush1.xpose.msra.mxu0 0.0
    %7687 = vmatprep.subr.mxu0 0.0
    %7688 = vmatpush1.xpose.msra.mxu0 0.0
    %7689 = vmatprep.subr.mxu0 0.0
    %7690 = vmatpush1.xpose.msra.mxu0 0.0
    %7691 = vmatprep.subr.mxu0 0.0
    %7692 = vmatpush1.xpose.msra.mxu0 0.0
    %7693 = vmatprep.subr.mxu0 0.0
    %7694 = vmatpush1.xpose.msra.mxu0 0.0
    %7695 = vmatprep.subr.mxu0 0.0
    %7696 = vmatpush1.xpose.msra.mxu0 0.0
    %7697 = vmatprep.subr.mxu0 0.0
    %7698 = vmatpush1.xpose.msra.mxu0 0.0
    %7699 = vmatprep.subr.mxu0 0.0
    %7700 = vmatpush1.xpose.msra.mxu0 0.0
    %7701 = vmatprep.subr.mxu0 0.0
    %7702 = vmatpush1.xpose.msra.mxu0 0.0
    %7703 = vmatprep.subr.mxu0 0.0
    %7704 = vmatpush1.xpose.msra.mxu0 0.0
    %7705 = vmatprep.subr.mxu0 0.0
    %7706 = vmatpush1.xpose.msra.mxu0 0.0
    %7707 = vmatprep.subr.mxu0 0.0
    %7708 = vmatpush1.xpose.msra.mxu0 0.0
    %7709 = vmatprep.subr.mxu0 0.0
    %7710 = vmatpush1.xpose.msra.mxu0 0.0
    %7711 = vmatprep.subr.mxu0 0.0
    %7712 = vmatpush1.xpose.msra.mxu0 0.0
    %7713 = vmatprep.mubr.f32.mxu0 0.0
    %7714 = vmatmul.mubr.f32.gmra.mrb[0].mxu0 %v7644
    %v7715 = vpop.f32.mrb[0].mxu0
    %v7716 = vadd.f32 0.0, %v7715
    %v7717 = vpop.f32.mrb[0].mxu0
    %7718 = vdwg.mxu0
    %v7720 = vsel %vm3725, %v7155, 0
    %v7723 = vsel %vm3725, %v7395, 0
    %7725 = vmatprep.subr.mxu0 0.0
    %7726 = vmatpush1.xpose.msra.mxu0 %v7723
    %7727 = vmatprep.subr.mxu0 0.0
    %7728 = vmatpush1.xpose.msra.mxu0 0.0
    %7729 = vmatprep.subr.mxu0 0.0
    %7730 = vmatpush1.xpose.msra.mxu0 0.0
    %7731 = vmatprep.subr.mxu0 0.0
    %7732 = vmatpush1.xpose.msra.mxu0 0.0
    %7733 = vmatprep.subr.mxu0 0.0
    %7734 = vmatpush1.xpose.msra.mxu0 0.0
    %7735 = vmatprep.subr.mxu0 0.0
    %7736 = vmatpush1.xpose.msra.mxu0 0.0
    %7737 = vmatprep.subr.mxu0 0.0
    %7738 = vmatpush1.xpose.msra.mxu0 0.0
    %7739 = vmatprep.subr.mxu0 0.0
    %7740 = vmatpush1.xpose.msra.mxu0 0.0
    %7741 = vmatprep.subr.mxu0 0.0
    %7742 = vmatpush1.xpose.msra.mxu0 0.0
    %7743 = vmatprep.subr.mxu0 0.0
    %7744 = vmatpush1.xpose.msra.mxu0 0.0
    %7745 = vmatprep.subr.mxu0 0.0
    %7746 = vmatpush1.xpose.msra.mxu0 0.0
    %7747 = vmatprep.subr.mxu0 0.0
    %7748 = vmatpush1.xpose.msra.mxu0 0.0
    %7749 = vmatprep.subr.mxu0 0.0
    %7750 = vmatpush1.xpose.msra.mxu0 0.0
    %7751 = vmatprep.subr.mxu0 0.0
    %7752 = vmatpush1.xpose.msra.mxu0 0.0
    %7753 = vmatprep.subr.mxu0 0.0
    %7754 = vmatpush1.xpose.msra.mxu0 0.0
    %7755 = vmatprep.subr.mxu0 0.0
    %7756 = vmatpush1.xpose.msra.mxu0 0.0
    %7757 = vmatprep.subr.mxu0 0.0
    %7758 = vmatpush1.xpose.msra.mxu0 0.0
    %7759 = vmatprep.subr.mxu0 0.0
    %7760 = vmatpush1.xpose.msra.mxu0 0.0
    %7761 = vmatprep.subr.mxu0 0.0
    %7762 = vmatpush1.xpose.msra.mxu0 0.0
    %7763 = vmatprep.subr.mxu0 0.0
    %7764 = vmatpush1.xpose.msra.mxu0 0.0
    %7765 = vmatprep.subr.mxu0 0.0
    %7766 = vmatpush1.xpose.msra.mxu0 0.0
    %7767 = vmatprep.subr.mxu0 0.0
    %7768 = vmatpush1.xpose.msra.mxu0 0.0
    %7769 = vmatprep.subr.mxu0 0.0
    %7770 = vmatpush1.xpose.msra.mxu0 0.0
    %7771 = vmatprep.subr.mxu0 0.0
    %7772 = vmatpush1.xpose.msra.mxu0 0.0
    %7773 = vmatprep.subr.mxu0 0.0
    %7774 = vmatpush1.xpose.msra.mxu0 0.0
    %7775 = vmatprep.subr.mxu0 0.0
    %7776 = vmatpush1.xpose.msra.mxu0 0.0
    %7777 = vmatprep.subr.mxu0 0.0
    %7778 = vmatpush1.xpose.msra.mxu0 0.0
    %7779 = vmatprep.subr.mxu0 0.0
    %7780 = vmatpush1.xpose.msra.mxu0 0.0
    %7781 = vmatprep.subr.mxu0 0.0
    %7782 = vmatpush1.xpose.msra.mxu0 0.0
    %7783 = vmatprep.subr.mxu0 0.0
    %7784 = vmatpush1.xpose.msra.mxu0 0.0
    %7785 = vmatprep.subr.mxu0 0.0
    %7786 = vmatpush1.xpose.msra.mxu0 0.0
    %7787 = vmatprep.subr.mxu0 0.0
    %7788 = vmatpush1.xpose.msra.mxu0 0.0
    %7789 = vmatprep.mubr.f32.mxu0 0.0
    %7790 = vmatmul.mubr.f32.gmra.mrb[0].mxu0 %v7720
    %v7791 = vpop.f32.mrb[0].mxu0
    %v7792 = vadd.f32 0.0, %v7791
    %v7793 = vpop.f32.mrb[0].mxu0
    %7794 = vdwg.mxu0
    %v7796 = vsel %vm3725, %v7156, 0
    %v7799 = vsel %vm3725, %v7396, 0
    %7801 = vmatprep.subr.mxu0 0.0
    %7802 = vmatpush1.xpose.msra.mxu0 %v7799
    %7803 = vmatprep.subr.mxu0 0.0
    %7804 = vmatpush1.xpose.msra.mxu0 0.0
    %7805 = vmatprep.subr.mxu0 0.0
    %7806 = vmatpush1.xpose.msra.mxu0 0.0
    %7807 = vmatprep.subr.mxu0 0.0
    %7808 = vmatpush1.xpose.msra.mxu0 0.0
    %7809 = vmatprep.subr.mxu0 0.0
    %7810 = vmatpush1.xpose.msra.mxu0 0.0
    %7811 = vmatprep.subr.mxu0 0.0
    %7812 = vmatpush1.xpose.msra.mxu0 0.0
    %7813 = vmatprep.subr.mxu0 0.0
    %7814 = vmatpush1.xpose.msra.mxu0 0.0
    %7815 = vmatprep.subr.mxu0 0.0
    %7816 = vmatpush1.xpose.msra.mxu0 0.0
    %7817 = vmatprep.subr.mxu0 0.0
    %7818 = vmatpush1.xpose.msra.mxu0 0.0
    %7819 = vmatprep.subr.mxu0 0.0
    %7820 = vmatpush1.xpose.msra.mxu0 0.0
    %7821 = vmatprep.subr.mxu0 0.0
    %7822 = vmatpush1.xpose.msra.mxu0 0.0
    %7823 = vmatprep.subr.mxu0 0.0
    %7824 = vmatpush1.xpose.msra.mxu0 0.0
    %7825 = vmatprep.subr.mxu0 0.0
    %7826 = vmatpush1.xpose.msra.mxu0 0.0
    %7827 = vmatprep.subr.mxu0 0.0
    %7828 = vmatpush1.xpose.msra.mxu0 0.0
    %7829 = vmatprep.subr.mxu0 0.0
    %7830 = vmatpush1.xpose.msra.mxu0 0.0
    %7831 = vmatprep.subr.mxu0 0.0
    %7832 = vmatpush1.xpose.msra.mxu0 0.0
    %7833 = vmatprep.subr.mxu0 0.0
    %7834 = vmatpush1.xpose.msra.mxu0 0.0
    %7835 = vmatprep.subr.mxu0 0.0
    %7836 = vmatpush1.xpose.msra.mxu0 0.0
    %7837 = vmatprep.subr.mxu0 0.0
    %7838 = vmatpush1.xpose.msra.mxu0 0.0
    %7839 = vmatprep.subr.mxu0 0.0
    %7840 = vmatpush1.xpose.msra.mxu0 0.0
    %7841 = vmatprep.subr.mxu0 0.0
    %7842 = vmatpush1.xpose.msra.mxu0 0.0
    %7843 = vmatprep.subr.mxu0 0.0
    %7844 = vmatpush1.xpose.msra.mxu0 0.0
    %7845 = vmatprep.subr.mxu0 0.0
    %7846 = vmatpush1.xpose.msra.mxu0 0.0
    %7847 = vmatprep.subr.mxu0 0.0
    %7848 = vmatpush1.xpose.msra.mxu0 0.0
    %7849 = vmatprep.subr.mxu0 0.0
    %7850 = vmatpush1.xpose.msra.mxu0 0.0
    %7851 = vmatprep.subr.mxu0 0.0
    %7852 = vmatpush1.xpose.msra.mxu0 0.0
    %7853 = vmatprep.subr.mxu0 0.0
    %7854 = vmatpush1.xpose.msra.mxu0 0.0
    %7855 = vmatprep.subr.mxu0 0.0
    %7856 = vmatpush1.xpose.msra.mxu0 0.0
    %7857 = vmatprep.subr.mxu0 0.0
    %7858 = vmatpush1.xpose.msra.mxu0 0.0
    %7859 = vmatprep.subr.mxu0 0.0
    %7860 = vmatpush1.xpose.msra.mxu0 0.0
    %7861 = vmatprep.subr.mxu0 0.0
    %7862 = vmatpush1.xpose.msra.mxu0 0.0
    %7863 = vmatprep.subr.mxu0 0.0
    %7864 = vmatpush1.xpose.msra.mxu0 0.0
    %7865 = vmatprep.mubr.f32.mxu0 0.0
    %7866 = vmatmul.mubr.f32.gmra.mrb[0].mxu0 %v7796
    %v7867 = vpop.f32.mrb[0].mxu0
    %v7868 = vadd.f32 0.0, %v7867
    %v7869 = vpop.f32.mrb[0].mxu0
    %7870 = vdwg.mxu0
    %v7872 = vsel %vm3725, %v7157, 0
    %v7875 = vsel %vm3725, %v7397, 0
    %7877 = vmatprep.subr.mxu0 0.0
    %7878 = vmatpush1.xpose.msra.mxu0 %v7875
    %7879 = vmatprep.subr.mxu0 0.0
    %7880 = vmatpush1.xpose.msra.mxu0 0.0
    %7881 = vmatprep.subr.mxu0 0.0
    %7882 = vmatpush1.xpose.msra.mxu0 0.0
    %7883 = vmatprep.subr.mxu0 0.0
    %7884 = vmatpush1.xpose.msra.mxu0 0.0
    %7885 = vmatprep.subr.mxu0 0.0
    %7886 = vmatpush1.xpose.msra.mxu0 0.0
    %7887 = vmatprep.subr.mxu0 0.0
    %7888 = vmatpush1.xpose.msra.mxu0 0.0
    %7889 = vmatprep.subr.mxu0 0.0
    %7890 = vmatpush1.xpose.msra.mxu0 0.0
    %7891 = vmatprep.subr.mxu0 0.0
    %7892 = vmatpush1.xpose.msra.mxu0 0.0
    %7893 = vmatprep.subr.mxu0 0.0
    %7894 = vmatpush1.xpose.msra.mxu0 0.0
    %7895 = vmatprep.subr.mxu0 0.0
    %7896 = vmatpush1.xpose.msra.mxu0 0.0
    %7897 = vmatprep.subr.mxu0 0.0
    %7898 = vmatpush1.xpose.msra.mxu0 0.0
    %7899 = vmatprep.subr.mxu0 0.0
    %7900 = vmatpush1.xpose.msra.mxu0 0.0
    %7901 = vmatprep.subr.mxu0 0.0
    %7902 = vmatpush1.xpose.msra.mxu0 0.0
    %7903 = vmatprep.subr.mxu0 0.0
    %7904 = vmatpush1.xpose.msra.mxu0 0.0
    %7905 = vmatprep.subr.mxu0 0.0
    %7906 = vmatpush1.xpose.msra.mxu0 0.0
    %7907 = vmatprep.subr.mxu0 0.0
    %7908 = vmatpush1.xpose.msra.mxu0 0.0
    %7909 = vmatprep.subr.mxu0 0.0
    %7910 = vmatpush1.xpose.msra.mxu0 0.0
    %7911 = vmatprep.subr.mxu0 0.0
    %7912 = vmatpush1.xpose.msra.mxu0 0.0
    %7913 = vmatprep.subr.mxu0 0.0
    %7914 = vmatpush1.xpose.msra.mxu0 0.0
    %7915 = vmatprep.subr.mxu0 0.0
    %7916 = vmatpush1.xpose.msra.mxu0 0.0
    %7917 = vmatprep.subr.mxu0 0.0
    %7918 = vmatpush1.xpose.msra.mxu0 0.0
    %7919 = vmatprep.subr.mxu0 0.0
    %7920 = vmatpush1.xpose.msra.mxu0 0.0
    %7921 = vmatprep.subr.mxu0 0.0
    %7922 = vmatpush1.xpose.msra.mxu0 0.0
    %7923 = vmatprep.subr.mxu0 0.0
    %7924 = vmatpush1.xpose.msra.mxu0 0.0
    %7925 = vmatprep.subr.mxu0 0.0
    %7926 = vmatpush1.xpose.msra.mxu0 0.0
    %7927 = vmatprep.subr.mxu0 0.0
    %7928 = vmatpush1.xpose.msra.mxu0 0.0
    %7929 = vmatprep.subr.mxu0 0.0
    %7930 = vmatpush1.xpose.msra.mxu0 0.0
    %7931 = vmatprep.subr.mxu0 0.0
    %7932 = vmatpush1.xpose.msra.mxu0 0.0
    %7933 = vmatprep.subr.mxu0 0.0
    %7934 = vmatpush1.xpose.msra.mxu0 0.0
    %7935 = vmatprep.subr.mxu0 0.0
    %7936 = vmatpush1.xpose.msra.mxu0 0.0
    %7937 = vmatprep.subr.mxu0 0.0
    %7938 = vmatpush1.xpose.msra.mxu0 0.0
    %7939 = vmatprep.subr.mxu0 0.0
    %7940 = vmatpush1.xpose.msra.mxu0 0.0
    %7941 = vmatprep.mubr.f32.mxu0 0.0
    %7942 = vmatmul.mubr.f32.gmra.mrb[0].mxu0 %v7872
    %v7943 = vpop.f32.mrb[0].mxu0
    %v7944 = vadd.f32 0.0, %v7943
    %v7945 = vpop.f32.mrb[0].mxu0
    %7946 = vdwg.mxu0
    %v7948 = vsel %vm3725, %v7158, 0
    %v7951 = vsel %vm3725, %v7398, 0
    %7953 = vmatprep.subr.mxu0 0.0
    %7954 = vmatpush1.xpose.msra.mxu0 %v7951
    %7955 = vmatprep.subr.mxu0 0.0
    %7956 = vmatpush1.xpose.msra.mxu0 0.0
    %7957 = vmatprep.subr.mxu0 0.0
    %7958 = vmatpush1.xpose.msra.mxu0 0.0
    %7959 = vmatprep.subr.mxu0 0.0
    %7960 = vmatpush1.xpose.msra.mxu0 0.0
    %7961 = vmatprep.subr.mxu0 0.0
    %7962 = vmatpush1.xpose.msra.mxu0 0.0
    %7963 = vmatprep.subr.mxu0 0.0
    %7964 = vmatpush1.xpose.msra.mxu0 0.0
    %7965 = vmatprep.subr.mxu0 0.0
    %7966 = vmatpush1.xpose.msra.mxu0 0.0
    %7967 = vmatprep.subr.mxu0 0.0
    %7968 = vmatpush1.xpose.msra.mxu0 0.0
    %7969 = vmatprep.subr.mxu0 0.0
    %7970 = vmatpush1.xpose.msra.mxu0 0.0
    %7971 = vmatprep.subr.mxu0 0.0
    %7972 = vmatpush1.xpose.msra.mxu0 0.0
    %7973 = vmatprep.subr.mxu0 0.0
    %7974 = vmatpush1.xpose.msra.mxu0 0.0
    %7975 = vmatprep.subr.mxu0 0.0
    %7976 = vmatpush1.xpose.msra.mxu0 0.0
    %7977 = vmatprep.subr.mxu0 0.0
    %7978 = vmatpush1.xpose.msra.mxu0 0.0
    %7979 = vmatprep.subr.mxu0 0.0
    %7980 = vmatpush1.xpose.msra.mxu0 0.0
    %7981 = vmatprep.subr.mxu0 0.0
    %7982 = vmatpush1.xpose.msra.mxu0 0.0
    %7983 = vmatprep.subr.mxu0 0.0
    %7984 = vmatpush1.xpose.msra.mxu0 0.0
    %7985 = vmatprep.subr.mxu0 0.0
    %7986 = vmatpush1.xpose.msra.mxu0 0.0
    %7987 = vmatprep.subr.mxu0 0.0
    %7988 = vmatpush1.xpose.msra.mxu0 0.0
    %7989 = vmatprep.subr.mxu0 0.0
    %7990 = vmatpush1.xpose.msra.mxu0 0.0
    %7991 = vmatprep.subr.mxu0 0.0
    %7992 = vmatpush1.xpose.msra.mxu0 0.0
    %7993 = vmatprep.subr.mxu0 0.0
    %7994 = vmatpush1.xpose.msra.mxu0 0.0
    %7995 = vmatprep.subr.mxu0 0.0
    %7996 = vmatpush1.xpose.msra.mxu0 0.0
    %7997 = vmatprep.subr.mxu0 0.0
    %7998 = vmatpush1.xpose.msra.mxu0 0.0
    %7999 = vmatprep.subr.mxu0 0.0
    %8000 = vmatpush1.xpose.msra.mxu0 0.0
    %8001 = vmatprep.subr.mxu0 0.0
    %8002 = vmatpush1.xpose.msra.mxu0 0.0
    %8003 = vmatprep.subr.mxu0 0.0
    %8004 = vmatpush1.xpose.msra.mxu0 0.0
    %8005 = vmatprep.subr.mxu0 0.0
    %8006 = vmatpush1.xpose.msra.mxu0 0.0
    %8007 = vmatprep.subr.mxu0 0.0
    %8008 = vmatpush1.xpose.msra.mxu0 0.0
    %8009 = vmatprep.subr.mxu0 0.0
    %8010 = vmatpush1.xpose.msra.mxu0 0.0
    %8011 = vmatprep.subr.mxu0 0.0
    %8012 = vmatpush1.xpose.msra.mxu0 0.0
    %8013 = vmatprep.subr.mxu0 0.0
    %8014 = vmatpush1.xpose.msra.mxu0 0.0
    %8015 = vmatprep.subr.mxu0 0.0
    %8016 = vmatpush1.xpose.msra.mxu0 0.0
    %8017 = vmatprep.mubr.f32.mxu0 0.0
    %8018 = vmatmul.mubr.f32.gmra.mrb[0].mxu0 %v7948
    %v8019 = vpop.f32.mrb[0].mxu0
    %v8020 = vadd.f32 0.0, %v8019
    %v8021 = vpop.f32.mrb[0].mxu0
    %8022 = vdwg.mxu0
    %v8024 = vsel %vm3725, %v7159, 0
    %v8027 = vsel %vm3725, %v7399, 0
    %8029 = vmatprep.subr.mxu0 0.0
    %8030 = vmatpush1.xpose.msra.mxu0 %v8027
    %8031 = vmatprep.subr.mxu0 0.0
    %8032 = vmatpush1.xpose.msra.mxu0 0.0
    %8033 = vmatprep.subr.mxu0 0.0
    %8034 = vmatpush1.xpose.msra.mxu0 0.0
    %8035 = vmatprep.subr.mxu0 0.0
    %8036 = vmatpush1.xpose.msra.mxu0 0.0
    %8037 = vmatprep.subr.mxu0 0.0
    %8038 = vmatpush1.xpose.msra.mxu0 0.0
    %8039 = vmatprep.subr.mxu0 0.0
    %8040 = vmatpush1.xpose.msra.mxu0 0.0
    %8041 = vmatprep.subr.mxu0 0.0
    %8042 = vmatpush1.xpose.msra.mxu0 0.0
    %8043 = vmatprep.subr.mxu0 0.0
    %8044 = vmatpush1.xpose.msra.mxu0 0.0
    %8045 = vmatprep.subr.mxu0 0.0
    %8046 = vmatpush1.xpose.msra.mxu0 0.0
    %8047 = vmatprep.subr.mxu0 0.0
    %8048 = vmatpush1.xpose.msra.mxu0 0.0
    %8049 = vmatprep.subr.mxu0 0.0
    %8050 = vmatpush1.xpose.msra.mxu0 0.0
    %8051 = vmatprep.subr.mxu0 0.0
    %8052 = vmatpush1.xpose.msra.mxu0 0.0
    %8053 = vmatprep.subr.mxu0 0.0
    %8054 = vmatpush1.xpose.msra.mxu0 0.0
    %8055 = vmatprep.subr.mxu0 0.0
    %8056 = vmatpush1.xpose.msra.mxu0 0.0
    %8057 = vmatprep.subr.mxu0 0.0
    %8058 = vmatpush1.xpose.msra.mxu0 0.0
    %8059 = vmatprep.subr.mxu0 0.0
    %8060 = vmatpush1.xpose.msra.mxu0 0.0
    %8061 = vmatprep.subr.mxu0 0.0
    %8062 = vmatpush1.xpose.msra.mxu0 0.0
    %8063 = vmatprep.subr.mxu0 0.0
    %8064 = vmatpush1.xpose.msra.mxu0 0.0
    %8065 = vmatprep.subr.mxu0 0.0
    %8066 = vmatpush1.xpose.msra.mxu0 0.0
    %8067 = vmatprep.subr.mxu0 0.0
    %8068 = vmatpush1.xpose.msra.mxu0 0.0
    %8069 = vmatprep.subr.mxu0 0.0
    %8070 = vmatpush1.xpose.msra.mxu0 0.0
    %8071 = vmatprep.subr.mxu0 0.0
    %8072 = vmatpush1.xpose.msra.mxu0 0.0
    %8073 = vmatprep.subr.mxu0 0.0
    %8074 = vmatpush1.xpose.msra.mxu0 0.0
    %8075 = vmatprep.subr.mxu0 0.0
    %8076 = vmatpush1.xpose.msra.mxu0 0.0
    %8077 = vmatprep.subr.mxu0 0.0
    %8078 = vmatpush1.xpose.msra.mxu0 0.0
    %8079 = vmatprep.subr.mxu0 0.0
    %8080 = vmatpush1.xpose.msra.mxu0 0.0
    %8081 = vmatprep.subr.mxu0 0.0
    %8082 = vmatpush1.xpose.msra.mxu0 0.0
    %8083 = vmatprep.subr.mxu0 0.0
    %8084 = vmatpush1.xpose.msra.mxu0 0.0
    %8085 = vmatprep.subr.mxu0 0.0
    %8086 = vmatpush1.xpose.msra.mxu0 0.0
    %8087 = vmatprep.subr.mxu0 0.0
    %8088 = vmatpush1.xpose.msra.mxu0 0.0
    %8089 = vmatprep.subr.mxu0 0.0
    %8090 = vmatpush1.xpose.msra.mxu0 0.0
    %8091 = vmatprep.subr.mxu0 0.0
    %8092 = vmatpush1.xpose.msra.mxu0 0.0
    %8093 = vmatprep.mubr.f32.mxu0 0.0
    %8094 = vmatmul.mubr.f32.gmra.mrb[0].mxu0 %v8024
    %v8095 = vpop.f32.mrb[0].mxu0
    %v8096 = vadd.f32 0.0, %v8095
    %v8097 = vpop.f32.mrb[0].mxu0
    %8098 = vdwg.mxu0
    %v8100 = vsel %vm3725, %v7160, 0
    %v8103 = vsel %vm3725, %v7400, 0
    %8105 = vmatprep.subr.mxu0 0.0
    %8106 = vmatpush1.xpose.msra.mxu0 %v8103
    %8107 = vmatprep.subr.mxu0 0.0
    %8108 = vmatpush1.xpose.msra.mxu0 0.0
    %8109 = vmatprep.subr.mxu0 0.0
    %8110 = vmatpush1.xpose.msra.mxu0 0.0
    %8111 = vmatprep.subr.mxu0 0.0
    %8112 = vmatpush1.xpose.msra.mxu0 0.0
    %8113 = vmatprep.subr.mxu0 0.0
    %8114 = vmatpush1.xpose.msra.mxu0 0.0
    %8115 = vmatprep.subr.mxu0 0.0
    %8116 = vmatpush1.xpose.msra.mxu0 0.0
    %8117 = vmatprep.subr.mxu0 0.0
    %8118 = vmatpush1.xpose.msra.mxu0 0.0
    %8119 = vmatprep.subr.mxu0 0.0
    %8120 = vmatpush1.xpose.msra.mxu0 0.0
    %8121 = vmatprep.subr.mxu0 0.0
    %8122 = vmatpush1.xpose.msra.mxu0 0.0
    %8123 = vmatprep.subr.mxu0 0.0
    %8124 = vmatpush1.xpose.msra.mxu0 0.0
    %8125 = vmatprep.subr.mxu0 0.0
    %8126 = vmatpush1.xpose.msra.mxu0 0.0
    %8127 = vmatprep.subr.mxu0 0.0
    %8128 = vmatpush1.xpose.msra.mxu0 0.0
    %8129 = vmatprep.subr.mxu0 0.0
    %8130 = vmatpush1.xpose.msra.mxu0 0.0
    %8131 = vmatprep.subr.mxu0 0.0
    %8132 = vmatpush1.xpose.msra.mxu0 0.0
    %8133 = vmatprep.subr.mxu0 0.0
    %8134 = vmatpush1.xpose.msra.mxu0 0.0
    %8135 = vmatprep.subr.mxu0 0.0
    %8136 = vmatpush1.xpose.msra.mxu0 0.0
    %8137 = vmatprep.subr.mxu0 0.0
    %8138 = vmatpush1.xpose.msra.mxu0 0.0
    %8139 = vmatprep.subr.mxu0 0.0
    %8140 = vmatpush1.xpose.msra.mxu0 0.0
    %8141 = vmatprep.subr.mxu0 0.0
    %8142 = vmatpush1.xpose.msra.mxu0 0.0
    %8143 = vmatprep.subr.mxu0 0.0
    %8144 = vmatpush1.xpose.msra.mxu0 0.0
    %8145 = vmatprep.subr.mxu0 0.0
    %8146 = vmatpush1.xpose.msra.mxu0 0.0
    %8147 = vmatprep.subr.mxu0 0.0
    %8148 = vmatpush1.xpose.msra.mxu0 0.0
    %8149 = vmatprep.subr.mxu0 0.0
    %8150 = vmatpush1.xpose.msra.mxu0 0.0
    %8151 = vmatprep.subr.mxu0 0.0
    %8152 = vmatpush1.xpose.msra.mxu0 0.0
    %8153 = vmatprep.subr.mxu0 0.0
    %8154 = vmatpush1.xpose.msra.mxu0 0.0
    %8155 = vmatprep.subr.mxu0 0.0
    %8156 = vmatpush1.xpose.msra.mxu0 0.0
    %8157 = vmatprep.subr.mxu0 0.0
    %8158 = vmatpush1.xpose.msra.mxu0 0.0
    %8159 = vmatprep.subr.mxu0 0.0
    %8160 = vmatpush1.xpose.msra.mxu0 0.0
    %8161 = vmatprep.subr.mxu0 0.0
    %8162 = vmatpush1.xpose.msra.mxu0 0.0
    %8163 = vmatprep.subr.mxu0 0.0
    %8164 = vmatpush1.xpose.msra.mxu0 0.0
    %8165 = vmatprep.subr.mxu0 0.0
    %8166 = vmatpush1.xpose.msra.mxu0 0.0
    %8167 = vmatprep.subr.mxu0 0.0
    %8168 = vmatpush1.xpose.msra.mxu0 0.0
    %8169 = vmatprep.mubr.f32.mxu0 0.0
    %8170 = vmatmul.mubr.f32.gmra.mrb[0].mxu0 %v8100
    %v8171 = vpop.f32.mrb[0].mxu0
    %v8172 = vadd.f32 0.0, %v8171
    %v8173 = vpop.f32.mrb[0].mxu0
    %8174 = vdwg.mxu0
    %v8176 = vsel %vm3725, %v7161, 0
    %v8179 = vsel %vm3725, %v7401, 0
    %8181 = vmatprep.subr.mxu0 0.0
    %8182 = vmatpush1.xpose.msra.mxu0 %v8179
    %8183 = vmatprep.subr.mxu0 0.0
    %8184 = vmatpush1.xpose.msra.mxu0 0.0
    %8185 = vmatprep.subr.mxu0 0.0
    %8186 = vmatpush1.xpose.msra.mxu0 0.0
    %8187 = vmatprep.subr.mxu0 0.0
    %8188 = vmatpush1.xpose.msra.mxu0 0.0
    %8189 = vmatprep.subr.mxu0 0.0
    %8190 = vmatpush1.xpose.msra.mxu0 0.0
    %8191 = vmatprep.subr.mxu0 0.0
    %8192 = vmatpush1.xpose.msra.mxu0 0.0
    %8193 = vmatprep.subr.mxu0 0.0
    %8194 = vmatpush1.xpose.msra.mxu0 0.0
    %8195 = vmatprep.subr.mxu0 0.0
    %8196 = vmatpush1.xpose.msra.mxu0 0.0
    %8197 = vmatprep.subr.mxu0 0.0
    %8198 = vmatpush1.xpose.msra.mxu0 0.0
    %8199 = vmatprep.subr.mxu0 0.0
    %8200 = vmatpush1.xpose.msra.mxu0 0.0
    %8201 = vmatprep.subr.mxu0 0.0
    %8202 = vmatpush1.xpose.msra.mxu0 0.0
    %8203 = vmatprep.subr.mxu0 0.0
    %8204 = vmatpush1.xpose.msra.mxu0 0.0
    %8205 = vmatprep.subr.mxu0 0.0
    %8206 = vmatpush1.xpose.msra.mxu0 0.0
    %8207 = vmatprep.subr.mxu0 0.0
    %8208 = vmatpush1.xpose.msra.mxu0 0.0
    %8209 = vmatprep.subr.mxu0 0.0
    %8210 = vmatpush1.xpose.msra.mxu0 0.0
    %8211 = vmatprep.subr.mxu0 0.0
    %8212 = vmatpush1.xpose.msra.mxu0 0.0
    %8213 = vmatprep.subr.mxu0 0.0
    %8214 = vmatpush1.xpose.msra.mxu0 0.0
    %8215 = vmatprep.subr.mxu0 0.0
    %8216 = vmatpush1.xpose.msra.mxu0 0.0
    %8217 = vmatprep.subr.mxu0 0.0
    %8218 = vmatpush1.xpose.msra.mxu0 0.0
    %8219 = vmatprep.subr.mxu0 0.0
    %8220 = vmatpush1.xpose.msra.mxu0 0.0
    %8221 = vmatprep.subr.mxu0 0.0
    %8222 = vmatpush1.xpose.msra.mxu0 0.0
    %8223 = vmatprep.subr.mxu0 0.0
    %8224 = vmatpush1.xpose.msra.mxu0 0.0
    %8225 = vmatprep.subr.mxu0 0.0
    %8226 = vmatpush1.xpose.msra.mxu0 0.0
    %8227 = vmatprep.subr.mxu0 0.0
    %8228 = vmatpush1.xpose.msra.mxu0 0.0
    %8229 = vmatprep.subr.mxu0 0.0
    %8230 = vmatpush1.xpose.msra.mxu0 0.0
    %8231 = vmatprep.subr.mxu0 0.0
    %8232 = vmatpush1.xpose.msra.mxu0 0.0
    %8233 = vmatprep.subr.mxu0 0.0
    %8234 = vmatpush1.xpose.msra.mxu0 0.0
    %8235 = vmatprep.subr.mxu0 0.0
    %8236 = vmatpush1.xpose.msra.mxu0 0.0
    %8237 = vmatprep.subr.mxu0 0.0
    %8238 = vmatpush1.xpose.msra.mxu0 0.0
    %8239 = vmatprep.subr.mxu0 0.0
    %8240 = vmatpush1.xpose.msra.mxu0 0.0
    %8241 = vmatprep.subr.mxu0 0.0
    %8242 = vmatpush1.xpose.msra.mxu0 0.0
    %8243 = vmatprep.subr.mxu0 0.0
    %8244 = vmatpush1.xpose.msra.mxu0 0.0
    %8245 = vmatprep.mubr.f32.mxu0 0.0
    %8246 = vmatmul.mubr.f32.gmra.mrb[0].mxu0 %v8176
    %v8247 = vpop.f32.mrb[0].mxu0
    %v8248 = vadd.f32 0.0, %v8247
    %v8249 = vpop.f32.mrb[0].mxu0
    %8250 = vdwg.mxu0
    %v8252 = vsel %vm3725, %v7162, 0
    %v8255 = vsel %vm3725, %v7402, 0
    %8257 = vmatprep.subr.mxu0 0.0
    %8258 = vmatpush1.xpose.msra.mxu0 %v8255
    %8259 = vmatprep.subr.mxu0 0.0
    %8260 = vmatpush1.xpose.msra.mxu0 0.0
    %8261 = vmatprep.subr.mxu0 0.0
    %8262 = vmatpush1.xpose.msra.mxu0 0.0
    %8263 = vmatprep.subr.mxu0 0.0
    %8264 = vmatpush1.xpose.msra.mxu0 0.0
    %8265 = vmatprep.subr.mxu0 0.0
    %8266 = vmatpush1.xpose.msra.mxu0 0.0
    %8267 = vmatprep.subr.mxu0 0.0
    %8268 = vmatpush1.xpose.msra.mxu0 0.0
    %8269 = vmatprep.subr.mxu0 0.0
    %8270 = vmatpush1.xpose.msra.mxu0 0.0
    %8271 = vmatprep.subr.mxu0 0.0
    %8272 = vmatpush1.xpose.msra.mxu0 0.0
    %8273 = vmatprep.subr.mxu0 0.0
    %8274 = vmatpush1.xpose.msra.mxu0 0.0
    %8275 = vmatprep.subr.mxu0 0.0
    %8276 = vmatpush1.xpose.msra.mxu0 0.0
    %8277 = vmatprep.subr.mxu0 0.0
    %8278 = vmatpush1.xpose.msra.mxu0 0.0
    %8279 = vmatprep.subr.mxu0 0.0
    %8280 = vmatpush1.xpose.msra.mxu0 0.0
    %8281 = vmatprep.subr.mxu0 0.0
    %8282 = vmatpush1.xpose.msra.mxu0 0.0
    %8283 = vmatprep.subr.mxu0 0.0
    %8284 = vmatpush1.xpose.msra.mxu0 0.0
    %8285 = vmatprep.subr.mxu0 0.0
    %8286 = vmatpush1.xpose.msra.mxu0 0.0
    %8287 = vmatprep.subr.mxu0 0.0
    %8288 = vmatpush1.xpose.msra.mxu0 0.0
    %8289 = vmatprep.subr.mxu0 0.0
    %8290 = vmatpush1.xpose.msra.mxu0 0.0
    %8291 = vmatprep.subr.mxu0 0.0
    %8292 = vmatpush1.xpose.msra.mxu0 0.0
    %8293 = vmatprep.subr.mxu0 0.0
    %8294 = vmatpush1.xpose.msra.mxu0 0.0
    %8295 = vmatprep.subr.mxu0 0.0
    %8296 = vmatpush1.xpose.msra.mxu0 0.0
    %8297 = vmatprep.subr.mxu0 0.0
    %8298 = vmatpush1.xpose.msra.mxu0 0.0
    %8299 = vmatprep.subr.mxu0 0.0
    %8300 = vmatpush1.xpose.msra.mxu0 0.0
    %8301 = vmatprep.subr.mxu0 0.0
    %8302 = vmatpush1.xpose.msra.mxu0 0.0
    %8303 = vmatprep.subr.mxu0 0.0
    %8304 = vmatpush1.xpose.msra.mxu0 0.0
    %8305 = vmatprep.subr.mxu0 0.0
    %8306 = vmatpush1.xpose.msra.mxu0 0.0
    %8307 = vmatprep.subr.mxu0 0.0
    %8308 = vmatpush1.xpose.msra.mxu0 0.0
    %8309 = vmatprep.subr.mxu0 0.0
    %8310 = vmatpush1.xpose.msra.mxu0 0.0
    %8311 = vmatprep.subr.mxu0 0.0
    %8312 = vmatpush1.xpose.msra.mxu0 0.0
    %8313 = vmatprep.subr.mxu0 0.0
    %8314 = vmatpush1.xpose.msra.mxu0 0.0
    %8315 = vmatprep.subr.mxu0 0.0
    %8316 = vmatpush1.xpose.msra.mxu0 0.0
    %8317 = vmatprep.subr.mxu0 0.0
    %8318 = vmatpush1.xpose.msra.mxu0 0.0
    %8319 = vmatprep.subr.mxu0 0.0
    %8320 = vmatpush1.xpose.msra.mxu0 0.0
    %8321 = vmatprep.mubr.f32.mxu0 0.0
    %8322 = vmatmul.mubr.f32.gmra.mrb[0].mxu0 %v8252
    %v8323 = vpop.f32.mrb[0].mxu0
    %v8324 = vadd.f32 0.0, %v8323
    %v8325 = vpop.f32.mrb[0].mxu0
    %8326 = vdwg.mxu0
    %v8328 = vsel %vm3725, %v7163, 0
    %v8331 = vsel %vm3725, %v7403, 0
    %8333 = vmatprep.subr.mxu0 0.0
    %8334 = vmatpush1.xpose.msra.mxu0 %v8331
    %8335 = vmatprep.subr.mxu0 0.0
    %8336 = vmatpush1.xpose.msra.mxu0 0.0
    %8337 = vmatprep.subr.mxu0 0.0
    %8338 = vmatpush1.xpose.msra.mxu0 0.0
    %8339 = vmatprep.subr.mxu0 0.0
    %8340 = vmatpush1.xpose.msra.mxu0 0.0
    %8341 = vmatprep.subr.mxu0 0.0
    %8342 = vmatpush1.xpose.msra.mxu0 0.0
    %8343 = vmatprep.subr.mxu0 0.0
    %8344 = vmatpush1.xpose.msra.mxu0 0.0
    %8345 = vmatprep.subr.mxu0 0.0
    %8346 = vmatpush1.xpose.msra.mxu0 0.0
    %8347 = vmatprep.subr.mxu0 0.0
    %8348 = vmatpush1.xpose.msra.mxu0 0.0
    %8349 = vmatprep.subr.mxu0 0.0
    %8350 = vmatpush1.xpose.msra.mxu0 0.0
    %8351 = vmatprep.subr.mxu0 0.0
    %8352 = vmatpush1.xpose.msra.mxu0 0.0
    %8353 = vmatprep.subr.mxu0 0.0
    %8354 = vmatpush1.xpose.msra.mxu0 0.0
    %8355 = vmatprep.subr.mxu0 0.0
    %8356 = vmatpush1.xpose.msra.mxu0 0.0
    %8357 = vmatprep.subr.mxu0 0.0
    %8358 = vmatpush1.xpose.msra.mxu0 0.0
    %8359 = vmatprep.subr.mxu0 0.0
    %8360 = vmatpush1.xpose.msra.mxu0 0.0
    %8361 = vmatprep.subr.mxu0 0.0
    %8362 = vmatpush1.xpose.msra.mxu0 0.0
    %8363 = vmatprep.subr.mxu0 0.0
    %8364 = vmatpush1.xpose.msra.mxu0 0.0
    %8365 = vmatprep.subr.mxu0 0.0
    %8366 = vmatpush1.xpose.msra.mxu0 0.0
    %8367 = vmatprep.subr.mxu0 0.0
    %8368 = vmatpush1.xpose.msra.mxu0 0.0
    %8369 = vmatprep.subr.mxu0 0.0
    %8370 = vmatpush1.xpose.msra.mxu0 0.0
    %8371 = vmatprep.subr.mxu0 0.0
    %8372 = vmatpush1.xpose.msra.mxu0 0.0
    %8373 = vmatprep.subr.mxu0 0.0
    %8374 = vmatpush1.xpose.msra.mxu0 0.0
    %8375 = vmatprep.subr.mxu0 0.0
    %8376 = vmatpush1.xpose.msra.mxu0 0.0
    %8377 = vmatprep.subr.mxu0 0.0
    %8378 = vmatpush1.xpose.msra.mxu0 0.0
    %8379 = vmatprep.subr.mxu0 0.0
    %8380 = vmatpush1.xpose.msra.mxu0 0.0
    %8381 = vmatprep.subr.mxu0 0.0
    %8382 = vmatpush1.xpose.msra.mxu0 0.0
    %8383 = vmatprep.subr.mxu0 0.0
    %8384 = vmatpush1.xpose.msra.mxu0 0.0
    %8385 = vmatprep.subr.mxu0 0.0
    %8386 = vmatpush1.xpose.msra.mxu0 0.0
    %8387 = vmatprep.subr.mxu0 0.0
    %8388 = vmatpush1.xpose.msra.mxu0 0.0
    %8389 = vmatprep.subr.mxu0 0.0
    %8390 = vmatpush1.xpose.msra.mxu0 0.0
    %8391 = vmatprep.subr.mxu0 0.0
    %8392 = vmatpush1.xpose.msra.mxu0 0.0
    %8393 = vmatprep.subr.mxu0 0.0
    %8394 = vmatpush1.xpose.msra.mxu0 0.0
    %8395 = vmatprep.subr.mxu0 0.0
    %8396 = vmatpush1.xpose.msra.mxu0 0.0
    %8397 = vmatprep.mubr.f32.mxu0 0.0
    %8398 = vmatmul.mubr.f32.gmra.mrb[0].mxu0 %v8328
    %v8399 = vpop.f32.mrb[0].mxu0
    %v8400 = vadd.f32 0.0, %v8399
    %v8401 = vpop.f32.mrb[0].mxu0
    %8402 = vdwg.mxu0
    %v8404 = vsel %vm3725, %v7164, 0
    %v8407 = vsel %vm3725, %v7404, 0
    %8409 = vmatprep.subr.mxu0 0.0
    %8410 = vmatpush1.xpose.msra.mxu0 %v8407
    %8411 = vmatprep.subr.mxu0 0.0
    %8412 = vmatpush1.xpose.msra.mxu0 0.0
    %8413 = vmatprep.subr.mxu0 0.0
    %8414 = vmatpush1.xpose.msra.mxu0 0.0
    %8415 = vmatprep.subr.mxu0 0.0
    %8416 = vmatpush1.xpose.msra.mxu0 0.0
    %8417 = vmatprep.subr.mxu0 0.0
    %8418 = vmatpush1.xpose.msra.mxu0 0.0
    %8419 = vmatprep.subr.mxu0 0.0
    %8420 = vmatpush1.xpose.msra.mxu0 0.0
    %8421 = vmatprep.subr.mxu0 0.0
    %8422 = vmatpush1.xpose.msra.mxu0 0.0
    %8423 = vmatprep.subr.mxu0 0.0
    %8424 = vmatpush1.xpose.msra.mxu0 0.0
    %8425 = vmatprep.subr.mxu0 0.0
    %8426 = vmatpush1.xpose.msra.mxu0 0.0
    %8427 = vmatprep.subr.mxu0 0.0
    %8428 = vmatpush1.xpose.msra.mxu0 0.0
    %8429 = vmatprep.subr.mxu0 0.0
    %8430 = vmatpush1.xpose.msra.mxu0 0.0
    %8431 = vmatprep.subr.mxu0 0.0
    %8432 = vmatpush1.xpose.msra.mxu0 0.0
    %8433 = vmatprep.subr.mxu0 0.0
    %8434 = vmatpush1.xpose.msra.mxu0 0.0
    %8435 = vmatprep.subr.mxu0 0.0
    %8436 = vmatpush1.xpose.msra.mxu0 0.0
    %8437 = vmatprep.subr.mxu0 0.0
    %8438 = vmatpush1.xpose.msra.mxu0 0.0
    %8439 = vmatprep.subr.mxu0 0.0
    %8440 = vmatpush1.xpose.msra.mxu0 0.0
    %8441 = vmatprep.subr.mxu0 0.0
    %8442 = vmatpush1.xpose.msra.mxu0 0.0
    %8443 = vmatprep.subr.mxu0 0.0
    %8444 = vmatpush1.xpose.msra.mxu0 0.0
    %8445 = vmatprep.subr.mxu0 0.0
    %8446 = vmatpush1.xpose.msra.mxu0 0.0
    %8447 = vmatprep.subr.mxu0 0.0
    %8448 = vmatpush1.xpose.msra.mxu0 0.0
    %8449 = vmatprep.subr.mxu0 0.0
    %8450 = vmatpush1.xpose.msra.mxu0 0.0
    %8451 = vmatprep.subr.mxu0 0.0
    %8452 = vmatpush1.xpose.msra.mxu0 0.0
    %8453 = vmatprep.subr.mxu0 0.0
    %8454 = vmatpush1.xpose.msra.mxu0 0.0
    %8455 = vmatprep.subr.mxu0 0.0
    %8456 = vmatpush1.xpose.msra.mxu0 0.0
    %8457 = vmatprep.subr.mxu0 0.0
    %8458 = vmatpush1.xpose.msra.mxu0 0.0
    %8459 = vmatprep.subr.mxu0 0.0
    %8460 = vmatpush1.xpose.msra.mxu0 0.0
    %8461 = vmatprep.subr.mxu0 0.0
    %8462 = vmatpush1.xpose.msra.mxu0 0.0
    %8463 = vmatprep.subr.mxu0 0.0
    %8464 = vmatpush1.xpose.msra.mxu0 0.0
    %8465 = vmatprep.subr.mxu0 0.0
    %8466 = vmatpush1.xpose.msra.mxu0 0.0
    %8467 = vmatprep.subr.mxu0 0.0
    %8468 = vmatpush1.xpose.msra.mxu0 0.0
    %8469 = vmatprep.subr.mxu0 0.0
    %8470 = vmatpush1.xpose.msra.mxu0 0.0
    %8471 = vmatprep.subr.mxu0 0.0
    %8472 = vmatpush1.xpose.msra.mxu0 0.0
    %8473 = vmatprep.mubr.f32.mxu0 0.0
    %8474 = vmatmul.mubr.f32.gmra.mrb[0].mxu0 %v8404
    %v8475 = vpop.f32.mrb[0].mxu0
    %v8476 = vadd.f32 0.0, %v8475
    %v8477 = vpop.f32.mrb[0].mxu0
    %8478 = vdwg.mxu0
    %v8480 = vsel %vm3725, %v7165, 0
    %v8483 = vsel %vm3725, %v7405, 0
    %8485 = vmatprep.subr.mxu0 0.0
    %8486 = vmatpush1.xpose.msra.mxu0 %v8483
    %8487 = vmatprep.subr.mxu0 0.0
    %8488 = vmatpush1.xpose.msra.mxu0 0.0
    %8489 = vmatprep.subr.mxu0 0.0
    %8490 = vmatpush1.xpose.msra.mxu0 0.0
    %8491 = vmatprep.subr.mxu0 0.0
    %8492 = vmatpush1.xpose.msra.mxu0 0.0
    %8493 = vmatprep.subr.mxu0 0.0
    %8494 = vmatpush1.xpose.msra.mxu0 0.0
    %8495 = vmatprep.subr.mxu0 0.0
    %8496 = vmatpush1.xpose.msra.mxu0 0.0
    %8497 = vmatprep.subr.mxu0 0.0
    %8498 = vmatpush1.xpose.msra.mxu0 0.0
    %8499 = vmatprep.subr.mxu0 0.0
    %8500 = vmatpush1.xpose.msra.mxu0 0.0
    %8501 = vmatprep.subr.mxu0 0.0
    %8502 = vmatpush1.xpose.msra.mxu0 0.0
    %8503 = vmatprep.subr.mxu0 0.0
    %8504 = vmatpush1.xpose.msra.mxu0 0.0
    %8505 = vmatprep.subr.mxu0 0.0
    %8506 = vmatpush1.xpose.msra.mxu0 0.0
    %8507 = vmatprep.subr.mxu0 0.0
    %8508 = vmatpush1.xpose.msra.mxu0 0.0
    %8509 = vmatprep.subr.mxu0 0.0
    %8510 = vmatpush1.xpose.msra.mxu0 0.0
    %8511 = vmatprep.subr.mxu0 0.0
    %8512 = vmatpush1.xpose.msra.mxu0 0.0
    %8513 = vmatprep.subr.mxu0 0.0
    %8514 = vmatpush1.xpose.msra.mxu0 0.0
    %8515 = vmatprep.subr.mxu0 0.0
    %8516 = vmatpush1.xpose.msra.mxu0 0.0
    %8517 = vmatprep.subr.mxu0 0.0
    %8518 = vmatpush1.xpose.msra.mxu0 0.0
    %8519 = vmatprep.subr.mxu0 0.0
    %8520 = vmatpush1.xpose.msra.mxu0 0.0
    %8521 = vmatprep.subr.mxu0 0.0
    %8522 = vmatpush1.xpose.msra.mxu0 0.0
    %8523 = vmatprep.subr.mxu0 0.0
    %8524 = vmatpush1.xpose.msra.mxu0 0.0
    %8525 = vmatprep.subr.mxu0 0.0
    %8526 = vmatpush1.xpose.msra.mxu0 0.0
    %8527 = vmatprep.subr.mxu0 0.0
    %8528 = vmatpush1.xpose.msra.mxu0 0.0
    %8529 = vmatprep.subr.mxu0 0.0
    %8530 = vmatpush1.xpose.msra.mxu0 0.0
    %8531 = vmatprep.subr.mxu0 0.0
    %8532 = vmatpush1.xpose.msra.mxu0 0.0
    %8533 = vmatprep.subr.mxu0 0.0
    %8534 = vmatpush1.xpose.msra.mxu0 0.0
    %8535 = vmatprep.subr.mxu0 0.0
    %8536 = vmatpush1.xpose.msra.mxu0 0.0
    %8537 = vmatprep.subr.mxu0 0.0
    %8538 = vmatpush1.xpose.msra.mxu0 0.0
    %8539 = vmatprep.subr.mxu0 0.0
    %8540 = vmatpush1.xpose.msra.mxu0 0.0
    %8541 = vmatprep.subr.mxu0 0.0
    %8542 = vmatpush1.xpose.msra.mxu0 0.0
    %8543 = vmatprep.subr.mxu0 0.0
    %8544 = vmatpush1.xpose.msra.mxu0 0.0
    %8545 = vmatprep.subr.mxu0 0.0
    %8546 = vmatpush1.xpose.msra.mxu0 0.0
    %8547 = vmatprep.subr.mxu0 0.0
    %8548 = vmatpush1.xpose.msra.mxu0 0.0
    %8549 = vmatprep.mubr.f32.mxu0 0.0
    %8550 = vmatmul.mubr.f32.gmra.mrb[0].mxu0 %v8480
    %v8551 = vpop.f32.mrb[0].mxu0
    %v8552 = vadd.f32 0.0, %v8551
    %v8553 = vpop.f32.mrb[0].mxu0
    %8554 = vdwg.mxu0
    %v8556 = vsel %vm3725, %v7166, 0
    %v8559 = vsel %vm3725, %v7406, 0
    %8561 = vmatprep.subr.mxu0 0.0
    %8562 = vmatpush1.xpose.msra.mxu0 %v8559
    %8563 = vmatprep.subr.mxu0 0.0
    %8564 = vmatpush1.xpose.msra.mxu0 0.0
    %8565 = vmatprep.subr.mxu0 0.0
    %8566 = vmatpush1.xpose.msra.mxu0 0.0
    %8567 = vmatprep.subr.mxu0 0.0
    %8568 = vmatpush1.xpose.msra.mxu0 0.0
    %8569 = vmatprep.subr.mxu0 0.0
    %8570 = vmatpush1.xpose.msra.mxu0 0.0
    %8571 = vmatprep.subr.mxu0 0.0
    %8572 = vmatpush1.xpose.msra.mxu0 0.0
    %8573 = vmatprep.subr.mxu0 0.0
    %8574 = vmatpush1.xpose.msra.mxu0 0.0
    %8575 = vmatprep.subr.mxu0 0.0
    %8576 = vmatpush1.xpose.msra.mxu0 0.0
    %8577 = vmatprep.subr.mxu0 0.0
    %8578 = vmatpush1.xpose.msra.mxu0 0.0
    %8579 = vmatprep.subr.mxu0 0.0
    %8580 = vmatpush1.xpose.msra.mxu0 0.0
    %8581 = vmatprep.subr.mxu0 0.0
    %8582 = vmatpush1.xpose.msra.mxu0 0.0
    %8583 = vmatprep.subr.mxu0 0.0
    %8584 = vmatpush1.xpose.msra.mxu0 0.0
    %8585 = vmatprep.subr.mxu0 0.0
    %8586 = vmatpush1.xpose.msra.mxu0 0.0
    %8587 = vmatprep.subr.mxu0 0.0
    %8588 = vmatpush1.xpose.msra.mxu0 0.0
    %8589 = vmatprep.subr.mxu0 0.0
    %8590 = vmatpush1.xpose.msra.mxu0 0.0
    %8591 = vmatprep.subr.mxu0 0.0
    %8592 = vmatpush1.xpose.msra.mxu0 0.0
    %8593 = vmatprep.subr.mxu0 0.0
    %8594 = vmatpush1.xpose.msra.mxu0 0.0
    %8595 = vmatprep.subr.mxu0 0.0
    %8596 = vmatpush1.xpose.msra.mxu0 0.0
    %8597 = vmatprep.subr.mxu0 0.0
    %8598 = vmatpush1.xpose.msra.mxu0 0.0
    %8599 = vmatprep.subr.mxu0 0.0
    %8600 = vmatpush1.xpose.msra.mxu0 0.0
    %8601 = vmatprep.subr.mxu0 0.0
    %8602 = vmatpush1.xpose.msra.mxu0 0.0
    %8603 = vmatprep.subr.mxu0 0.0
    %8604 = vmatpush1.xpose.msra.mxu0 0.0
    %8605 = vmatprep.subr.mxu0 0.0
    %8606 = vmatpush1.xpose.msra.mxu0 0.0
    %8607 = vmatprep.subr.mxu0 0.0
    %8608 = vmatpush1.xpose.msra.mxu0 0.0
    %8609 = vmatprep.subr.mxu0 0.0
    %8610 = vmatpush1.xpose.msra.mxu0 0.0
    %8611 = vmatprep.subr.mxu0 0.0
    %8612 = vmatpush1.xpose.msra.mxu0 0.0
    %8613 = vmatprep.subr.mxu0 0.0
    %8614 = vmatpush1.xpose.msra.mxu0 0.0
    %8615 = vmatprep.subr.mxu0 0.0
    %8616 = vmatpush1.xpose.msra.mxu0 0.0
    %8617 = vmatprep.subr.mxu0 0.0
    %8618 = vmatpush1.xpose.msra.mxu0 0.0
    %8619 = vmatprep.subr.mxu0 0.0
    %8620 = vmatpush1.xpose.msra.mxu0 0.0
    %8621 = vmatprep.subr.mxu0 0.0
    %8622 = vmatpush1.xpose.msra.mxu0 0.0
    %8623 = vmatprep.subr.mxu0 0.0
    %8624 = vmatpush1.xpose.msra.mxu0 0.0
    %8625 = vmatprep.mubr.f32.mxu0 0.0
    %8626 = vmatmul.mubr.f32.gmra.mrb[0].mxu0 %v8556
    %v8627 = vpop.f32.mrb[0].mxu0
    %v8628 = vadd.f32 0.0, %v8627
    %v8629 = vpop.f32.mrb[0].mxu0
    %8630 = vdwg.mxu0
    %v8632 = vsel %vm3725, %v7167, 0
    %v8635 = vsel %vm3725, %v7407, 0
    %8637 = vmatprep.subr.mxu0 0.0
    %8638 = vmatpush1.xpose.msra.mxu0 %v8635
    %8639 = vmatprep.subr.mxu0 0.0
    %8640 = vmatpush1.xpose.msra.mxu0 0.0
    %8641 = vmatprep.subr.mxu0 0.0
    %8642 = vmatpush1.xpose.msra.mxu0 0.0
    %8643 = vmatprep.subr.mxu0 0.0
    %8644 = vmatpush1.xpose.msra.mxu0 0.0
    %8645 = vmatprep.subr.mxu0 0.0
    %8646 = vmatpush1.xpose.msra.mxu0 0.0
    %8647 = vmatprep.subr.mxu0 0.0
    %8648 = vmatpush1.xpose.msra.mxu0 0.0
    %8649 = vmatprep.subr.mxu0 0.0
    %8650 = vmatpush1.xpose.msra.mxu0 0.0
    %8651 = vmatprep.subr.mxu0 0.0
    %8652 = vmatpush1.xpose.msra.mxu0 0.0
    %8653 = vmatprep.subr.mxu0 0.0
    %8654 = vmatpush1.xpose.msra.mxu0 0.0
    %8655 = vmatprep.subr.mxu0 0.0
    %8656 = vmatpush1.xpose.msra.mxu0 0.0
    %8657 = vmatprep.subr.mxu0 0.0
    %8658 = vmatpush1.xpose.msra.mxu0 0.0
    %8659 = vmatprep.subr.mxu0 0.0
    %8660 = vmatpush1.xpose.msra.mxu0 0.0
    %8661 = vmatprep.subr.mxu0 0.0
    %8662 = vmatpush1.xpose.msra.mxu0 0.0
    %8663 = vmatprep.subr.mxu0 0.0
    %8664 = vmatpush1.xpose.msra.mxu0 0.0
    %8665 = vmatprep.subr.mxu0 0.0
    %8666 = vmatpush1.xpose.msra.mxu0 0.0
    %8667 = vmatprep.subr.mxu0 0.0
    %8668 = vmatpush1.xpose.msra.mxu0 0.0
    %8669 = vmatprep.subr.mxu0 0.0
    %8670 = vmatpush1.xpose.msra.mxu0 0.0
    %8671 = vmatprep.subr.mxu0 0.0
    %8672 = vmatpush1.xpose.msra.mxu0 0.0
    %8673 = vmatprep.subr.mxu0 0.0
    %8674 = vmatpush1.xpose.msra.mxu0 0.0
    %8675 = vmatprep.subr.mxu0 0.0
    %8676 = vmatpush1.xpose.msra.mxu0 0.0
    %8677 = vmatprep.subr.mxu0 0.0
    %8678 = vmatpush1.xpose.msra.mxu0 0.0
    %8679 = vmatprep.subr.mxu0 0.0
    %8680 = vmatpush1.xpose.msra.mxu0 0.0
    %8681 = vmatprep.subr.mxu0 0.0
    %8682 = vmatpush1.xpose.msra.mxu0 0.0
    %8683 = vmatprep.subr.mxu0 0.0
    %8684 = vmatpush1.xpose.msra.mxu0 0.0
    %8685 = vmatprep.subr.mxu0 0.0
    %8686 = vmatpush1.xpose.msra.mxu0 0.0
    %8687 = vmatprep.subr.mxu0 0.0
    %8688 = vmatpush1.xpose.msra.mxu0 0.0
    %8689 = vmatprep.subr.mxu0 0.0
    %8690 = vmatpush1.xpose.msra.mxu0 0.0
    %8691 = vmatprep.subr.mxu0 0.0
    %8692 = vmatpush1.xpose.msra.mxu0 0.0
    %8693 = vmatprep.subr.mxu0 0.0
    %8694 = vmatpush1.xpose.msra.mxu0 0.0
    %8695 = vmatprep.subr.mxu0 0.0
    %8696 = vmatpush1.xpose.msra.mxu0 0.0
    %8697 = vmatprep.subr.mxu0 0.0
    %8698 = vmatpush1.xpose.msra.mxu0 0.0
    %8699 = vmatprep.subr.mxu0 0.0
    %8700 = vmatpush1.xpose.msra.mxu0 0.0
    %8701 = vmatprep.mubr.f32.mxu0 0.0
    %8702 = vmatmul.mubr.f32.gmra.mrb[0].mxu0 %v8632
    %v8703 = vpop.f32.mrb[0].mxu0
    %v8704 = vadd.f32 0.0, %v8703
    %v8705 = vpop.f32.mrb[0].mxu0
    %8706 = vdwg.mxu0
    %v8708 = vsel %vm3725, %v7168, 0
    %v8711 = vsel %vm3725, %v7408, 0
    %8713 = vmatprep.subr.mxu0 0.0
    %8714 = vmatpush1.xpose.msra.mxu0 %v8711
    %8715 = vmatprep.subr.mxu0 0.0
    %8716 = vmatpush1.xpose.msra.mxu0 0.0
    %8717 = vmatprep.subr.mxu0 0.0
    %8718 = vmatpush1.xpose.msra.mxu0 0.0
    %8719 = vmatprep.subr.mxu0 0.0
    %8720 = vmatpush1.xpose.msra.mxu0 0.0
    %8721 = vmatprep.subr.mxu0 0.0
    %8722 = vmatpush1.xpose.msra.mxu0 0.0
    %8723 = vmatprep.subr.mxu0 0.0
    %8724 = vmatpush1.xpose.msra.mxu0 0.0
    %8725 = vmatprep.subr.mxu0 0.0
    %8726 = vmatpush1.xpose.msra.mxu0 0.0
    %8727 = vmatprep.subr.mxu0 0.0
    %8728 = vmatpush1.xpose.msra.mxu0 0.0
    %8729 = vmatprep.subr.mxu0 0.0
    %8730 = vmatpush1.xpose.msra.mxu0 0.0
    %8731 = vmatprep.subr.mxu0 0.0
    %8732 = vmatpush1.xpose.msra.mxu0 0.0
    %8733 = vmatprep.subr.mxu0 0.0
    %8734 = vmatpush1.xpose.msra.mxu0 0.0
    %8735 = vmatprep.subr.mxu0 0.0
    %8736 = vmatpush1.xpose.msra.mxu0 0.0
    %8737 = vmatprep.subr.mxu0 0.0
    %8738 = vmatpush1.xpose.msra.mxu0 0.0
    %8739 = vmatprep.subr.mxu0 0.0
    %8740 = vmatpush1.xpose.msra.mxu0 0.0
    %8741 = vmatprep.subr.mxu0 0.0
    %8742 = vmatpush1.xpose.msra.mxu0 0.0
    %8743 = vmatprep.subr.mxu0 0.0
    %8744 = vmatpush1.xpose.msra.mxu0 0.0
    %8745 = vmatprep.subr.mxu0 0.0
    %8746 = vmatpush1.xpose.msra.mxu0 0.0
    %8747 = vmatprep.subr.mxu0 0.0
    %8748 = vmatpush1.xpose.msra.mxu0 0.0
    %8749 = vmatprep.subr.mxu0 0.0
    %8750 = vmatpush1.xpose.msra.mxu0 0.0
    %8751 = vmatprep.subr.mxu0 0.0
    %8752 = vmatpush1.xpose.msra.mxu0 0.0
    %8753 = vmatprep.subr.mxu0 0.0
    %8754 = vmatpush1.xpose.msra.mxu0 0.0
    %8755 = vmatprep.subr.mxu0 0.0
    %8756 = vmatpush1.xpose.msra.mxu0 0.0
    %8757 = vmatprep.subr.mxu0 0.0
    %8758 = vmatpush1.xpose.msra.mxu0 0.0
    %8759 = vmatprep.subr.mxu0 0.0
    %8760 = vmatpush1.xpose.msra.mxu0 0.0
    %8761 = vmatprep.subr.mxu0 0.0
    %8762 = vmatpush1.xpose.msra.mxu0 0.0
    %8763 = vmatprep.subr.mxu0 0.0
    %8764 = vmatpush1.xpose.msra.mxu0 0.0
    %8765 = vmatprep.subr.mxu0 0.0
    %8766 = vmatpush1.xpose.msra.mxu0 0.0
    %8767 = vmatprep.subr.mxu0 0.0
    %8768 = vmatpush1.xpose.msra.mxu0 0.0
    %8769 = vmatprep.subr.mxu0 0.0
    %8770 = vmatpush1.xpose.msra.mxu0 0.0
    %8771 = vmatprep.subr.mxu0 0.0
    %8772 = vmatpush1.xpose.msra.mxu0 0.0
    %8773 = vmatprep.subr.mxu0 0.0
    %8774 = vmatpush1.xpose.msra.mxu0 0.0
    %8775 = vmatprep.subr.mxu0 0.0
    %8776 = vmatpush1.xpose.msra.mxu0 0.0
    %8777 = vmatprep.mubr.f32.mxu0 0.0
    %8778 = vmatmul.mubr.f32.gmra.mrb[0].mxu0 %v8708
    %v8779 = vpop.f32.mrb[0].mxu0
    %v8780 = vadd.f32 0.0, %v8779
    %v8781 = vpop.f32.mrb[0].mxu0
    %8782 = vdwg.mxu0
    %v8784 = vsel %vm3725, %v7169, 0
    %v8787 = vsel %vm3725, %v7409, 0
    %8789 = vmatprep.subr.mxu0 0.0
    %8790 = vmatpush1.xpose.msra.mxu0 %v8787
    %8791 = vmatprep.subr.mxu0 0.0
    %8792 = vmatpush1.xpose.msra.mxu0 0.0
    %8793 = vmatprep.subr.mxu0 0.0
    %8794 = vmatpush1.xpose.msra.mxu0 0.0
    %8795 = vmatprep.subr.mxu0 0.0
    %8796 = vmatpush1.xpose.msra.mxu0 0.0
    %8797 = vmatprep.subr.mxu0 0.0
    %8798 = vmatpush1.xpose.msra.mxu0 0.0
    %8799 = vmatprep.subr.mxu0 0.0
    %8800 = vmatpush1.xpose.msra.mxu0 0.0
    %8801 = vmatprep.subr.mxu0 0.0
    %8802 = vmatpush1.xpose.msra.mxu0 0.0
    %8803 = vmatprep.subr.mxu0 0.0
    %8804 = vmatpush1.xpose.msra.mxu0 0.0
    %8805 = vmatprep.subr.mxu0 0.0
    %8806 = vmatpush1.xpose.msra.mxu0 0.0
    %8807 = vmatprep.subr.mxu0 0.0
    %8808 = vmatpush1.xpose.msra.mxu0 0.0
    %8809 = vmatprep.subr.mxu0 0.0
    %8810 = vmatpush1.xpose.msra.mxu0 0.0
    %8811 = vmatprep.subr.mxu0 0.0
    %8812 = vmatpush1.xpose.msra.mxu0 0.0
    %8813 = vmatprep.subr.mxu0 0.0
    %8814 = vmatpush1.xpose.msra.mxu0 0.0
    %8815 = vmatprep.subr.mxu0 0.0
    %8816 = vmatpush1.xpose.msra.mxu0 0.0
    %8817 = vmatprep.subr.mxu0 0.0
    %8818 = vmatpush1.xpose.msra.mxu0 0.0
    %8819 = vmatprep.subr.mxu0 0.0
    %8820 = vmatpush1.xpose.msra.mxu0 0.0
    %8821 = vmatprep.subr.mxu0 0.0
    %8822 = vmatpush1.xpose.msra.mxu0 0.0
    %8823 = vmatprep.subr.mxu0 0.0
    %8824 = vmatpush1.xpose.msra.mxu0 0.0
    %8825 = vmatprep.subr.mxu0 0.0
    %8826 = vmatpush1.xpose.msra.mxu0 0.0
    %8827 = vmatprep.subr.mxu0 0.0
    %8828 = vmatpush1.xpose.msra.mxu0 0.0
    %8829 = vmatprep.subr.mxu0 0.0
    %8830 = vmatpush1.xpose.msra.mxu0 0.0
    %8831 = vmatprep.subr.mxu0 0.0
    %8832 = vmatpush1.xpose.msra.mxu0 0.0
    %8833 = vmatprep.subr.mxu0 0.0
    %8834 = vmatpush1.xpose.msra.mxu0 0.0
    %8835 = vmatprep.subr.mxu0 0.0
    %8836 = vmatpush1.xpose.msra.mxu0 0.0
    %8837 = vmatprep.subr.mxu0 0.0
    %8838 = vmatpush1.xpose.msra.mxu0 0.0
    %8839 = vmatprep.subr.mxu0 0.0
    %8840 = vmatpush1.xpose.msra.mxu0 0.0
    %8841 = vmatprep.subr.mxu0 0.0
    %8842 = vmatpush1.xpose.msra.mxu0 0.0
    %8843 = vmatprep.subr.mxu0 0.0
    %8844 = vmatpush1.xpose.msra.mxu0 0.0
    %8845 = vmatprep.subr.mxu0 0.0
    %8846 = vmatpush1.xpose.msra.mxu0 0.0
    %8847 = vmatprep.subr.mxu0 0.0
    %8848 = vmatpush1.xpose.msra.mxu0 0.0
    %8849 = vmatprep.subr.mxu0 0.0
    %8850 = vmatpush1.xpose.msra.mxu0 0.0
    %8851 = vmatprep.subr.mxu0 0.0
    %8852 = vmatpush1.xpose.msra.mxu0 0.0
    %8853 = vmatprep.mubr.f32.mxu0 0.0
    %8854 = vmatmul.mubr.f32.gmra.mrb[0].mxu0 %v8784
    %v8855 = vpop.f32.mrb[0].mxu0
    %v8856 = vadd.f32 0.0, %v8855
    %v8857 = vpop.f32.mrb[0].mxu0
    %8858 = vdwg.mxu0
    %v8860 = vsel %vm3725, %v7170, 0
    %v8863 = vsel %vm3725, %v7410, 0
    %8865 = vmatprep.subr.mxu0 0.0
    %8866 = vmatpush1.xpose.msra.mxu0 %v8863
    %8867 = vmatprep.subr.mxu0 0.0
    %8868 = vmatpush1.xpose.msra.mxu0 0.0
    %8869 = vmatprep.subr.mxu0 0.0
    %8870 = vmatpush1.xpose.msra.mxu0 0.0
    %8871 = vmatprep.subr.mxu0 0.0
    %8872 = vmatpush1.xpose.msra.mxu0 0.0
    %8873 = vmatprep.subr.mxu0 0.0
    %8874 = vmatpush1.xpose.msra.mxu0 0.0
    %8875 = vmatprep.subr.mxu0 0.0
    %8876 = vmatpush1.xpose.msra.mxu0 0.0
    %8877 = vmatprep.subr.mxu0 0.0
    %8878 = vmatpush1.xpose.msra.mxu0 0.0
    %8879 = vmatprep.subr.mxu0 0.0
    %8880 = vmatpush1.xpose.msra.mxu0 0.0
    %8881 = vmatprep.subr.mxu0 0.0
    %8882 = vmatpush1.xpose.msra.mxu0 0.0
    %8883 = vmatprep.subr.mxu0 0.0
    %8884 = vmatpush1.xpose.msra.mxu0 0.0
    %8885 = vmatprep.subr.mxu0 0.0
    %8886 = vmatpush1.xpose.msra.mxu0 0.0
    %8887 = vmatprep.subr.mxu0 0.0
    %8888 = vmatpush1.xpose.msra.mxu0 0.0
    %8889 = vmatprep.subr.mxu0 0.0
    %8890 = vmatpush1.xpose.msra.mxu0 0.0
    %8891 = vmatprep.subr.mxu0 0.0
    %8892 = vmatpush1.xpose.msra.mxu0 0.0
    %8893 = vmatprep.subr.mxu0 0.0
    %8894 = vmatpush1.xpose.msra.mxu0 0.0
    %8895 = vmatprep.subr.mxu0 0.0
    %8896 = vmatpush1.xpose.msra.mxu0 0.0
    %8897 = vmatprep.subr.mxu0 0.0
    %8898 = vmatpush1.xpose.msra.mxu0 0.0
    %8899 = vmatprep.subr.mxu0 0.0
    %8900 = vmatpush1.xpose.msra.mxu0 0.0
    %8901 = vmatprep.subr.mxu0 0.0
    %8902 = vmatpush1.xpose.msra.mxu0 0.0
    %8903 = vmatprep.subr.mxu0 0.0
    %8904 = vmatpush1.xpose.msra.mxu0 0.0
    %8905 = vmatprep.subr.mxu0 0.0
    %8906 = vmatpush1.xpose.msra.mxu0 0.0
    %8907 = vmatprep.subr.mxu0 0.0
    %8908 = vmatpush1.xpose.msra.mxu0 0.0
    %8909 = vmatprep.subr.mxu0 0.0
    %8910 = vmatpush1.xpose.msra.mxu0 0.0
    %8911 = vmatprep.subr.mxu0 0.0
    %8912 = vmatpush1.xpose.msra.mxu0 0.0
    %8913 = vmatprep.subr.mxu0 0.0
    %8914 = vmatpush1.xpose.msra.mxu0 0.0
    %8915 = vmatprep.subr.mxu0 0.0
    %8916 = vmatpush1.xpose.msra.mxu0 0.0
    %8917 = vmatprep.subr.mxu0 0.0
    %8918 = vmatpush1.xpose.msra.mxu0 0.0
    %8919 = vmatprep.subr.mxu0 0.0
    %8920 = vmatpush1.xpose.msra.mxu0 0.0
    %8921 = vmatprep.subr.mxu0 0.0
    %8922 = vmatpush1.xpose.msra.mxu0 0.0
    %8923 = vmatprep.subr.mxu0 0.0
    %8924 = vmatpush1.xpose.msra.mxu0 0.0
    %8925 = vmatprep.subr.mxu0 0.0
    %8926 = vmatpush1.xpose.msra.mxu0 0.0
    %8927 = vmatprep.subr.mxu0 0.0
    %8928 = vmatpush1.xpose.msra.mxu0 0.0
    %8929 = vmatprep.mubr.f32.mxu0 0.0
    %8930 = vmatmul.mubr.f32.gmra.mrb[0].mxu0 %v8860
    %v8931 = vpop.f32.mrb[0].mxu0
    %v8932 = vadd.f32 0.0, %v8931
    %v8933 = vpop.f32.mrb[0].mxu0
    %8934 = vdwg.mxu0
    %v8936 = vsel %vm3725, %v7171, 0
    %v8939 = vsel %vm3725, %v7411, 0
    %8941 = vmatprep.subr.mxu0 0.0
    %8942 = vmatpush1.xpose.msra.mxu0 %v8939
    %8943 = vmatprep.subr.mxu0 0.0
    %8944 = vmatpush1.xpose.msra.mxu0 0.0
    %8945 = vmatprep.subr.mxu0 0.0
    %8946 = vmatpush1.xpose.msra.mxu0 0.0
    %8947 = vmatprep.subr.mxu0 0.0
    %8948 = vmatpush1.xpose.msra.mxu0 0.0
    %8949 = vmatprep.subr.mxu0 0.0
    %8950 = vmatpush1.xpose.msra.mxu0 0.0
    %8951 = vmatprep.subr.mxu0 0.0
    %8952 = vmatpush1.xpose.msra.mxu0 0.0
    %8953 = vmatprep.subr.mxu0 0.0
    %8954 = vmatpush1.xpose.msra.mxu0 0.0
    %8955 = vmatprep.subr.mxu0 0.0
    %8956 = vmatpush1.xpose.msra.mxu0 0.0
    %8957 = vmatprep.subr.mxu0 0.0
    %8958 = vmatpush1.xpose.msra.mxu0 0.0
    %8959 = vmatprep.subr.mxu0 0.0
    %8960 = vmatpush1.xpose.msra.mxu0 0.0
    %8961 = vmatprep.subr.mxu0 0.0
    %8962 = vmatpush1.xpose.msra.mxu0 0.0
    %8963 = vmatprep.subr.mxu0 0.0
    %8964 = vmatpush1.xpose.msra.mxu0 0.0
    %8965 = vmatprep.subr.mxu0 0.0
    %8966 = vmatpush1.xpose.msra.mxu0 0.0
    %8967 = vmatprep.subr.mxu0 0.0
    %8968 = vmatpush1.xpose.msra.mxu0 0.0
    %8969 = vmatprep.subr.mxu0 0.0
    %8970 = vmatpush1.xpose.msra.mxu0 0.0
    %8971 = vmatprep.subr.mxu0 0.0
    %8972 = vmatpush1.xpose.msra.mxu0 0.0
    %8973 = vmatprep.subr.mxu0 0.0
    %8974 = vmatpush1.xpose.msra.mxu0 0.0
    %8975 = vmatprep.subr.mxu0 0.0
    %8976 = vmatpush1.xpose.msra.mxu0 0.0
    %8977 = vmatprep.subr.mxu0 0.0
    %8978 = vmatpush1.xpose.msra.mxu0 0.0
    %8979 = vmatprep.subr.mxu0 0.0
    %8980 = vmatpush1.xpose.msra.mxu0 0.0
    %8981 = vmatprep.subr.mxu0 0.0
    %8982 = vmatpush1.xpose.msra.mxu0 0.0
    %8983 = vmatprep.subr.mxu0 0.0
    %8984 = vmatpush1.xpose.msra.mxu0 0.0
    %8985 = vmatprep.subr.mxu0 0.0
    %8986 = vmatpush1.xpose.msra.mxu0 0.0
    %8987 = vmatprep.subr.mxu0 0.0
    %8988 = vmatpush1.xpose.msra.mxu0 0.0
    %8989 = vmatprep.subr.mxu0 0.0
    %8990 = vmatpush1.xpose.msra.mxu0 0.0
    %8991 = vmatprep.subr.mxu0 0.0
    %8992 = vmatpush1.xpose.msra.mxu0 0.0
    %8993 = vmatprep.subr.mxu0 0.0
    %8994 = vmatpush1.xpose.msra.mxu0 0.0
    %8995 = vmatprep.subr.mxu0 0.0
    %8996 = vmatpush1.xpose.msra.mxu0 0.0
    %8997 = vmatprep.subr.mxu0 0.0
    %8998 = vmatpush1.xpose.msra.mxu0 0.0
    %8999 = vmatprep.subr.mxu0 0.0
    %9000 = vmatpush1.xpose.msra.mxu0 0.0
    %9001 = vmatprep.subr.mxu0 0.0
    %9002 = vmatpush1.xpose.msra.mxu0 0.0
    %9003 = vmatprep.subr.mxu0 0.0
    %9004 = vmatpush1.xpose.msra.mxu0 0.0
    %9005 = vmatprep.mubr.f32.mxu0 0.0
    %9006 = vmatmul.mubr.f32.gmra.mrb[0].mxu0 %v8936
    %v9007 = vpop.f32.mrb[0].mxu0
    %v9008 = vadd.f32 0.0, %v9007
    %v9009 = vpop.f32.mrb[0].mxu0
    %9010 = vdwg.mxu0
    %v9012 = vsel %vm3725, %v7172, 0
    %v9015 = vsel %vm3725, %v7412, 0
    %9017 = vmatprep.subr.mxu0 0.0
    %9018 = vmatpush1.xpose.msra.mxu0 %v9015
    %9019 = vmatprep.subr.mxu0 0.0
    %9020 = vmatpush1.xpose.msra.mxu0 0.0
    %9021 = vmatprep.subr.mxu0 0.0
    %9022 = vmatpush1.xpose.msra.mxu0 0.0
    %9023 = vmatprep.subr.mxu0 0.0
    %9024 = vmatpush1.xpose.msra.mxu0 0.0
    %9025 = vmatprep.subr.mxu0 0.0
    %9026 = vmatpush1.xpose.msra.mxu0 0.0
    %9027 = vmatprep.subr.mxu0 0.0
    %9028 = vmatpush1.xpose.msra.mxu0 0.0
    %9029 = vmatprep.subr.mxu0 0.0
    %9030 = vmatpush1.xpose.msra.mxu0 0.0
    %9031 = vmatprep.subr.mxu0 0.0
    %9032 = vmatpush1.xpose.msra.mxu0 0.0
    %9033 = vmatprep.subr.mxu0 0.0
    %9034 = vmatpush1.xpose.msra.mxu0 0.0
    %9035 = vmatprep.subr.mxu0 0.0
    %9036 = vmatpush1.xpose.msra.mxu0 0.0
    %9037 = vmatprep.subr.mxu0 0.0
    %9038 = vmatpush1.xpose.msra.mxu0 0.0
    %9039 = vmatprep.subr.mxu0 0.0
    %9040 = vmatpush1.xpose.msra.mxu0 0.0
    %9041 = vmatprep.subr.mxu0 0.0
    %9042 = vmatpush1.xpose.msra.mxu0 0.0
    %9043 = vmatprep.subr.mxu0 0.0
    %9044 = vmatpush1.xpose.msra.mxu0 0.0
    %9045 = vmatprep.subr.mxu0 0.0
    %9046 = vmatpush1.xpose.msra.mxu0 0.0
    %9047 = vmatprep.subr.mxu0 0.0
    %9048 = vmatpush1.xpose.msra.mxu0 0.0
    %9049 = vmatprep.subr.mxu0 0.0
    %9050 = vmatpush1.xpose.msra.mxu0 0.0
    %9051 = vmatprep.subr.mxu0 0.0
    %9052 = vmatpush1.xpose.msra.mxu0 0.0
    %9053 = vmatprep.subr.mxu0 0.0
    %9054 = vmatpush1.xpose.msra.mxu0 0.0
    %9055 = vmatprep.subr.mxu0 0.0
    %9056 = vmatpush1.xpose.msra.mxu0 0.0
    %9057 = vmatprep.subr.mxu0 0.0
    %9058 = vmatpush1.xpose.msra.mxu0 0.0
    %9059 = vmatprep.subr.mxu0 0.0
    %9060 = vmatpush1.xpose.msra.mxu0 0.0
    %9061 = vmatprep.subr.mxu0 0.0
    %9062 = vmatpush1.xpose.msra.mxu0 0.0
    %9063 = vmatprep.subr.mxu0 0.0
    %9064 = vmatpush1.xpose.msra.mxu0 0.0
    %9065 = vmatprep.subr.mxu0 0.0
    %9066 = vmatpush1.xpose.msra.mxu0 0.0
    %9067 = vmatprep.subr.mxu0 0.0
    %9068 = vmatpush1.xpose.msra.mxu0 0.0
    %9069 = vmatprep.subr.mxu0 0.0
    %9070 = vmatpush1.xpose.msra.mxu0 0.0
    %9071 = vmatprep.subr.mxu0 0.0
    %9072 = vmatpush1.xpose.msra.mxu0 0.0
    %9073 = vmatprep.subr.mxu0 0.0
    %9074 = vmatpush1.xpose.msra.mxu0 0.0
    %9075 = vmatprep.subr.mxu0 0.0
    %9076 = vmatpush1.xpose.msra.mxu0 0.0
    %9077 = vmatprep.subr.mxu0 0.0
    %9078 = vmatpush1.xpose.msra.mxu0 0.0
    %9079 = vmatprep.subr.mxu0 0.0
    %9080 = vmatpush1.xpose.msra.mxu0 0.0
    %9081 = vmatprep.mubr.f32.mxu0 0.0
    %9082 = vmatmul.mubr.f32.gmra.mrb[0].mxu0 %v9012
    %v9083 = vpop.f32.mrb[0].mxu0
    %v9084 = vadd.f32 0.0, %v9083
    %v9085 = vpop.f32.mrb[0].mxu0
    %9086 = vdwg.mxu0
    %v9088 = vsel %vm3725, %v7173, 0
    %v9091 = vsel %vm3725, %v7413, 0
    %9093 = vmatprep.subr.mxu0 0.0
    %9094 = vmatpush1.xpose.msra.mxu0 %v9091
    %9095 = vmatprep.subr.mxu0 0.0
    %9096 = vmatpush1.xpose.msra.mxu0 0.0
    %9097 = vmatprep.subr.mxu0 0.0
    %9098 = vmatpush1.xpose.msra.mxu0 0.0
    %9099 = vmatprep.subr.mxu0 0.0
    %9100 = vmatpush1.xpose.msra.mxu0 0.0
    %9101 = vmatprep.subr.mxu0 0.0
    %9102 = vmatpush1.xpose.msra.mxu0 0.0
    %9103 = vmatprep.subr.mxu0 0.0
    %9104 = vmatpush1.xpose.msra.mxu0 0.0
    %9105 = vmatprep.subr.mxu0 0.0
    %9106 = vmatpush1.xpose.msra.mxu0 0.0
    %9107 = vmatprep.subr.mxu0 0.0
    %9108 = vmatpush1.xpose.msra.mxu0 0.0
    %9109 = vmatprep.subr.mxu0 0.0
    %9110 = vmatpush1.xpose.msra.mxu0 0.0
    %9111 = vmatprep.subr.mxu0 0.0
    %9112 = vmatpush1.xpose.msra.mxu0 0.0
    %9113 = vmatprep.subr.mxu0 0.0
    %9114 = vmatpush1.xpose.msra.mxu0 0.0
    %9115 = vmatprep.subr.mxu0 0.0
    %9116 = vmatpush1.xpose.msra.mxu0 0.0
    %9117 = vmatprep.subr.mxu0 0.0
    %9118 = vmatpush1.xpose.msra.mxu0 0.0
    %9119 = vmatprep.subr.mxu0 0.0
    %9120 = vmatpush1.xpose.msra.mxu0 0.0
    %9121 = vmatprep.subr.mxu0 0.0
    %9122 = vmatpush1.xpose.msra.mxu0 0.0
    %9123 = vmatprep.subr.mxu0 0.0
    %9124 = vmatpush1.xpose.msra.mxu0 0.0
    %9125 = vmatprep.subr.mxu0 0.0
    %9126 = vmatpush1.xpose.msra.mxu0 0.0
    %9127 = vmatprep.subr.mxu0 0.0
    %9128 = vmatpush1.xpose.msra.mxu0 0.0
    %9129 = vmatprep.subr.mxu0 0.0
    %9130 = vmatpush1.xpose.msra.mxu0 0.0
    %9131 = vmatprep.subr.mxu0 0.0
    %9132 = vmatpush1.xpose.msra.mxu0 0.0
    %9133 = vmatprep.subr.mxu0 0.0
    %9134 = vmatpush1.xpose.msra.mxu0 0.0
    %9135 = vmatprep.subr.mxu0 0.0
    %9136 = vmatpush1.xpose.msra.mxu0 0.0
    %9137 = vmatprep.subr.mxu0 0.0
    %9138 = vmatpush1.xpose.msra.mxu0 0.0
    %9139 = vmatprep.subr.mxu0 0.0
    %9140 = vmatpush1.xpose.msra.mxu0 0.0
    %9141 = vmatprep.subr.mxu0 0.0
    %9142 = vmatpush1.xpose.msra.mxu0 0.0
    %9143 = vmatprep.subr.mxu0 0.0
    %9144 = vmatpush1.xpose.msra.mxu0 0.0
    %9145 = vmatprep.subr.mxu0 0.0
    %9146 = vmatpush1.xpose.msra.mxu0 0.0
    %9147 = vmatprep.subr.mxu0 0.0
    %9148 = vmatpush1.xpose.msra.mxu0 0.0
    %9149 = vmatprep.subr.mxu0 0.0
    %9150 = vmatpush1.xpose.msra.mxu0 0.0
    %9151 = vmatprep.subr.mxu0 0.0
    %9152 = vmatpush1.xpose.msra.mxu0 0.0
    %9153 = vmatprep.subr.mxu0 0.0
    %9154 = vmatpush1.xpose.msra.mxu0 0.0
    %9155 = vmatprep.subr.mxu0 0.0
    %9156 = vmatpush1.xpose.msra.mxu0 0.0
    %9157 = vmatprep.mubr.f32.mxu0 0.0
    %9158 = vmatmul.mubr.f32.gmra.mrb[0].mxu0 %v9088
    %v9159 = vpop.f32.mrb[0].mxu0
    %v9160 = vadd.f32 0.0, %v9159
    %v9161 = vpop.f32.mrb[0].mxu0
    %9162 = vdwg.mxu0
    %v9164 = vsel %vm3725, %v7174, 0
    %v9167 = vsel %vm3725, %v7414, 0
    %9169 = vmatprep.subr.mxu0 0.0
    %9170 = vmatpush1.xpose.msra.mxu0 %v9167
    %9171 = vmatprep.subr.mxu0 0.0
    %9172 = vmatpush1.xpose.msra.mxu0 0.0
    %9173 = vmatprep.subr.mxu0 0.0
    %9174 = vmatpush1.xpose.msra.mxu0 0.0
    %9175 = vmatprep.subr.mxu0 0.0
    %9176 = vmatpush1.xpose.msra.mxu0 0.0
    %9177 = vmatprep.subr.mxu0 0.0
    %9178 = vmatpush1.xpose.msra.mxu0 0.0
    %9179 = vmatprep.subr.mxu0 0.0
    %9180 = vmatpush1.xpose.msra.mxu0 0.0
    %9181 = vmatprep.subr.mxu0 0.0
    %9182 = vmatpush1.xpose.msra.mxu0 0.0
    %9183 = vmatprep.subr.mxu0 0.0
    %9184 = vmatpush1.xpose.msra.mxu0 0.0
    %9185 = vmatprep.subr.mxu0 0.0
    %9186 = vmatpush1.xpose.msra.mxu0 0.0
    %9187 = vmatprep.subr.mxu0 0.0
    %9188 = vmatpush1.xpose.msra.mxu0 0.0
    %9189 = vmatprep.subr.mxu0 0.0
    %9190 = vmatpush1.xpose.msra.mxu0 0.0
    %9191 = vmatprep.subr.mxu0 0.0
    %9192 = vmatpush1.xpose.msra.mxu0 0.0
    %9193 = vmatprep.subr.mxu0 0.0
    %9194 = vmatpush1.xpose.msra.mxu0 0.0
    %9195 = vmatprep.subr.mxu0 0.0
    %9196 = vmatpush1.xpose.msra.mxu0 0.0
    %9197 = vmatprep.subr.mxu0 0.0
    %9198 = vmatpush1.xpose.msra.mxu0 0.0
    %9199 = vmatprep.subr.mxu0 0.0
    %9200 = vmatpush1.xpose.msra.mxu0 0.0
    %9201 = vmatprep.subr.mxu0 0.0
    %9202 = vmatpush1.xpose.msra.mxu0 0.0
    %9203 = vmatprep.subr.mxu0 0.0
    %9204 = vmatpush1.xpose.msra.mxu0 0.0
    %9205 = vmatprep.subr.mxu0 0.0
    %9206 = vmatpush1.xpose.msra.mxu0 0.0
    %9207 = vmatprep.subr.mxu0 0.0
    %9208 = vmatpush1.xpose.msra.mxu0 0.0
    %9209 = vmatprep.subr.mxu0 0.0
    %9210 = vmatpush1.xpose.msra.mxu0 0.0
    %9211 = vmatprep.subr.mxu0 0.0
    %9212 = vmatpush1.xpose.msra.mxu0 0.0
    %9213 = vmatprep.subr.mxu0 0.0
    %9214 = vmatpush1.xpose.msra.mxu0 0.0
    %9215 = vmatprep.subr.mxu0 0.0
    %9216 = vmatpush1.xpose.msra.mxu0 0.0
    %9217 = vmatprep.subr.mxu0 0.0
    %9218 = vmatpush1.xpose.msra.mxu0 0.0
    %9219 = vmatprep.subr.mxu0 0.0
    %9220 = vmatpush1.xpose.msra.mxu0 0.0
    %9221 = vmatprep.subr.mxu0 0.0
    %9222 = vmatpush1.xpose.msra.mxu0 0.0
    %9223 = vmatprep.subr.mxu0 0.0
    %9224 = vmatpush1.xpose.msra.mxu0 0.0
    %9225 = vmatprep.subr.mxu0 0.0
    %9226 = vmatpush1.xpose.msra.mxu0 0.0
    %9227 = vmatprep.subr.mxu0 0.0
    %9228 = vmatpush1.xpose.msra.mxu0 0.0
    %9229 = vmatprep.subr.mxu0 0.0
    %9230 = vmatpush1.xpose.msra.mxu0 0.0
    %9231 = vmatprep.subr.mxu0 0.0
    %9232 = vmatpush1.xpose.msra.mxu0 0.0
    %9233 = vmatprep.mubr.f32.mxu0 0.0
    %9234 = vmatmul.mubr.f32.gmra.mrb[0].mxu0 %v9164
    %v9235 = vpop.f32.mrb[0].mxu0
    %v9236 = vadd.f32 0.0, %v9235
    %v9237 = vpop.f32.mrb[0].mxu0
    %9238 = vdwg.mxu0
    %v9239 = vmul.f32 %v7488, 0.125
    %v9240 = vmul.f32 %v7564, 0.125
    %v9241 = vmul.f32 %v7640, 0.125
    %v9242 = vmul.f32 %v7716, 0.125
    %v9243 = vmul.f32 %v7792, 0.125
    %v9244 = vmul.f32 %v7868, 0.125
    %v9245 = vmul.f32 %v7944, 0.125
    %v9246 = vmul.f32 %v8020, 0.125
    %v9247 = vmul.f32 %v8096, 0.125
    %v9248 = vmul.f32 %v8172, 0.125
    %v9249 = vmul.f32 %v8248, 0.125
    %v9250 = vmul.f32 %v8324, 0.125
    %v9251 = vmul.f32 %v8400, 0.125
    %v9252 = vmul.f32 %v8476, 0.125
    %v9253 = vmul.f32 %v8552, 0.125
    %v9254 = vmul.f32 %v8628, 0.125
    %v9255 = vmul.f32 %v8704, 0.125
    %v9256 = vmul.f32 %v8780, 0.125
    %v9257 = vmul.f32 %v8856, 0.125
    %v9258 = vmul.f32 %v8932, 0.125
    %v9259 = vmul.f32 %v9008, 0.125
    %v9260 = vmul.f32 %v9084, 0.125
    %v9261 = vmul.f32 %v9160, 0.125
    %v9262 = vmul.f32 %v9236, 0.125
    %vm9263 = vcmask 64512
    %v9264 = vsel %vm9263, %v9239, -inf
    %9265 = vmax.xlane.f32.xlu0 %v9264
    %v9266 = vpop.xlane.xlu0 %9265
    %v9267 = vsel %vm9263, %v9240, -inf
    %9268 = vmax.xlane.f32.xlu0 %v9267
    %v9269 = vpop.xlane.xlu0 %9268
    %v9270 = vsel %vm9263, %v9241, -inf
    %9271 = vmax.xlane.f32.xlu0 %v9270
    %v9272 = vpop.xlane.xlu0 %9271
    %v9273 = vsel %vm9263, %v9242, -inf
    %9274 = vmax.xlane.f32.xlu0 %v9273
    %v9275 = vpop.xlane.xlu0 %9274
    %v9276 = vsel %vm9263, %v9243, -inf
    %9277 = vmax.xlane.f32.xlu0 %v9276
    %v9278 = vpop.xlane.xlu0 %9277
    %v9279 = vsel %vm9263, %v9244, -inf
    %9280 = vmax.xlane.f32.xlu0 %v9279
    %v9281 = vpop.xlane.xlu0 %9280
    %v9282 = vsel %vm9263, %v9245, -inf
    %9283 = vmax.xlane.f32.xlu0 %v9282
    %v9284 = vpop.xlane.xlu0 %9283
    %v9285 = vsel %vm9263, %v9246, -inf
    %9286 = vmax.xlane.f32.xlu0 %v9285
    %v9287 = vpop.xlane.xlu0 %9286
    %v9288 = vsel %vm9263, %v9247, -inf
    %9289 = vmax.xlane.f32.xlu0 %v9288
    %v9290 = vpop.xlane.xlu0 %9289
    %v9291 = vsel %vm9263, %v9248, -inf
    %9292 = vmax.xlane.f32.xlu0 %v9291
    %v9293 = vpop.xlane.xlu0 %9292
    %v9294 = vsel %vm9263, %v9249, -inf
    %9295 = vmax.xlane.f32.xlu0 %v9294
    %v9296 = vpop.xlane.xlu0 %9295
    %v9297 = vsel %vm9263, %v9250, -inf
    %9298 = vmax.xlane.f32.xlu0 %v9297
    %v9299 = vpop.xlane.xlu0 %9298
    %v9300 = vsel %vm9263, %v9251, -inf
    %9301 = vmax.xlane.f32.xlu0 %v9300
    %v9302 = vpop.xlane.xlu0 %9301
    %v9303 = vsel %vm9263, %v9252, -inf
    %9304 = vmax.xlane.f32.xlu0 %v9303
    %v9305 = vpop.xlane.xlu0 %9304
    %v9306 = vsel %vm9263, %v9253, -inf
    %9307 = vmax.xlane.f32.xlu0 %v9306
    %v9308 = vpop.xlane.xlu0 %9307
    %v9309 = vsel %vm9263, %v9254, -inf
    %9310 = vmax.xlane.f32.xlu0 %v9309
    %v9311 = vpop.xlane.xlu0 %9310
    %v9312 = vsel %vm9263, %v9255, -inf
    %9313 = vmax.xlane.f32.xlu0 %v9312
    %v9314 = vpop.xlane.xlu0 %9313
    %v9315 = vsel %vm9263, %v9256, -inf
    %9316 = vmax.xlane.f32.xlu0 %v9315
    %v9317 = vpop.xlane.xlu0 %9316
    %v9318 = vsel %vm9263, %v9257, -inf
    %9319 = vmax.xlane.f32.xlu0 %v9318
    %v9320 = vpop.xlane.xlu0 %9319
    %v9321 = vsel %vm9263, %v9258, -inf
    %9322 = vmax.xlane.f32.xlu0 %v9321
    %v9323 = vpop.xlane.xlu0 %9322
    %v9324 = vsel %vm9263, %v9259, -inf
    %9325 = vmax.xlane.f32.xlu0 %v9324
    %v9326 = vpop.xlane.xlu0 %9325
    %v9327 = vsel %vm9263, %v9260, -inf
    %9328 = vmax.xlane.f32.xlu0 %v9327
    %v9329 = vpop.xlane.xlu0 %9328
    %v9330 = vsel %vm9263, %v9261, -inf
    %9331 = vmax.xlane.f32.xlu0 %v9330
    %v9332 = vpop.xlane.xlu0 %9331
    %v9333 = vsel %vm9263, %v9262, -inf
    %9334 = vmax.xlane.f32.xlu0 %v9333
    %v9335 = vpop.xlane.xlu0 %9334
    %v9336 = vsub.f32 %v9239, %v9266
    %v9337 = vsub.f32 %v9240, %v9269
    %v9338 = vsub.f32 %v9241, %v9272
    %v9339 = vsub.f32 %v9242, %v9275
    %v9340 = vsub.f32 %v9243, %v9278
    %v9341 = vsub.f32 %v9244, %v9281
    %v9342 = vsub.f32 %v9245, %v9284
    %v9343 = vsub.f32 %v9246, %v9287
    %v9344 = vsub.f32 %v9247, %v9290
    %v9345 = vsub.f32 %v9248, %v9293
    %v9346 = vsub.f32 %v9249, %v9296
    %v9347 = vsub.f32 %v9250, %v9299
    %v9348 = vsub.f32 %v9251, %v9302
    %v9349 = vsub.f32 %v9252, %v9305
    %v9350 = vsub.f32 %v9253, %v9308
    %v9351 = vsub.f32 %v9254, %v9311
    %v9352 = vsub.f32 %v9255, %v9314
    %v9353 = vsub.f32 %v9256, %v9317
    %v9354 = vsub.f32 %v9257, %v9320
    %v9355 = vsub.f32 %v9258, %v9323
    %v9356 = vsub.f32 %v9259, %v9326
    %v9357 = vsub.f32 %v9260, %v9329
    %v9358 = vsub.f32 %v9261, %v9332
    %v9359 = vsub.f32 %v9262, %v9335
    %v9360 = vmul.f32 %v9336, 1.442695
    %v9361 = vpow.pop %v9360
    %v9362 = vmul.f32 %v9337, 1.442695
    %v9363 = vpow.pop %v9362
    %v9364 = vmul.f32 %v9338, 1.442695
    %v9365 = vpow.pop %v9364
    %v9366 = vmul.f32 %v9339, 1.442695
    %v9367 = vpow.pop %v9366
    %v9368 = vmul.f32 %v9340, 1.442695
    %v9369 = vpow.pop %v9368
    %v9370 = vmul.f32 %v9341, 1.442695
    %v9371 = vpow.pop %v9370
    %v9372 = vmul.f32 %v9342, 1.442695
    %v9373 = vpow.pop %v9372
    %v9374 = vmul.f32 %v9343, 1.442695
    %v9375 = vpow.pop %v9374
    %v9376 = vmul.f32 %v9344, 1.442695
    %v9377 = vpow.pop %v9376
    %v9378 = vmul.f32 %v9345, 1.442695
    %v9379 = vpow.pop %v9378
    %v9380 = vmul.f32 %v9346, 1.442695
    %v9381 = vpow.pop %v9380
    %v9382 = vmul.f32 %v9347, 1.442695
    %v9383 = vpow.pop %v9382
    %v9384 = vmul.f32 %v9348, 1.442695
    %v9385 = vpow.pop %v9384
    %v9386 = vmul.f32 %v9349, 1.442695
    %v9387 = vpow.pop %v9386
    %v9388 = vmul.f32 %v9350, 1.442695
    %v9389 = vpow.pop %v9388
    %v9390 = vmul.f32 %v9351, 1.442695
    %v9391 = vpow.pop %v9390
    %v9392 = vmul.f32 %v9352, 1.442695
    %v9393 = vpow.pop %v9392
    %v9394 = vmul.f32 %v9353, 1.442695
    %v9395 = vpow.pop %v9394
    %v9396 = vmul.f32 %v9354, 1.442695
    %v9397 = vpow.pop %v9396
    %v9398 = vmul.f32 %v9355, 1.442695
    %v9399 = vpow.pop %v9398
    %v9400 = vmul.f32 %v9356, 1.442695
    %v9401 = vpow.pop %v9400
    %v9402 = vmul.f32 %v9357, 1.442695
    %v9403 = vpow.pop %v9402
    %v9404 = vmul.f32 %v9358, 1.442695
    %v9405 = vpow.pop %v9404
    %v9406 = vmul.f32 %v9359, 1.442695
    %v9407 = vpow.pop %v9406
    %v9408 = vsel %vm9263, %v9361, 0.0
    %9409 = vadd.xlane.f32.xlu0 %v9408
    %v9410 = vpop.xlane.xlu0 %9409
    %v9411 = vsel %vm9263, %v9363, 0.0
    %9412 = vadd.xlane.f32.xlu0 %v9411
    %v9413 = vpop.xlane.xlu0 %9412
    %v9414 = vsel %vm9263, %v9365, 0.0
    %9415 = vadd.xlane.f32.xlu0 %v9414
    %v9416 = vpop.xlane.xlu0 %9415
    %v9417 = vsel %vm9263, %v9367, 0.0
    %9418 = vadd.xlane.f32.xlu0 %v9417
    %v9419 = vpop.xlane.xlu0 %9418
    %v9420 = vsel %vm9263, %v9369, 0.0
    %9421 = vadd.xlane.f32.xlu0 %v9420
    %v9422 = vpop.xlane.xlu0 %9421
    %v9423 = vsel %vm9263, %v9371, 0.0
    %9424 = vadd.xlane.f32.xlu0 %v9423
    %v9425 = vpop.xlane.xlu0 %9424
    %v9426 = vsel %vm9263, %v9373, 0.0
    %9427 = vadd.xlane.f32.xlu0 %v9426
    %v9428 = vpop.xlane.xlu0 %9427
    %v9429 = vsel %vm9263, %v9375, 0.0
    %9430 = vadd.xlane.f32.xlu0 %v9429
    %v9431 = vpop.xlane.xlu0 %9430
    %v9432 = vsel %vm9263, %v9377, 0.0
    %9433 = vadd.xlane.f32.xlu0 %v9432
    %v9434 = vpop.xlane.xlu0 %9433
    %v9435 = vsel %vm9263, %v9379, 0.0
    %9436 = vadd.xlane.f32.xlu0 %v9435
    %v9437 = vpop.xlane.xlu0 %9436
    %v9438 = vsel %vm9263, %v9381, 0.0
    %9439 = vadd.xlane.f32.xlu0 %v9438
    %v9440 = vpop.xlane.xlu0 %9439
    %v9441 = vsel %vm9263, %v9383, 0.0
    %9442 = vadd.xlane.f32.xlu0 %v9441
    %v9443 = vpop.xlane.xlu0 %9442
    %v9444 = vsel %vm9263, %v9385, 0.0
    %9445 = vadd.xlane.f32.xlu0 %v9444
    %v9446 = vpop.xlane.xlu0 %9445
    %v9447 = vsel %vm9263, %v9387, 0.0
    %9448 = vadd.xlane.f32.xlu0 %v9447
    %v9449 = vpop.xlane.xlu0 %9448
    %v9450 = vsel %vm9263, %v9389, 0.0
    %9451 = vadd.xlane.f32.xlu0 %v9450
    %v9452 = vpop.xlane.xlu0 %9451
    %v9453 = vsel %vm9263, %v9391, 0.0
    %9454 = vadd.xlane.f32.xlu0 %v9453
    %v9455 = vpop.xlane.xlu0 %9454
    %v9456 = vsel %vm9263, %v9393, 0.0
    %9457 = vadd.xlane.f32.xlu0 %v9456
    %v9458 = vpop.xlane.xlu0 %9457
    %v9459 = vsel %vm9263, %v9395, 0.0
    %9460 = vadd.xlane.f32.xlu0 %v9459
    %v9461 = vpop.xlane.xlu0 %9460
    %v9462 = vsel %vm9263, %v9397, 0.0
    %9463 = vadd.xlane.f32.xlu0 %v9462
    %v9464 = vpop.xlane.xlu0 %9463
    %v9465 = vsel %vm9263, %v9399, 0.0
    %9466 = vadd.xlane.f32.xlu0 %v9465
    %v9467 = vpop.xlane.xlu0 %9466
    %v9468 = vsel %vm9263, %v9401, 0.0
    %9469 = vadd.xlane.f32.xlu0 %v9468
    %v9470 = vpop.xlane.xlu0 %9469
    %v9471 = vsel %vm9263, %v9403, 0.0
    %9472 = vadd.xlane.f32.xlu0 %v9471
    %v9473 = vpop.xlane.xlu0 %9472
    %v9474 = vsel %vm9263, %v9405, 0.0
    %9475 = vadd.xlane.f32.xlu0 %v9474
    %v9476 = vpop.xlane.xlu0 %9475
    %v9477 = vsel %vm9263, %v9407, 0.0
    %9478 = vadd.xlane.f32.xlu0 %v9477
    %v9479 = vpop.xlane.xlu0 %9478
    %v9480 = vrcp.pop %v9410
    %v9481 = vrcp.pop %v9413
    %v9482 = vrcp.pop %v9416
    %v9483 = vrcp.pop %v9419
    %v9484 = vrcp.pop %v9422
    %v9485 = vrcp.pop %v9425
    %v9486 = vrcp.pop %v9428
    %v9487 = vrcp.pop %v9431
    %v9488 = vrcp.pop %v9434
    %v9489 = vrcp.pop %v9437
    %v9490 = vrcp.pop %v9440
    %v9491 = vrcp.pop %v9443
    %v9492 = vrcp.pop %v9446
    %v9493 = vrcp.pop %v9449
    %v9494 = vrcp.pop %v9452
    %v9495 = vrcp.pop %v9455
    %v9496 = vrcp.pop %v9458
    %v9497 = vrcp.pop %v9461
    %v9498 = vrcp.pop %v9464
    %v9499 = vrcp.pop %v9467
    %v9500 = vrcp.pop %v9470
    %v9501 = vrcp.pop %v9473
    %v9502 = vrcp.pop %v9476
    %v9503 = vrcp.pop %v9479
    %v9504 = vmul.f32 %v9361, %v9480
    %v9505 = vmul.f32 %v9363, %v9481
    %v9506 = vmul.f32 %v9365, %v9482
    %v9507 = vmul.f32 %v9367, %v9483
    %v9508 = vmul.f32 %v9369, %v9484
    %v9509 = vmul.f32 %v9371, %v9485
    %v9510 = vmul.f32 %v9373, %v9486
    %v9511 = vmul.f32 %v9375, %v9487
    %v9512 = vmul.f32 %v9377, %v9488
    %v9513 = vmul.f32 %v9379, %v9489
    %v9514 = vmul.f32 %v9381, %v9490
    %v9515 = vmul.f32 %v9383, %v9491
    %v9516 = vmul.f32 %v9385, %v9492
    %v9517 = vmul.f32 %v9387, %v9493
    %v9518 = vmul.f32 %v9389, %v9494
    %v9519 = vmul.f32 %v9391, %v9495
    %v9520 = vmul.f32 %v9393, %v9496
    %v9521 = vmul.f32 %v9395, %v9497
    %v9522 = vmul.f32 %v9397, %v9498
    %v9523 = vmul.f32 %v9399, %v9499
    %v9524 = vmul.f32 %v9401, %v9500
    %v9525 = vmul.f32 %v9403, %v9501
    %v9526 = vmul.f32 %v9405, %v9502
    %v9527 = vmul.f32 %v9407, %v9503
    %v9528 = vmul.f32 %v9504, %v3231
    %v9529 = vmul.f32 %v9505, %v3231
    %v9530 = vmul.f32 %v9506, %v3231
    %v9531 = vmul.f32 %v9507, %v3231
    %v9532 = vmul.f32 %v9508, %v3232
    %v9533 = vmul.f32 %v9509, %v3232
    %v9534 = vmul.f32 %v9510, %v3232
    %v9535 = vmul.f32 %v9511, %v3232
    %v9536 = vmul.f32 %v9512, %v3233
    %v9537 = vmul.f32 %v9513, %v3233
    %v9538 = vmul.f32 %v9514, %v3233
    %v9539 = vmul.f32 %v9515, %v3233
    %v9540 = vmul.f32 %v9516, %v3234
    %v9541 = vmul.f32 %v9517, %v3234
    %v9542 = vmul.f32 %v9518, %v3234
    %v9543 = vmul.f32 %v9519, %v3234
    %v9544 = vmul.f32 %v9520, %v3235
    %v9545 = vmul.f32 %v9521, %v3235
    %v9546 = vmul.f32 %v9522, %v3235
    %v9547 = vmul.f32 %v9523, %v3235
    %v9548 = vmul.f32 %v9524, %v3236
    %v9549 = vmul.f32 %v9525, %v3236
    %v9550 = vmul.f32 %v9526, %v3236
    %v9551 = vmul.f32 %v9527, %v3236
    %v9552 = vmul.f32 %v9528, 1.442695
    %v9553 = vpow.pop %v9552
    %v9554 = vmul.f32 %v9529, 1.442695
    %v9555 = vpow.pop %v9554
    %v9556 = vmul.f32 %v9530, 1.442695
    %v9557 = vpow.pop %v9556
    %v9558 = vmul.f32 %v9531, 1.442695
    %v9559 = vpow.pop %v9558
    %v9560 = vmul.f32 %v9532, 1.442695
    %v9561 = vpow.pop %v9560
    %v9562 = vmul.f32 %v9533, 1.442695
    %v9563 = vpow.pop %v9562
    %v9564 = vmul.f32 %v9534, 1.442695
    %v9565 = vpow.pop %v9564
    %v9566 = vmul.f32 %v9535, 1.442695
    %v9567 = vpow.pop %v9566
    %v9568 = vmul.f32 %v9536, 1.442695
    %v9569 = vpow.pop %v9568
    %v9570 = vmul.f32 %v9537, 1.442695
    %v9571 = vpow.pop %v9570
    %v9572 = vmul.f32 %v9538, 1.442695
    %v9573 = vpow.pop %v9572
    %v9574 = vmul.f32 %v9539, 1.442695
    %v9575 = vpow.pop %v9574
    %v9576 = vmul.f32 %v9540, 1.442695
    %v9577 = vpow.pop %v9576
    %v9578 = vmul.f32 %v9541, 1.442695
    %v9579 = vpow.pop %v9578
    %v9580 = vmul.f32 %v9542, 1.442695
    %v9581 = vpow.pop %v9580
    %v9582 = vmul.f32 %v9543, 1.442695
    %v9583 = vpow.pop %v9582
    %v9584 = vmul.f32 %v9544, 1.442695
    %v9585 = vpow.pop %v9584
    %v9586 = vmul.f32 %v9545, 1.442695
    %v9587 = vpow.pop %v9586
    %v9588 = vmul.f32 %v9546, 1.442695
    %v9589 = vpow.pop %v9588
    %v9590 = vmul.f32 %v9547, 1.442695
    %v9591 = vpow.pop %v9590
    %v9592 = vmul.f32 %v9548, 1.442695
    %v9593 = vpow.pop %v9592
    %v9594 = vmul.f32 %v9549, 1.442695
    %v9595 = vpow.pop %v9594
    %v9596 = vmul.f32 %v9550, 1.442695
    %v9597 = vpow.pop %v9596
    %v9598 = vmul.f32 %v9551, 1.442695
    %v9599 = vpow.pop %v9598
    %v9600 = vsel %vm9263, %v9553, 0.0
    %9601 = vadd.xlane.f32.xlu0 %v9600
    %v9602 = vpop.xlane.xlu0 %9601
    %v9603 = vsel %vm9263, %v9555, 0.0
    %9604 = vadd.xlane.f32.xlu0 %v9603
    %v9605 = vpop.xlane.xlu0 %9604
    %v9606 = vsel %vm9263, %v9557, 0.0
    %9607 = vadd.xlane.f32.xlu0 %v9606
    %v9608 = vpop.xlane.xlu0 %9607
    %v9609 = vsel %vm9263, %v9559, 0.0
    %9610 = vadd.xlane.f32.xlu0 %v9609
    %v9611 = vpop.xlane.xlu0 %9610
    %v9612 = vsel %vm9263, %v9561, 0.0
    %9613 = vadd.xlane.f32.xlu0 %v9612
    %v9614 = vpop.xlane.xlu0 %9613
    %v9615 = vsel %vm9263, %v9563, 0.0
    %9616 = vadd.xlane.f32.xlu0 %v9615
    %v9617 = vpop.xlane.xlu0 %9616
    %v9618 = vsel %vm9263, %v9565, 0.0
    %9619 = vadd.xlane.f32.xlu0 %v9618
    %v9620 = vpop.xlane.xlu0 %9619
    %v9621 = vsel %vm9263, %v9567, 0.0
    %9622 = vadd.xlane.f32.xlu0 %v9621
    %v9623 = vpop.xlane.xlu0 %9622
    %v9624 = vsel %vm9263, %v9569, 0.0
    %9625 = vadd.xlane.f32.xlu0 %v9624
    %v9626 = vpop.xlane.xlu0 %9625
    %v9627 = vsel %vm9263, %v9571, 0.0
    %9628 = vadd.xlane.f32.xlu0 %v9627
    %v9629 = vpop.xlane.xlu0 %9628
    %v9630 = vsel %vm9263, %v9573, 0.0
    %9631 = vadd.xlane.f32.xlu0 %v9630
    %v9632 = vpop.xlane.xlu0 %9631
    %v9633 = vsel %vm9263, %v9575, 0.0
    %9634 = vadd.xlane.f32.xlu0 %v9633
    %v9635 = vpop.xlane.xlu0 %9634
    %v9636 = vsel %vm9263, %v9577, 0.0
    %9637 = vadd.xlane.f32.xlu0 %v9636
    %v9638 = vpop.xlane.xlu0 %9637
    %v9639 = vsel %vm9263, %v9579, 0.0
    %9640 = vadd.xlane.f32.xlu0 %v9639
    %v9641 = vpop.xlane.xlu0 %9640
    %v9642 = vsel %vm9263, %v9581, 0.0
    %9643 = vadd.xlane.f32.xlu0 %v9642
    %v9644 = vpop.xlane.xlu0 %9643
    %v9645 = vsel %vm9263, %v9583, 0.0
    %9646 = vadd.xlane.f32.xlu0 %v9645
    %v9647 = vpop.xlane.xlu0 %9646
    %v9648 = vsel %vm9263, %v9585, 0.0
    %9649 = vadd.xlane.f32.xlu0 %v9648
    %v9650 = vpop.xlane.xlu0 %9649
    %v9651 = vsel %vm9263, %v9587, 0.0
    %9652 = vadd.xlane.f32.xlu0 %v9651
    %v9653 = vpop.xlane.xlu0 %9652
    %v9654 = vsel %vm9263, %v9589, 0.0
    %9655 = vadd.xlane.f32.xlu0 %v9654
    %v9656 = vpop.xlane.xlu0 %9655
    %v9657 = vsel %vm9263, %v9591, 0.0
    %9658 = vadd.xlane.f32.xlu0 %v9657
    %v9659 = vpop.xlane.xlu0 %9658
    %v9660 = vsel %vm9263, %v9593, 0.0
    %9661 = vadd.xlane.f32.xlu0 %v9660
    %v9662 = vpop.xlane.xlu0 %9661
    %v9663 = vsel %vm9263, %v9595, 0.0
    %9664 = vadd.xlane.f32.xlu0 %v9663
    %v9665 = vpop.xlane.xlu0 %9664
    %v9666 = vsel %vm9263, %v9597, 0.0
    %9667 = vadd.xlane.f32.xlu0 %v9666
    %v9668 = vpop.xlane.xlu0 %9667
    %v9669 = vsel %vm9263, %v9599, 0.0
    %9670 = vadd.xlane.f32.xlu0 %v9669
    %v9671 = vpop.xlane.xlu0 %9670
    %v9672 = vrcp.pop %v9602
    %v9673 = vrcp.pop %v9605
    %v9674 = vrcp.pop %v9608
    %v9675 = vrcp.pop %v9611
    %v9676 = vrcp.pop %v9614
    %v9677 = vrcp.pop %v9617
    %v9678 = vrcp.pop %v9620
    %v9679 = vrcp.pop %v9623
    %v9680 = vrcp.pop %v9626
    %v9681 = vrcp.pop %v9629
    %v9682 = vrcp.pop %v9632
    %v9683 = vrcp.pop %v9635
    %v9684 = vrcp.pop %v9638
    %v9685 = vrcp.pop %v9641
    %v9686 = vrcp.pop %v9644
    %v9687 = vrcp.pop %v9647
    %v9688 = vrcp.pop %v9650
    %v9689 = vrcp.pop %v9653
    %v9690 = vrcp.pop %v9656
    %v9691 = vrcp.pop %v9659
    %v9692 = vrcp.pop %v9662
    %v9693 = vrcp.pop %v9665
    %v9694 = vrcp.pop %v9668
    %v9695 = vrcp.pop %v9671
    %v9696 = vmul.f32 %v9553, %v9672
    %v9697 = vmul.f32 %v9555, %v9673
    %v9698 = vmul.f32 %v9557, %v9674
    %v9699 = vmul.f32 %v9559, %v9675
    %v9700 = vmul.f32 %v9561, %v9676
    %v9701 = vmul.f32 %v9563, %v9677
    %v9702 = vmul.f32 %v9565, %v9678
    %v9703 = vmul.f32 %v9567, %v9679
    %v9704 = vmul.f32 %v9569, %v9680
    %v9705 = vmul.f32 %v9571, %v9681
    %v9706 = vmul.f32 %v9573, %v9682
    %v9707 = vmul.f32 %v9575, %v9683
    %v9708 = vmul.f32 %v9577, %v9684
    %v9709 = vmul.f32 %v9579, %v9685
    %v9710 = vmul.f32 %v9581, %v9686
    %v9711 = vmul.f32 %v9583, %v9687
    %v9712 = vmul.f32 %v9585, %v9688
    %v9713 = vmul.f32 %v9587, %v9689
    %v9714 = vmul.f32 %v9589, %v9690
    %v9715 = vmul.f32 %v9591, %v9691
    %v9716 = vmul.f32 %v9593, %v9692
    %v9717 = vmul.f32 %v9595, %v9693
    %v9718 = vmul.f32 %v9597, %v9694
    %v9719 = vmul.f32 %v9599, %v9695
    %9720 = vst.msk [vmem:[#allocation2] sm:$0xff] %vm9263, %v9696
    %9721 = vst.msk [vmem:[#allocation2 + $0x8] sm:$0xff] %vm9263, %v9697
    %9722 = vst.msk [vmem:[#allocation2 + $0x10] sm:$0xff] %vm9263, %v9698
    %9723 = vst.msk [vmem:[#allocation2 + $0x18] sm:$0xff] %vm9263, %v9699
    %9724 = vst.msk [vmem:[#allocation2 + $0x20] sm:$0xff] %vm9263, %v9700
    %9725 = vst.msk [vmem:[#allocation2 + $0x28] sm:$0xff] %vm9263, %v9701
    %9726 = vst.msk [vmem:[#allocation2 + $0x30] sm:$0xff] %vm9263, %v9702
    %9727 = vst.msk [vmem:[#allocation2 + $0x38] sm:$0xff] %vm9263, %v9703
    %9728 = vst.msk [vmem:[#allocation2 + $0x40] sm:$0xff] %vm9263, %v9704
    %9729 = vst.msk [vmem:[#allocation2 + $0x48] sm:$0xff] %vm9263, %v9705
    %9730 = vst.msk [vmem:[#allocation2 + $0x50] sm:$0xff] %vm9263, %v9706
    %9731 = vst.msk [vmem:[#allocation2 + $0x58] sm:$0xff] %vm9263, %v9707
    %9732 = vst.msk [vmem:[#allocation2 + $0x60] sm:$0xff] %vm9263, %v9708
    %9733 = vst.msk [vmem:[#allocation2 + $0x68] sm:$0xff] %vm9263, %v9709
    %9734 = vst.msk [vmem:[#allocation2 + $0x70] sm:$0xff] %vm9263, %v9710
    %9735 = vst.msk [vmem:[#allocation2 + $0x78] sm:$0xff] %vm9263, %v9711
    %9736 = vst.msk [vmem:[#allocation2 + $0x80] sm:$0xff] %vm9263, %v9712
    %9737 = vst.msk [vmem:[#allocation2 + $0x88] sm:$0xff] %vm9263, %v9713
    %9738 = vst.msk [vmem:[#allocation2 + $0x90] sm:$0xff] %vm9263, %v9714
    %9739 = vst.msk [vmem:[#allocation2 + $0x98] sm:$0xff] %vm9263, %v9715
    %9740 = vst.msk [vmem:[#allocation2 + $0xa0] sm:$0xff] %vm9263, %v9716
    %9741 = vst.msk [vmem:[#allocation2 + $0xa8] sm:$0xff] %vm9263, %v9717
    %9742 = vst.msk [vmem:[#allocation2 + $0xb0] sm:$0xff] %vm9263, %v9718
    %9743 = vst.msk [vmem:[#allocation2 + $0xb8] sm:$0xff] %vm9263, %v9719
    // Predicated region
    $region34: #{sparse_weighted_adjacency.1} parent=1 // pred_check
      _
    $region35: #{sparse_weighted_adjacency.1} parent=1 // pred_check_branch
      %9745 = sbr.rel (0) target = $region37
    $region36: #{sparse_weighted_adjacency.1} parent=1 // pred_region
      _
    $region37: #{sparse_weighted_adjacency.1} parent=1 // pred_fallthru
      _
    // Predicated region
    $region38: #{sparse_weighted_adjacency.1} parent=1 // pred_check
      _
    $region39: #{sparse_weighted_adjacency.1} parent=1 // pred_check_branch
      %9747 = sbr.rel (0) target = $region41
    $region40: #{sparse_weighted_adjacency.1} parent=1 // pred_region
      %s9749 = ssub.s32 3072, 3072
      %9750 = vsyncadd [#allocation3], %s9749
      %s9751 = sshll.u32 [#allocation2], 4
      %s9752 = int_to_ptr.vmem [resolvable:$true] %s9751
      %9757 = dma.vmem_to_hbm [thread:$0]  %s9752, 3072, %s9, [#allocation3], 128, 128, 8
    $region41: #{sparse_weighted_adjacency.1} parent=1 // pred_fallthru
      _
    // Predicated region
    $region42: #{sparse_weighted_adjacency.1} parent=1 // pred_check
      _
    $region43: #{sparse_weighted_adjacency.1} parent=1 // pred_check_branch
      %9759 = sbr.rel (0) target = $region45
    $region44: #{sparse_weighted_adjacency.1} parent=1 // pred_region
      _
    $region45: #{sparse_weighted_adjacency.1} parent=1 // pred_fallthru
      _
    // Predicated region
    $region46: #{sparse_weighted_adjacency.1} parent=1 // pred_check
      _
    $region47: #{sparse_weighted_adjacency.1} parent=1 // pred_check_branch
      %9761 = sbr.rel (0) target = $region49
    $region48: #{sparse_weighted_adjacency.1} parent=1 // pred_region
      %9762 = dma.done [#allocation3], 3072
    $region49: #{sparse_weighted_adjacency.1} parent=1 // pred_fallthru
      _
    %9763 = vsyncpa [#allocation3], 1

</llo_original>
